<compile_context>
chip_gen: v6e
topology: v6e:2x2x1
jax: 0.10.0
libtpu: 0.0.40
codegen_flags: <defaults>
</compile_context>

<pallas_src>
import functools

import jax
import jax.numpy as jnp
from jax import lax
from jax.experimental import pallas as pl
from jax.experimental.pallas import tpu as pltpu


def _resblock_kernel(xp_ref, w1_ref, b1_ref, w2_ref, b2_ref, mask_ref,
                     out_ref, col_ref, *, H, W, C, Bb):
    # xp_ref  : (Bb, C, Pf)   padded-flat input, f32, zeros in padding ring/tail
    # w*_ref  : (C, 9*C)      fused tap-major weights, bf16
    #                         w[c_out, (ky*3+kx)*C + c_in]
    # b*_ref  : (C, 1)        biases, f32 (broadcast over lanes)
    # mask_ref: (1, Pf)       1.0 on interior pixels, 0.0 on padding ring / tail
    # out_ref : (Bb, C, Pf)   result, same padded-flat layout, ring/tail zeroed
    # col_ref : (9*C, Bb*Pf)  bf16 im2col-over-taps scratch (VMEM)
    Wp = W + 2
    Pp = (H + 2) * Wp
    Pf = xp_ref.shape[-1]
    # Roll-wraparound safety: interior pixels q have q + dq in [0, Pp) <= Pf for
    # every tap offset dq, so wrapped lanes only land on masked/sliced positions.
    assert Pp <= Pf

    mask = mask_ref[...]  # (1, Pf) f32

    def fill_taps(get_slab):
        # get_slab(bb) -> (C, Pf) f32, already zero on the padding ring / tail.
        for bb in range(Bb):
            slab = get_slab(bb)
            for ky in range(3):
                for kx in range(3):
                    t = ky * 3 + kx
                    dq = (ky - 1) * Wp + (kx - 1)        # lane offset of this tap
                    sh = slab if dq == 0 else pltpu.roll(
                        slab, shift=(-dq) % Pf, axis=1)
                    col_ref[t * C:(t + 1) * C, bb * Pf:(bb + 1) * Pf] = (
                        sh.astype(jnp.bfloat16))

    # ---- conv1: single fused-K matmul + bias + ReLU -------------------------
    fill_taps(lambda bb: xp_ref[bb].astype(jnp.float32))
    h1 = jnp.dot(w1_ref[...], col_ref[...],
                 preferred_element_type=jnp.float32)         # (C, Bb*Pf) f32
    h1 = jnp.maximum(h1 + b1_ref[...], 0.0)

    # ---- conv2: mask restores zero padding, then fused-K matmul + bias ------
    fill_taps(lambda bb: h1[:, bb * Pf:(bb + 1) * Pf] * mask)
    y = jnp.dot(w2_ref[...], col_ref[...],
                preferred_element_type=jnp.float32) + b2_ref[...]

    # ---- residual add (identity path stays f32); zero ring/tail so the output
    #      is directly chainable in the padded-flat layout -------------------
    for bb in range(Bb):
        x_bb = xp_ref[bb].astype(jnp.float32)
        out_ref[bb] = ((x_bb + y[:, bb * Pf:(bb + 1) * Pf]) * mask
                       ).astype(out_ref.dtype)


def residual_block_nobn_flat(xflat, w1, b1, w2, b2, *, H, W, batch_block=None):
    """Padded-flat core.

    xflat: (B, C, Pf) — image zero-padded to (H+2, W+2), spatially flattened and
    lane-padded to Pf (multiple of 128), with zeros in the padding ring/tail.
    Returns the block output in the same layout (ring/tail zeroed), so stacked
    ResidualBlock_noBN calls can chain without re-doing pad/slice plumbing.
    """
    B, C, Pf = xflat.shape
    Hp, Wp = H + 2, W + 2
    Pp = Hp * Wp
    assert Pf % 128 == 0 and Pf >= Pp
    assert w1.shape == (C, C, 3, 3) and w2.shape == (C, C, 3, 3)
    assert b1.shape == (C,) and b2.shape == (C,)
    assert C % 16 == 0, "channels must be a multiple of 16 (bf16 sublane tiling)"

    # Batch blocking: pack Bb images along the matmul N axis when images are
    # small so N = Bb*Pf >= ~512 lanes per MXU pass; Bb must divide B.
    if batch_block is None:
        batch_block = min(B, max(1, pl.cdiv(512, Pf)))
    while B % batch_block:
        batch_block -= 1
    Bb = batch_block

    # Fused tap-major weights: Wf[c_out, (ky*3+kx)*C + c_in] = w[c_out, c_in, ky, kx]
    w1f = jnp.transpose(w1, (0, 2, 3, 1)).reshape(C, 9 * C).astype(jnp.bfloat16)
    w2f = jnp.transpose(w2, (0, 2, 3, 1)).reshape(C, 9 * C).astype(jnp.bfloat16)
    b1c = b1.reshape(C, 1).astype(jnp.float32)
    b2c = b2.reshape(C, 1).astype(jnp.float32)

    # Interior mask in padded-flat coordinates (tiny constant input; kept as an
    # explicit operand rather than in-kernel vector div/mod for robust lowering).
    q = jnp.arange(Pf)
    row, col = q // Wp, q % Wp
    mask = (((row >= 1) & (row <= H) & (col >= 1) & (col <= W) & (q < Pp))
            .astype(jnp.float32).reshape(1, Pf))

    flops = 2 * 2 * 9 * C * C * H * W * B                 # 2 convs, MAC = 2 flops
    bytes_accessed = 2 * B * C * Pf * 4 + 2 * 9 * C * C * 2 + 2 * C * 4 + 4 * Pf

    # Raise the scoped-VMEM limit (default ~32 MiB) only if the estimated
    # working set needs it (relevant for larger images on v6e).
    vmem_est = (4 * Bb * C * Pf * 4          # double-buffered in/out blocks (f32)
                + 9 * C * Bb * Pf * 2        # im2col scratch (bf16)
                + 4 * 9 * C * C * 2          # double-buffered fused weights
                + 4 * Bb * C * Pf * 4)       # live f32 temporaries (h1, y, slabs)
    vmem_limit = int(vmem_est * 1.25) if vmem_est > (32 << 20) else None

    kernel = functools.partial(_resblock_kernel, H=H, W=W, C=C, Bb=Bb)
    out_flat = pl.pallas_call(
        kernel,
        out_shape=jax.ShapeDtypeStruct((B, C, Pf), xflat.dtype),
        grid=(B // Bb,),
        in_specs=[
            pl.BlockSpec((Bb, C, Pf), lambda b: (b, 0, 0)),   # activations
            pl.BlockSpec((C, 9 * C), lambda b: (0, 0)),       # conv1 fused weights
            pl.BlockSpec((C, 1), lambda b: (0, 0)),           # conv1 bias
            pl.BlockSpec((C, 9 * C), lambda b: (0, 0)),       # conv2 fused weights
            pl.BlockSpec((C, 1), lambda b: (0, 0)),           # conv2 bias
            pl.BlockSpec((1, Pf), lambda b: (0, 0)),          # interior mask
        ],
        out_specs=pl.BlockSpec((Bb, C, Pf), lambda b: (b, 0, 0)),
        scratch_shapes=[pltpu.VMEM((9 * C, Bb * Pf), jnp.bfloat16)],
        compiler_params=pltpu.CompilerParams(
            dimension_semantics=("parallel",),
            vmem_limit_bytes=vmem_limit),
        cost_estimate=pl.CostEstimate(flops=flops, transcendentals=0,
                                      bytes_accessed=bytes_accessed),
    )(xflat, w1f, b1c, w2f, b2c, mask)
    return out_flat


def residual_block_nobn(x, w1, b1, w2, b2):
    """x: (B, C, H, W); w1, w2: (C, C, 3, 3); b1, b2: (C,) -> (B, C, H, W)."""
    B, C, H, W = x.shape
    Hp, Wp = H + 2, W + 2
    Pp = Hp * Wp
    Pf = ((Pp + 127) // 128) * 128                # lane-dense, multiple of 128

    # Layout plumbing (padded-flat, lane-dense). For stacks of residual blocks,
    # do this once and call residual_block_nobn_flat repeatedly instead.
    xp = jnp.pad(x, ((0, 0), (0, 0), (1, 1), (1, 1))).reshape(B, C, Pp)
    xp = jnp.pad(xp, ((0, 0), (0, 0), (0, Pf - Pp))).astype(jnp.float32)

    out_flat = residual_block_nobn_flat(xp, w1, b1, w2, b2, H=H, W=W)

    # Back to NCHW: drop the lane tail and the padding ring.
    out = out_flat[:, :, :Pp].reshape(B, C, Hp, Wp)[:, :, 1:-1, 1:-1]
    return out.astype(x.dtype)


def _resblock_ref(x, w1, b1, w2, b2):
    """Pure-JAX reference (same forward math) for a correctness check."""
    dn = lax.conv_dimension_numbers(x.shape, w1.shape, ('NCHW', 'OIHW', 'NCHW'))
    y = lax.conv_general_dilated(x, w1, (1, 1), 'SAME', dimension_numbers=dn,
                                 precision=lax.Precision.HIGHEST)
    y = jnp.maximum(y + b1[None, :, None, None], 0.0)
    y = lax.conv_general_dilated(y, w2, (1, 1), 'SAME', dimension_numbers=dn,
                                 precision=lax.Precision.HIGHEST)
    return x + y + b2[None, :, None, None]


if __name__ == "__main__":
    B, C, H, W = 2, 64, 16, 16                 # nf=64 is the module default
    key = jax.random.PRNGKey(0)
    kx, k1, k2, kb1, kb2 = jax.random.split(key, 5)

    x = jax.random.normal(kx, (B, C, H, W), dtype=jnp.float32)
    fan_in = C * 3 * 3
    scale = 0.1 * (2.0 / fan_in) ** 0.5        # kaiming_normal(fan_in) * 0.1
    w1 = scale * jax.random.normal(k1, (C, C, 3, 3), dtype=jnp.float32)
    w2 = scale * jax.random.normal(k2, (C, C, 3, 3), dtype=jnp.float32)
    # module init zeroes biases; use small nonzero ones to exercise the bias path
    b1 = 0.01 * jax.random.normal(kb1, (C,), dtype=jnp.float32)
    b2 = 0.01 * jax.random.normal(kb2, (C,), dtype=jnp.float32)

    out = jax.block_until_ready(residual_block_nobn(x, w1, b1, w2, b2))
    ref = _resblock_ref(x, w1, b1, w2, b2)

    assert out.shape == (B, C, H, W)
    max_err = jnp.max(jnp.abs(out - ref))
    assert jnp.allclose(out, ref, rtol=2e-3, atol=2e-3), f"mismatch, max err {max_err}"
    print("KERNEL_OK")
</pallas_src>

<mosaic_0001>
module attributes {stable_mosaic.version = 11 : i64} {
  func.func @_resblock_kernel(%arg0: i32, %arg1: memref<2x64x384xf32, #tpu.memory_space<vmem>>, %arg2: memref<64x576xbf16, #tpu.memory_space<vmem>>, %arg3: memref<64x1xf32, #tpu.memory_space<vmem>>, %arg4: memref<64x576xbf16, #tpu.memory_space<vmem>>, %arg5: memref<64x1xf32, #tpu.memory_space<vmem>>, %arg6: memref<1x384xf32, #tpu.memory_space<vmem>>, %arg7: memref<2x64x384xf32, #tpu.memory_space<vmem>>, %arg8: memref<576x768xbf16, #tpu.memory_space<vmem>>) attributes {dimension_semantics = [#tpu.dimension_semantics<parallel>], iteration_bounds = array<i64: 1>, scalar_prefetch = 0 : i64, scratch_operands = 1 : i64, tpu.core_type = #tpu.core_type<tc>, window_params = [{transform_indices = @transform_0, window_bounds = array<i64: 2, 64, 384>}, {pipeline_mode = #tpu.pipeline_mode<synchronous>, transform_indices = @transform_1, window_bounds = array<i64: 64, 576>}, {pipeline_mode = #tpu.pipeline_mode<synchronous>, transform_indices = @transform_2, window_bounds = array<i64: 64, 1>}, {pipeline_mode = #tpu.pipeline_mode<synchronous>, transform_indices = @transform_3, window_bounds = array<i64: 64, 576>}, {pipeline_mode = #tpu.pipeline_mode<synchronous>, transform_indices = @transform_4, window_bounds = array<i64: 64, 1>}, {pipeline_mode = #tpu.pipeline_mode<synchronous>, transform_indices = @transform_5, window_bounds = array<i64: 1, 384>}, {transform_indices = @transform_6, window_bounds = array<i64: 2, 64, 384>}]} {
    %c0 = arith.constant 0 : index
    %c0_0 = arith.constant 0 : index
    %0 = vector.load %arg6[%c0, %c0_0] : memref<1x384xf32, #tpu.memory_space<vmem>>, vector<1x384xf32>
    %c0_1 = arith.constant 0 : index
    %c0_2 = arith.constant 0 : index
    %c0_3 = arith.constant 0 : index
    %1 = vector.load %arg1[%c0_1, %c0_2, %c0_3] : memref<2x64x384xf32, #tpu.memory_space<vmem>>, vector<1x64x384xf32>
    %2 = vector.shape_cast %1 : vector<1x64x384xf32> to vector<64x384xf32>
    %c19_i32 = arith.constant 19 : i32
    %3 = tpu.dynamic_rotate %2 by %c19_i32 dim 1 : vector<64x384xf32>, i32 -> vector<64x384xf32>
    %4 = arith.truncf %3 : vector<64x384xf32> to vector<64x384xbf16>
    %c0_4 = arith.constant 0 : index
    %c0_5 = arith.constant 0 : index
    %5 = vector.load %arg8[%c0_4, %c0_5] : memref<576x768xbf16, #tpu.memory_space<vmem>>, vector<64x384xbf16>
    tpu.vector_store %arg8[%c0_4, %c0_5], %4 {strides = array<i32>} : memref<576x768xbf16, #tpu.memory_space<vmem>>, vector<64x384xbf16>,
    %c18_i32 = arith.constant 18 : i32
    %6 = tpu.dynamic_rotate %2 by %c18_i32 dim 1 : vector<64x384xf32>, i32 -> vector<64x384xf32>
    %7 = arith.truncf %6 : vector<64x384xf32> to vector<64x384xbf16>
    %c64 = arith.constant 64 : index
    %c0_6 = arith.constant 0 : index
    %8 = vector.load %arg8[%c64, %c0_6] : memref<576x768xbf16, #tpu.memory_space<vmem>>, vector<64x384xbf16>
    tpu.vector_store %arg8[%c64, %c0_6], %7 {strides = array<i32>} : memref<576x768xbf16, #tpu.memory_space<vmem>>, vector<64x384xbf16>,
    %c17_i32 = arith.constant 17 : i32
    %9 = tpu.dynamic_rotate %2 by %c17_i32 dim 1 : vector<64x384xf32>, i32 -> vector<64x384xf32>
    %10 = arith.truncf %9 : vector<64x384xf32> to vector<64x384xbf16>
    %c128 = arith.constant 128 : index
    %c0_7 = arith.constant 0 : index
    %11 = vector.load %arg8[%c128, %c0_7] : memref<576x768xbf16, #tpu.memory_space<vmem>>, vector<64x384xbf16>
    tpu.vector_store %arg8[%c128, %c0_7], %10 {strides = array<i32>} : memref<576x768xbf16, #tpu.memory_space<vmem>>, vector<64x384xbf16>,
    %c1_i32 = arith.constant 1 : i32
    %12 = tpu.dynamic_rotate %2 by %c1_i32 dim 1 : vector<64x384xf32>, i32 -> vector<64x384xf32>
    %13 = arith.truncf %12 : vector<64x384xf32> to vector<64x384xbf16>
    %c192 = arith.constant 192 : index
    %c0_8 = arith.constant 0 : index
    %14 = vector.load %arg8[%c192, %c0_8] : memref<576x768xbf16, #tpu.memory_space<vmem>>, vector<64x384xbf16>
    tpu.vector_store %arg8[%c192, %c0_8], %13 {strides = array<i32>} : memref<576x768xbf16, #tpu.memory_space<vmem>>, vector<64x384xbf16>,
    %15 = arith.truncf %2 : vector<64x384xf32> to vector<64x384xbf16>
    %c256 = arith.constant 256 : index
    %c0_9 = arith.constant 0 : index
    %16 = vector.load %arg8[%c256, %c0_9] : memref<576x768xbf16, #tpu.memory_space<vmem>>, vector<64x384xbf16>
    tpu.vector_store %arg8[%c256, %c0_9], %15 {strides = array<i32>} : memref<576x768xbf16, #tpu.memory_space<vmem>>, vector<64x384xbf16>,
    %c383_i32 = arith.constant 383 : i32
    %17 = tpu.dynamic_rotate %2 by %c383_i32 dim 1 : vector<64x384xf32>, i32 -> vector<64x384xf32>
    %18 = arith.truncf %17 : vector<64x384xf32> to vector<64x384xbf16>
    %c320 = arith.constant 320 : index
    %c0_10 = arith.constant 0 : index
    %19 = vector.load %arg8[%c320, %c0_10] : memref<576x768xbf16, #tpu.memory_space<vmem>>, vector<64x384xbf16>
    tpu.vector_store %arg8[%c320, %c0_10], %18 {strides = array<i32>} : memref<576x768xbf16, #tpu.memory_space<vmem>>, vector<64x384xbf16>,
    %c367_i32 = arith.constant 367 : i32
    %20 = tpu.dynamic_rotate %2 by %c367_i32 dim 1 : vector<64x384xf32>, i32 -> vector<64x384xf32>
    %21 = arith.truncf %20 : vector<64x384xf32> to vector<64x384xbf16>
    %c384 = arith.constant 384 : index
    %c0_11 = arith.constant 0 : index
    %22 = vector.load %arg8[%c384, %c0_11] : memref<576x768xbf16, #tpu.memory_space<vmem>>, vector<64x384xbf16>
    tpu.vector_store %arg8[%c384, %c0_11], %21 {strides = array<i32>} : memref<576x768xbf16, #tpu.memory_space<vmem>>, vector<64x384xbf16>,
    %c366_i32 = arith.constant 366 : i32
    %23 = tpu.dynamic_rotate %2 by %c366_i32 dim 1 : vector<64x384xf32>, i32 -> vector<64x384xf32>
    %24 = arith.truncf %23 : vector<64x384xf32> to vector<64x384xbf16>
    %c448 = arith.constant 448 : index
    %c0_12 = arith.constant 0 : index
    %25 = vector.load %arg8[%c448, %c0_12] : memref<576x768xbf16, #tpu.memory_space<vmem>>, vector<64x384xbf16>
    tpu.vector_store %arg8[%c448, %c0_12], %24 {strides = array<i32>} : memref<576x768xbf16, #tpu.memory_space<vmem>>, vector<64x384xbf16>,
    %c365_i32 = arith.constant 365 : i32
    %26 = tpu.dynamic_rotate %2 by %c365_i32 dim 1 : vector<64x384xf32>, i32 -> vector<64x384xf32>
    %27 = arith.truncf %26 : vector<64x384xf32> to vector<64x384xbf16>
    %c512 = arith.constant 512 : index
    %c0_13 = arith.constant 0 : index
    %28 = vector.load %arg8[%c512, %c0_13] : memref<576x768xbf16, #tpu.memory_space<vmem>>, vector<64x384xbf16>
    tpu.vector_store %arg8[%c512, %c0_13], %27 {strides = array<i32>} : memref<576x768xbf16, #tpu.memory_space<vmem>>, vector<64x384xbf16>,
    %c1 = arith.constant 1 : index
    %c0_14 = arith.constant 0 : index
    %c0_15 = arith.constant 0 : index
    %29 = vector.load %arg1[%c1, %c0_14, %c0_15] : memref<2x64x384xf32, #tpu.memory_space<vmem>>, vector<1x64x384xf32>
    %30 = vector.shape_cast %29 : vector<1x64x384xf32> to vector<64x384xf32>
    %c19_i32_16 = arith.constant 19 : i32
    %31 = tpu.dynamic_rotate %30 by %c19_i32_16 dim 1 : vector<64x384xf32>, i32 -> vector<64x384xf32>
    %32 = arith.truncf %31 : vector<64x384xf32> to vector<64x384xbf16>
    %c0_17 = arith.constant 0 : index
    %c384_18 = arith.constant 384 : index
    %33 = vector.load %arg8[%c0_17, %c384_18] : memref<576x768xbf16, #tpu.memory_space<vmem>>, vector<64x384xbf16>
    tpu.vector_store %arg8[%c0_17, %c384_18], %32 {strides = array<i32>} : memref<576x768xbf16, #tpu.memory_space<vmem>>, vector<64x384xbf16>,
    %c18_i32_19 = arith.constant 18 : i32
    %34 = tpu.dynamic_rotate %30 by %c18_i32_19 dim 1 : vector<64x384xf32>, i32 -> vector<64x384xf32>
    %35 = arith.truncf %34 : vector<64x384xf32> to vector<64x384xbf16>
    %c64_20 = arith.constant 64 : index
    %c384_21 = arith.constant 384 : index
    %36 = vector.load %arg8[%c64_20, %c384_21] : memref<576x768xbf16, #tpu.memory_space<vmem>>, vector<64x384xbf16>
    tpu.vector_store %arg8[%c64_20, %c384_21], %35 {strides = array<i32>} : memref<576x768xbf16, #tpu.memory_space<vmem>>, vector<64x384xbf16>,
    %c17_i32_22 = arith.constant 17 : i32
    %37 = tpu.dynamic_rotate %30 by %c17_i32_22 dim 1 : vector<64x384xf32>, i32 -> vector<64x384xf32>
    %38 = arith.truncf %37 : vector<64x384xf32> to vector<64x384xbf16>
    %c128_23 = arith.constant 128 : index
    %c384_24 = arith.constant 384 : index
    %39 = vector.load %arg8[%c128_23, %c384_24] : memref<576x768xbf16, #tpu.memory_space<vmem>>, vector<64x384xbf16>
    tpu.vector_store %arg8[%c128_23, %c384_24], %38 {strides = array<i32>} : memref<576x768xbf16, #tpu.memory_space<vmem>>, vector<64x384xbf16>,
    %c1_i32_25 = arith.constant 1 : i32
    %40 = tpu.dynamic_rotate %30 by %c1_i32_25 dim 1 : vector<64x384xf32>, i32 -> vector<64x384xf32>
    %41 = arith.truncf %40 : vector<64x384xf32> to vector<64x384xbf16>
    %c192_26 = arith.constant 192 : index
    %c384_27 = arith.constant 384 : index
    %42 = vector.load %arg8[%c192_26, %c384_27] : memref<576x768xbf16, #tpu.memory_space<vmem>>, vector<64x384xbf16>
    tpu.vector_store %arg8[%c192_26, %c384_27], %41 {strides = array<i32>} : memref<576x768xbf16, #tpu.memory_space<vmem>>, vector<64x384xbf16>,
    %43 = arith.truncf %30 : vector<64x384xf32> to vector<64x384xbf16>
    %c256_28 = arith.constant 256 : index
    %c384_29 = arith.constant 384 : index
    %44 = vector.load %arg8[%c256_28, %c384_29] : memref<576x768xbf16, #tpu.memory_space<vmem>>, vector<64x384xbf16>
    tpu.vector_store %arg8[%c256_28, %c384_29], %43 {strides = array<i32>} : memref<576x768xbf16, #tpu.memory_space<vmem>>, vector<64x384xbf16>,
    %c383_i32_30 = arith.constant 383 : i32
    %45 = tpu.dynamic_rotate %30 by %c383_i32_30 dim 1 : vector<64x384xf32>, i32 -> vector<64x384xf32>
    %46 = arith.truncf %45 : vector<64x384xf32> to vector<64x384xbf16>
    %c320_31 = arith.constant 320 : index
    %c384_32 = arith.constant 384 : index
    %47 = vector.load %arg8[%c320_31, %c384_32] : memref<576x768xbf16, #tpu.memory_space<vmem>>, vector<64x384xbf16>
    tpu.vector_store %arg8[%c320_31, %c384_32], %46 {strides = array<i32>} : memref<576x768xbf16, #tpu.memory_space<vmem>>, vector<64x384xbf16>,
    %c367_i32_33 = arith.constant 367 : i32
    %48 = tpu.dynamic_rotate %30 by %c367_i32_33 dim 1 : vector<64x384xf32>, i32 -> vector<64x384xf32>
    %49 = arith.truncf %48 : vector<64x384xf32> to vector<64x384xbf16>
    %c384_34 = arith.constant 384 : index
    %c384_35 = arith.constant 384 : index
    %50 = vector.load %arg8[%c384_34, %c384_35] : memref<576x768xbf16, #tpu.memory_space<vmem>>, vector<64x384xbf16>
    tpu.vector_store %arg8[%c384_34, %c384_35], %49 {strides = array<i32>} : memref<576x768xbf16, #tpu.memory_space<vmem>>, vector<64x384xbf16>,
    %c366_i32_36 = arith.constant 366 : i32
    %51 = tpu.dynamic_rotate %30 by %c366_i32_36 dim 1 : vector<64x384xf32>, i32 -> vector<64x384xf32>
    %52 = arith.truncf %51 : vector<64x384xf32> to vector<64x384xbf16>
    %c448_37 = arith.constant 448 : index
    %c384_38 = arith.constant 384 : index
    %53 = vector.load %arg8[%c448_37, %c384_38] : memref<576x768xbf16, #tpu.memory_space<vmem>>, vector<64x384xbf16>
    tpu.vector_store %arg8[%c448_37, %c384_38], %52 {strides = array<i32>} : memref<576x768xbf16, #tpu.memory_space<vmem>>, vector<64x384xbf16>,
    %c365_i32_39 = arith.constant 365 : i32
    %54 = tpu.dynamic_rotate %30 by %c365_i32_39 dim 1 : vector<64x384xf32>, i32 -> vector<64x384xf32>
    %55 = arith.truncf %54 : vector<64x384xf32> to vector<64x384xbf16>
    %c512_40 = arith.constant 512 : index
    %c384_41 = arith.constant 384 : index
    %56 = vector.load %arg8[%c512_40, %c384_41] : memref<576x768xbf16, #tpu.memory_space<vmem>>, vector<64x384xbf16>
    tpu.vector_store %arg8[%c512_40, %c384_41], %55 {strides = array<i32>} : memref<576x768xbf16, #tpu.memory_space<vmem>>, vector<64x384xbf16>,
    %c0_42 = arith.constant 0 : index
    %c0_43 = arith.constant 0 : index
    %57 = vector.load %arg2[%c0_42, %c0_43] : memref<64x576xbf16, #tpu.memory_space<vmem>>, vector<64x576xbf16>
    %c0_44 = arith.constant 0 : index
    %c0_45 = arith.constant 0 : index
    %58 = vector.load %arg8[%c0_44, %c0_45] : memref<576x768xbf16, #tpu.memory_space<vmem>>, vector<576x768xbf16>
    %cst = arith.constant dense<0.000000e+00> : vector<64x768xf32>
    %59 = tpu.matmul %57, %58, %cst {dimension_numbers = #tpu.dot_dimension_numbers<[1], [0], [0], [1], [0, 0, 1, 1], [], []>} : vector<64x576xbf16>, vector<576x768xbf16>, vector<64x768xf32> -> vector<64x768xf32>
    %c0_46 = arith.constant 0 : index
    %c0_47 = arith.constant 0 : index
    %60 = vector.load %arg3[%c0_46, %c0_47] : memref<64x1xf32, #tpu.memory_space<vmem>>, vector<64x1xf32>
    %61 = vector.broadcast %60 : vector<64x1xf32> to vector<64x768xf32>
    %62 = arith.addf %59, %61 : vector<64x768xf32>
    %cst_48 = arith.constant 0.000000e+00 : f32
    %63 = vector.broadcast %cst_48 : f32 to vector<64x768xf32>
    %64 = arith.maximumf %62, %63 : vector<64x768xf32>
    %65 = vector.extract_strided_slice %64 {offsets = [0, 0], sizes = [64, 384], strides = [1, 1]} : vector<64x768xf32> to vector<64x384xf32>
    %66 = vector.broadcast %0 : vector<1x384xf32> to vector<64x384xf32>
    %67 = arith.mulf %65, %66 : vector<64x384xf32>
    %c19_i32_49 = arith.constant 19 : i32
    %68 = tpu.dynamic_rotate %67 by %c19_i32_49 dim 1 : vector<64x384xf32>, i32 -> vector<64x384xf32>
    %69 = arith.truncf %68 : vector<64x384xf32> to vector<64x384xbf16>
    %c0_50 = arith.constant 0 : index
    %c0_51 = arith.constant 0 : index
    %70 = vector.load %arg8[%c0_50, %c0_51] : memref<576x768xbf16, #tpu.memory_space<vmem>>, vector<64x384xbf16>
    tpu.vector_store %arg8[%c0_50, %c0_51], %69 {strides = array<i32>} : memref<576x768xbf16, #tpu.memory_space<vmem>>, vector<64x384xbf16>,
    %c18_i32_52 = arith.constant 18 : i32
    %71 = tpu.dynamic_rotate %67 by %c18_i32_52 dim 1 : vector<64x384xf32>, i32 -> vector<64x384xf32>
    %72 = arith.truncf %71 : vector<64x384xf32> to vector<64x384xbf16>
    %c64_53 = arith.constant 64 : index
    %c0_54 = arith.constant 0 : index
    %73 = vector.load %arg8[%c64_53, %c0_54] : memref<576x768xbf16, #tpu.memory_space<vmem>>, vector<64x384xbf16>
    tpu.vector_store %arg8[%c64_53, %c0_54], %72 {strides = array<i32>} : memref<576x768xbf16, #tpu.memory_space<vmem>>, vector<64x384xbf16>,
    %c17_i32_55 = arith.constant 17 : i32
    %74 = tpu.dynamic_rotate %67 by %c17_i32_55 dim 1 : vector<64x384xf32>, i32 -> vector<64x384xf32>
    %75 = arith.truncf %74 : vector<64x384xf32> to vector<64x384xbf16>
    %c128_56 = arith.constant 128 : index
    %c0_57 = arith.constant 0 : index
    %76 = vector.load %arg8[%c128_56, %c0_57] : memref<576x768xbf16, #tpu.memory_space<vmem>>, vector<64x384xbf16>
    tpu.vector_store %arg8[%c128_56, %c0_57], %75 {strides = array<i32>} : memref<576x768xbf16, #tpu.memory_space<vmem>>, vector<64x384xbf16>,
    %c1_i32_58 = arith.constant 1 : i32
    %77 = tpu.dynamic_rotate %67 by %c1_i32_58 dim 1 : vector<64x384xf32>, i32 -> vector<64x384xf32>
    %78 = arith.truncf %77 : vector<64x384xf32> to vector<64x384xbf16>
    %c192_59 = arith.constant 192 : index
    %c0_60 = arith.constant 0 : index
    %79 = vector.load %arg8[%c192_59, %c0_60] : memref<576x768xbf16, #tpu.memory_space<vmem>>, vector<64x384xbf16>
    tpu.vector_store %arg8[%c192_59, %c0_60], %78 {strides = array<i32>} : memref<576x768xbf16, #tpu.memory_space<vmem>>, vector<64x384xbf16>,
    %80 = arith.truncf %67 : vector<64x384xf32> to vector<64x384xbf16>
    %c256_61 = arith.constant 256 : index
    %c0_62 = arith.constant 0 : index
    %81 = vector.load %arg8[%c256_61, %c0_62] : memref<576x768xbf16, #tpu.memory_space<vmem>>, vector<64x384xbf16>
    tpu.vector_store %arg8[%c256_61, %c0_62], %80 {strides = array<i32>} : memref<576x768xbf16, #tpu.memory_space<vmem>>, vector<64x384xbf16>,
    %c383_i32_63 = arith.constant 383 : i32
    %82 = tpu.dynamic_rotate %67 by %c383_i32_63 dim 1 : vector<64x384xf32>, i32 -> vector<64x384xf32>
    %83 = arith.truncf %82 : vector<64x384xf32> to vector<64x384xbf16>
    %c320_64 = arith.constant 320 : index
    %c0_65 = arith.constant 0 : index
    %84 = vector.load %arg8[%c320_64, %c0_65] : memref<576x768xbf16, #tpu.memory_space<vmem>>, vector<64x384xbf16>
    tpu.vector_store %arg8[%c320_64, %c0_65], %83 {strides = array<i32>} : memref<576x768xbf16, #tpu.memory_space<vmem>>, vector<64x384xbf16>,
    %c367_i32_66 = arith.constant 367 : i32
    %85 = tpu.dynamic_rotate %67 by %c367_i32_66 dim 1 : vector<64x384xf32>, i32 -> vector<64x384xf32>
    %86 = arith.truncf %85 : vector<64x384xf32> to vector<64x384xbf16>
    %c384_67 = arith.constant 384 : index
    %c0_68 = arith.constant 0 : index
    %87 = vector.load %arg8[%c384_67, %c0_68] : memref<576x768xbf16, #tpu.memory_space<vmem>>, vector<64x384xbf16>
    tpu.vector_store %arg8[%c384_67, %c0_68], %86 {strides = array<i32>} : memref<576x768xbf16, #tpu.memory_space<vmem>>, vector<64x384xbf16>,
    %c366_i32_69 = arith.constant 366 : i32
    %88 = tpu.dynamic_rotate %67 by %c366_i32_69 dim 1 : vector<64x384xf32>, i32 -> vector<64x384xf32>
    %89 = arith.truncf %88 : vector<64x384xf32> to vector<64x384xbf16>
    %c448_70 = arith.constant 448 : index
    %c0_71 = arith.constant 0 : index
    %90 = vector.load %arg8[%c448_70, %c0_71] : memref<576x768xbf16, #tpu.memory_space<vmem>>, vector<64x384xbf16>
    tpu.vector_store %arg8[%c448_70, %c0_71], %89 {strides = array<i32>} : memref<576x768xbf16, #tpu.memory_space<vmem>>, vector<64x384xbf16>,
    %c365_i32_72 = arith.constant 365 : i32
    %91 = tpu.dynamic_rotate %67 by %c365_i32_72 dim 1 : vector<64x384xf32>, i32 -> vector<64x384xf32>
    %92 = arith.truncf %91 : vector<64x384xf32> to vector<64x384xbf16>
    %c512_73 = arith.constant 512 : index
    %c0_74 = arith.constant 0 : index
    %93 = vector.load %arg8[%c512_73, %c0_74] : memref<576x768xbf16, #tpu.memory_space<vmem>>, vector<64x384xbf16>
    tpu.vector_store %arg8[%c512_73, %c0_74], %92 {strides = array<i32>} : memref<576x768xbf16, #tpu.memory_space<vmem>>, vector<64x384xbf16>,
    %94 = vector.extract_strided_slice %64 {offsets = [0, 384], sizes = [64, 384], strides = [1, 1]} : vector<64x768xf32> to vector<64x384xf32>
    %95 = vector.broadcast %0 : vector<1x384xf32> to vector<64x384xf32>
    %96 = arith.mulf %94, %95 : vector<64x384xf32>
    %c19_i32_75 = arith.constant 19 : i32
    %97 = tpu.dynamic_rotate %96 by %c19_i32_75 dim 1 : vector<64x384xf32>, i32 -> vector<64x384xf32>
    %98 = arith.truncf %97 : vector<64x384xf32> to vector<64x384xbf16>
    %c0_76 = arith.constant 0 : index
    %c384_77 = arith.constant 384 : index
    %99 = vector.load %arg8[%c0_76, %c384_77] : memref<576x768xbf16, #tpu.memory_space<vmem>>, vector<64x384xbf16>
    tpu.vector_store %arg8[%c0_76, %c384_77], %98 {strides = array<i32>} : memref<576x768xbf16, #tpu.memory_space<vmem>>, vector<64x384xbf16>,
    %c18_i32_78 = arith.constant 18 : i32
    %100 = tpu.dynamic_rotate %96 by %c18_i32_78 dim 1 : vector<64x384xf32>, i32 -> vector<64x384xf32>
    %101 = arith.truncf %100 : vector<64x384xf32> to vector<64x384xbf16>
    %c64_79 = arith.constant 64 : index
    %c384_80 = arith.constant 384 : index
    %102 = vector.load %arg8[%c64_79, %c384_80] : memref<576x768xbf16, #tpu.memory_space<vmem>>, vector<64x384xbf16>
    tpu.vector_store %arg8[%c64_79, %c384_80], %101 {strides = array<i32>} : memref<576x768xbf16, #tpu.memory_space<vmem>>, vector<64x384xbf16>,
    %c17_i32_81 = arith.constant 17 : i32
    %103 = tpu.dynamic_rotate %96 by %c17_i32_81 dim 1 : vector<64x384xf32>, i32 -> vector<64x384xf32>
    %104 = arith.truncf %103 : vector<64x384xf32> to vector<64x384xbf16>
    %c128_82 = arith.constant 128 : index
    %c384_83 = arith.constant 384 : index
    %105 = vector.load %arg8[%c128_82, %c384_83] : memref<576x768xbf16, #tpu.memory_space<vmem>>, vector<64x384xbf16>
    tpu.vector_store %arg8[%c128_82, %c384_83], %104 {strides = array<i32>} : memref<576x768xbf16, #tpu.memory_space<vmem>>, vector<64x384xbf16>,
    %c1_i32_84 = arith.constant 1 : i32
    %106 = tpu.dynamic_rotate %96 by %c1_i32_84 dim 1 : vector<64x384xf32>, i32 -> vector<64x384xf32>
    %107 = arith.truncf %106 : vector<64x384xf32> to vector<64x384xbf16>
    %c192_85 = arith.constant 192 : index
    %c384_86 = arith.constant 384 : index
    %108 = vector.load %arg8[%c192_85, %c384_86] : memref<576x768xbf16, #tpu.memory_space<vmem>>, vector<64x384xbf16>
    tpu.vector_store %arg8[%c192_85, %c384_86], %107 {strides = array<i32>} : memref<576x768xbf16, #tpu.memory_space<vmem>>, vector<64x384xbf16>,
    %109 = arith.truncf %96 : vector<64x384xf32> to vector<64x384xbf16>
    %c256_87 = arith.constant 256 : index
    %c384_88 = arith.constant 384 : index
    %110 = vector.load %arg8[%c256_87, %c384_88] : memref<576x768xbf16, #tpu.memory_space<vmem>>, vector<64x384xbf16>
    tpu.vector_store %arg8[%c256_87, %c384_88], %109 {strides = array<i32>} : memref<576x768xbf16, #tpu.memory_space<vmem>>, vector<64x384xbf16>,
    %c383_i32_89 = arith.constant 383 : i32
    %111 = tpu.dynamic_rotate %96 by %c383_i32_89 dim 1 : vector<64x384xf32>, i32 -> vector<64x384xf32>
    %112 = arith.truncf %111 : vector<64x384xf32> to vector<64x384xbf16>
    %c320_90 = arith.constant 320 : index
    %c384_91 = arith.constant 384 : index
    %113 = vector.load %arg8[%c320_90, %c384_91] : memref<576x768xbf16, #tpu.memory_space<vmem>>, vector<64x384xbf16>
    tpu.vector_store %arg8[%c320_90, %c384_91], %112 {strides = array<i32>} : memref<576x768xbf16, #tpu.memory_space<vmem>>, vector<64x384xbf16>,
    %c367_i32_92 = arith.constant 367 : i32
    %114 = tpu.dynamic_rotate %96 by %c367_i32_92 dim 1 : vector<64x384xf32>, i32 -> vector<64x384xf32>
    %115 = arith.truncf %114 : vector<64x384xf32> to vector<64x384xbf16>
    %c384_93 = arith.constant 384 : index
    %c384_94 = arith.constant 384 : index
    %116 = vector.load %arg8[%c384_93, %c384_94] : memref<576x768xbf16, #tpu.memory_space<vmem>>, vector<64x384xbf16>
    tpu.vector_store %arg8[%c384_93, %c384_94], %115 {strides = array<i32>} : memref<576x768xbf16, #tpu.memory_space<vmem>>, vector<64x384xbf16>,
    %c366_i32_95 = arith.constant 366 : i32
    %117 = tpu.dynamic_rotate %96 by %c366_i32_95 dim 1 : vector<64x384xf32>, i32 -> vector<64x384xf32>
    %118 = arith.truncf %117 : vector<64x384xf32> to vector<64x384xbf16>
    %c448_96 = arith.constant 448 : index
    %c384_97 = arith.constant 384 : index
    %119 = vector.load %arg8[%c448_96, %c384_97] : memref<576x768xbf16, #tpu.memory_space<vmem>>, vector<64x384xbf16>
    tpu.vector_store %arg8[%c448_96, %c384_97], %118 {strides = array<i32>} : memref<576x768xbf16, #tpu.memory_space<vmem>>, vector<64x384xbf16>,
    %c365_i32_98 = arith.constant 365 : i32
    %120 = tpu.dynamic_rotate %96 by %c365_i32_98 dim 1 : vector<64x384xf32>, i32 -> vector<64x384xf32>
    %121 = arith.truncf %120 : vector<64x384xf32> to vector<64x384xbf16>
    %c512_99 = arith.constant 512 : index
    %c384_100 = arith.constant 384 : index
    %122 = vector.load %arg8[%c512_99, %c384_100] : memref<576x768xbf16, #tpu.memory_space<vmem>>, vector<64x384xbf16>
    tpu.vector_store %arg8[%c512_99, %c384_100], %121 {strides = array<i32>} : memref<576x768xbf16, #tpu.memory_space<vmem>>, vector<64x384xbf16>,
    %c0_101 = arith.constant 0 : index
    %c0_102 = arith.constant 0 : index
    %123 = vector.load %arg4[%c0_101, %c0_102] : memref<64x576xbf16, #tpu.memory_space<vmem>>, vector<64x576xbf16>
    %c0_103 = arith.constant 0 : index
    %c0_104 = arith.constant 0 : index
    %124 = vector.load %arg8[%c0_103, %c0_104] : memref<576x768xbf16, #tpu.memory_space<vmem>>, vector<576x768xbf16>
    %cst_105 = arith.constant dense<0.000000e+00> : vector<64x768xf32>
    %125 = tpu.matmul %123, %124, %cst_105 {dimension_numbers = #tpu.dot_dimension_numbers<[1], [0], [0], [1], [0, 0, 1, 1], [], []>} : vector<64x576xbf16>, vector<576x768xbf16>, vector<64x768xf32> -> vector<64x768xf32>
    %c0_106 = arith.constant 0 : index
    %c0_107 = arith.constant 0 : index
    %126 = vector.load %arg5[%c0_106, %c0_107] : memref<64x1xf32, #tpu.memory_space<vmem>>, vector<64x1xf32>
    %127 = vector.broadcast %126 : vector<64x1xf32> to vector<64x768xf32>
    %128 = arith.addf %125, %127 : vector<64x768xf32>
    %c0_108 = arith.constant 0 : index
    %c0_109 = arith.constant 0 : index
    %c0_110 = arith.constant 0 : index
    %129 = vector.load %arg1[%c0_108, %c0_109, %c0_110] : memref<2x64x384xf32, #tpu.memory_space<vmem>>, vector<1x64x384xf32>
    %130 = vector.shape_cast %129 : vector<1x64x384xf32> to vector<64x384xf32>
    %131 = vector.extract_strided_slice %128 {offsets = [0, 0], sizes = [64, 384], strides = [1, 1]} : vector<64x768xf32> to vector<64x384xf32>
    %132 = arith.addf %130, %131 : vector<64x384xf32>
    %133 = vector.broadcast %0 : vector<1x384xf32> to vector<64x384xf32>
    %134 = arith.mulf %132, %133 : vector<64x384xf32>
    %c0_111 = arith.constant 0 : index
    %c0_112 = arith.constant 0 : index
    %c0_113 = arith.constant 0 : index
    %135 = vector.load %arg7[%c0_111, %c0_112, %c0_113] : memref<2x64x384xf32, #tpu.memory_space<vmem>>, vector<1x64x384xf32>
    %136 = vector.shape_cast %135 : vector<1x64x384xf32> to vector<64x384xf32>
    %137 = vector.shape_cast %134 : vector<64x384xf32> to vector<1x64x384xf32>
    tpu.vector_store %arg7[%c0_111, %c0_112, %c0_113], %137 {strides = array<i32>} : memref<2x64x384xf32, #tpu.memory_space<vmem>>, vector<1x64x384xf32>,
    %c1_114 = arith.constant 1 : index
    %c0_115 = arith.constant 0 : index
    %c0_116 = arith.constant 0 : index
    %138 = vector.load %arg1[%c1_114, %c0_115, %c0_116] : memref<2x64x384xf32, #tpu.memory_space<vmem>>, vector<1x64x384xf32>
    %139 = vector.shape_cast %138 : vector<1x64x384xf32> to vector<64x384xf32>
    %140 = vector.extract_strided_slice %128 {offsets = [0, 384], sizes = [64, 384], strides = [1, 1]} : vector<64x768xf32> to vector<64x384xf32>
    %141 = arith.addf %139, %140 : vector<64x384xf32>
    %142 = vector.broadcast %0 : vector<1x384xf32> to vector<64x384xf32>
    %143 = arith.mulf %141, %142 : vector<64x384xf32>
    %c1_117 = arith.constant 1 : index
    %c0_118 = arith.constant 0 : index
    %c0_119 = arith.constant 0 : index
    %144 = vector.load %arg7[%c1_117, %c0_118, %c0_119] : memref<2x64x384xf32, #tpu.memory_space<vmem>>, vector<1x64x384xf32>
    %145 = vector.shape_cast %144 : vector<1x64x384xf32> to vector<64x384xf32>
    %146 = vector.shape_cast %143 : vector<64x384xf32> to vector<1x64x384xf32>
    tpu.vector_store %arg7[%c1_117, %c0_118, %c0_119], %146 {strides = array<i32>} : memref<2x64x384xf32, #tpu.memory_space<vmem>>, vector<1x64x384xf32>,
    return
  }
  func.func @transform_0(%arg0: i32) -> (i32, i32, i32) {
    %c0_i32 = arith.constant 0 : i32
    %c0_i32_0 = arith.constant 0 : i32
    %c0_i32_1 = arith.constant 0 : i32
    return %arg0, %c0_i32, %c0_i32_0 : i32, i32, i32
  }
  func.func @transform_1(%arg0: i32) -> (i32, i32) {
    %c0_i32 = arith.constant 0 : i32
    %c0_i32_0 = arith.constant 0 : i32
    %c0_i32_1 = arith.constant 0 : i32
    return %c0_i32, %c0_i32_0 : i32, i32
  }
  func.func @transform_2(%arg0: i32) -> (i32, i32) {
    %c0_i32 = arith.constant 0 : i32
    %c0_i32_0 = arith.constant 0 : i32
    %c0_i32_1 = arith.constant 0 : i32
    return %c0_i32, %c0_i32_0 : i32, i32
  }
  func.func @transform_3(%arg0: i32) -> (i32, i32) {
    %c0_i32 = arith.constant 0 : i32
    %c0_i32_0 = arith.constant 0 : i32
    %c0_i32_1 = arith.constant 0 : i32
    return %c0_i32, %c0_i32_0 : i32, i32
  }
  func.func @transform_4(%arg0: i32) -> (i32, i32) {
    %c0_i32 = arith.constant 0 : i32
    %c0_i32_0 = arith.constant 0 : i32
    %c0_i32_1 = arith.constant 0 : i32
    return %c0_i32, %c0_i32_0 : i32, i32
  }
  func.func @transform_5(%arg0: i32) -> (i32, i32) {
    %c0_i32 = arith.constant 0 : i32
    %c0_i32_0 = arith.constant 0 : i32
    %c0_i32_1 = arith.constant 0 : i32
    return %c0_i32, %c0_i32_0 : i32, i32
  }
  func.func @transform_6(%arg0: i32) -> (i32, i32, i32) {
    %c0_i32 = arith.constant 0 : i32
    %c0_i32_0 = arith.constant 0 : i32
    %c0_i32_1 = arith.constant 0 : i32
    return %arg0, %c0_i32, %c0_i32_0 : i32, i32, i32
  }
}

</mosaic_0001>

<llo_original>
// kernel: tpu_custom_call.1
$region0: #{tpu_custom_call.1}
  #allocation0 [shape = 'u32[]', space=smem, size = 0x4, offset = 0x4, fixed_abs, tag = 'smem constant byte address 0x4 - core index']
  #allocation1 [shape = 'u32[144,128]{1,0:T(1,128)}', space=vmem, size = 0x12000, scoped, tag = 'internal scratch']
  #allocation2 [shape = 'bf16[576,768]{1,0:T(8,128)(2,1)}', space=vmem, size = 0xd8000, scoped, tag = 'scratch operand']
  %s0 = inlined_call_operand.hbm [shape: f32[2,64,384], index: 0, kind: input, shape index: {}]
  %s1 = inlined_call_operand.hbm [shape: bf16[64,576], index: 1, kind: input, shape index: {}]
  %s2 = inlined_call_operand.vmem [shape: f32[64,1], index: 2, kind: input, shape index: {}]
  %s3 = inlined_call_operand.hbm [shape: bf16[64,576], index: 3, kind: input, shape index: {}]
  %s4 = inlined_call_operand.vmem [shape: f32[64,1], index: 4, kind: input, shape index: {}]
  %s5 = inlined_call_operand.vmem [shape: f32[1,384], index: 5, kind: input, shape index: {}]
  %s6 = inlined_call_operand.hbm [shape: f32[2,64,384], index: 6, kind: output, shape index: {}]
  %s7 = sld [smem:[#allocation0]]
  $region46: #{tpu_custom_call.1} parent=0
    _
  %s9 = ssub.s32 1, %s7
  %s10 = scalar_select 0, %s9, %s7
  $region1: #{tpu_custom_call.1} parent=0
    #allocation3 [shape = 'u8[196608]{0}', space=vmem, size = 0x30000, scoped, tag = 'input window, operand 0, single buffered']
    #allocation4 [shape = 's32[1]{0}', space=sflag, size = 0x4, scoped, tag = 'scoped memory for tpu_custom_call.1']
    #allocation5 [shape = 's32[1]{0}', space=sflag, size = 0x4, scoped, tag = 'scoped memory for tpu_custom_call.1']
    #allocation6 [shape = 'u8[81920]{0}', space=vmem, size = 0x14000, scoped, tag = 'input window, operand 1, single buffered']
    #allocation7 [shape = 's32[1]{0}', space=sflag, size = 0x4, scoped, tag = 'scoped memory for tpu_custom_call.1']
    #allocation8 [shape = 'u8[81920]{0}', space=vmem, size = 0x14000, scoped, tag = 'input window, operand 3, single buffered']
    #allocation9 [shape = 'u8[196608]{0}', space=vmem, size = 0x30000, scoped, tag = 'output window, operand 0, single buffered']
    %11 = vsyncpa [#allocation4], 0
    %12 = vsyncpa [#allocation7], 0
    %13 = vsyncpa [#allocation5], 0
    // Predicated region
    $region2: #{tpu_custom_call.1} parent=1 // pred_check
      _
    $region3: #{tpu_custom_call.1} parent=1 // pred_check_branch
      %15 = sbr.rel (0) target = $region5
    $region4: #{tpu_custom_call.1} parent=1 // pred_region
      %s17 = ssub.s32 6144, 6144
      %18 = vsyncadd [#allocation4], %s17
      %s19 = sshll.u32 [#allocation3], 4
      %s20 = int_to_ptr.vmem [resolvable:$true] %s19
      %25 = dma.hbm_to_vmem [thread:$0]  %s0, 6144, %s20, [#allocation4], 384, 384, 24
    $region5: #{tpu_custom_call.1} parent=1 // pred_fallthru
      _
    // Predicated region
    $region6: #{tpu_custom_call.1} parent=1 // pred_check
      _
    $region7: #{tpu_custom_call.1} parent=1 // pred_check_branch
      %27 = sbr.rel (0) target = $region9
    $region8: #{tpu_custom_call.1} parent=1 // pred_region
      %s29 = ssub.s32 2560, 2560
      %30 = vsyncadd [#allocation7], %s29
      %s31 = sshll.u32 [#allocation6], 4
      %s32 = int_to_ptr.vmem [resolvable:$true] %s31
      %37 = dma.hbm_to_vmem [thread:$0]  %s1, 2560, %s32, [#allocation7], 320, 320, 20
    $region9: #{tpu_custom_call.1} parent=1 // pred_fallthru
      _
    // Predicated region
    $region10: #{tpu_custom_call.1} parent=1 // pred_check
      _
    $region11: #{tpu_custom_call.1} parent=1 // pred_check_branch
      %39 = sbr.rel (0) target = $region13
    $region12: #{tpu_custom_call.1} parent=1 // pred_region
      _
    $region13: #{tpu_custom_call.1} parent=1 // pred_fallthru
      _
    // Predicated region
    $region14: #{tpu_custom_call.1} parent=1 // pred_check
      _
    $region15: #{tpu_custom_call.1} parent=1 // pred_check_branch
      %41 = sbr.rel (0) target = $region17
    $region16: #{tpu_custom_call.1} parent=1 // pred_region
      %s43 = ssub.s32 2560, 2560
      %44 = vsyncadd [#allocation7], %s43
      %s45 = sshll.u32 [#allocation8], 4
      %s46 = int_to_ptr.vmem [resolvable:$true] %s45
      %51 = dma.hbm_to_vmem [thread:$0]  %s3, 2560, %s46, [#allocation7], 320, 320, 20
    $region17: #{tpu_custom_call.1} parent=1 // pred_fallthru
      _
    // Predicated region
    $region18: #{tpu_custom_call.1} parent=1 // pred_check
      _
    $region19: #{tpu_custom_call.1} parent=1 // pred_check_branch
      %53 = sbr.rel (0) target = $region21
    $region20: #{tpu_custom_call.1} parent=1 // pred_region
      _
    $region21: #{tpu_custom_call.1} parent=1 // pred_fallthru
      _
    // Predicated region
    $region22: #{tpu_custom_call.1} parent=1 // pred_check
      _
    $region23: #{tpu_custom_call.1} parent=1 // pred_check_branch
      %55 = sbr.rel (0) target = $region25
    $region24: #{tpu_custom_call.1} parent=1 // pred_region
      _
    $region25: #{tpu_custom_call.1} parent=1 // pred_fallthru
      _
    // Predicated region
    $region26: #{tpu_custom_call.1} parent=1 // pred_check
      _
    $region27: #{tpu_custom_call.1} parent=1 // pred_check_branch
      %57 = sbr.rel (0) target = $region29
    $region28: #{tpu_custom_call.1} parent=1 // pred_region
      %58 = dma.done [#allocation4], 6144
    $region29: #{tpu_custom_call.1} parent=1 // pred_fallthru
      _
    // Predicated region
    $region30: #{tpu_custom_call.1} parent=1 // pred_check
      _
    $region31: #{tpu_custom_call.1} parent=1 // pred_check_branch
      %60 = sbr.rel (0) target = $region33
    $region32: #{tpu_custom_call.1} parent=1 // pred_region
      %61 = dma.done [#allocation7], 2560
    $region33: #{tpu_custom_call.1} parent=1 // pred_fallthru
      _
    // Predicated region
    $region34: #{tpu_custom_call.1} parent=1 // pred_check
      _
    $region35: #{tpu_custom_call.1} parent=1 // pred_check_branch
      %63 = sbr.rel (0) target = $region37
    $region36: #{tpu_custom_call.1} parent=1 // pred_region
      %64 = dma.done [#allocation7], 2560
    $region37: #{tpu_custom_call.1} parent=1 // pred_fallthru
      _
    %v66 = vld [vmem:[%s5] sm:$0x7]
    %v67 = vld [vmem:[#allocation3] sm:$0xff]
    %v68 = vld [vmem:[#allocation3 + $0x8] sm:$0xff]
    %v69 = vld [vmem:[#allocation3 + $0x10] sm:$0xff]
    %v70 = vld [vmem:[#allocation3 + $0x18] sm:$0xff]
    %v71 = vld [vmem:[#allocation3 + $0x20] sm:$0xff]
    %v72 = vld [vmem:[#allocation3 + $0x28] sm:$0xff]
    %v73 = vld [vmem:[#allocation3 + $0x30] sm:$0xff]
    %v74 = vld [vmem:[#allocation3 + $0x38] sm:$0xff]
    %v75 = vld [vmem:[#allocation3 + $0x40] sm:$0xff]
    %v76 = vld [vmem:[#allocation3 + $0x48] sm:$0xff]
    %v77 = vld [vmem:[#allocation3 + $0x50] sm:$0xff]
    %v78 = vld [vmem:[#allocation3 + $0x58] sm:$0xff]
    %v79 = vld [vmem:[#allocation3 + $0x60] sm:$0xff]
    %v80 = vld [vmem:[#allocation3 + $0x68] sm:$0xff]
    %v81 = vld [vmem:[#allocation3 + $0x70] sm:$0xff]
    %v82 = vld [vmem:[#allocation3 + $0x78] sm:$0xff]
    %v83 = vld [vmem:[#allocation3 + $0x80] sm:$0xff]
    %v84 = vld [vmem:[#allocation3 + $0x88] sm:$0xff]
    %v85 = vld [vmem:[#allocation3 + $0x90] sm:$0xff]
    %v86 = vld [vmem:[#allocation3 + $0x98] sm:$0xff]
    %v87 = vld [vmem:[#allocation3 + $0xa0] sm:$0xff]
    %v88 = vld [vmem:[#allocation3 + $0xa8] sm:$0xff]
    %v89 = vld [vmem:[#allocation3 + $0xb0] sm:$0xff]
    %v90 = vld [vmem:[#allocation3 + $0xb8] sm:$0xff]
    %91 = vrot.lane.b32.xlu0 %v67, 19
    %v92 = vpop.permute.xlu0 %91
    %93 = vrot.lane.b32.xlu0 %v70, 19
    %v94 = vpop.permute.xlu0 %93
    %95 = vrot.lane.b32.xlu0 %v73, 19
    %v96 = vpop.permute.xlu0 %95
    %97 = vrot.lane.b32.xlu0 %v76, 19
    %v98 = vpop.permute.xlu0 %97
    %99 = vrot.lane.b32.xlu0 %v79, 19
    %v100 = vpop.permute.xlu0 %99
    %101 = vrot.lane.b32.xlu0 %v82, 19
    %v102 = vpop.permute.xlu0 %101
    %103 = vrot.lane.b32.xlu0 %v85, 19
    %v104 = vpop.permute.xlu0 %103
    %105 = vrot.lane.b32.xlu0 %v88, 19
    %v106 = vpop.permute.xlu0 %105
    %107 = vrot.lane.b32.xlu0 %v68, 19
    %v108 = vpop.permute.xlu0 %107
    %109 = vrot.lane.b32.xlu0 %v71, 19
    %v110 = vpop.permute.xlu0 %109
    %111 = vrot.lane.b32.xlu0 %v74, 19
    %v112 = vpop.permute.xlu0 %111
    %113 = vrot.lane.b32.xlu0 %v77, 19
    %v114 = vpop.permute.xlu0 %113
    %115 = vrot.lane.b32.xlu0 %v80, 19
    %v116 = vpop.permute.xlu0 %115
    %117 = vrot.lane.b32.xlu0 %v83, 19
    %v118 = vpop.permute.xlu0 %117
    %119 = vrot.lane.b32.xlu0 %v86, 19
    %v120 = vpop.permute.xlu0 %119
    %121 = vrot.lane.b32.xlu0 %v89, 19
    %v122 = vpop.permute.xlu0 %121
    %123 = vrot.lane.b32.xlu0 %v69, 19
    %v124 = vpop.permute.xlu0 %123
    %125 = vrot.lane.b32.xlu0 %v72, 19
    %v126 = vpop.permute.xlu0 %125
    %127 = vrot.lane.b32.xlu0 %v75, 19
    %v128 = vpop.permute.xlu0 %127
    %129 = vrot.lane.b32.xlu0 %v78, 19
    %v130 = vpop.permute.xlu0 %129
    %131 = vrot.lane.b32.xlu0 %v81, 19
    %v132 = vpop.permute.xlu0 %131
    %133 = vrot.lane.b32.xlu0 %v84, 19
    %v134 = vpop.permute.xlu0 %133
    %135 = vrot.lane.b32.xlu0 %v87, 19
    %v136 = vpop.permute.xlu0 %135
    %137 = vrot.lane.b32.xlu0 %v90, 19
    %v138 = vpop.permute.xlu0 %137
    %v139 = vlaneseq
    %v140 = vand.u32 %v139, 127
    %vm141 = vcmp.lt.s32.totalorder %v140, 19
    %v142 = vsel %vm141, %v108, %v124
    %v143 = vsel %vm141, %v110, %v126
    %v144 = vsel %vm141, %v112, %v128
    %v145 = vsel %vm141, %v114, %v130
    %v146 = vsel %vm141, %v116, %v132
    %v147 = vsel %vm141, %v118, %v134
    %v148 = vsel %vm141, %v120, %v136
    %v149 = vsel %vm141, %v122, %v138
    %v150 = vsel %vm141, %v92, %v108
    %v151 = vsel %vm141, %v94, %v110
    %v152 = vsel %vm141, %v96, %v112
    %v153 = vsel %vm141, %v98, %v114
    %v154 = vsel %vm141, %v100, %v116
    %v155 = vsel %vm141, %v102, %v118
    %v156 = vsel %vm141, %v104, %v120
    %v157 = vsel %vm141, %v106, %v122
    %v158 = vsel %vm141, %v124, %v92
    %v159 = vsel %vm141, %v126, %v94
    %v160 = vsel %vm141, %v128, %v96
    %v161 = vsel %vm141, %v130, %v98
    %v162 = vsel %vm141, %v132, %v100
    %v163 = vsel %vm141, %v134, %v102
    %v164 = vsel %vm141, %v136, %v104
    %v165 = vsel %vm141, %v138, %v106
    %v166 = vpack.c.bf16 %v159, %v158
    %v167 = vpack.c.bf16 %v151, %v150
    %v168 = vpack.c.bf16 %v143, %v142
    %v169 = vpack.c.bf16 %v161, %v160
    %v170 = vpack.c.bf16 %v153, %v152
    %v171 = vpack.c.bf16 %v145, %v144
    %v172 = vpack.c.bf16 %v163, %v162
    %v173 = vpack.c.bf16 %v155, %v154
    %v174 = vpack.c.bf16 %v147, %v146
    %v175 = vpack.c.bf16 %v165, %v164
    %v176 = vpack.c.bf16 %v157, %v156
    %v177 = vpack.c.bf16 %v149, %v148
    %v190 = vunpack.c.l.b16 %v166
    %v191 = vunpack.c.l.b16 %v167
    %v192 = vunpack.c.l.b16 %v168
    %v193 = vunpack.c.h.b16 %v166
    %v194 = vunpack.c.h.b16 %v167
    %v195 = vunpack.c.h.b16 %v168
    %v196 = vunpack.c.l.b16 %v169
    %v197 = vunpack.c.l.b16 %v170
    %v198 = vunpack.c.l.b16 %v171
    %v199 = vunpack.c.h.b16 %v169
    %v200 = vunpack.c.h.b16 %v170
    %v201 = vunpack.c.h.b16 %v171
    %v202 = vunpack.c.l.b16 %v172
    %v203 = vunpack.c.l.b16 %v173
    %v204 = vunpack.c.l.b16 %v174
    %v205 = vunpack.c.h.b16 %v172
    %v206 = vunpack.c.h.b16 %v173
    %v207 = vunpack.c.h.b16 %v174
    %v208 = vunpack.c.l.b16 %v175
    %v209 = vunpack.c.l.b16 %v176
    %v210 = vunpack.c.l.b16 %v177
    %v211 = vunpack.c.h.b16 %v175
    %v212 = vunpack.c.h.b16 %v176
    %v213 = vunpack.c.h.b16 %v177
    %v214 = vpack.c.b16 %v191, %v190
    %v215 = vpack.c.b16 %v192, %v192
    %v216 = vpack.c.b16 %v194, %v193
    %v217 = vpack.c.b16 %v195, %v195
    %v218 = vpack.c.b16 %v197, %v196
    %v219 = vpack.c.b16 %v198, %v198
    %v220 = vpack.c.b16 %v200, %v199
    %v221 = vpack.c.b16 %v201, %v201
    %v222 = vpack.c.b16 %v203, %v202
    %v223 = vpack.c.b16 %v204, %v204
    %v224 = vpack.c.b16 %v206, %v205
    %v225 = vpack.c.b16 %v207, %v207
    %v226 = vpack.c.b16 %v209, %v208
    %v227 = vpack.c.b16 %v210, %v210
    %v228 = vpack.c.b16 %v212, %v211
    %v229 = vpack.c.b16 %v213, %v213
    %246 = vst [vmem:[#allocation2] sm:$0xff] %v214
    %247 = vst [vmem:[#allocation2 + $0x8] sm:$0xf] %v215
    %248 = vst [vmem:[#allocation2 + $0x18] sm:$0xff] %v216
    %249 = vst [vmem:[#allocation2 + $0x20] sm:$0xf] %v217
    %250 = vst [vmem:[#allocation2 + $0x30] sm:$0xff] %v218
    %251 = vst [vmem:[#allocation2 + $0x38] sm:$0xf] %v219
    %252 = vst [vmem:[#allocation2 + $0x48] sm:$0xff] %v220
    %253 = vst [vmem:[#allocation2 + $0x50] sm:$0xf] %v221
    %254 = vst [vmem:[#allocation2 + $0x60] sm:$0xff] %v222
    %255 = vst [vmem:[#allocation2 + $0x68] sm:$0xf] %v223
    %256 = vst [vmem:[#allocation2 + $0x78] sm:$0xff] %v224
    %257 = vst [vmem:[#allocation2 + $0x80] sm:$0xf] %v225
    %258 = vst [vmem:[#allocation2 + $0x90] sm:$0xff] %v226
    %259 = vst [vmem:[#allocation2 + $0x98] sm:$0xf] %v227
    %260 = vst [vmem:[#allocation2 + $0xa8] sm:$0xff] %v228
    %261 = vst [vmem:[#allocation2 + $0xb0] sm:$0xf] %v229
    %262 = vrot.lane.b32.xlu0 %v67, 18
    %v263 = vpop.permute.xlu0 %262
    %264 = vrot.lane.b32.xlu0 %v70, 18
    %v265 = vpop.permute.xlu0 %264
    %266 = vrot.lane.b32.xlu0 %v73, 18
    %v267 = vpop.permute.xlu0 %266
    %268 = vrot.lane.b32.xlu0 %v76, 18
    %v269 = vpop.permute.xlu0 %268
    %270 = vrot.lane.b32.xlu0 %v79, 18
    %v271 = vpop.permute.xlu0 %270
    %272 = vrot.lane.b32.xlu0 %v82, 18
    %v273 = vpop.permute.xlu0 %272
    %274 = vrot.lane.b32.xlu0 %v85, 18
    %v275 = vpop.permute.xlu0 %274
    %276 = vrot.lane.b32.xlu0 %v88, 18
    %v277 = vpop.permute.xlu0 %276
    %278 = vrot.lane.b32.xlu0 %v68, 18
    %v279 = vpop.permute.xlu0 %278
    %280 = vrot.lane.b32.xlu0 %v71, 18
    %v281 = vpop.permute.xlu0 %280
    %282 = vrot.lane.b32.xlu0 %v74, 18
    %v283 = vpop.permute.xlu0 %282
    %284 = vrot.lane.b32.xlu0 %v77, 18
    %v285 = vpop.permute.xlu0 %284
    %286 = vrot.lane.b32.xlu0 %v80, 18
    %v287 = vpop.permute.xlu0 %286
    %288 = vrot.lane.b32.xlu0 %v83, 18
    %v289 = vpop.permute.xlu0 %288
    %290 = vrot.lane.b32.xlu0 %v86, 18
    %v291 = vpop.permute.xlu0 %290
    %292 = vrot.lane.b32.xlu0 %v89, 18
    %v293 = vpop.permute.xlu0 %292
    %294 = vrot.lane.b32.xlu0 %v69, 18
    %v295 = vpop.permute.xlu0 %294
    %296 = vrot.lane.b32.xlu0 %v72, 18
    %v297 = vpop.permute.xlu0 %296
    %298 = vrot.lane.b32.xlu0 %v75, 18
    %v299 = vpop.permute.xlu0 %298
    %300 = vrot.lane.b32.xlu0 %v78, 18
    %v301 = vpop.permute.xlu0 %300
    %302 = vrot.lane.b32.xlu0 %v81, 18
    %v303 = vpop.permute.xlu0 %302
    %304 = vrot.lane.b32.xlu0 %v84, 18
    %v305 = vpop.permute.xlu0 %304
    %306 = vrot.lane.b32.xlu0 %v87, 18
    %v307 = vpop.permute.xlu0 %306
    %308 = vrot.lane.b32.xlu0 %v90, 18
    %v309 = vpop.permute.xlu0 %308
    %vm310 = vcmp.lt.s32.totalorder %v140, 18
    %v311 = vsel %vm310, %v279, %v295
    %v312 = vsel %vm310, %v281, %v297
    %v313 = vsel %vm310, %v283, %v299
    %v314 = vsel %vm310, %v285, %v301
    %v315 = vsel %vm310, %v287, %v303
    %v316 = vsel %vm310, %v289, %v305
    %v317 = vsel %vm310, %v291, %v307
    %v318 = vsel %vm310, %v293, %v309
    %v319 = vsel %vm310, %v263, %v279
    %v320 = vsel %vm310, %v265, %v281
    %v321 = vsel %vm310, %v267, %v283
    %v322 = vsel %vm310, %v269, %v285
    %v323 = vsel %vm310, %v271, %v287
    %v324 = vsel %vm310, %v273, %v289
    %v325 = vsel %vm310, %v275, %v291
    %v326 = vsel %vm310, %v277, %v293
    %v327 = vsel %vm310, %v295, %v263
    %v328 = vsel %vm310, %v297, %v265
    %v329 = vsel %vm310, %v299, %v267
    %v330 = vsel %vm310, %v301, %v269
    %v331 = vsel %vm310, %v303, %v271
    %v332 = vsel %vm310, %v305, %v273
    %v333 = vsel %vm310, %v307, %v275
    %v334 = vsel %vm310, %v309, %v277
    %v335 = vpack.c.bf16 %v328, %v327
    %v336 = vpack.c.bf16 %v320, %v319
    %v337 = vpack.c.bf16 %v312, %v311
    %v338 = vpack.c.bf16 %v330, %v329
    %v339 = vpack.c.bf16 %v322, %v321
    %v340 = vpack.c.bf16 %v314, %v313
    %v341 = vpack.c.bf16 %v332, %v331
    %v342 = vpack.c.bf16 %v324, %v323
    %v343 = vpack.c.bf16 %v316, %v315
    %v344 = vpack.c.bf16 %v334, %v333
    %v345 = vpack.c.bf16 %v326, %v325
    %v346 = vpack.c.bf16 %v318, %v317
    %v359 = vunpack.c.l.b16 %v335
    %v360 = vunpack.c.l.b16 %v336
    %v361 = vunpack.c.l.b16 %v337
    %v362 = vunpack.c.h.b16 %v335
    %v363 = vunpack.c.h.b16 %v336
    %v364 = vunpack.c.h.b16 %v337
    %v365 = vunpack.c.l.b16 %v338
    %v366 = vunpack.c.l.b16 %v339
    %v367 = vunpack.c.l.b16 %v340
    %v368 = vunpack.c.h.b16 %v338
    %v369 = vunpack.c.h.b16 %v339
    %v370 = vunpack.c.h.b16 %v340
    %v371 = vunpack.c.l.b16 %v341
    %v372 = vunpack.c.l.b16 %v342
    %v373 = vunpack.c.l.b16 %v343
    %v374 = vunpack.c.h.b16 %v341
    %v375 = vunpack.c.h.b16 %v342
    %v376 = vunpack.c.h.b16 %v343
    %v377 = vunpack.c.l.b16 %v344
    %v378 = vunpack.c.l.b16 %v345
    %v379 = vunpack.c.l.b16 %v346
    %v380 = vunpack.c.h.b16 %v344
    %v381 = vunpack.c.h.b16 %v345
    %v382 = vunpack.c.h.b16 %v346
    %v383 = vpack.c.b16 %v360, %v359
    %v384 = vpack.c.b16 %v361, %v361
    %v385 = vpack.c.b16 %v363, %v362
    %v386 = vpack.c.b16 %v364, %v364
    %v387 = vpack.c.b16 %v366, %v365
    %v388 = vpack.c.b16 %v367, %v367
    %v389 = vpack.c.b16 %v369, %v368
    %v390 = vpack.c.b16 %v370, %v370
    %v391 = vpack.c.b16 %v372, %v371
    %v392 = vpack.c.b16 %v373, %v373
    %v393 = vpack.c.b16 %v375, %v374
    %v394 = vpack.c.b16 %v376, %v376
    %v395 = vpack.c.b16 %v378, %v377
    %v396 = vpack.c.b16 %v379, %v379
    %v397 = vpack.c.b16 %v381, %v380
    %v398 = vpack.c.b16 %v382, %v382
    %415 = vst [vmem:[#allocation2 + $0xc0] sm:$0xff] %v383
    %416 = vst [vmem:[#allocation2 + $0xc8] sm:$0xf] %v384
    %417 = vst [vmem:[#allocation2 + $0xd8] sm:$0xff] %v385
    %418 = vst [vmem:[#allocation2 + $0xe0] sm:$0xf] %v386
    %419 = vst [vmem:[#allocation2 + $0xf0] sm:$0xff] %v387
    %420 = vst [vmem:[#allocation2 + $0xf8] sm:$0xf] %v388
    %421 = vst [vmem:[#allocation2 + $0x108] sm:$0xff] %v389
    %422 = vst [vmem:[#allocation2 + $0x110] sm:$0xf] %v390
    %423 = vst [vmem:[#allocation2 + $0x120] sm:$0xff] %v391
    %424 = vst [vmem:[#allocation2 + $0x128] sm:$0xf] %v392
    %425 = vst [vmem:[#allocation2 + $0x138] sm:$0xff] %v393
    %426 = vst [vmem:[#allocation2 + $0x140] sm:$0xf] %v394
    %427 = vst [vmem:[#allocation2 + $0x150] sm:$0xff] %v395
    %428 = vst [vmem:[#allocation2 + $0x158] sm:$0xf] %v396
    %429 = vst [vmem:[#allocation2 + $0x168] sm:$0xff] %v397
    %430 = vst [vmem:[#allocation2 + $0x170] sm:$0xf] %v398
    %431 = vrot.lane.b32.xlu0 %v67, 17
    %v432 = vpop.permute.xlu0 %431
    %433 = vrot.lane.b32.xlu0 %v70, 17
    %v434 = vpop.permute.xlu0 %433
    %435 = vrot.lane.b32.xlu0 %v73, 17
    %v436 = vpop.permute.xlu0 %435
    %437 = vrot.lane.b32.xlu0 %v76, 17
    %v438 = vpop.permute.xlu0 %437
    %439 = vrot.lane.b32.xlu0 %v79, 17
    %v440 = vpop.permute.xlu0 %439
    %441 = vrot.lane.b32.xlu0 %v82, 17
    %v442 = vpop.permute.xlu0 %441
    %443 = vrot.lane.b32.xlu0 %v85, 17
    %v444 = vpop.permute.xlu0 %443
    %445 = vrot.lane.b32.xlu0 %v88, 17
    %v446 = vpop.permute.xlu0 %445
    %447 = vrot.lane.b32.xlu0 %v68, 17
    %v448 = vpop.permute.xlu0 %447
    %449 = vrot.lane.b32.xlu0 %v71, 17
    %v450 = vpop.permute.xlu0 %449
    %451 = vrot.lane.b32.xlu0 %v74, 17
    %v452 = vpop.permute.xlu0 %451
    %453 = vrot.lane.b32.xlu0 %v77, 17
    %v454 = vpop.permute.xlu0 %453
    %455 = vrot.lane.b32.xlu0 %v80, 17
    %v456 = vpop.permute.xlu0 %455
    %457 = vrot.lane.b32.xlu0 %v83, 17
    %v458 = vpop.permute.xlu0 %457
    %459 = vrot.lane.b32.xlu0 %v86, 17
    %v460 = vpop.permute.xlu0 %459
    %461 = vrot.lane.b32.xlu0 %v89, 17
    %v462 = vpop.permute.xlu0 %461
    %463 = vrot.lane.b32.xlu0 %v69, 17
    %v464 = vpop.permute.xlu0 %463
    %465 = vrot.lane.b32.xlu0 %v72, 17
    %v466 = vpop.permute.xlu0 %465
    %467 = vrot.lane.b32.xlu0 %v75, 17
    %v468 = vpop.permute.xlu0 %467
    %469 = vrot.lane.b32.xlu0 %v78, 17
    %v470 = vpop.permute.xlu0 %469
    %471 = vrot.lane.b32.xlu0 %v81, 17
    %v472 = vpop.permute.xlu0 %471
    %473 = vrot.lane.b32.xlu0 %v84, 17
    %v474 = vpop.permute.xlu0 %473
    %475 = vrot.lane.b32.xlu0 %v87, 17
    %v476 = vpop.permute.xlu0 %475
    %477 = vrot.lane.b32.xlu0 %v90, 17
    %v478 = vpop.permute.xlu0 %477
    %vm479 = vcmp.lt.s32.totalorder %v140, 17
    %v480 = vsel %vm479, %v448, %v464
    %v481 = vsel %vm479, %v450, %v466
    %v482 = vsel %vm479, %v452, %v468
    %v483 = vsel %vm479, %v454, %v470
    %v484 = vsel %vm479, %v456, %v472
    %v485 = vsel %vm479, %v458, %v474
    %v486 = vsel %vm479, %v460, %v476
    %v487 = vsel %vm479, %v462, %v478
    %v488 = vsel %vm479, %v432, %v448
    %v489 = vsel %vm479, %v434, %v450
    %v490 = vsel %vm479, %v436, %v452
    %v491 = vsel %vm479, %v438, %v454
    %v492 = vsel %vm479, %v440, %v456
    %v493 = vsel %vm479, %v442, %v458
    %v494 = vsel %vm479, %v444, %v460
    %v495 = vsel %vm479, %v446, %v462
    %v496 = vsel %vm479, %v464, %v432
    %v497 = vsel %vm479, %v466, %v434
    %v498 = vsel %vm479, %v468, %v436
    %v499 = vsel %vm479, %v470, %v438
    %v500 = vsel %vm479, %v472, %v440
    %v501 = vsel %vm479, %v474, %v442
    %v502 = vsel %vm479, %v476, %v444
    %v503 = vsel %vm479, %v478, %v446
    %v504 = vpack.c.bf16 %v497, %v496
    %v505 = vpack.c.bf16 %v489, %v488
    %v506 = vpack.c.bf16 %v481, %v480
    %v507 = vpack.c.bf16 %v499, %v498
    %v508 = vpack.c.bf16 %v491, %v490
    %v509 = vpack.c.bf16 %v483, %v482
    %v510 = vpack.c.bf16 %v501, %v500
    %v511 = vpack.c.bf16 %v493, %v492
    %v512 = vpack.c.bf16 %v485, %v484
    %v513 = vpack.c.bf16 %v503, %v502
    %v514 = vpack.c.bf16 %v495, %v494
    %v515 = vpack.c.bf16 %v487, %v486
    %v528 = vunpack.c.l.b16 %v504
    %v529 = vunpack.c.l.b16 %v505
    %v530 = vunpack.c.l.b16 %v506
    %v531 = vunpack.c.h.b16 %v504
    %v532 = vunpack.c.h.b16 %v505
    %v533 = vunpack.c.h.b16 %v506
    %v534 = vunpack.c.l.b16 %v507
    %v535 = vunpack.c.l.b16 %v508
    %v536 = vunpack.c.l.b16 %v509
    %v537 = vunpack.c.h.b16 %v507
    %v538 = vunpack.c.h.b16 %v508
    %v539 = vunpack.c.h.b16 %v509
    %v540 = vunpack.c.l.b16 %v510
    %v541 = vunpack.c.l.b16 %v511
    %v542 = vunpack.c.l.b16 %v512
    %v543 = vunpack.c.h.b16 %v510
    %v544 = vunpack.c.h.b16 %v511
    %v545 = vunpack.c.h.b16 %v512
    %v546 = vunpack.c.l.b16 %v513
    %v547 = vunpack.c.l.b16 %v514
    %v548 = vunpack.c.l.b16 %v515
    %v549 = vunpack.c.h.b16 %v513
    %v550 = vunpack.c.h.b16 %v514
    %v551 = vunpack.c.h.b16 %v515
    %v552 = vpack.c.b16 %v529, %v528
    %v553 = vpack.c.b16 %v530, %v530
    %v554 = vpack.c.b16 %v532, %v531
    %v555 = vpack.c.b16 %v533, %v533
    %v556 = vpack.c.b16 %v535, %v534
    %v557 = vpack.c.b16 %v536, %v536
    %v558 = vpack.c.b16 %v538, %v537
    %v559 = vpack.c.b16 %v539, %v539
    %v560 = vpack.c.b16 %v541, %v540
    %v561 = vpack.c.b16 %v542, %v542
    %v562 = vpack.c.b16 %v544, %v543
    %v563 = vpack.c.b16 %v545, %v545
    %v564 = vpack.c.b16 %v547, %v546
    %v565 = vpack.c.b16 %v548, %v548
    %v566 = vpack.c.b16 %v550, %v549
    %v567 = vpack.c.b16 %v551, %v551
    %584 = vst [vmem:[#allocation2 + $0x180] sm:$0xff] %v552
    %585 = vst [vmem:[#allocation2 + $0x188] sm:$0xf] %v553
    %586 = vst [vmem:[#allocation2 + $0x198] sm:$0xff] %v554
    %587 = vst [vmem:[#allocation2 + $0x1a0] sm:$0xf] %v555
    %588 = vst [vmem:[#allocation2 + $0x1b0] sm:$0xff] %v556
    %589 = vst [vmem:[#allocation2 + $0x1b8] sm:$0xf] %v557
    %590 = vst [vmem:[#allocation2 + $0x1c8] sm:$0xff] %v558
    %591 = vst [vmem:[#allocation2 + $0x1d0] sm:$0xf] %v559
    %592 = vst [vmem:[#allocation2 + $0x1e0] sm:$0xff] %v560
    %593 = vst [vmem:[#allocation2 + $0x1e8] sm:$0xf] %v561
    %594 = vst [vmem:[#allocation2 + $0x1f8] sm:$0xff] %v562
    %595 = vst [vmem:[#allocation2 + $0x200] sm:$0xf] %v563
    %596 = vst [vmem:[#allocation2 + $0x210] sm:$0xff] %v564
    %597 = vst [vmem:[#allocation2 + $0x218] sm:$0xf] %v565
    %598 = vst [vmem:[#allocation2 + $0x228] sm:$0xff] %v566
    %599 = vst [vmem:[#allocation2 + $0x230] sm:$0xf] %v567
    %600 = vrot.lane.b32.xlu0 %v67, 1
    %v601 = vpop.permute.xlu0 %600
    %602 = vrot.lane.b32.xlu0 %v70, 1
    %v603 = vpop.permute.xlu0 %602
    %604 = vrot.lane.b32.xlu0 %v73, 1
    %v605 = vpop.permute.xlu0 %604
    %606 = vrot.lane.b32.xlu0 %v76, 1
    %v607 = vpop.permute.xlu0 %606
    %608 = vrot.lane.b32.xlu0 %v79, 1
    %v609 = vpop.permute.xlu0 %608
    %610 = vrot.lane.b32.xlu0 %v82, 1
    %v611 = vpop.permute.xlu0 %610
    %612 = vrot.lane.b32.xlu0 %v85, 1
    %v613 = vpop.permute.xlu0 %612
    %614 = vrot.lane.b32.xlu0 %v88, 1
    %v615 = vpop.permute.xlu0 %614
    %616 = vrot.lane.b32.xlu0 %v68, 1
    %v617 = vpop.permute.xlu0 %616
    %618 = vrot.lane.b32.xlu0 %v71, 1
    %v619 = vpop.permute.xlu0 %618
    %620 = vrot.lane.b32.xlu0 %v74, 1
    %v621 = vpop.permute.xlu0 %620
    %622 = vrot.lane.b32.xlu0 %v77, 1
    %v623 = vpop.permute.xlu0 %622
    %624 = vrot.lane.b32.xlu0 %v80, 1
    %v625 = vpop.permute.xlu0 %624
    %626 = vrot.lane.b32.xlu0 %v83, 1
    %v627 = vpop.permute.xlu0 %626
    %628 = vrot.lane.b32.xlu0 %v86, 1
    %v629 = vpop.permute.xlu0 %628
    %630 = vrot.lane.b32.xlu0 %v89, 1
    %v631 = vpop.permute.xlu0 %630
    %632 = vrot.lane.b32.xlu0 %v69, 1
    %v633 = vpop.permute.xlu0 %632
    %634 = vrot.lane.b32.xlu0 %v72, 1
    %v635 = vpop.permute.xlu0 %634
    %636 = vrot.lane.b32.xlu0 %v75, 1
    %v637 = vpop.permute.xlu0 %636
    %638 = vrot.lane.b32.xlu0 %v78, 1
    %v639 = vpop.permute.xlu0 %638
    %640 = vrot.lane.b32.xlu0 %v81, 1
    %v641 = vpop.permute.xlu0 %640
    %642 = vrot.lane.b32.xlu0 %v84, 1
    %v643 = vpop.permute.xlu0 %642
    %644 = vrot.lane.b32.xlu0 %v87, 1
    %v645 = vpop.permute.xlu0 %644
    %646 = vrot.lane.b32.xlu0 %v90, 1
    %v647 = vpop.permute.xlu0 %646
    %vm648 = vcmp.lt.s32.totalorder %v140, 1
    %v649 = vsel %vm648, %v617, %v633
    %v650 = vsel %vm648, %v619, %v635
    %v651 = vsel %vm648, %v621, %v637
    %v652 = vsel %vm648, %v623, %v639
    %v653 = vsel %vm648, %v625, %v641
    %v654 = vsel %vm648, %v627, %v643
    %v655 = vsel %vm648, %v629, %v645
    %v656 = vsel %vm648, %v631, %v647
    %v657 = vsel %vm648, %v601, %v617
    %v658 = vsel %vm648, %v603, %v619
    %v659 = vsel %vm648, %v605, %v621
    %v660 = vsel %vm648, %v607, %v623
    %v661 = vsel %vm648, %v609, %v625
    %v662 = vsel %vm648, %v611, %v627
    %v663 = vsel %vm648, %v613, %v629
    %v664 = vsel %vm648, %v615, %v631
    %v665 = vsel %vm648, %v633, %v601
    %v666 = vsel %vm648, %v635, %v603
    %v667 = vsel %vm648, %v637, %v605
    %v668 = vsel %vm648, %v639, %v607
    %v669 = vsel %vm648, %v641, %v609
    %v670 = vsel %vm648, %v643, %v611
    %v671 = vsel %vm648, %v645, %v613
    %v672 = vsel %vm648, %v647, %v615
    %v673 = vpack.c.bf16 %v666, %v665
    %v674 = vpack.c.bf16 %v658, %v657
    %v675 = vpack.c.bf16 %v650, %v649
    %v676 = vpack.c.bf16 %v668, %v667
    %v677 = vpack.c.bf16 %v660, %v659
    %v678 = vpack.c.bf16 %v652, %v651
    %v679 = vpack.c.bf16 %v670, %v669
    %v680 = vpack.c.bf16 %v662, %v661
    %v681 = vpack.c.bf16 %v654, %v653
    %v682 = vpack.c.bf16 %v672, %v671
    %v683 = vpack.c.bf16 %v664, %v663
    %v684 = vpack.c.bf16 %v656, %v655
    %v697 = vunpack.c.l.b16 %v673
    %v698 = vunpack.c.l.b16 %v674
    %v699 = vunpack.c.l.b16 %v675
    %v700 = vunpack.c.h.b16 %v673
    %v701 = vunpack.c.h.b16 %v674
    %v702 = vunpack.c.h.b16 %v675
    %v703 = vunpack.c.l.b16 %v676
    %v704 = vunpack.c.l.b16 %v677
    %v705 = vunpack.c.l.b16 %v678
    %v706 = vunpack.c.h.b16 %v676
    %v707 = vunpack.c.h.b16 %v677
    %v708 = vunpack.c.h.b16 %v678
    %v709 = vunpack.c.l.b16 %v679
    %v710 = vunpack.c.l.b16 %v680
    %v711 = vunpack.c.l.b16 %v681
    %v712 = vunpack.c.h.b16 %v679
    %v713 = vunpack.c.h.b16 %v680
    %v714 = vunpack.c.h.b16 %v681
    %v715 = vunpack.c.l.b16 %v682
    %v716 = vunpack.c.l.b16 %v683
    %v717 = vunpack.c.l.b16 %v684
    %v718 = vunpack.c.h.b16 %v682
    %v719 = vunpack.c.h.b16 %v683
    %v720 = vunpack.c.h.b16 %v684
    %v721 = vpack.c.b16 %v698, %v697
    %v722 = vpack.c.b16 %v699, %v699
    %v723 = vpack.c.b16 %v701, %v700
    %v724 = vpack.c.b16 %v702, %v702
    %v725 = vpack.c.b16 %v704, %v703
    %v726 = vpack.c.b16 %v705, %v705
    %v727 = vpack.c.b16 %v707, %v706
    %v728 = vpack.c.b16 %v708, %v708
    %v729 = vpack.c.b16 %v710, %v709
    %v730 = vpack.c.b16 %v711, %v711
    %v731 = vpack.c.b16 %v713, %v712
    %v732 = vpack.c.b16 %v714, %v714
    %v733 = vpack.c.b16 %v716, %v715
    %v734 = vpack.c.b16 %v717, %v717
    %v735 = vpack.c.b16 %v719, %v718
    %v736 = vpack.c.b16 %v720, %v720
    %753 = vst [vmem:[#allocation2 + $0x240] sm:$0xff] %v721
    %754 = vst [vmem:[#allocation2 + $0x248] sm:$0xf] %v722
    %755 = vst [vmem:[#allocation2 + $0x258] sm:$0xff] %v723
    %756 = vst [vmem:[#allocation2 + $0x260] sm:$0xf] %v724
    %757 = vst [vmem:[#allocation2 + $0x270] sm:$0xff] %v725
    %758 = vst [vmem:[#allocation2 + $0x278] sm:$0xf] %v726
    %759 = vst [vmem:[#allocation2 + $0x288] sm:$0xff] %v727
    %760 = vst [vmem:[#allocation2 + $0x290] sm:$0xf] %v728
    %761 = vst [vmem:[#allocation2 + $0x2a0] sm:$0xff] %v729
    %762 = vst [vmem:[#allocation2 + $0x2a8] sm:$0xf] %v730
    %763 = vst [vmem:[#allocation2 + $0x2b8] sm:$0xff] %v731
    %764 = vst [vmem:[#allocation2 + $0x2c0] sm:$0xf] %v732
    %765 = vst [vmem:[#allocation2 + $0x2d0] sm:$0xff] %v733
    %766 = vst [vmem:[#allocation2 + $0x2d8] sm:$0xf] %v734
    %767 = vst [vmem:[#allocation2 + $0x2e8] sm:$0xff] %v735
    %768 = vst [vmem:[#allocation2 + $0x2f0] sm:$0xf] %v736
    %v769 = vpack.c.bf16 %v70, %v67
    %v770 = vpack.c.bf16 %v71, %v68
    %v771 = vpack.c.bf16 %v72, %v69
    %v772 = vpack.c.bf16 %v76, %v73
    %v773 = vpack.c.bf16 %v77, %v74
    %v774 = vpack.c.bf16 %v78, %v75
    %v775 = vpack.c.bf16 %v82, %v79
    %v776 = vpack.c.bf16 %v83, %v80
    %v777 = vpack.c.bf16 %v84, %v81
    %v778 = vpack.c.bf16 %v88, %v85
    %v779 = vpack.c.bf16 %v89, %v86
    %v780 = vpack.c.bf16 %v90, %v87
    %v793 = vunpack.c.l.b16 %v769
    %v794 = vunpack.c.l.b16 %v770
    %v795 = vunpack.c.l.b16 %v771
    %v796 = vunpack.c.h.b16 %v769
    %v797 = vunpack.c.h.b16 %v770
    %v798 = vunpack.c.h.b16 %v771
    %v799 = vunpack.c.l.b16 %v772
    %v800 = vunpack.c.l.b16 %v773
    %v801 = vunpack.c.l.b16 %v774
    %v802 = vunpack.c.h.b16 %v772
    %v803 = vunpack.c.h.b16 %v773
    %v804 = vunpack.c.h.b16 %v774
    %v805 = vunpack.c.l.b16 %v775
    %v806 = vunpack.c.l.b16 %v776
    %v807 = vunpack.c.l.b16 %v777
    %v808 = vunpack.c.h.b16 %v775
    %v809 = vunpack.c.h.b16 %v776
    %v810 = vunpack.c.h.b16 %v777
    %v811 = vunpack.c.l.b16 %v778
    %v812 = vunpack.c.l.b16 %v779
    %v813 = vunpack.c.l.b16 %v780
    %v814 = vunpack.c.h.b16 %v778
    %v815 = vunpack.c.h.b16 %v779
    %v816 = vunpack.c.h.b16 %v780
    %v817 = vpack.c.b16 %v794, %v793
    %v818 = vpack.c.b16 %v795, %v795
    %v819 = vpack.c.b16 %v797, %v796
    %v820 = vpack.c.b16 %v798, %v798
    %v821 = vpack.c.b16 %v800, %v799
    %v822 = vpack.c.b16 %v801, %v801
    %v823 = vpack.c.b16 %v803, %v802
    %v824 = vpack.c.b16 %v804, %v804
    %v825 = vpack.c.b16 %v806, %v805
    %v826 = vpack.c.b16 %v807, %v807
    %v827 = vpack.c.b16 %v809, %v808
    %v828 = vpack.c.b16 %v810, %v810
    %v829 = vpack.c.b16 %v812, %v811
    %v830 = vpack.c.b16 %v813, %v813
    %v831 = vpack.c.b16 %v815, %v814
    %v832 = vpack.c.b16 %v816, %v816
    %849 = vst [vmem:[#allocation2 + $0x300] sm:$0xff] %v817
    %850 = vst [vmem:[#allocation2 + $0x308] sm:$0xf] %v818
    %851 = vst [vmem:[#allocation2 + $0x318] sm:$0xff] %v819
    %852 = vst [vmem:[#allocation2 + $0x320] sm:$0xf] %v820
    %853 = vst [vmem:[#allocation2 + $0x330] sm:$0xff] %v821
    %854 = vst [vmem:[#allocation2 + $0x338] sm:$0xf] %v822
    %855 = vst [vmem:[#allocation2 + $0x348] sm:$0xff] %v823
    %856 = vst [vmem:[#allocation2 + $0x350] sm:$0xf] %v824
    %857 = vst [vmem:[#allocation2 + $0x360] sm:$0xff] %v825
    %858 = vst [vmem:[#allocation2 + $0x368] sm:$0xf] %v826
    %859 = vst [vmem:[#allocation2 + $0x378] sm:$0xff] %v827
    %860 = vst [vmem:[#allocation2 + $0x380] sm:$0xf] %v828
    %861 = vst [vmem:[#allocation2 + $0x390] sm:$0xff] %v829
    %862 = vst [vmem:[#allocation2 + $0x398] sm:$0xf] %v830
    %863 = vst [vmem:[#allocation2 + $0x3a8] sm:$0xff] %v831
    %864 = vst [vmem:[#allocation2 + $0x3b0] sm:$0xf] %v832
    %865 = vrot.lane.b32.xlu0 %v67, 127
    %v866 = vpop.permute.xlu0 %865
    %867 = vrot.lane.b32.xlu0 %v70, 127
    %v868 = vpop.permute.xlu0 %867
    %869 = vrot.lane.b32.xlu0 %v73, 127
    %v870 = vpop.permute.xlu0 %869
    %871 = vrot.lane.b32.xlu0 %v76, 127
    %v872 = vpop.permute.xlu0 %871
    %873 = vrot.lane.b32.xlu0 %v79, 127
    %v874 = vpop.permute.xlu0 %873
    %875 = vrot.lane.b32.xlu0 %v82, 127
    %v876 = vpop.permute.xlu0 %875
    %877 = vrot.lane.b32.xlu0 %v85, 127
    %v878 = vpop.permute.xlu0 %877
    %879 = vrot.lane.b32.xlu0 %v88, 127
    %v880 = vpop.permute.xlu0 %879
    %881 = vrot.lane.b32.xlu0 %v68, 127
    %v882 = vpop.permute.xlu0 %881
    %883 = vrot.lane.b32.xlu0 %v71, 127
    %v884 = vpop.permute.xlu0 %883
    %885 = vrot.lane.b32.xlu0 %v74, 127
    %v886 = vpop.permute.xlu0 %885
    %887 = vrot.lane.b32.xlu0 %v77, 127
    %v888 = vpop.permute.xlu0 %887
    %889 = vrot.lane.b32.xlu0 %v80, 127
    %v890 = vpop.permute.xlu0 %889
    %891 = vrot.lane.b32.xlu0 %v83, 127
    %v892 = vpop.permute.xlu0 %891
    %893 = vrot.lane.b32.xlu0 %v86, 127
    %v894 = vpop.permute.xlu0 %893
    %895 = vrot.lane.b32.xlu0 %v89, 127
    %v896 = vpop.permute.xlu0 %895
    %897 = vrot.lane.b32.xlu0 %v69, 127
    %v898 = vpop.permute.xlu0 %897
    %899 = vrot.lane.b32.xlu0 %v72, 127
    %v900 = vpop.permute.xlu0 %899
    %901 = vrot.lane.b32.xlu0 %v75, 127
    %v902 = vpop.permute.xlu0 %901
    %903 = vrot.lane.b32.xlu0 %v78, 127
    %v904 = vpop.permute.xlu0 %903
    %905 = vrot.lane.b32.xlu0 %v81, 127
    %v906 = vpop.permute.xlu0 %905
    %907 = vrot.lane.b32.xlu0 %v84, 127
    %v908 = vpop.permute.xlu0 %907
    %909 = vrot.lane.b32.xlu0 %v87, 127
    %v910 = vpop.permute.xlu0 %909
    %911 = vrot.lane.b32.xlu0 %v90, 127
    %v912 = vpop.permute.xlu0 %911
    %vm913 = vcmp.lt.s32.totalorder %v140, 127
    %v914 = vsel %vm913, %v882, %v898
    %v915 = vsel %vm913, %v884, %v900
    %v916 = vsel %vm913, %v886, %v902
    %v917 = vsel %vm913, %v888, %v904
    %v918 = vsel %vm913, %v890, %v906
    %v919 = vsel %vm913, %v892, %v908
    %v920 = vsel %vm913, %v894, %v910
    %v921 = vsel %vm913, %v896, %v912
    %v922 = vsel %vm913, %v866, %v882
    %v923 = vsel %vm913, %v868, %v884
    %v924 = vsel %vm913, %v870, %v886
    %v925 = vsel %vm913, %v872, %v888
    %v926 = vsel %vm913, %v874, %v890
    %v927 = vsel %vm913, %v876, %v892
    %v928 = vsel %vm913, %v878, %v894
    %v929 = vsel %vm913, %v880, %v896
    %v930 = vsel %vm913, %v898, %v866
    %v931 = vsel %vm913, %v900, %v868
    %v932 = vsel %vm913, %v902, %v870
    %v933 = vsel %vm913, %v904, %v872
    %v934 = vsel %vm913, %v906, %v874
    %v935 = vsel %vm913, %v908, %v876
    %v936 = vsel %vm913, %v910, %v878
    %v937 = vsel %vm913, %v912, %v880
    %v938 = vpack.c.bf16 %v923, %v922
    %v939 = vpack.c.bf16 %v915, %v914
    %v940 = vpack.c.bf16 %v931, %v930
    %v941 = vpack.c.bf16 %v925, %v924
    %v942 = vpack.c.bf16 %v917, %v916
    %v943 = vpack.c.bf16 %v933, %v932
    %v944 = vpack.c.bf16 %v927, %v926
    %v945 = vpack.c.bf16 %v919, %v918
    %v946 = vpack.c.bf16 %v935, %v934
    %v947 = vpack.c.bf16 %v929, %v928
    %v948 = vpack.c.bf16 %v921, %v920
    %v949 = vpack.c.bf16 %v937, %v936
    %v962 = vunpack.c.l.b16 %v938
    %v963 = vunpack.c.l.b16 %v939
    %v964 = vunpack.c.l.b16 %v940
    %v965 = vunpack.c.h.b16 %v938
    %v966 = vunpack.c.h.b16 %v939
    %v967 = vunpack.c.h.b16 %v940
    %v968 = vunpack.c.l.b16 %v941
    %v969 = vunpack.c.l.b16 %v942
    %v970 = vunpack.c.l.b16 %v943
    %v971 = vunpack.c.h.b16 %v941
    %v972 = vunpack.c.h.b16 %v942
    %v973 = vunpack.c.h.b16 %v943
    %v974 = vunpack.c.l.b16 %v944
    %v975 = vunpack.c.l.b16 %v945
    %v976 = vunpack.c.l.b16 %v946
    %v977 = vunpack.c.h.b16 %v944
    %v978 = vunpack.c.h.b16 %v945
    %v979 = vunpack.c.h.b16 %v946
    %v980 = vunpack.c.l.b16 %v947
    %v981 = vunpack.c.l.b16 %v948
    %v982 = vunpack.c.l.b16 %v949
    %v983 = vunpack.c.h.b16 %v947
    %v984 = vunpack.c.h.b16 %v948
    %v985 = vunpack.c.h.b16 %v949
    %v986 = vpack.c.b16 %v963, %v962
    %v987 = vpack.c.b16 %v964, %v964
    %v988 = vpack.c.b16 %v966, %v965
    %v989 = vpack.c.b16 %v967, %v967
    %v990 = vpack.c.b16 %v969, %v968
    %v991 = vpack.c.b16 %v970, %v970
    %v992 = vpack.c.b16 %v972, %v971
    %v993 = vpack.c.b16 %v973, %v973
    %v994 = vpack.c.b16 %v975, %v974
    %v995 = vpack.c.b16 %v976, %v976
    %v996 = vpack.c.b16 %v978, %v977
    %v997 = vpack.c.b16 %v979, %v979
    %v998 = vpack.c.b16 %v981, %v980
    %v999 = vpack.c.b16 %v982, %v982
    %v1000 = vpack.c.b16 %v984, %v983
    %v1001 = vpack.c.b16 %v985, %v985
    %1018 = vst [vmem:[#allocation2 + $0x3c0] sm:$0xff] %v986
    %1019 = vst [vmem:[#allocation2 + $0x3c8] sm:$0xf] %v987
    %1020 = vst [vmem:[#allocation2 + $0x3d8] sm:$0xff] %v988
    %1021 = vst [vmem:[#allocation2 + $0x3e0] sm:$0xf] %v989
    %1022 = vst [vmem:[#allocation2 + $0x3f0] sm:$0xff] %v990
    %1023 = vst [vmem:[#allocation2 + $0x3f8] sm:$0xf] %v991
    %1024 = vst [vmem:[#allocation2 + $0x408] sm:$0xff] %v992
    %1025 = vst [vmem:[#allocation2 + $0x410] sm:$0xf] %v993
    %1026 = vst [vmem:[#allocation2 + $0x420] sm:$0xff] %v994
    %1027 = vst [vmem:[#allocation2 + $0x428] sm:$0xf] %v995
    %1028 = vst [vmem:[#allocation2 + $0x438] sm:$0xff] %v996
    %1029 = vst [vmem:[#allocation2 + $0x440] sm:$0xf] %v997
    %1030 = vst [vmem:[#allocation2 + $0x450] sm:$0xff] %v998
    %1031 = vst [vmem:[#allocation2 + $0x458] sm:$0xf] %v999
    %1032 = vst [vmem:[#allocation2 + $0x468] sm:$0xff] %v1000
    %1033 = vst [vmem:[#allocation2 + $0x470] sm:$0xf] %v1001
    %1034 = vrot.lane.b32.xlu0 %v67, 111
    %v1035 = vpop.permute.xlu0 %1034
    %1036 = vrot.lane.b32.xlu0 %v70, 111
    %v1037 = vpop.permute.xlu0 %1036
    %1038 = vrot.lane.b32.xlu0 %v73, 111
    %v1039 = vpop.permute.xlu0 %1038
    %1040 = vrot.lane.b32.xlu0 %v76, 111
    %v1041 = vpop.permute.xlu0 %1040
    %1042 = vrot.lane.b32.xlu0 %v79, 111
    %v1043 = vpop.permute.xlu0 %1042
    %1044 = vrot.lane.b32.xlu0 %v82, 111
    %v1045 = vpop.permute.xlu0 %1044
    %1046 = vrot.lane.b32.xlu0 %v85, 111
    %v1047 = vpop.permute.xlu0 %1046
    %1048 = vrot.lane.b32.xlu0 %v88, 111
    %v1049 = vpop.permute.xlu0 %1048
    %1050 = vrot.lane.b32.xlu0 %v68, 111
    %v1051 = vpop.permute.xlu0 %1050
    %1052 = vrot.lane.b32.xlu0 %v71, 111
    %v1053 = vpop.permute.xlu0 %1052
    %1054 = vrot.lane.b32.xlu0 %v74, 111
    %v1055 = vpop.permute.xlu0 %1054
    %1056 = vrot.lane.b32.xlu0 %v77, 111
    %v1057 = vpop.permute.xlu0 %1056
    %1058 = vrot.lane.b32.xlu0 %v80, 111
    %v1059 = vpop.permute.xlu0 %1058
    %1060 = vrot.lane.b32.xlu0 %v83, 111
    %v1061 = vpop.permute.xlu0 %1060
    %1062 = vrot.lane.b32.xlu0 %v86, 111
    %v1063 = vpop.permute.xlu0 %1062
    %1064 = vrot.lane.b32.xlu0 %v89, 111
    %v1065 = vpop.permute.xlu0 %1064
    %1066 = vrot.lane.b32.xlu0 %v69, 111
    %v1067 = vpop.permute.xlu0 %1066
    %1068 = vrot.lane.b32.xlu0 %v72, 111
    %v1069 = vpop.permute.xlu0 %1068
    %1070 = vrot.lane.b32.xlu0 %v75, 111
    %v1071 = vpop.permute.xlu0 %1070
    %1072 = vrot.lane.b32.xlu0 %v78, 111
    %v1073 = vpop.permute.xlu0 %1072
    %1074 = vrot.lane.b32.xlu0 %v81, 111
    %v1075 = vpop.permute.xlu0 %1074
    %1076 = vrot.lane.b32.xlu0 %v84, 111
    %v1077 = vpop.permute.xlu0 %1076
    %1078 = vrot.lane.b32.xlu0 %v87, 111
    %v1079 = vpop.permute.xlu0 %1078
    %1080 = vrot.lane.b32.xlu0 %v90, 111
    %v1081 = vpop.permute.xlu0 %1080
    %vm1082 = vcmp.lt.s32.totalorder %v140, 111
    %v1083 = vsel %vm1082, %v1051, %v1067
    %v1084 = vsel %vm1082, %v1053, %v1069
    %v1085 = vsel %vm1082, %v1055, %v1071
    %v1086 = vsel %vm1082, %v1057, %v1073
    %v1087 = vsel %vm1082, %v1059, %v1075
    %v1088 = vsel %vm1082, %v1061, %v1077
    %v1089 = vsel %vm1082, %v1063, %v1079
    %v1090 = vsel %vm1082, %v1065, %v1081
    %v1091 = vsel %vm1082, %v1035, %v1051
    %v1092 = vsel %vm1082, %v1037, %v1053
    %v1093 = vsel %vm1082, %v1039, %v1055
    %v1094 = vsel %vm1082, %v1041, %v1057
    %v1095 = vsel %vm1082, %v1043, %v1059
    %v1096 = vsel %vm1082, %v1045, %v1061
    %v1097 = vsel %vm1082, %v1047, %v1063
    %v1098 = vsel %vm1082, %v1049, %v1065
    %v1099 = vsel %vm1082, %v1067, %v1035
    %v1100 = vsel %vm1082, %v1069, %v1037
    %v1101 = vsel %vm1082, %v1071, %v1039
    %v1102 = vsel %vm1082, %v1073, %v1041
    %v1103 = vsel %vm1082, %v1075, %v1043
    %v1104 = vsel %vm1082, %v1077, %v1045
    %v1105 = vsel %vm1082, %v1079, %v1047
    %v1106 = vsel %vm1082, %v1081, %v1049
    %v1107 = vpack.c.bf16 %v1092, %v1091
    %v1108 = vpack.c.bf16 %v1084, %v1083
    %v1109 = vpack.c.bf16 %v1100, %v1099
    %v1110 = vpack.c.bf16 %v1094, %v1093
    %v1111 = vpack.c.bf16 %v1086, %v1085
    %v1112 = vpack.c.bf16 %v1102, %v1101
    %v1113 = vpack.c.bf16 %v1096, %v1095
    %v1114 = vpack.c.bf16 %v1088, %v1087
    %v1115 = vpack.c.bf16 %v1104, %v1103
    %v1116 = vpack.c.bf16 %v1098, %v1097
    %v1117 = vpack.c.bf16 %v1090, %v1089
    %v1118 = vpack.c.bf16 %v1106, %v1105
    %v1131 = vunpack.c.l.b16 %v1107
    %v1132 = vunpack.c.l.b16 %v1108
    %v1133 = vunpack.c.l.b16 %v1109
    %v1134 = vunpack.c.h.b16 %v1107
    %v1135 = vunpack.c.h.b16 %v1108
    %v1136 = vunpack.c.h.b16 %v1109
    %v1137 = vunpack.c.l.b16 %v1110
    %v1138 = vunpack.c.l.b16 %v1111
    %v1139 = vunpack.c.l.b16 %v1112
    %v1140 = vunpack.c.h.b16 %v1110
    %v1141 = vunpack.c.h.b16 %v1111
    %v1142 = vunpack.c.h.b16 %v1112
    %v1143 = vunpack.c.l.b16 %v1113
    %v1144 = vunpack.c.l.b16 %v1114
    %v1145 = vunpack.c.l.b16 %v1115
    %v1146 = vunpack.c.h.b16 %v1113
    %v1147 = vunpack.c.h.b16 %v1114
    %v1148 = vunpack.c.h.b16 %v1115
    %v1149 = vunpack.c.l.b16 %v1116
    %v1150 = vunpack.c.l.b16 %v1117
    %v1151 = vunpack.c.l.b16 %v1118
    %v1152 = vunpack.c.h.b16 %v1116
    %v1153 = vunpack.c.h.b16 %v1117
    %v1154 = vunpack.c.h.b16 %v1118
    %v1155 = vpack.c.b16 %v1132, %v1131
    %v1156 = vpack.c.b16 %v1133, %v1133
    %v1157 = vpack.c.b16 %v1135, %v1134
    %v1158 = vpack.c.b16 %v1136, %v1136
    %v1159 = vpack.c.b16 %v1138, %v1137
    %v1160 = vpack.c.b16 %v1139, %v1139
    %v1161 = vpack.c.b16 %v1141, %v1140
    %v1162 = vpack.c.b16 %v1142, %v1142
    %v1163 = vpack.c.b16 %v1144, %v1143
    %v1164 = vpack.c.b16 %v1145, %v1145
    %v1165 = vpack.c.b16 %v1147, %v1146
    %v1166 = vpack.c.b16 %v1148, %v1148
    %v1167 = vpack.c.b16 %v1150, %v1149
    %v1168 = vpack.c.b16 %v1151, %v1151
    %v1169 = vpack.c.b16 %v1153, %v1152
    %v1170 = vpack.c.b16 %v1154, %v1154
    %1187 = vst [vmem:[#allocation2 + $0x480] sm:$0xff] %v1155
    %1188 = vst [vmem:[#allocation2 + $0x488] sm:$0xf] %v1156
    %1189 = vst [vmem:[#allocation2 + $0x498] sm:$0xff] %v1157
    %1190 = vst [vmem:[#allocation2 + $0x4a0] sm:$0xf] %v1158
    %1191 = vst [vmem:[#allocation2 + $0x4b0] sm:$0xff] %v1159
    %1192 = vst [vmem:[#allocation2 + $0x4b8] sm:$0xf] %v1160
    %1193 = vst [vmem:[#allocation2 + $0x4c8] sm:$0xff] %v1161
    %1194 = vst [vmem:[#allocation2 + $0x4d0] sm:$0xf] %v1162
    %1195 = vst [vmem:[#allocation2 + $0x4e0] sm:$0xff] %v1163
    %1196 = vst [vmem:[#allocation2 + $0x4e8] sm:$0xf] %v1164
    %1197 = vst [vmem:[#allocation2 + $0x4f8] sm:$0xff] %v1165
    %1198 = vst [vmem:[#allocation2 + $0x500] sm:$0xf] %v1166
    %1199 = vst [vmem:[#allocation2 + $0x510] sm:$0xff] %v1167
    %1200 = vst [vmem:[#allocation2 + $0x518] sm:$0xf] %v1168
    %1201 = vst [vmem:[#allocation2 + $0x528] sm:$0xff] %v1169
    %1202 = vst [vmem:[#allocation2 + $0x530] sm:$0xf] %v1170
    %1203 = vrot.lane.b32.xlu0 %v67, 110
    %v1204 = vpop.permute.xlu0 %1203
    %1205 = vrot.lane.b32.xlu0 %v70, 110
    %v1206 = vpop.permute.xlu0 %1205
    %1207 = vrot.lane.b32.xlu0 %v73, 110
    %v1208 = vpop.permute.xlu0 %1207
    %1209 = vrot.lane.b32.xlu0 %v76, 110
    %v1210 = vpop.permute.xlu0 %1209
    %1211 = vrot.lane.b32.xlu0 %v79, 110
    %v1212 = vpop.permute.xlu0 %1211
    %1213 = vrot.lane.b32.xlu0 %v82, 110
    %v1214 = vpop.permute.xlu0 %1213
    %1215 = vrot.lane.b32.xlu0 %v85, 110
    %v1216 = vpop.permute.xlu0 %1215
    %1217 = vrot.lane.b32.xlu0 %v88, 110
    %v1218 = vpop.permute.xlu0 %1217
    %1219 = vrot.lane.b32.xlu0 %v68, 110
    %v1220 = vpop.permute.xlu0 %1219
    %1221 = vrot.lane.b32.xlu0 %v71, 110
    %v1222 = vpop.permute.xlu0 %1221
    %1223 = vrot.lane.b32.xlu0 %v74, 110
    %v1224 = vpop.permute.xlu0 %1223
    %1225 = vrot.lane.b32.xlu0 %v77, 110
    %v1226 = vpop.permute.xlu0 %1225
    %1227 = vrot.lane.b32.xlu0 %v80, 110
    %v1228 = vpop.permute.xlu0 %1227
    %1229 = vrot.lane.b32.xlu0 %v83, 110
    %v1230 = vpop.permute.xlu0 %1229
    %1231 = vrot.lane.b32.xlu0 %v86, 110
    %v1232 = vpop.permute.xlu0 %1231
    %1233 = vrot.lane.b32.xlu0 %v89, 110
    %v1234 = vpop.permute.xlu0 %1233
    %1235 = vrot.lane.b32.xlu0 %v69, 110
    %v1236 = vpop.permute.xlu0 %1235
    %1237 = vrot.lane.b32.xlu0 %v72, 110
    %v1238 = vpop.permute.xlu0 %1237
    %1239 = vrot.lane.b32.xlu0 %v75, 110
    %v1240 = vpop.permute.xlu0 %1239
    %1241 = vrot.lane.b32.xlu0 %v78, 110
    %v1242 = vpop.permute.xlu0 %1241
    %1243 = vrot.lane.b32.xlu0 %v81, 110
    %v1244 = vpop.permute.xlu0 %1243
    %1245 = vrot.lane.b32.xlu0 %v84, 110
    %v1246 = vpop.permute.xlu0 %1245
    %1247 = vrot.lane.b32.xlu0 %v87, 110
    %v1248 = vpop.permute.xlu0 %1247
    %1249 = vrot.lane.b32.xlu0 %v90, 110
    %v1250 = vpop.permute.xlu0 %1249
    %vm1251 = vcmp.lt.s32.totalorder %v140, 110
    %v1252 = vsel %vm1251, %v1220, %v1236
    %v1253 = vsel %vm1251, %v1222, %v1238
    %v1254 = vsel %vm1251, %v1224, %v1240
    %v1255 = vsel %vm1251, %v1226, %v1242
    %v1256 = vsel %vm1251, %v1228, %v1244
    %v1257 = vsel %vm1251, %v1230, %v1246
    %v1258 = vsel %vm1251, %v1232, %v1248
    %v1259 = vsel %vm1251, %v1234, %v1250
    %v1260 = vsel %vm1251, %v1204, %v1220
    %v1261 = vsel %vm1251, %v1206, %v1222
    %v1262 = vsel %vm1251, %v1208, %v1224
    %v1263 = vsel %vm1251, %v1210, %v1226
    %v1264 = vsel %vm1251, %v1212, %v1228
    %v1265 = vsel %vm1251, %v1214, %v1230
    %v1266 = vsel %vm1251, %v1216, %v1232
    %v1267 = vsel %vm1251, %v1218, %v1234
    %v1268 = vsel %vm1251, %v1236, %v1204
    %v1269 = vsel %vm1251, %v1238, %v1206
    %v1270 = vsel %vm1251, %v1240, %v1208
    %v1271 = vsel %vm1251, %v1242, %v1210
    %v1272 = vsel %vm1251, %v1244, %v1212
    %v1273 = vsel %vm1251, %v1246, %v1214
    %v1274 = vsel %vm1251, %v1248, %v1216
    %v1275 = vsel %vm1251, %v1250, %v1218
    %v1276 = vpack.c.bf16 %v1261, %v1260
    %v1277 = vpack.c.bf16 %v1253, %v1252
    %v1278 = vpack.c.bf16 %v1269, %v1268
    %v1279 = vpack.c.bf16 %v1263, %v1262
    %v1280 = vpack.c.bf16 %v1255, %v1254
    %v1281 = vpack.c.bf16 %v1271, %v1270
    %v1282 = vpack.c.bf16 %v1265, %v1264
    %v1283 = vpack.c.bf16 %v1257, %v1256
    %v1284 = vpack.c.bf16 %v1273, %v1272
    %v1285 = vpack.c.bf16 %v1267, %v1266
    %v1286 = vpack.c.bf16 %v1259, %v1258
    %v1287 = vpack.c.bf16 %v1275, %v1274
    %v1300 = vunpack.c.l.b16 %v1276
    %v1301 = vunpack.c.l.b16 %v1277
    %v1302 = vunpack.c.l.b16 %v1278
    %v1303 = vunpack.c.h.b16 %v1276
    %v1304 = vunpack.c.h.b16 %v1277
    %v1305 = vunpack.c.h.b16 %v1278
    %v1306 = vunpack.c.l.b16 %v1279
    %v1307 = vunpack.c.l.b16 %v1280
    %v1308 = vunpack.c.l.b16 %v1281
    %v1309 = vunpack.c.h.b16 %v1279
    %v1310 = vunpack.c.h.b16 %v1280
    %v1311 = vunpack.c.h.b16 %v1281
    %v1312 = vunpack.c.l.b16 %v1282
    %v1313 = vunpack.c.l.b16 %v1283
    %v1314 = vunpack.c.l.b16 %v1284
    %v1315 = vunpack.c.h.b16 %v1282
    %v1316 = vunpack.c.h.b16 %v1283
    %v1317 = vunpack.c.h.b16 %v1284
    %v1318 = vunpack.c.l.b16 %v1285
    %v1319 = vunpack.c.l.b16 %v1286
    %v1320 = vunpack.c.l.b16 %v1287
    %v1321 = vunpack.c.h.b16 %v1285
    %v1322 = vunpack.c.h.b16 %v1286
    %v1323 = vunpack.c.h.b16 %v1287
    %v1324 = vpack.c.b16 %v1301, %v1300
    %v1325 = vpack.c.b16 %v1302, %v1302
    %v1326 = vpack.c.b16 %v1304, %v1303
    %v1327 = vpack.c.b16 %v1305, %v1305
    %v1328 = vpack.c.b16 %v1307, %v1306
    %v1329 = vpack.c.b16 %v1308, %v1308
    %v1330 = vpack.c.b16 %v1310, %v1309
    %v1331 = vpack.c.b16 %v1311, %v1311
    %v1332 = vpack.c.b16 %v1313, %v1312
    %v1333 = vpack.c.b16 %v1314, %v1314
    %v1334 = vpack.c.b16 %v1316, %v1315
    %v1335 = vpack.c.b16 %v1317, %v1317
    %v1336 = vpack.c.b16 %v1319, %v1318
    %v1337 = vpack.c.b16 %v1320, %v1320
    %v1338 = vpack.c.b16 %v1322, %v1321
    %v1339 = vpack.c.b16 %v1323, %v1323
    %1356 = vst [vmem:[#allocation2 + $0x540] sm:$0xff] %v1324
    %1357 = vst [vmem:[#allocation2 + $0x548] sm:$0xf] %v1325
    %1358 = vst [vmem:[#allocation2 + $0x558] sm:$0xff] %v1326
    %1359 = vst [vmem:[#allocation2 + $0x560] sm:$0xf] %v1327
    %1360 = vst [vmem:[#allocation2 + $0x570] sm:$0xff] %v1328
    %1361 = vst [vmem:[#allocation2 + $0x578] sm:$0xf] %v1329
    %1362 = vst [vmem:[#allocation2 + $0x588] sm:$0xff] %v1330
    %1363 = vst [vmem:[#allocation2 + $0x590] sm:$0xf] %v1331
    %1364 = vst [vmem:[#allocation2 + $0x5a0] sm:$0xff] %v1332
    %1365 = vst [vmem:[#allocation2 + $0x5a8] sm:$0xf] %v1333
    %1366 = vst [vmem:[#allocation2 + $0x5b8] sm:$0xff] %v1334
    %1367 = vst [vmem:[#allocation2 + $0x5c0] sm:$0xf] %v1335
    %1368 = vst [vmem:[#allocation2 + $0x5d0] sm:$0xff] %v1336
    %1369 = vst [vmem:[#allocation2 + $0x5d8] sm:$0xf] %v1337
    %1370 = vst [vmem:[#allocation2 + $0x5e8] sm:$0xff] %v1338
    %1371 = vst [vmem:[#allocation2 + $0x5f0] sm:$0xf] %v1339
    %1372 = vrot.lane.b32.xlu0 %v67, 109
    %v1373 = vpop.permute.xlu0 %1372
    %1374 = vrot.lane.b32.xlu0 %v70, 109
    %v1375 = vpop.permute.xlu0 %1374
    %1376 = vrot.lane.b32.xlu0 %v73, 109
    %v1377 = vpop.permute.xlu0 %1376
    %1378 = vrot.lane.b32.xlu0 %v76, 109
    %v1379 = vpop.permute.xlu0 %1378
    %1380 = vrot.lane.b32.xlu0 %v79, 109
    %v1381 = vpop.permute.xlu0 %1380
    %1382 = vrot.lane.b32.xlu0 %v82, 109
    %v1383 = vpop.permute.xlu0 %1382
    %1384 = vrot.lane.b32.xlu0 %v85, 109
    %v1385 = vpop.permute.xlu0 %1384
    %1386 = vrot.lane.b32.xlu0 %v88, 109
    %v1387 = vpop.permute.xlu0 %1386
    %1388 = vrot.lane.b32.xlu0 %v68, 109
    %v1389 = vpop.permute.xlu0 %1388
    %1390 = vrot.lane.b32.xlu0 %v71, 109
    %v1391 = vpop.permute.xlu0 %1390
    %1392 = vrot.lane.b32.xlu0 %v74, 109
    %v1393 = vpop.permute.xlu0 %1392
    %1394 = vrot.lane.b32.xlu0 %v77, 109
    %v1395 = vpop.permute.xlu0 %1394
    %1396 = vrot.lane.b32.xlu0 %v80, 109
    %v1397 = vpop.permute.xlu0 %1396
    %1398 = vrot.lane.b32.xlu0 %v83, 109
    %v1399 = vpop.permute.xlu0 %1398
    %1400 = vrot.lane.b32.xlu0 %v86, 109
    %v1401 = vpop.permute.xlu0 %1400
    %1402 = vrot.lane.b32.xlu0 %v89, 109
    %v1403 = vpop.permute.xlu0 %1402
    %1404 = vrot.lane.b32.xlu0 %v69, 109
    %v1405 = vpop.permute.xlu0 %1404
    %1406 = vrot.lane.b32.xlu0 %v72, 109
    %v1407 = vpop.permute.xlu0 %1406
    %1408 = vrot.lane.b32.xlu0 %v75, 109
    %v1409 = vpop.permute.xlu0 %1408
    %1410 = vrot.lane.b32.xlu0 %v78, 109
    %v1411 = vpop.permute.xlu0 %1410
    %1412 = vrot.lane.b32.xlu0 %v81, 109
    %v1413 = vpop.permute.xlu0 %1412
    %1414 = vrot.lane.b32.xlu0 %v84, 109
    %v1415 = vpop.permute.xlu0 %1414
    %1416 = vrot.lane.b32.xlu0 %v87, 109
    %v1417 = vpop.permute.xlu0 %1416
    %1418 = vrot.lane.b32.xlu0 %v90, 109
    %v1419 = vpop.permute.xlu0 %1418
    %vm1420 = vcmp.lt.s32.totalorder %v140, 109
    %v1421 = vsel %vm1420, %v1389, %v1405
    %v1422 = vsel %vm1420, %v1391, %v1407
    %v1423 = vsel %vm1420, %v1393, %v1409
    %v1424 = vsel %vm1420, %v1395, %v1411
    %v1425 = vsel %vm1420, %v1397, %v1413
    %v1426 = vsel %vm1420, %v1399, %v1415
    %v1427 = vsel %vm1420, %v1401, %v1417
    %v1428 = vsel %vm1420, %v1403, %v1419
    %v1429 = vsel %vm1420, %v1373, %v1389
    %v1430 = vsel %vm1420, %v1375, %v1391
    %v1431 = vsel %vm1420, %v1377, %v1393
    %v1432 = vsel %vm1420, %v1379, %v1395
    %v1433 = vsel %vm1420, %v1381, %v1397
    %v1434 = vsel %vm1420, %v1383, %v1399
    %v1435 = vsel %vm1420, %v1385, %v1401
    %v1436 = vsel %vm1420, %v1387, %v1403
    %v1437 = vsel %vm1420, %v1405, %v1373
    %v1438 = vsel %vm1420, %v1407, %v1375
    %v1439 = vsel %vm1420, %v1409, %v1377
    %v1440 = vsel %vm1420, %v1411, %v1379
    %v1441 = vsel %vm1420, %v1413, %v1381
    %v1442 = vsel %vm1420, %v1415, %v1383
    %v1443 = vsel %vm1420, %v1417, %v1385
    %v1444 = vsel %vm1420, %v1419, %v1387
    %v1445 = vpack.c.bf16 %v1430, %v1429
    %v1446 = vpack.c.bf16 %v1422, %v1421
    %v1447 = vpack.c.bf16 %v1438, %v1437
    %v1448 = vpack.c.bf16 %v1432, %v1431
    %v1449 = vpack.c.bf16 %v1424, %v1423
    %v1450 = vpack.c.bf16 %v1440, %v1439
    %v1451 = vpack.c.bf16 %v1434, %v1433
    %v1452 = vpack.c.bf16 %v1426, %v1425
    %v1453 = vpack.c.bf16 %v1442, %v1441
    %v1454 = vpack.c.bf16 %v1436, %v1435
    %v1455 = vpack.c.bf16 %v1428, %v1427
    %v1456 = vpack.c.bf16 %v1444, %v1443
    %v1469 = vunpack.c.l.b16 %v1445
    %v1470 = vunpack.c.l.b16 %v1446
    %v1471 = vunpack.c.l.b16 %v1447
    %v1472 = vunpack.c.h.b16 %v1445
    %v1473 = vunpack.c.h.b16 %v1446
    %v1474 = vunpack.c.h.b16 %v1447
    %v1475 = vunpack.c.l.b16 %v1448
    %v1476 = vunpack.c.l.b16 %v1449
    %v1477 = vunpack.c.l.b16 %v1450
    %v1478 = vunpack.c.h.b16 %v1448
    %v1479 = vunpack.c.h.b16 %v1449
    %v1480 = vunpack.c.h.b16 %v1450
    %v1481 = vunpack.c.l.b16 %v1451
    %v1482 = vunpack.c.l.b16 %v1452
    %v1483 = vunpack.c.l.b16 %v1453
    %v1484 = vunpack.c.h.b16 %v1451
    %v1485 = vunpack.c.h.b16 %v1452
    %v1486 = vunpack.c.h.b16 %v1453
    %v1487 = vunpack.c.l.b16 %v1454
    %v1488 = vunpack.c.l.b16 %v1455
    %v1489 = vunpack.c.l.b16 %v1456
    %v1490 = vunpack.c.h.b16 %v1454
    %v1491 = vunpack.c.h.b16 %v1455
    %v1492 = vunpack.c.h.b16 %v1456
    %v1493 = vpack.c.b16 %v1470, %v1469
    %v1494 = vpack.c.b16 %v1471, %v1471
    %v1495 = vpack.c.b16 %v1473, %v1472
    %v1496 = vpack.c.b16 %v1474, %v1474
    %v1497 = vpack.c.b16 %v1476, %v1475
    %v1498 = vpack.c.b16 %v1477, %v1477
    %v1499 = vpack.c.b16 %v1479, %v1478
    %v1500 = vpack.c.b16 %v1480, %v1480
    %v1501 = vpack.c.b16 %v1482, %v1481
    %v1502 = vpack.c.b16 %v1483, %v1483
    %v1503 = vpack.c.b16 %v1485, %v1484
    %v1504 = vpack.c.b16 %v1486, %v1486
    %v1505 = vpack.c.b16 %v1488, %v1487
    %v1506 = vpack.c.b16 %v1489, %v1489
    %v1507 = vpack.c.b16 %v1491, %v1490
    %v1508 = vpack.c.b16 %v1492, %v1492
    %1525 = vst [vmem:[#allocation2 + $0x600] sm:$0xff] %v1493
    %1526 = vst [vmem:[#allocation2 + $0x608] sm:$0xf] %v1494
    %1527 = vst [vmem:[#allocation2 + $0x618] sm:$0xff] %v1495
    %1528 = vst [vmem:[#allocation2 + $0x620] sm:$0xf] %v1496
    %1529 = vst [vmem:[#allocation2 + $0x630] sm:$0xff] %v1497
    %1530 = vst [vmem:[#allocation2 + $0x638] sm:$0xf] %v1498
    %1531 = vst [vmem:[#allocation2 + $0x648] sm:$0xff] %v1499
    %1532 = vst [vmem:[#allocation2 + $0x650] sm:$0xf] %v1500
    %1533 = vst [vmem:[#allocation2 + $0x660] sm:$0xff] %v1501
    %1534 = vst [vmem:[#allocation2 + $0x668] sm:$0xf] %v1502
    %1535 = vst [vmem:[#allocation2 + $0x678] sm:$0xff] %v1503
    %1536 = vst [vmem:[#allocation2 + $0x680] sm:$0xf] %v1504
    %1537 = vst [vmem:[#allocation2 + $0x690] sm:$0xff] %v1505
    %1538 = vst [vmem:[#allocation2 + $0x698] sm:$0xf] %v1506
    %1539 = vst [vmem:[#allocation2 + $0x6a8] sm:$0xff] %v1507
    %1540 = vst [vmem:[#allocation2 + $0x6b0] sm:$0xf] %v1508
    %s1541 = scalar_lea.vmem [#allocation3], 192
    %v1542 = vld [vmem:[%s1541] sm:$0xff]
    %v1543 = vld [vmem:[%s1541 + $0x8] sm:$0xff]
    %v1544 = vld [vmem:[%s1541 + $0x10] sm:$0xff]
    %v1545 = vld [vmem:[%s1541 + $0x18] sm:$0xff]
    %v1546 = vld [vmem:[%s1541 + $0x20] sm:$0xff]
    %v1547 = vld [vmem:[%s1541 + $0x28] sm:$0xff]
    %v1548 = vld [vmem:[%s1541 + $0x30] sm:$0xff]
    %v1549 = vld [vmem:[%s1541 + $0x38] sm:$0xff]
    %v1550 = vld [vmem:[%s1541 + $0x40] sm:$0xff]
    %v1551 = vld [vmem:[%s1541 + $0x48] sm:$0xff]
    %v1552 = vld [vmem:[%s1541 + $0x50] sm:$0xff]
    %v1553 = vld [vmem:[%s1541 + $0x58] sm:$0xff]
    %v1554 = vld [vmem:[%s1541 + $0x60] sm:$0xff]
    %v1555 = vld [vmem:[%s1541 + $0x68] sm:$0xff]
    %v1556 = vld [vmem:[%s1541 + $0x70] sm:$0xff]
    %v1557 = vld [vmem:[%s1541 + $0x78] sm:$0xff]
    %v1558 = vld [vmem:[%s1541 + $0x80] sm:$0xff]
    %v1559 = vld [vmem:[%s1541 + $0x88] sm:$0xff]
    %v1560 = vld [vmem:[%s1541 + $0x90] sm:$0xff]
    %v1561 = vld [vmem:[%s1541 + $0x98] sm:$0xff]
    %v1562 = vld [vmem:[%s1541 + $0xa0] sm:$0xff]
    %v1563 = vld [vmem:[%s1541 + $0xa8] sm:$0xff]
    %v1564 = vld [vmem:[%s1541 + $0xb0] sm:$0xff]
    %v1565 = vld [vmem:[%s1541 + $0xb8] sm:$0xff]
    %1566 = vrot.lane.b32.xlu0 %v1542, 19
    %v1567 = vpop.permute.xlu0 %1566
    %1568 = vrot.lane.b32.xlu0 %v1545, 19
    %v1569 = vpop.permute.xlu0 %1568
    %1570 = vrot.lane.b32.xlu0 %v1548, 19
    %v1571 = vpop.permute.xlu0 %1570
    %1572 = vrot.lane.b32.xlu0 %v1551, 19
    %v1573 = vpop.permute.xlu0 %1572
    %1574 = vrot.lane.b32.xlu0 %v1554, 19
    %v1575 = vpop.permute.xlu0 %1574
    %1576 = vrot.lane.b32.xlu0 %v1557, 19
    %v1577 = vpop.permute.xlu0 %1576
    %1578 = vrot.lane.b32.xlu0 %v1560, 19
    %v1579 = vpop.permute.xlu0 %1578
    %1580 = vrot.lane.b32.xlu0 %v1563, 19
    %v1581 = vpop.permute.xlu0 %1580
    %1582 = vrot.lane.b32.xlu0 %v1543, 19
    %v1583 = vpop.permute.xlu0 %1582
    %1584 = vrot.lane.b32.xlu0 %v1546, 19
    %v1585 = vpop.permute.xlu0 %1584
    %1586 = vrot.lane.b32.xlu0 %v1549, 19
    %v1587 = vpop.permute.xlu0 %1586
    %1588 = vrot.lane.b32.xlu0 %v1552, 19
    %v1589 = vpop.permute.xlu0 %1588
    %1590 = vrot.lane.b32.xlu0 %v1555, 19
    %v1591 = vpop.permute.xlu0 %1590
    %1592 = vrot.lane.b32.xlu0 %v1558, 19
    %v1593 = vpop.permute.xlu0 %1592
    %1594 = vrot.lane.b32.xlu0 %v1561, 19
    %v1595 = vpop.permute.xlu0 %1594
    %1596 = vrot.lane.b32.xlu0 %v1564, 19
    %v1597 = vpop.permute.xlu0 %1596
    %1598 = vrot.lane.b32.xlu0 %v1544, 19
    %v1599 = vpop.permute.xlu0 %1598
    %1600 = vrot.lane.b32.xlu0 %v1547, 19
    %v1601 = vpop.permute.xlu0 %1600
    %1602 = vrot.lane.b32.xlu0 %v1550, 19
    %v1603 = vpop.permute.xlu0 %1602
    %1604 = vrot.lane.b32.xlu0 %v1553, 19
    %v1605 = vpop.permute.xlu0 %1604
    %1606 = vrot.lane.b32.xlu0 %v1556, 19
    %v1607 = vpop.permute.xlu0 %1606
    %1608 = vrot.lane.b32.xlu0 %v1559, 19
    %v1609 = vpop.permute.xlu0 %1608
    %1610 = vrot.lane.b32.xlu0 %v1562, 19
    %v1611 = vpop.permute.xlu0 %1610
    %1612 = vrot.lane.b32.xlu0 %v1565, 19
    %v1613 = vpop.permute.xlu0 %1612
    %v1614 = vsel %vm141, %v1583, %v1599
    %v1615 = vsel %vm141, %v1585, %v1601
    %v1616 = vsel %vm141, %v1587, %v1603
    %v1617 = vsel %vm141, %v1589, %v1605
    %v1618 = vsel %vm141, %v1591, %v1607
    %v1619 = vsel %vm141, %v1593, %v1609
    %v1620 = vsel %vm141, %v1595, %v1611
    %v1621 = vsel %vm141, %v1597, %v1613
    %v1622 = vsel %vm141, %v1567, %v1583
    %v1623 = vsel %vm141, %v1569, %v1585
    %v1624 = vsel %vm141, %v1571, %v1587
    %v1625 = vsel %vm141, %v1573, %v1589
    %v1626 = vsel %vm141, %v1575, %v1591
    %v1627 = vsel %vm141, %v1577, %v1593
    %v1628 = vsel %vm141, %v1579, %v1595
    %v1629 = vsel %vm141, %v1581, %v1597
    %v1630 = vsel %vm141, %v1599, %v1567
    %v1631 = vsel %vm141, %v1601, %v1569
    %v1632 = vsel %vm141, %v1603, %v1571
    %v1633 = vsel %vm141, %v1605, %v1573
    %v1634 = vsel %vm141, %v1607, %v1575
    %v1635 = vsel %vm141, %v1609, %v1577
    %v1636 = vsel %vm141, %v1611, %v1579
    %v1637 = vsel %vm141, %v1613, %v1581
    %v1638 = vpack.c.bf16 %v1631, %v1630
    %v1639 = vpack.c.bf16 %v1623, %v1622
    %v1640 = vpack.c.bf16 %v1615, %v1614
    %v1641 = vpack.c.bf16 %v1633, %v1632
    %v1642 = vpack.c.bf16 %v1625, %v1624
    %v1643 = vpack.c.bf16 %v1617, %v1616
    %v1644 = vpack.c.bf16 %v1635, %v1634
    %v1645 = vpack.c.bf16 %v1627, %v1626
    %v1646 = vpack.c.bf16 %v1619, %v1618
    %v1647 = vpack.c.bf16 %v1637, %v1636
    %v1648 = vpack.c.bf16 %v1629, %v1628
    %v1649 = vpack.c.bf16 %v1621, %v1620
    %v1662 = vunpack.c.l.b16 %v1638
    %v1663 = vunpack.c.l.b16 %v1639
    %v1664 = vunpack.c.l.b16 %v1640
    %v1665 = vunpack.c.h.b16 %v1638
    %v1666 = vunpack.c.h.b16 %v1639
    %v1667 = vunpack.c.h.b16 %v1640
    %v1668 = vunpack.c.l.b16 %v1641
    %v1669 = vunpack.c.l.b16 %v1642
    %v1670 = vunpack.c.l.b16 %v1643
    %v1671 = vunpack.c.h.b16 %v1641
    %v1672 = vunpack.c.h.b16 %v1642
    %v1673 = vunpack.c.h.b16 %v1643
    %v1674 = vunpack.c.l.b16 %v1644
    %v1675 = vunpack.c.l.b16 %v1645
    %v1676 = vunpack.c.l.b16 %v1646
    %v1677 = vunpack.c.h.b16 %v1644
    %v1678 = vunpack.c.h.b16 %v1645
    %v1679 = vunpack.c.h.b16 %v1646
    %v1680 = vunpack.c.l.b16 %v1647
    %v1681 = vunpack.c.l.b16 %v1648
    %v1682 = vunpack.c.l.b16 %v1649
    %v1683 = vunpack.c.h.b16 %v1647
    %v1684 = vunpack.c.h.b16 %v1648
    %v1685 = vunpack.c.h.b16 %v1649
    %v1686 = vpack.c.b16 %v1663, %v1662
    %v1687 = vpack.c.b16 %v1664, %v1664
    %v1688 = vpack.c.b16 %v1666, %v1665
    %v1689 = vpack.c.b16 %v1667, %v1667
    %v1690 = vpack.c.b16 %v1669, %v1668
    %v1691 = vpack.c.b16 %v1670, %v1670
    %v1692 = vpack.c.b16 %v1672, %v1671
    %v1693 = vpack.c.b16 %v1673, %v1673
    %v1694 = vpack.c.b16 %v1675, %v1674
    %v1695 = vpack.c.b16 %v1676, %v1676
    %v1696 = vpack.c.b16 %v1678, %v1677
    %v1697 = vpack.c.b16 %v1679, %v1679
    %v1698 = vpack.c.b16 %v1681, %v1680
    %v1699 = vpack.c.b16 %v1682, %v1682
    %v1700 = vpack.c.b16 %v1684, %v1683
    %v1701 = vpack.c.b16 %v1685, %v1685
    %1718 = vst [vmem:[#allocation2 + $0xc] sm:$0xff] %v1686
    %1719 = vst [vmem:[#allocation2 + $0x14] sm:$0xf] %v1687
    %1720 = vst [vmem:[#allocation2 + $0x24] sm:$0xff] %v1688
    %1721 = vst [vmem:[#allocation2 + $0x2c] sm:$0xf] %v1689
    %1722 = vst [vmem:[#allocation2 + $0x3c] sm:$0xff] %v1690
    %1723 = vst [vmem:[#allocation2 + $0x44] sm:$0xf] %v1691
    %1724 = vst [vmem:[#allocation2 + $0x54] sm:$0xff] %v1692
    %1725 = vst [vmem:[#allocation2 + $0x5c] sm:$0xf] %v1693
    %1726 = vst [vmem:[#allocation2 + $0x6c] sm:$0xff] %v1694
    %1727 = vst [vmem:[#allocation2 + $0x74] sm:$0xf] %v1695
    %1728 = vst [vmem:[#allocation2 + $0x84] sm:$0xff] %v1696
    %1729 = vst [vmem:[#allocation2 + $0x8c] sm:$0xf] %v1697
    %1730 = vst [vmem:[#allocation2 + $0x9c] sm:$0xff] %v1698
    %1731 = vst [vmem:[#allocation2 + $0xa4] sm:$0xf] %v1699
    %1732 = vst [vmem:[#allocation2 + $0xb4] sm:$0xff] %v1700
    %1733 = vst [vmem:[#allocation2 + $0xbc] sm:$0xf] %v1701
    %1734 = vrot.lane.b32.xlu0 %v1542, 18
    %v1735 = vpop.permute.xlu0 %1734
    %1736 = vrot.lane.b32.xlu0 %v1545, 18
    %v1737 = vpop.permute.xlu0 %1736
    %1738 = vrot.lane.b32.xlu0 %v1548, 18
    %v1739 = vpop.permute.xlu0 %1738
    %1740 = vrot.lane.b32.xlu0 %v1551, 18
    %v1741 = vpop.permute.xlu0 %1740
    %1742 = vrot.lane.b32.xlu0 %v1554, 18
    %v1743 = vpop.permute.xlu0 %1742
    %1744 = vrot.lane.b32.xlu0 %v1557, 18
    %v1745 = vpop.permute.xlu0 %1744
    %1746 = vrot.lane.b32.xlu0 %v1560, 18
    %v1747 = vpop.permute.xlu0 %1746
    %1748 = vrot.lane.b32.xlu0 %v1563, 18
    %v1749 = vpop.permute.xlu0 %1748
    %1750 = vrot.lane.b32.xlu0 %v1543, 18
    %v1751 = vpop.permute.xlu0 %1750
    %1752 = vrot.lane.b32.xlu0 %v1546, 18
    %v1753 = vpop.permute.xlu0 %1752
    %1754 = vrot.lane.b32.xlu0 %v1549, 18
    %v1755 = vpop.permute.xlu0 %1754
    %1756 = vrot.lane.b32.xlu0 %v1552, 18
    %v1757 = vpop.permute.xlu0 %1756
    %1758 = vrot.lane.b32.xlu0 %v1555, 18
    %v1759 = vpop.permute.xlu0 %1758
    %1760 = vrot.lane.b32.xlu0 %v1558, 18
    %v1761 = vpop.permute.xlu0 %1760
    %1762 = vrot.lane.b32.xlu0 %v1561, 18
    %v1763 = vpop.permute.xlu0 %1762
    %1764 = vrot.lane.b32.xlu0 %v1564, 18
    %v1765 = vpop.permute.xlu0 %1764
    %1766 = vrot.lane.b32.xlu0 %v1544, 18
    %v1767 = vpop.permute.xlu0 %1766
    %1768 = vrot.lane.b32.xlu0 %v1547, 18
    %v1769 = vpop.permute.xlu0 %1768
    %1770 = vrot.lane.b32.xlu0 %v1550, 18
    %v1771 = vpop.permute.xlu0 %1770
    %1772 = vrot.lane.b32.xlu0 %v1553, 18
    %v1773 = vpop.permute.xlu0 %1772
    %1774 = vrot.lane.b32.xlu0 %v1556, 18
    %v1775 = vpop.permute.xlu0 %1774
    %1776 = vrot.lane.b32.xlu0 %v1559, 18
    %v1777 = vpop.permute.xlu0 %1776
    %1778 = vrot.lane.b32.xlu0 %v1562, 18
    %v1779 = vpop.permute.xlu0 %1778
    %1780 = vrot.lane.b32.xlu0 %v1565, 18
    %v1781 = vpop.permute.xlu0 %1780
    %v1782 = vsel %vm310, %v1751, %v1767
    %v1783 = vsel %vm310, %v1753, %v1769
    %v1784 = vsel %vm310, %v1755, %v1771
    %v1785 = vsel %vm310, %v1757, %v1773
    %v1786 = vsel %vm310, %v1759, %v1775
    %v1787 = vsel %vm310, %v1761, %v1777
    %v1788 = vsel %vm310, %v1763, %v1779
    %v1789 = vsel %vm310, %v1765, %v1781
    %v1790 = vsel %vm310, %v1735, %v1751
    %v1791 = vsel %vm310, %v1737, %v1753
    %v1792 = vsel %vm310, %v1739, %v1755
    %v1793 = vsel %vm310, %v1741, %v1757
    %v1794 = vsel %vm310, %v1743, %v1759
    %v1795 = vsel %vm310, %v1745, %v1761
    %v1796 = vsel %vm310, %v1747, %v1763
    %v1797 = vsel %vm310, %v1749, %v1765
    %v1798 = vsel %vm310, %v1767, %v1735
    %v1799 = vsel %vm310, %v1769, %v1737
    %v1800 = vsel %vm310, %v1771, %v1739
    %v1801 = vsel %vm310, %v1773, %v1741
    %v1802 = vsel %vm310, %v1775, %v1743
    %v1803 = vsel %vm310, %v1777, %v1745
    %v1804 = vsel %vm310, %v1779, %v1747
    %v1805 = vsel %vm310, %v1781, %v1749
    %v1806 = vpack.c.bf16 %v1799, %v1798
    %v1807 = vpack.c.bf16 %v1791, %v1790
    %v1808 = vpack.c.bf16 %v1783, %v1782
    %v1809 = vpack.c.bf16 %v1801, %v1800
    %v1810 = vpack.c.bf16 %v1793, %v1792
    %v1811 = vpack.c.bf16 %v1785, %v1784
    %v1812 = vpack.c.bf16 %v1803, %v1802
    %v1813 = vpack.c.bf16 %v1795, %v1794
    %v1814 = vpack.c.bf16 %v1787, %v1786
    %v1815 = vpack.c.bf16 %v1805, %v1804
    %v1816 = vpack.c.bf16 %v1797, %v1796
    %v1817 = vpack.c.bf16 %v1789, %v1788
    %v1830 = vunpack.c.l.b16 %v1806
    %v1831 = vunpack.c.l.b16 %v1807
    %v1832 = vunpack.c.l.b16 %v1808
    %v1833 = vunpack.c.h.b16 %v1806
    %v1834 = vunpack.c.h.b16 %v1807
    %v1835 = vunpack.c.h.b16 %v1808
    %v1836 = vunpack.c.l.b16 %v1809
    %v1837 = vunpack.c.l.b16 %v1810
    %v1838 = vunpack.c.l.b16 %v1811
    %v1839 = vunpack.c.h.b16 %v1809
    %v1840 = vunpack.c.h.b16 %v1810
    %v1841 = vunpack.c.h.b16 %v1811
    %v1842 = vunpack.c.l.b16 %v1812
    %v1843 = vunpack.c.l.b16 %v1813
    %v1844 = vunpack.c.l.b16 %v1814
    %v1845 = vunpack.c.h.b16 %v1812
    %v1846 = vunpack.c.h.b16 %v1813
    %v1847 = vunpack.c.h.b16 %v1814
    %v1848 = vunpack.c.l.b16 %v1815
    %v1849 = vunpack.c.l.b16 %v1816
    %v1850 = vunpack.c.l.b16 %v1817
    %v1851 = vunpack.c.h.b16 %v1815
    %v1852 = vunpack.c.h.b16 %v1816
    %v1853 = vunpack.c.h.b16 %v1817
    %v1854 = vpack.c.b16 %v1831, %v1830
    %v1855 = vpack.c.b16 %v1832, %v1832
    %v1856 = vpack.c.b16 %v1834, %v1833
    %v1857 = vpack.c.b16 %v1835, %v1835
    %v1858 = vpack.c.b16 %v1837, %v1836
    %v1859 = vpack.c.b16 %v1838, %v1838
    %v1860 = vpack.c.b16 %v1840, %v1839
    %v1861 = vpack.c.b16 %v1841, %v1841
    %v1862 = vpack.c.b16 %v1843, %v1842
    %v1863 = vpack.c.b16 %v1844, %v1844
    %v1864 = vpack.c.b16 %v1846, %v1845
    %v1865 = vpack.c.b16 %v1847, %v1847
    %v1866 = vpack.c.b16 %v1849, %v1848
    %v1867 = vpack.c.b16 %v1850, %v1850
    %v1868 = vpack.c.b16 %v1852, %v1851
    %v1869 = vpack.c.b16 %v1853, %v1853
    %1886 = vst [vmem:[#allocation2 + $0xcc] sm:$0xff] %v1854
    %1887 = vst [vmem:[#allocation2 + $0xd4] sm:$0xf] %v1855
    %1888 = vst [vmem:[#allocation2 + $0xe4] sm:$0xff] %v1856
    %1889 = vst [vmem:[#allocation2 + $0xec] sm:$0xf] %v1857
    %1890 = vst [vmem:[#allocation2 + $0xfc] sm:$0xff] %v1858
    %1891 = vst [vmem:[#allocation2 + $0x104] sm:$0xf] %v1859
    %1892 = vst [vmem:[#allocation2 + $0x114] sm:$0xff] %v1860
    %1893 = vst [vmem:[#allocation2 + $0x11c] sm:$0xf] %v1861
    %1894 = vst [vmem:[#allocation2 + $0x12c] sm:$0xff] %v1862
    %1895 = vst [vmem:[#allocation2 + $0x134] sm:$0xf] %v1863
    %1896 = vst [vmem:[#allocation2 + $0x144] sm:$0xff] %v1864
    %1897 = vst [vmem:[#allocation2 + $0x14c] sm:$0xf] %v1865
    %1898 = vst [vmem:[#allocation2 + $0x15c] sm:$0xff] %v1866
    %1899 = vst [vmem:[#allocation2 + $0x164] sm:$0xf] %v1867
    %1900 = vst [vmem:[#allocation2 + $0x174] sm:$0xff] %v1868
    %1901 = vst [vmem:[#allocation2 + $0x17c] sm:$0xf] %v1869
    %1902 = vrot.lane.b32.xlu0 %v1542, 17
    %v1903 = vpop.permute.xlu0 %1902
    %1904 = vrot.lane.b32.xlu0 %v1545, 17
    %v1905 = vpop.permute.xlu0 %1904
    %1906 = vrot.lane.b32.xlu0 %v1548, 17
    %v1907 = vpop.permute.xlu0 %1906
    %1908 = vrot.lane.b32.xlu0 %v1551, 17
    %v1909 = vpop.permute.xlu0 %1908
    %1910 = vrot.lane.b32.xlu0 %v1554, 17
    %v1911 = vpop.permute.xlu0 %1910
    %1912 = vrot.lane.b32.xlu0 %v1557, 17
    %v1913 = vpop.permute.xlu0 %1912
    %1914 = vrot.lane.b32.xlu0 %v1560, 17
    %v1915 = vpop.permute.xlu0 %1914
    %1916 = vrot.lane.b32.xlu0 %v1563, 17
    %v1917 = vpop.permute.xlu0 %1916
    %1918 = vrot.lane.b32.xlu0 %v1543, 17
    %v1919 = vpop.permute.xlu0 %1918
    %1920 = vrot.lane.b32.xlu0 %v1546, 17
    %v1921 = vpop.permute.xlu0 %1920
    %1922 = vrot.lane.b32.xlu0 %v1549, 17
    %v1923 = vpop.permute.xlu0 %1922
    %1924 = vrot.lane.b32.xlu0 %v1552, 17
    %v1925 = vpop.permute.xlu0 %1924
    %1926 = vrot.lane.b32.xlu0 %v1555, 17
    %v1927 = vpop.permute.xlu0 %1926
    %1928 = vrot.lane.b32.xlu0 %v1558, 17
    %v1929 = vpop.permute.xlu0 %1928
    %1930 = vrot.lane.b32.xlu0 %v1561, 17
    %v1931 = vpop.permute.xlu0 %1930
    %1932 = vrot.lane.b32.xlu0 %v1564, 17
    %v1933 = vpop.permute.xlu0 %1932
    %1934 = vrot.lane.b32.xlu0 %v1544, 17
    %v1935 = vpop.permute.xlu0 %1934
    %1936 = vrot.lane.b32.xlu0 %v1547, 17
    %v1937 = vpop.permute.xlu0 %1936
    %1938 = vrot.lane.b32.xlu0 %v1550, 17
    %v1939 = vpop.permute.xlu0 %1938
    %1940 = vrot.lane.b32.xlu0 %v1553, 17
    %v1941 = vpop.permute.xlu0 %1940
    %1942 = vrot.lane.b32.xlu0 %v1556, 17
    %v1943 = vpop.permute.xlu0 %1942
    %1944 = vrot.lane.b32.xlu0 %v1559, 17
    %v1945 = vpop.permute.xlu0 %1944
    %1946 = vrot.lane.b32.xlu0 %v1562, 17
    %v1947 = vpop.permute.xlu0 %1946
    %1948 = vrot.lane.b32.xlu0 %v1565, 17
    %v1949 = vpop.permute.xlu0 %1948
    %v1950 = vsel %vm479, %v1919, %v1935
    %v1951 = vsel %vm479, %v1921, %v1937
    %v1952 = vsel %vm479, %v1923, %v1939
    %v1953 = vsel %vm479, %v1925, %v1941
    %v1954 = vsel %vm479, %v1927, %v1943
    %v1955 = vsel %vm479, %v1929, %v1945
    %v1956 = vsel %vm479, %v1931, %v1947
    %v1957 = vsel %vm479, %v1933, %v1949
    %v1958 = vsel %vm479, %v1903, %v1919
    %v1959 = vsel %vm479, %v1905, %v1921
    %v1960 = vsel %vm479, %v1907, %v1923
    %v1961 = vsel %vm479, %v1909, %v1925
    %v1962 = vsel %vm479, %v1911, %v1927
    %v1963 = vsel %vm479, %v1913, %v1929
    %v1964 = vsel %vm479, %v1915, %v1931
    %v1965 = vsel %vm479, %v1917, %v1933
    %v1966 = vsel %vm479, %v1935, %v1903
    %v1967 = vsel %vm479, %v1937, %v1905
    %v1968 = vsel %vm479, %v1939, %v1907
    %v1969 = vsel %vm479, %v1941, %v1909
    %v1970 = vsel %vm479, %v1943, %v1911
    %v1971 = vsel %vm479, %v1945, %v1913
    %v1972 = vsel %vm479, %v1947, %v1915
    %v1973 = vsel %vm479, %v1949, %v1917
    %v1974 = vpack.c.bf16 %v1967, %v1966
    %v1975 = vpack.c.bf16 %v1959, %v1958
    %v1976 = vpack.c.bf16 %v1951, %v1950
    %v1977 = vpack.c.bf16 %v1969, %v1968
    %v1978 = vpack.c.bf16 %v1961, %v1960
    %v1979 = vpack.c.bf16 %v1953, %v1952
    %v1980 = vpack.c.bf16 %v1971, %v1970
    %v1981 = vpack.c.bf16 %v1963, %v1962
    %v1982 = vpack.c.bf16 %v1955, %v1954
    %v1983 = vpack.c.bf16 %v1973, %v1972
    %v1984 = vpack.c.bf16 %v1965, %v1964
    %v1985 = vpack.c.bf16 %v1957, %v1956
    %v1998 = vunpack.c.l.b16 %v1974
    %v1999 = vunpack.c.l.b16 %v1975
    %v2000 = vunpack.c.l.b16 %v1976
    %v2001 = vunpack.c.h.b16 %v1974
    %v2002 = vunpack.c.h.b16 %v1975
    %v2003 = vunpack.c.h.b16 %v1976
    %v2004 = vunpack.c.l.b16 %v1977
    %v2005 = vunpack.c.l.b16 %v1978
    %v2006 = vunpack.c.l.b16 %v1979
    %v2007 = vunpack.c.h.b16 %v1977
    %v2008 = vunpack.c.h.b16 %v1978
    %v2009 = vunpack.c.h.b16 %v1979
    %v2010 = vunpack.c.l.b16 %v1980
    %v2011 = vunpack.c.l.b16 %v1981
    %v2012 = vunpack.c.l.b16 %v1982
    %v2013 = vunpack.c.h.b16 %v1980
    %v2014 = vunpack.c.h.b16 %v1981
    %v2015 = vunpack.c.h.b16 %v1982
    %v2016 = vunpack.c.l.b16 %v1983
    %v2017 = vunpack.c.l.b16 %v1984
    %v2018 = vunpack.c.l.b16 %v1985
    %v2019 = vunpack.c.h.b16 %v1983
    %v2020 = vunpack.c.h.b16 %v1984
    %v2021 = vunpack.c.h.b16 %v1985
    %v2022 = vpack.c.b16 %v1999, %v1998
    %v2023 = vpack.c.b16 %v2000, %v2000
    %v2024 = vpack.c.b16 %v2002, %v2001
    %v2025 = vpack.c.b16 %v2003, %v2003
    %v2026 = vpack.c.b16 %v2005, %v2004
    %v2027 = vpack.c.b16 %v2006, %v2006
    %v2028 = vpack.c.b16 %v2008, %v2007
    %v2029 = vpack.c.b16 %v2009, %v2009
    %v2030 = vpack.c.b16 %v2011, %v2010
    %v2031 = vpack.c.b16 %v2012, %v2012
    %v2032 = vpack.c.b16 %v2014, %v2013
    %v2033 = vpack.c.b16 %v2015, %v2015
    %v2034 = vpack.c.b16 %v2017, %v2016
    %v2035 = vpack.c.b16 %v2018, %v2018
    %v2036 = vpack.c.b16 %v2020, %v2019
    %v2037 = vpack.c.b16 %v2021, %v2021
    %2054 = vst [vmem:[#allocation2 + $0x18c] sm:$0xff] %v2022
    %2055 = vst [vmem:[#allocation2 + $0x194] sm:$0xf] %v2023
    %2056 = vst [vmem:[#allocation2 + $0x1a4] sm:$0xff] %v2024
    %2057 = vst [vmem:[#allocation2 + $0x1ac] sm:$0xf] %v2025
    %2058 = vst [vmem:[#allocation2 + $0x1bc] sm:$0xff] %v2026
    %2059 = vst [vmem:[#allocation2 + $0x1c4] sm:$0xf] %v2027
    %2060 = vst [vmem:[#allocation2 + $0x1d4] sm:$0xff] %v2028
    %2061 = vst [vmem:[#allocation2 + $0x1dc] sm:$0xf] %v2029
    %2062 = vst [vmem:[#allocation2 + $0x1ec] sm:$0xff] %v2030
    %2063 = vst [vmem:[#allocation2 + $0x1f4] sm:$0xf] %v2031
    %2064 = vst [vmem:[#allocation2 + $0x204] sm:$0xff] %v2032
    %2065 = vst [vmem:[#allocation2 + $0x20c] sm:$0xf] %v2033
    %2066 = vst [vmem:[#allocation2 + $0x21c] sm:$0xff] %v2034
    %2067 = vst [vmem:[#allocation2 + $0x224] sm:$0xf] %v2035
    %2068 = vst [vmem:[#allocation2 + $0x234] sm:$0xff] %v2036
    %2069 = vst [vmem:[#allocation2 + $0x23c] sm:$0xf] %v2037
    %2070 = vrot.lane.b32.xlu0 %v1542, 1
    %v2071 = vpop.permute.xlu0 %2070
    %2072 = vrot.lane.b32.xlu0 %v1545, 1
    %v2073 = vpop.permute.xlu0 %2072
    %2074 = vrot.lane.b32.xlu0 %v1548, 1
    %v2075 = vpop.permute.xlu0 %2074
    %2076 = vrot.lane.b32.xlu0 %v1551, 1
    %v2077 = vpop.permute.xlu0 %2076
    %2078 = vrot.lane.b32.xlu0 %v1554, 1
    %v2079 = vpop.permute.xlu0 %2078
    %2080 = vrot.lane.b32.xlu0 %v1557, 1
    %v2081 = vpop.permute.xlu0 %2080
    %2082 = vrot.lane.b32.xlu0 %v1560, 1
    %v2083 = vpop.permute.xlu0 %2082
    %2084 = vrot.lane.b32.xlu0 %v1563, 1
    %v2085 = vpop.permute.xlu0 %2084
    %2086 = vrot.lane.b32.xlu0 %v1543, 1
    %v2087 = vpop.permute.xlu0 %2086
    %2088 = vrot.lane.b32.xlu0 %v1546, 1
    %v2089 = vpop.permute.xlu0 %2088
    %2090 = vrot.lane.b32.xlu0 %v1549, 1
    %v2091 = vpop.permute.xlu0 %2090
    %2092 = vrot.lane.b32.xlu0 %v1552, 1
    %v2093 = vpop.permute.xlu0 %2092
    %2094 = vrot.lane.b32.xlu0 %v1555, 1
    %v2095 = vpop.permute.xlu0 %2094
    %2096 = vrot.lane.b32.xlu0 %v1558, 1
    %v2097 = vpop.permute.xlu0 %2096
    %2098 = vrot.lane.b32.xlu0 %v1561, 1
    %v2099 = vpop.permute.xlu0 %2098
    %2100 = vrot.lane.b32.xlu0 %v1564, 1
    %v2101 = vpop.permute.xlu0 %2100
    %2102 = vrot.lane.b32.xlu0 %v1544, 1
    %v2103 = vpop.permute.xlu0 %2102
    %2104 = vrot.lane.b32.xlu0 %v1547, 1
    %v2105 = vpop.permute.xlu0 %2104
    %2106 = vrot.lane.b32.xlu0 %v1550, 1
    %v2107 = vpop.permute.xlu0 %2106
    %2108 = vrot.lane.b32.xlu0 %v1553, 1
    %v2109 = vpop.permute.xlu0 %2108
    %2110 = vrot.lane.b32.xlu0 %v1556, 1
    %v2111 = vpop.permute.xlu0 %2110
    %2112 = vrot.lane.b32.xlu0 %v1559, 1
    %v2113 = vpop.permute.xlu0 %2112
    %2114 = vrot.lane.b32.xlu0 %v1562, 1
    %v2115 = vpop.permute.xlu0 %2114
    %2116 = vrot.lane.b32.xlu0 %v1565, 1
    %v2117 = vpop.permute.xlu0 %2116
    %v2118 = vsel %vm648, %v2087, %v2103
    %v2119 = vsel %vm648, %v2089, %v2105
    %v2120 = vsel %vm648, %v2091, %v2107
    %v2121 = vsel %vm648, %v2093, %v2109
    %v2122 = vsel %vm648, %v2095, %v2111
    %v2123 = vsel %vm648, %v2097, %v2113
    %v2124 = vsel %vm648, %v2099, %v2115
    %v2125 = vsel %vm648, %v2101, %v2117
    %v2126 = vsel %vm648, %v2071, %v2087
    %v2127 = vsel %vm648, %v2073, %v2089
    %v2128 = vsel %vm648, %v2075, %v2091
    %v2129 = vsel %vm648, %v2077, %v2093
    %v2130 = vsel %vm648, %v2079, %v2095
    %v2131 = vsel %vm648, %v2081, %v2097
    %v2132 = vsel %vm648, %v2083, %v2099
    %v2133 = vsel %vm648, %v2085, %v2101
    %v2134 = vsel %vm648, %v2103, %v2071
    %v2135 = vsel %vm648, %v2105, %v2073
    %v2136 = vsel %vm648, %v2107, %v2075
    %v2137 = vsel %vm648, %v2109, %v2077
    %v2138 = vsel %vm648, %v2111, %v2079
    %v2139 = vsel %vm648, %v2113, %v2081
    %v2140 = vsel %vm648, %v2115, %v2083
    %v2141 = vsel %vm648, %v2117, %v2085
    %v2142 = vpack.c.bf16 %v2135, %v2134
    %v2143 = vpack.c.bf16 %v2127, %v2126
    %v2144 = vpack.c.bf16 %v2119, %v2118
    %v2145 = vpack.c.bf16 %v2137, %v2136
    %v2146 = vpack.c.bf16 %v2129, %v2128
    %v2147 = vpack.c.bf16 %v2121, %v2120
    %v2148 = vpack.c.bf16 %v2139, %v2138
    %v2149 = vpack.c.bf16 %v2131, %v2130
    %v2150 = vpack.c.bf16 %v2123, %v2122
    %v2151 = vpack.c.bf16 %v2141, %v2140
    %v2152 = vpack.c.bf16 %v2133, %v2132
    %v2153 = vpack.c.bf16 %v2125, %v2124
    %v2166 = vunpack.c.l.b16 %v2142
    %v2167 = vunpack.c.l.b16 %v2143
    %v2168 = vunpack.c.l.b16 %v2144
    %v2169 = vunpack.c.h.b16 %v2142
    %v2170 = vunpack.c.h.b16 %v2143
    %v2171 = vunpack.c.h.b16 %v2144
    %v2172 = vunpack.c.l.b16 %v2145
    %v2173 = vunpack.c.l.b16 %v2146
    %v2174 = vunpack.c.l.b16 %v2147
    %v2175 = vunpack.c.h.b16 %v2145
    %v2176 = vunpack.c.h.b16 %v2146
    %v2177 = vunpack.c.h.b16 %v2147
    %v2178 = vunpack.c.l.b16 %v2148
    %v2179 = vunpack.c.l.b16 %v2149
    %v2180 = vunpack.c.l.b16 %v2150
    %v2181 = vunpack.c.h.b16 %v2148
    %v2182 = vunpack.c.h.b16 %v2149
    %v2183 = vunpack.c.h.b16 %v2150
    %v2184 = vunpack.c.l.b16 %v2151
    %v2185 = vunpack.c.l.b16 %v2152
    %v2186 = vunpack.c.l.b16 %v2153
    %v2187 = vunpack.c.h.b16 %v2151
    %v2188 = vunpack.c.h.b16 %v2152
    %v2189 = vunpack.c.h.b16 %v2153
    %v2190 = vpack.c.b16 %v2167, %v2166
    %v2191 = vpack.c.b16 %v2168, %v2168
    %v2192 = vpack.c.b16 %v2170, %v2169
    %v2193 = vpack.c.b16 %v2171, %v2171
    %v2194 = vpack.c.b16 %v2173, %v2172
    %v2195 = vpack.c.b16 %v2174, %v2174
    %v2196 = vpack.c.b16 %v2176, %v2175
    %v2197 = vpack.c.b16 %v2177, %v2177
    %v2198 = vpack.c.b16 %v2179, %v2178
    %v2199 = vpack.c.b16 %v2180, %v2180
    %v2200 = vpack.c.b16 %v2182, %v2181
    %v2201 = vpack.c.b16 %v2183, %v2183
    %v2202 = vpack.c.b16 %v2185, %v2184
    %v2203 = vpack.c.b16 %v2186, %v2186
    %v2204 = vpack.c.b16 %v2188, %v2187
    %v2205 = vpack.c.b16 %v2189, %v2189
    %2222 = vst [vmem:[#allocation2 + $0x24c] sm:$0xff] %v2190
    %2223 = vst [vmem:[#allocation2 + $0x254] sm:$0xf] %v2191
    %2224 = vst [vmem:[#allocation2 + $0x264] sm:$0xff] %v2192
    %2225 = vst [vmem:[#allocation2 + $0x26c] sm:$0xf] %v2193
    %2226 = vst [vmem:[#allocation2 + $0x27c] sm:$0xff] %v2194
    %2227 = vst [vmem:[#allocation2 + $0x284] sm:$0xf] %v2195
    %2228 = vst [vmem:[#allocation2 + $0x294] sm:$0xff] %v2196
    %2229 = vst [vmem:[#allocation2 + $0x29c] sm:$0xf] %v2197
    %2230 = vst [vmem:[#allocation2 + $0x2ac] sm:$0xff] %v2198
    %2231 = vst [vmem:[#allocation2 + $0x2b4] sm:$0xf] %v2199
    %2232 = vst [vmem:[#allocation2 + $0x2c4] sm:$0xff] %v2200
    %2233 = vst [vmem:[#allocation2 + $0x2cc] sm:$0xf] %v2201
    %2234 = vst [vmem:[#allocation2 + $0x2dc] sm:$0xff] %v2202
    %2235 = vst [vmem:[#allocation2 + $0x2e4] sm:$0xf] %v2203
    %2236 = vst [vmem:[#allocation2 + $0x2f4] sm:$0xff] %v2204
    %2237 = vst [vmem:[#allocation2 + $0x2fc] sm:$0xf] %v2205
    %v2238 = vpack.c.bf16 %v1545, %v1542
    %v2239 = vpack.c.bf16 %v1546, %v1543
    %v2240 = vpack.c.bf16 %v1547, %v1544
    %v2241 = vpack.c.bf16 %v1551, %v1548
    %v2242 = vpack.c.bf16 %v1552, %v1549
    %v2243 = vpack.c.bf16 %v1553, %v1550
    %v2244 = vpack.c.bf16 %v1557, %v1554
    %v2245 = vpack.c.bf16 %v1558, %v1555
    %v2246 = vpack.c.bf16 %v1559, %v1556
    %v2247 = vpack.c.bf16 %v1563, %v1560
    %v2248 = vpack.c.bf16 %v1564, %v1561
    %v2249 = vpack.c.bf16 %v1565, %v1562
    %v2262 = vunpack.c.l.b16 %v2238
    %v2263 = vunpack.c.l.b16 %v2239
    %v2264 = vunpack.c.l.b16 %v2240
    %v2265 = vunpack.c.h.b16 %v2238
    %v2266 = vunpack.c.h.b16 %v2239
    %v2267 = vunpack.c.h.b16 %v2240
    %v2268 = vunpack.c.l.b16 %v2241
    %v2269 = vunpack.c.l.b16 %v2242
    %v2270 = vunpack.c.l.b16 %v2243
    %v2271 = vunpack.c.h.b16 %v2241
    %v2272 = vunpack.c.h.b16 %v2242
    %v2273 = vunpack.c.h.b16 %v2243
    %v2274 = vunpack.c.l.b16 %v2244
    %v2275 = vunpack.c.l.b16 %v2245
    %v2276 = vunpack.c.l.b16 %v2246
    %v2277 = vunpack.c.h.b16 %v2244
    %v2278 = vunpack.c.h.b16 %v2245
    %v2279 = vunpack.c.h.b16 %v2246
    %v2280 = vunpack.c.l.b16 %v2247
    %v2281 = vunpack.c.l.b16 %v2248
    %v2282 = vunpack.c.l.b16 %v2249
    %v2283 = vunpack.c.h.b16 %v2247
    %v2284 = vunpack.c.h.b16 %v2248
    %v2285 = vunpack.c.h.b16 %v2249
    %v2286 = vpack.c.b16 %v2263, %v2262
    %v2287 = vpack.c.b16 %v2264, %v2264
    %v2288 = vpack.c.b16 %v2266, %v2265
    %v2289 = vpack.c.b16 %v2267, %v2267
    %v2290 = vpack.c.b16 %v2269, %v2268
    %v2291 = vpack.c.b16 %v2270, %v2270
    %v2292 = vpack.c.b16 %v2272, %v2271
    %v2293 = vpack.c.b16 %v2273, %v2273
    %v2294 = vpack.c.b16 %v2275, %v2274
    %v2295 = vpack.c.b16 %v2276, %v2276
    %v2296 = vpack.c.b16 %v2278, %v2277
    %v2297 = vpack.c.b16 %v2279, %v2279
    %v2298 = vpack.c.b16 %v2281, %v2280
    %v2299 = vpack.c.b16 %v2282, %v2282
    %v2300 = vpack.c.b16 %v2284, %v2283
    %v2301 = vpack.c.b16 %v2285, %v2285
    %2318 = vst [vmem:[#allocation2 + $0x30c] sm:$0xff] %v2286
    %2319 = vst [vmem:[#allocation2 + $0x314] sm:$0xf] %v2287
    %2320 = vst [vmem:[#allocation2 + $0x324] sm:$0xff] %v2288
    %2321 = vst [vmem:[#allocation2 + $0x32c] sm:$0xf] %v2289
    %2322 = vst [vmem:[#allocation2 + $0x33c] sm:$0xff] %v2290
    %2323 = vst [vmem:[#allocation2 + $0x344] sm:$0xf] %v2291
    %2324 = vst [vmem:[#allocation2 + $0x354] sm:$0xff] %v2292
    %2325 = vst [vmem:[#allocation2 + $0x35c] sm:$0xf] %v2293
    %2326 = vst [vmem:[#allocation2 + $0x36c] sm:$0xff] %v2294
    %2327 = vst [vmem:[#allocation2 + $0x374] sm:$0xf] %v2295
    %2328 = vst [vmem:[#allocation2 + $0x384] sm:$0xff] %v2296
    %2329 = vst [vmem:[#allocation2 + $0x38c] sm:$0xf] %v2297
    %2330 = vst [vmem:[#allocation2 + $0x39c] sm:$0xff] %v2298
    %2331 = vst [vmem:[#allocation2 + $0x3a4] sm:$0xf] %v2299
    %2332 = vst [vmem:[#allocation2 + $0x3b4] sm:$0xff] %v2300
    %2333 = vst [vmem:[#allocation2 + $0x3bc] sm:$0xf] %v2301
    %2334 = vrot.lane.b32.xlu0 %v1542, 127
    %v2335 = vpop.permute.xlu0 %2334
    %2336 = vrot.lane.b32.xlu0 %v1545, 127
    %v2337 = vpop.permute.xlu0 %2336
    %2338 = vrot.lane.b32.xlu0 %v1548, 127
    %v2339 = vpop.permute.xlu0 %2338
    %2340 = vrot.lane.b32.xlu0 %v1551, 127
    %v2341 = vpop.permute.xlu0 %2340
    %2342 = vrot.lane.b32.xlu0 %v1554, 127
    %v2343 = vpop.permute.xlu0 %2342
    %2344 = vrot.lane.b32.xlu0 %v1557, 127
    %v2345 = vpop.permute.xlu0 %2344
    %2346 = vrot.lane.b32.xlu0 %v1560, 127
    %v2347 = vpop.permute.xlu0 %2346
    %2348 = vrot.lane.b32.xlu0 %v1563, 127
    %v2349 = vpop.permute.xlu0 %2348
    %2350 = vrot.lane.b32.xlu0 %v1543, 127
    %v2351 = vpop.permute.xlu0 %2350
    %2352 = vrot.lane.b32.xlu0 %v1546, 127
    %v2353 = vpop.permute.xlu0 %2352
    %2354 = vrot.lane.b32.xlu0 %v1549, 127
    %v2355 = vpop.permute.xlu0 %2354
    %2356 = vrot.lane.b32.xlu0 %v1552, 127
    %v2357 = vpop.permute.xlu0 %2356
    %2358 = vrot.lane.b32.xlu0 %v1555, 127
    %v2359 = vpop.permute.xlu0 %2358
    %2360 = vrot.lane.b32.xlu0 %v1558, 127
    %v2361 = vpop.permute.xlu0 %2360
    %2362 = vrot.lane.b32.xlu0 %v1561, 127
    %v2363 = vpop.permute.xlu0 %2362
    %2364 = vrot.lane.b32.xlu0 %v1564, 127
    %v2365 = vpop.permute.xlu0 %2364
    %2366 = vrot.lane.b32.xlu0 %v1544, 127
    %v2367 = vpop.permute.xlu0 %2366
    %2368 = vrot.lane.b32.xlu0 %v1547, 127
    %v2369 = vpop.permute.xlu0 %2368
    %2370 = vrot.lane.b32.xlu0 %v1550, 127
    %v2371 = vpop.permute.xlu0 %2370
    %2372 = vrot.lane.b32.xlu0 %v1553, 127
    %v2373 = vpop.permute.xlu0 %2372
    %2374 = vrot.lane.b32.xlu0 %v1556, 127
    %v2375 = vpop.permute.xlu0 %2374
    %2376 = vrot.lane.b32.xlu0 %v1559, 127
    %v2377 = vpop.permute.xlu0 %2376
    %2378 = vrot.lane.b32.xlu0 %v1562, 127
    %v2379 = vpop.permute.xlu0 %2378
    %2380 = vrot.lane.b32.xlu0 %v1565, 127
    %v2381 = vpop.permute.xlu0 %2380
    %v2382 = vsel %vm913, %v2351, %v2367
    %v2383 = vsel %vm913, %v2353, %v2369
    %v2384 = vsel %vm913, %v2355, %v2371
    %v2385 = vsel %vm913, %v2357, %v2373
    %v2386 = vsel %vm913, %v2359, %v2375
    %v2387 = vsel %vm913, %v2361, %v2377
    %v2388 = vsel %vm913, %v2363, %v2379
    %v2389 = vsel %vm913, %v2365, %v2381
    %v2390 = vsel %vm913, %v2335, %v2351
    %v2391 = vsel %vm913, %v2337, %v2353
    %v2392 = vsel %vm913, %v2339, %v2355
    %v2393 = vsel %vm913, %v2341, %v2357
    %v2394 = vsel %vm913, %v2343, %v2359
    %v2395 = vsel %vm913, %v2345, %v2361
    %v2396 = vsel %vm913, %v2347, %v2363
    %v2397 = vsel %vm913, %v2349, %v2365
    %v2398 = vsel %vm913, %v2367, %v2335
    %v2399 = vsel %vm913, %v2369, %v2337
    %v2400 = vsel %vm913, %v2371, %v2339
    %v2401 = vsel %vm913, %v2373, %v2341
    %v2402 = vsel %vm913, %v2375, %v2343
    %v2403 = vsel %vm913, %v2377, %v2345
    %v2404 = vsel %vm913, %v2379, %v2347
    %v2405 = vsel %vm913, %v2381, %v2349
    %v2406 = vpack.c.bf16 %v2391, %v2390
    %v2407 = vpack.c.bf16 %v2383, %v2382
    %v2408 = vpack.c.bf16 %v2399, %v2398
    %v2409 = vpack.c.bf16 %v2393, %v2392
    %v2410 = vpack.c.bf16 %v2385, %v2384
    %v2411 = vpack.c.bf16 %v2401, %v2400
    %v2412 = vpack.c.bf16 %v2395, %v2394
    %v2413 = vpack.c.bf16 %v2387, %v2386
    %v2414 = vpack.c.bf16 %v2403, %v2402
    %v2415 = vpack.c.bf16 %v2397, %v2396
    %v2416 = vpack.c.bf16 %v2389, %v2388
    %v2417 = vpack.c.bf16 %v2405, %v2404
    %v2430 = vunpack.c.l.b16 %v2406
    %v2431 = vunpack.c.l.b16 %v2407
    %v2432 = vunpack.c.l.b16 %v2408
    %v2433 = vunpack.c.h.b16 %v2406
    %v2434 = vunpack.c.h.b16 %v2407
    %v2435 = vunpack.c.h.b16 %v2408
    %v2436 = vunpack.c.l.b16 %v2409
    %v2437 = vunpack.c.l.b16 %v2410
    %v2438 = vunpack.c.l.b16 %v2411
    %v2439 = vunpack.c.h.b16 %v2409
    %v2440 = vunpack.c.h.b16 %v2410
    %v2441 = vunpack.c.h.b16 %v2411
    %v2442 = vunpack.c.l.b16 %v2412
    %v2443 = vunpack.c.l.b16 %v2413
    %v2444 = vunpack.c.l.b16 %v2414
    %v2445 = vunpack.c.h.b16 %v2412
    %v2446 = vunpack.c.h.b16 %v2413
    %v2447 = vunpack.c.h.b16 %v2414
    %v2448 = vunpack.c.l.b16 %v2415
    %v2449 = vunpack.c.l.b16 %v2416
    %v2450 = vunpack.c.l.b16 %v2417
    %v2451 = vunpack.c.h.b16 %v2415
    %v2452 = vunpack.c.h.b16 %v2416
    %v2453 = vunpack.c.h.b16 %v2417
    %v2454 = vpack.c.b16 %v2431, %v2430
    %v2455 = vpack.c.b16 %v2432, %v2432
    %v2456 = vpack.c.b16 %v2434, %v2433
    %v2457 = vpack.c.b16 %v2435, %v2435
    %v2458 = vpack.c.b16 %v2437, %v2436
    %v2459 = vpack.c.b16 %v2438, %v2438
    %v2460 = vpack.c.b16 %v2440, %v2439
    %v2461 = vpack.c.b16 %v2441, %v2441
    %v2462 = vpack.c.b16 %v2443, %v2442
    %v2463 = vpack.c.b16 %v2444, %v2444
    %v2464 = vpack.c.b16 %v2446, %v2445
    %v2465 = vpack.c.b16 %v2447, %v2447
    %v2466 = vpack.c.b16 %v2449, %v2448
    %v2467 = vpack.c.b16 %v2450, %v2450
    %v2468 = vpack.c.b16 %v2452, %v2451
    %v2469 = vpack.c.b16 %v2453, %v2453
    %2486 = vst [vmem:[#allocation2 + $0x3cc] sm:$0xff] %v2454
    %2487 = vst [vmem:[#allocation2 + $0x3d4] sm:$0xf] %v2455
    %2488 = vst [vmem:[#allocation2 + $0x3e4] sm:$0xff] %v2456
    %2489 = vst [vmem:[#allocation2 + $0x3ec] sm:$0xf] %v2457
    %2490 = vst [vmem:[#allocation2 + $0x3fc] sm:$0xff] %v2458
    %2491 = vst [vmem:[#allocation2 + $0x404] sm:$0xf] %v2459
    %2492 = vst [vmem:[#allocation2 + $0x414] sm:$0xff] %v2460
    %2493 = vst [vmem:[#allocation2 + $0x41c] sm:$0xf] %v2461
    %2494 = vst [vmem:[#allocation2 + $0x42c] sm:$0xff] %v2462
    %2495 = vst [vmem:[#allocation2 + $0x434] sm:$0xf] %v2463
    %2496 = vst [vmem:[#allocation2 + $0x444] sm:$0xff] %v2464
    %2497 = vst [vmem:[#allocation2 + $0x44c] sm:$0xf] %v2465
    %2498 = vst [vmem:[#allocation2 + $0x45c] sm:$0xff] %v2466
    %2499 = vst [vmem:[#allocation2 + $0x464] sm:$0xf] %v2467
    %2500 = vst [vmem:[#allocation2 + $0x474] sm:$0xff] %v2468
    %2501 = vst [vmem:[#allocation2 + $0x47c] sm:$0xf] %v2469
    %2502 = vrot.lane.b32.xlu0 %v1542, 111
    %v2503 = vpop.permute.xlu0 %2502
    %2504 = vrot.lane.b32.xlu0 %v1545, 111
    %v2505 = vpop.permute.xlu0 %2504
    %2506 = vrot.lane.b32.xlu0 %v1548, 111
    %v2507 = vpop.permute.xlu0 %2506
    %2508 = vrot.lane.b32.xlu0 %v1551, 111
    %v2509 = vpop.permute.xlu0 %2508
    %2510 = vrot.lane.b32.xlu0 %v1554, 111
    %v2511 = vpop.permute.xlu0 %2510
    %2512 = vrot.lane.b32.xlu0 %v1557, 111
    %v2513 = vpop.permute.xlu0 %2512
    %2514 = vrot.lane.b32.xlu0 %v1560, 111
    %v2515 = vpop.permute.xlu0 %2514
    %2516 = vrot.lane.b32.xlu0 %v1563, 111
    %v2517 = vpop.permute.xlu0 %2516
    %2518 = vrot.lane.b32.xlu0 %v1543, 111
    %v2519 = vpop.permute.xlu0 %2518
    %2520 = vrot.lane.b32.xlu0 %v1546, 111
    %v2521 = vpop.permute.xlu0 %2520
    %2522 = vrot.lane.b32.xlu0 %v1549, 111
    %v2523 = vpop.permute.xlu0 %2522
    %2524 = vrot.lane.b32.xlu0 %v1552, 111
    %v2525 = vpop.permute.xlu0 %2524
    %2526 = vrot.lane.b32.xlu0 %v1555, 111
    %v2527 = vpop.permute.xlu0 %2526
    %2528 = vrot.lane.b32.xlu0 %v1558, 111
    %v2529 = vpop.permute.xlu0 %2528
    %2530 = vrot.lane.b32.xlu0 %v1561, 111
    %v2531 = vpop.permute.xlu0 %2530
    %2532 = vrot.lane.b32.xlu0 %v1564, 111
    %v2533 = vpop.permute.xlu0 %2532
    %2534 = vrot.lane.b32.xlu0 %v1544, 111
    %v2535 = vpop.permute.xlu0 %2534
    %2536 = vrot.lane.b32.xlu0 %v1547, 111
    %v2537 = vpop.permute.xlu0 %2536
    %2538 = vrot.lane.b32.xlu0 %v1550, 111
    %v2539 = vpop.permute.xlu0 %2538
    %2540 = vrot.lane.b32.xlu0 %v1553, 111
    %v2541 = vpop.permute.xlu0 %2540
    %2542 = vrot.lane.b32.xlu0 %v1556, 111
    %v2543 = vpop.permute.xlu0 %2542
    %2544 = vrot.lane.b32.xlu0 %v1559, 111
    %v2545 = vpop.permute.xlu0 %2544
    %2546 = vrot.lane.b32.xlu0 %v1562, 111
    %v2547 = vpop.permute.xlu0 %2546
    %2548 = vrot.lane.b32.xlu0 %v1565, 111
    %v2549 = vpop.permute.xlu0 %2548
    %v2550 = vsel %vm1082, %v2519, %v2535
    %v2551 = vsel %vm1082, %v2521, %v2537
    %v2552 = vsel %vm1082, %v2523, %v2539
    %v2553 = vsel %vm1082, %v2525, %v2541
    %v2554 = vsel %vm1082, %v2527, %v2543
    %v2555 = vsel %vm1082, %v2529, %v2545
    %v2556 = vsel %vm1082, %v2531, %v2547
    %v2557 = vsel %vm1082, %v2533, %v2549
    %v2558 = vsel %vm1082, %v2503, %v2519
    %v2559 = vsel %vm1082, %v2505, %v2521
    %v2560 = vsel %vm1082, %v2507, %v2523
    %v2561 = vsel %vm1082, %v2509, %v2525
    %v2562 = vsel %vm1082, %v2511, %v2527
    %v2563 = vsel %vm1082, %v2513, %v2529
    %v2564 = vsel %vm1082, %v2515, %v2531
    %v2565 = vsel %vm1082, %v2517, %v2533
    %v2566 = vsel %vm1082, %v2535, %v2503
    %v2567 = vsel %vm1082, %v2537, %v2505
    %v2568 = vsel %vm1082, %v2539, %v2507
    %v2569 = vsel %vm1082, %v2541, %v2509
    %v2570 = vsel %vm1082, %v2543, %v2511
    %v2571 = vsel %vm1082, %v2545, %v2513
    %v2572 = vsel %vm1082, %v2547, %v2515
    %v2573 = vsel %vm1082, %v2549, %v2517
    %v2574 = vpack.c.bf16 %v2559, %v2558
    %v2575 = vpack.c.bf16 %v2551, %v2550
    %v2576 = vpack.c.bf16 %v2567, %v2566
    %v2577 = vpack.c.bf16 %v2561, %v2560
    %v2578 = vpack.c.bf16 %v2553, %v2552
    %v2579 = vpack.c.bf16 %v2569, %v2568
    %v2580 = vpack.c.bf16 %v2563, %v2562
    %v2581 = vpack.c.bf16 %v2555, %v2554
    %v2582 = vpack.c.bf16 %v2571, %v2570
    %v2583 = vpack.c.bf16 %v2565, %v2564
    %v2584 = vpack.c.bf16 %v2557, %v2556
    %v2585 = vpack.c.bf16 %v2573, %v2572
    %v2598 = vunpack.c.l.b16 %v2574
    %v2599 = vunpack.c.l.b16 %v2575
    %v2600 = vunpack.c.l.b16 %v2576
    %v2601 = vunpack.c.h.b16 %v2574
    %v2602 = vunpack.c.h.b16 %v2575
    %v2603 = vunpack.c.h.b16 %v2576
    %v2604 = vunpack.c.l.b16 %v2577
    %v2605 = vunpack.c.l.b16 %v2578
    %v2606 = vunpack.c.l.b16 %v2579
    %v2607 = vunpack.c.h.b16 %v2577
    %v2608 = vunpack.c.h.b16 %v2578
    %v2609 = vunpack.c.h.b16 %v2579
    %v2610 = vunpack.c.l.b16 %v2580
    %v2611 = vunpack.c.l.b16 %v2581
    %v2612 = vunpack.c.l.b16 %v2582
    %v2613 = vunpack.c.h.b16 %v2580
    %v2614 = vunpack.c.h.b16 %v2581
    %v2615 = vunpack.c.h.b16 %v2582
    %v2616 = vunpack.c.l.b16 %v2583
    %v2617 = vunpack.c.l.b16 %v2584
    %v2618 = vunpack.c.l.b16 %v2585
    %v2619 = vunpack.c.h.b16 %v2583
    %v2620 = vunpack.c.h.b16 %v2584
    %v2621 = vunpack.c.h.b16 %v2585
    %v2622 = vpack.c.b16 %v2599, %v2598
    %v2623 = vpack.c.b16 %v2600, %v2600
    %v2624 = vpack.c.b16 %v2602, %v2601
    %v2625 = vpack.c.b16 %v2603, %v2603
    %v2626 = vpack.c.b16 %v2605, %v2604
    %v2627 = vpack.c.b16 %v2606, %v2606
    %v2628 = vpack.c.b16 %v2608, %v2607
    %v2629 = vpack.c.b16 %v2609, %v2609
    %v2630 = vpack.c.b16 %v2611, %v2610
    %v2631 = vpack.c.b16 %v2612, %v2612
    %v2632 = vpack.c.b16 %v2614, %v2613
    %v2633 = vpack.c.b16 %v2615, %v2615
    %v2634 = vpack.c.b16 %v2617, %v2616
    %v2635 = vpack.c.b16 %v2618, %v2618
    %v2636 = vpack.c.b16 %v2620, %v2619
    %v2637 = vpack.c.b16 %v2621, %v2621
    %2654 = vst [vmem:[#allocation2 + $0x48c] sm:$0xff] %v2622
    %2655 = vst [vmem:[#allocation2 + $0x494] sm:$0xf] %v2623
    %2656 = vst [vmem:[#allocation2 + $0x4a4] sm:$0xff] %v2624
    %2657 = vst [vmem:[#allocation2 + $0x4ac] sm:$0xf] %v2625
    %2658 = vst [vmem:[#allocation2 + $0x4bc] sm:$0xff] %v2626
    %2659 = vst [vmem:[#allocation2 + $0x4c4] sm:$0xf] %v2627
    %2660 = vst [vmem:[#allocation2 + $0x4d4] sm:$0xff] %v2628
    %2661 = vst [vmem:[#allocation2 + $0x4dc] sm:$0xf] %v2629
    %2662 = vst [vmem:[#allocation2 + $0x4ec] sm:$0xff] %v2630
    %2663 = vst [vmem:[#allocation2 + $0x4f4] sm:$0xf] %v2631
    %2664 = vst [vmem:[#allocation2 + $0x504] sm:$0xff] %v2632
    %2665 = vst [vmem:[#allocation2 + $0x50c] sm:$0xf] %v2633
    %2666 = vst [vmem:[#allocation2 + $0x51c] sm:$0xff] %v2634
    %2667 = vst [vmem:[#allocation2 + $0x524] sm:$0xf] %v2635
    %2668 = vst [vmem:[#allocation2 + $0x534] sm:$0xff] %v2636
    %2669 = vst [vmem:[#allocation2 + $0x53c] sm:$0xf] %v2637
    %2670 = vrot.lane.b32.xlu0 %v1542, 110
    %v2671 = vpop.permute.xlu0 %2670
    %2672 = vrot.lane.b32.xlu0 %v1545, 110
    %v2673 = vpop.permute.xlu0 %2672
    %2674 = vrot.lane.b32.xlu0 %v1548, 110
    %v2675 = vpop.permute.xlu0 %2674
    %2676 = vrot.lane.b32.xlu0 %v1551, 110
    %v2677 = vpop.permute.xlu0 %2676
    %2678 = vrot.lane.b32.xlu0 %v1554, 110
    %v2679 = vpop.permute.xlu0 %2678
    %2680 = vrot.lane.b32.xlu0 %v1557, 110
    %v2681 = vpop.permute.xlu0 %2680
    %2682 = vrot.lane.b32.xlu0 %v1560, 110
    %v2683 = vpop.permute.xlu0 %2682
    %2684 = vrot.lane.b32.xlu0 %v1563, 110
    %v2685 = vpop.permute.xlu0 %2684
    %2686 = vrot.lane.b32.xlu0 %v1543, 110
    %v2687 = vpop.permute.xlu0 %2686
    %2688 = vrot.lane.b32.xlu0 %v1546, 110
    %v2689 = vpop.permute.xlu0 %2688
    %2690 = vrot.lane.b32.xlu0 %v1549, 110
    %v2691 = vpop.permute.xlu0 %2690
    %2692 = vrot.lane.b32.xlu0 %v1552, 110
    %v2693 = vpop.permute.xlu0 %2692
    %2694 = vrot.lane.b32.xlu0 %v1555, 110
    %v2695 = vpop.permute.xlu0 %2694
    %2696 = vrot.lane.b32.xlu0 %v1558, 110
    %v2697 = vpop.permute.xlu0 %2696
    %2698 = vrot.lane.b32.xlu0 %v1561, 110
    %v2699 = vpop.permute.xlu0 %2698
    %2700 = vrot.lane.b32.xlu0 %v1564, 110
    %v2701 = vpop.permute.xlu0 %2700
    %2702 = vrot.lane.b32.xlu0 %v1544, 110
    %v2703 = vpop.permute.xlu0 %2702
    %2704 = vrot.lane.b32.xlu0 %v1547, 110
    %v2705 = vpop.permute.xlu0 %2704
    %2706 = vrot.lane.b32.xlu0 %v1550, 110
    %v2707 = vpop.permute.xlu0 %2706
    %2708 = vrot.lane.b32.xlu0 %v1553, 110
    %v2709 = vpop.permute.xlu0 %2708
    %2710 = vrot.lane.b32.xlu0 %v1556, 110
    %v2711 = vpop.permute.xlu0 %2710
    %2712 = vrot.lane.b32.xlu0 %v1559, 110
    %v2713 = vpop.permute.xlu0 %2712
    %2714 = vrot.lane.b32.xlu0 %v1562, 110
    %v2715 = vpop.permute.xlu0 %2714
    %2716 = vrot.lane.b32.xlu0 %v1565, 110
    %v2717 = vpop.permute.xlu0 %2716
    %v2718 = vsel %vm1251, %v2687, %v2703
    %v2719 = vsel %vm1251, %v2689, %v2705
    %v2720 = vsel %vm1251, %v2691, %v2707
    %v2721 = vsel %vm1251, %v2693, %v2709
    %v2722 = vsel %vm1251, %v2695, %v2711
    %v2723 = vsel %vm1251, %v2697, %v2713
    %v2724 = vsel %vm1251, %v2699, %v2715
    %v2725 = vsel %vm1251, %v2701, %v2717
    %v2726 = vsel %vm1251, %v2671, %v2687
    %v2727 = vsel %vm1251, %v2673, %v2689
    %v2728 = vsel %vm1251, %v2675, %v2691
    %v2729 = vsel %vm1251, %v2677, %v2693
    %v2730 = vsel %vm1251, %v2679, %v2695
    %v2731 = vsel %vm1251, %v2681, %v2697
    %v2732 = vsel %vm1251, %v2683, %v2699
    %v2733 = vsel %vm1251, %v2685, %v2701
    %v2734 = vsel %vm1251, %v2703, %v2671
    %v2735 = vsel %vm1251, %v2705, %v2673
    %v2736 = vsel %vm1251, %v2707, %v2675
    %v2737 = vsel %vm1251, %v2709, %v2677
    %v2738 = vsel %vm1251, %v2711, %v2679
    %v2739 = vsel %vm1251, %v2713, %v2681
    %v2740 = vsel %vm1251, %v2715, %v2683
    %v2741 = vsel %vm1251, %v2717, %v2685
    %v2742 = vpack.c.bf16 %v2727, %v2726
    %v2743 = vpack.c.bf16 %v2719, %v2718
    %v2744 = vpack.c.bf16 %v2735, %v2734
    %v2745 = vpack.c.bf16 %v2729, %v2728
    %v2746 = vpack.c.bf16 %v2721, %v2720
    %v2747 = vpack.c.bf16 %v2737, %v2736
    %v2748 = vpack.c.bf16 %v2731, %v2730
    %v2749 = vpack.c.bf16 %v2723, %v2722
    %v2750 = vpack.c.bf16 %v2739, %v2738
    %v2751 = vpack.c.bf16 %v2733, %v2732
    %v2752 = vpack.c.bf16 %v2725, %v2724
    %v2753 = vpack.c.bf16 %v2741, %v2740
    %v2766 = vunpack.c.l.b16 %v2742
    %v2767 = vunpack.c.l.b16 %v2743
    %v2768 = vunpack.c.l.b16 %v2744
    %v2769 = vunpack.c.h.b16 %v2742
    %v2770 = vunpack.c.h.b16 %v2743
    %v2771 = vunpack.c.h.b16 %v2744
    %v2772 = vunpack.c.l.b16 %v2745
    %v2773 = vunpack.c.l.b16 %v2746
    %v2774 = vunpack.c.l.b16 %v2747
    %v2775 = vunpack.c.h.b16 %v2745
    %v2776 = vunpack.c.h.b16 %v2746
    %v2777 = vunpack.c.h.b16 %v2747
    %v2778 = vunpack.c.l.b16 %v2748
    %v2779 = vunpack.c.l.b16 %v2749
    %v2780 = vunpack.c.l.b16 %v2750
    %v2781 = vunpack.c.h.b16 %v2748
    %v2782 = vunpack.c.h.b16 %v2749
    %v2783 = vunpack.c.h.b16 %v2750
    %v2784 = vunpack.c.l.b16 %v2751
    %v2785 = vunpack.c.l.b16 %v2752
    %v2786 = vunpack.c.l.b16 %v2753
    %v2787 = vunpack.c.h.b16 %v2751
    %v2788 = vunpack.c.h.b16 %v2752
    %v2789 = vunpack.c.h.b16 %v2753
    %v2790 = vpack.c.b16 %v2767, %v2766
    %v2791 = vpack.c.b16 %v2768, %v2768
    %v2792 = vpack.c.b16 %v2770, %v2769
    %v2793 = vpack.c.b16 %v2771, %v2771
    %v2794 = vpack.c.b16 %v2773, %v2772
    %v2795 = vpack.c.b16 %v2774, %v2774
    %v2796 = vpack.c.b16 %v2776, %v2775
    %v2797 = vpack.c.b16 %v2777, %v2777
    %v2798 = vpack.c.b16 %v2779, %v2778
    %v2799 = vpack.c.b16 %v2780, %v2780
    %v2800 = vpack.c.b16 %v2782, %v2781
    %v2801 = vpack.c.b16 %v2783, %v2783
    %v2802 = vpack.c.b16 %v2785, %v2784
    %v2803 = vpack.c.b16 %v2786, %v2786
    %v2804 = vpack.c.b16 %v2788, %v2787
    %v2805 = vpack.c.b16 %v2789, %v2789
    %2822 = vst [vmem:[#allocation2 + $0x54c] sm:$0xff] %v2790
    %2823 = vst [vmem:[#allocation2 + $0x554] sm:$0xf] %v2791
    %2824 = vst [vmem:[#allocation2 + $0x564] sm:$0xff] %v2792
    %2825 = vst [vmem:[#allocation2 + $0x56c] sm:$0xf] %v2793
    %2826 = vst [vmem:[#allocation2 + $0x57c] sm:$0xff] %v2794
    %2827 = vst [vmem:[#allocation2 + $0x584] sm:$0xf] %v2795
    %2828 = vst [vmem:[#allocation2 + $0x594] sm:$0xff] %v2796
    %2829 = vst [vmem:[#allocation2 + $0x59c] sm:$0xf] %v2797
    %2830 = vst [vmem:[#allocation2 + $0x5ac] sm:$0xff] %v2798
    %2831 = vst [vmem:[#allocation2 + $0x5b4] sm:$0xf] %v2799
    %2832 = vst [vmem:[#allocation2 + $0x5c4] sm:$0xff] %v2800
    %2833 = vst [vmem:[#allocation2 + $0x5cc] sm:$0xf] %v2801
    %2834 = vst [vmem:[#allocation2 + $0x5dc] sm:$0xff] %v2802
    %2835 = vst [vmem:[#allocation2 + $0x5e4] sm:$0xf] %v2803
    %2836 = vst [vmem:[#allocation2 + $0x5f4] sm:$0xff] %v2804
    %2837 = vst [vmem:[#allocation2 + $0x5fc] sm:$0xf] %v2805
    %2838 = vrot.lane.b32.xlu0 %v1542, 109
    %v2839 = vpop.permute.xlu0 %2838
    %2840 = vrot.lane.b32.xlu0 %v1545, 109
    %v2841 = vpop.permute.xlu0 %2840
    %2842 = vrot.lane.b32.xlu0 %v1548, 109
    %v2843 = vpop.permute.xlu0 %2842
    %2844 = vrot.lane.b32.xlu0 %v1551, 109
    %v2845 = vpop.permute.xlu0 %2844
    %2846 = vrot.lane.b32.xlu0 %v1554, 109
    %v2847 = vpop.permute.xlu0 %2846
    %2848 = vrot.lane.b32.xlu0 %v1557, 109
    %v2849 = vpop.permute.xlu0 %2848
    %2850 = vrot.lane.b32.xlu0 %v1560, 109
    %v2851 = vpop.permute.xlu0 %2850
    %2852 = vrot.lane.b32.xlu0 %v1563, 109
    %v2853 = vpop.permute.xlu0 %2852
    %2854 = vrot.lane.b32.xlu0 %v1543, 109
    %v2855 = vpop.permute.xlu0 %2854
    %2856 = vrot.lane.b32.xlu0 %v1546, 109
    %v2857 = vpop.permute.xlu0 %2856
    %2858 = vrot.lane.b32.xlu0 %v1549, 109
    %v2859 = vpop.permute.xlu0 %2858
    %2860 = vrot.lane.b32.xlu0 %v1552, 109
    %v2861 = vpop.permute.xlu0 %2860
    %2862 = vrot.lane.b32.xlu0 %v1555, 109
    %v2863 = vpop.permute.xlu0 %2862
    %2864 = vrot.lane.b32.xlu0 %v1558, 109
    %v2865 = vpop.permute.xlu0 %2864
    %2866 = vrot.lane.b32.xlu0 %v1561, 109
    %v2867 = vpop.permute.xlu0 %2866
    %2868 = vrot.lane.b32.xlu0 %v1564, 109
    %v2869 = vpop.permute.xlu0 %2868
    %2870 = vrot.lane.b32.xlu0 %v1544, 109
    %v2871 = vpop.permute.xlu0 %2870
    %2872 = vrot.lane.b32.xlu0 %v1547, 109
    %v2873 = vpop.permute.xlu0 %2872
    %2874 = vrot.lane.b32.xlu0 %v1550, 109
    %v2875 = vpop.permute.xlu0 %2874
    %2876 = vrot.lane.b32.xlu0 %v1553, 109
    %v2877 = vpop.permute.xlu0 %2876
    %2878 = vrot.lane.b32.xlu0 %v1556, 109
    %v2879 = vpop.permute.xlu0 %2878
    %2880 = vrot.lane.b32.xlu0 %v1559, 109
    %v2881 = vpop.permute.xlu0 %2880
    %2882 = vrot.lane.b32.xlu0 %v1562, 109
    %v2883 = vpop.permute.xlu0 %2882
    %2884 = vrot.lane.b32.xlu0 %v1565, 109
    %v2885 = vpop.permute.xlu0 %2884
    %v2886 = vsel %vm1420, %v2855, %v2871
    %v2887 = vsel %vm1420, %v2857, %v2873
    %v2888 = vsel %vm1420, %v2859, %v2875
    %v2889 = vsel %vm1420, %v2861, %v2877
    %v2890 = vsel %vm1420, %v2863, %v2879
    %v2891 = vsel %vm1420, %v2865, %v2881
    %v2892 = vsel %vm1420, %v2867, %v2883
    %v2893 = vsel %vm1420, %v2869, %v2885
    %v2894 = vsel %vm1420, %v2839, %v2855
    %v2895 = vsel %vm1420, %v2841, %v2857
    %v2896 = vsel %vm1420, %v2843, %v2859
    %v2897 = vsel %vm1420, %v2845, %v2861
    %v2898 = vsel %vm1420, %v2847, %v2863
    %v2899 = vsel %vm1420, %v2849, %v2865
    %v2900 = vsel %vm1420, %v2851, %v2867
    %v2901 = vsel %vm1420, %v2853, %v2869
    %v2902 = vsel %vm1420, %v2871, %v2839
    %v2903 = vsel %vm1420, %v2873, %v2841
    %v2904 = vsel %vm1420, %v2875, %v2843
    %v2905 = vsel %vm1420, %v2877, %v2845
    %v2906 = vsel %vm1420, %v2879, %v2847
    %v2907 = vsel %vm1420, %v2881, %v2849
    %v2908 = vsel %vm1420, %v2883, %v2851
    %v2909 = vsel %vm1420, %v2885, %v2853
    %v2910 = vpack.c.bf16 %v2895, %v2894
    %v2911 = vpack.c.bf16 %v2887, %v2886
    %v2912 = vpack.c.bf16 %v2903, %v2902
    %v2913 = vpack.c.bf16 %v2897, %v2896
    %v2914 = vpack.c.bf16 %v2889, %v2888
    %v2915 = vpack.c.bf16 %v2905, %v2904
    %v2916 = vpack.c.bf16 %v2899, %v2898
    %v2917 = vpack.c.bf16 %v2891, %v2890
    %v2918 = vpack.c.bf16 %v2907, %v2906
    %v2919 = vpack.c.bf16 %v2901, %v2900
    %v2920 = vpack.c.bf16 %v2893, %v2892
    %v2921 = vpack.c.bf16 %v2909, %v2908
    %v2934 = vunpack.c.l.b16 %v2910
    %v2935 = vunpack.c.l.b16 %v2911
    %v2936 = vunpack.c.l.b16 %v2912
    %v2937 = vunpack.c.h.b16 %v2910
    %v2938 = vunpack.c.h.b16 %v2911
    %v2939 = vunpack.c.h.b16 %v2912
    %v2940 = vunpack.c.l.b16 %v2913
    %v2941 = vunpack.c.l.b16 %v2914
    %v2942 = vunpack.c.l.b16 %v2915
    %v2943 = vunpack.c.h.b16 %v2913
    %v2944 = vunpack.c.h.b16 %v2914
    %v2945 = vunpack.c.h.b16 %v2915
    %v2946 = vunpack.c.l.b16 %v2916
    %v2947 = vunpack.c.l.b16 %v2917
    %v2948 = vunpack.c.l.b16 %v2918
    %v2949 = vunpack.c.h.b16 %v2916
    %v2950 = vunpack.c.h.b16 %v2917
    %v2951 = vunpack.c.h.b16 %v2918
    %v2952 = vunpack.c.l.b16 %v2919
    %v2953 = vunpack.c.l.b16 %v2920
    %v2954 = vunpack.c.l.b16 %v2921
    %v2955 = vunpack.c.h.b16 %v2919
    %v2956 = vunpack.c.h.b16 %v2920
    %v2957 = vunpack.c.h.b16 %v2921
    %v2958 = vpack.c.b16 %v2935, %v2934
    %v2959 = vpack.c.b16 %v2936, %v2936
    %v2960 = vpack.c.b16 %v2938, %v2937
    %v2961 = vpack.c.b16 %v2939, %v2939
    %v2962 = vpack.c.b16 %v2941, %v2940
    %v2963 = vpack.c.b16 %v2942, %v2942
    %v2964 = vpack.c.b16 %v2944, %v2943
    %v2965 = vpack.c.b16 %v2945, %v2945
    %v2966 = vpack.c.b16 %v2947, %v2946
    %v2967 = vpack.c.b16 %v2948, %v2948
    %v2968 = vpack.c.b16 %v2950, %v2949
    %v2969 = vpack.c.b16 %v2951, %v2951
    %v2970 = vpack.c.b16 %v2953, %v2952
    %v2971 = vpack.c.b16 %v2954, %v2954
    %v2972 = vpack.c.b16 %v2956, %v2955
    %v2973 = vpack.c.b16 %v2957, %v2957
    %2990 = vst [vmem:[#allocation2 + $0x60c] sm:$0xff] %v2958
    %2991 = vst [vmem:[#allocation2 + $0x614] sm:$0xf] %v2959
    %2992 = vst [vmem:[#allocation2 + $0x624] sm:$0xff] %v2960
    %2993 = vst [vmem:[#allocation2 + $0x62c] sm:$0xf] %v2961
    %2994 = vst [vmem:[#allocation2 + $0x63c] sm:$0xff] %v2962
    %2995 = vst [vmem:[#allocation2 + $0x644] sm:$0xf] %v2963
    %2996 = vst [vmem:[#allocation2 + $0x654] sm:$0xff] %v2964
    %2997 = vst [vmem:[#allocation2 + $0x65c] sm:$0xf] %v2965
    %2998 = vst [vmem:[#allocation2 + $0x66c] sm:$0xff] %v2966
    %2999 = vst [vmem:[#allocation2 + $0x674] sm:$0xf] %v2967
    %3000 = vst [vmem:[#allocation2 + $0x684] sm:$0xff] %v2968
    %3001 = vst [vmem:[#allocation2 + $0x68c] sm:$0xf] %v2969
    %3002 = vst [vmem:[#allocation2 + $0x69c] sm:$0xff] %v2970
    %3003 = vst [vmem:[#allocation2 + $0x6a4] sm:$0xf] %v2971
    %3004 = vst [vmem:[#allocation2 + $0x6b4] sm:$0xff] %v2972
    %3005 = vst [vmem:[#allocation2 + $0x6bc] sm:$0xf] %v2973
    %v3006 = vld [vmem:[#allocation6] sm:$0xff]
    %v3007 = vld [vmem:[#allocation6 + $0x8] sm:$0xff]
    %v3008 = vld [vmem:[#allocation6 + $0x10] sm:$0xf]
    %v3009 = vld [vmem:[#allocation6 + $0x14] sm:$0xff]
    %v3010 = vld [vmem:[#allocation6 + $0x1c] sm:$0xff]
    %v3011 = vld [vmem:[#allocation6 + $0x24] sm:$0xf]
    %v3012 = vld [vmem:[#allocation6 + $0x28] sm:$0xff]
    %v3013 = vld [vmem:[#allocation6 + $0x30] sm:$0xff]
    %v3014 = vld [vmem:[#allocation6 + $0x38] sm:$0xf]
    %v3015 = vld [vmem:[#allocation6 + $0x3c] sm:$0xff]
    %v3016 = vld [vmem:[#allocation6 + $0x44] sm:$0xff]
    %v3017 = vld [vmem:[#allocation6 + $0x4c] sm:$0xf]
    %v3018 = vld [vmem:[#allocation6 + $0x50] sm:$0xff]
    %v3019 = vld [vmem:[#allocation6 + $0x58] sm:$0xff]
    %v3020 = vld [vmem:[#allocation6 + $0x60] sm:$0xf]
    %v3021 = vld [vmem:[#allocation6 + $0x64] sm:$0xff]
    %v3022 = vld [vmem:[#allocation6 + $0x6c] sm:$0xff]
    %v3023 = vld [vmem:[#allocation6 + $0x74] sm:$0xf]
    %v3024 = vld [vmem:[#allocation6 + $0x78] sm:$0xff]
    %v3025 = vld [vmem:[#allocation6 + $0x80] sm:$0xff]
    %v3026 = vld [vmem:[#allocation6 + $0x88] sm:$0xf]
    %v3027 = vld [vmem:[#allocation6 + $0x8c] sm:$0xff]
    %v3028 = vld [vmem:[#allocation6 + $0x94] sm:$0xff]
    %v3029 = vld [vmem:[#allocation6 + $0x9c] sm:$0xf]
    %v3030 = vld [vmem:[#allocation2] sm:$0xff]
    %v3031 = vld [vmem:[#allocation2 + $0x8] sm:$0xff]
    %v3032 = vld [vmem:[#allocation2 + $0x10] sm:$0xff]
    %v3033 = vld [vmem:[#allocation2 + $0x18] sm:$0xff]
    %v3034 = vld [vmem:[#allocation2 + $0x20] sm:$0xff]
    %v3035 = vld [vmem:[#allocation2 + $0x28] sm:$0xff]
    %v3036 = vld [vmem:[#allocation2 + $0x30] sm:$0xff]
    %v3037 = vld [vmem:[#allocation2 + $0x38] sm:$0xff]
    %v3038 = vld [vmem:[#allocation2 + $0x40] sm:$0xff]
    %v3039 = vld [vmem:[#allocation2 + $0x48] sm:$0xff]
    %v3040 = vld [vmem:[#allocation2 + $0x50] sm:$0xff]
    %v3041 = vld [vmem:[#allocation2 + $0x58] sm:$0xff]
    %v3042 = vld [vmem:[#allocation2 + $0x60] sm:$0xff]
    %v3043 = vld [vmem:[#allocation2 + $0x68] sm:$0xff]
    %v3044 = vld [vmem:[#allocation2 + $0x70] sm:$0xff]
    %v3045 = vld [vmem:[#allocation2 + $0x78] sm:$0xff]
    %v3046 = vld [vmem:[#allocation2 + $0x80] sm:$0xff]
    %v3047 = vld [vmem:[#allocation2 + $0x88] sm:$0xff]
    %v3048 = vld [vmem:[#allocation2 + $0x90] sm:$0xff]
    %v3049 = vld [vmem:[#allocation2 + $0x98] sm:$0xff]
    %v3050 = vld [vmem:[#allocation2 + $0xa0] sm:$0xff]
    %v3051 = vld [vmem:[#allocation2 + $0xa8] sm:$0xff]
    %v3052 = vld [vmem:[#allocation2 + $0xb0] sm:$0xff]
    %v3053 = vld [vmem:[#allocation2 + $0xb8] sm:$0xff]
    %v3054 = vld [vmem:[#allocation2 + $0xc0] sm:$0xff]
    %v3055 = vld [vmem:[#allocation2 + $0xc8] sm:$0xff]
    %v3056 = vld [vmem:[#allocation2 + $0xd0] sm:$0xff]
    %v3057 = vld [vmem:[#allocation2 + $0xd8] sm:$0xff]
    %v3058 = vld [vmem:[#allocation2 + $0xe0] sm:$0xff]
    %v3059 = vld [vmem:[#allocation2 + $0xe8] sm:$0xff]
    %v3060 = vld [vmem:[#allocation2 + $0xf0] sm:$0xff]
    %v3061 = vld [vmem:[#allocation2 + $0xf8] sm:$0xff]
    %v3062 = vld [vmem:[#allocation2 + $0x100] sm:$0xff]
    %v3063 = vld [vmem:[#allocation2 + $0x108] sm:$0xff]
    %v3064 = vld [vmem:[#allocation2 + $0x110] sm:$0xff]
    %v3065 = vld [vmem:[#allocation2 + $0x118] sm:$0xff]
    %v3066 = vld [vmem:[#allocation2 + $0x120] sm:$0xff]
    %v3067 = vld [vmem:[#allocation2 + $0x128] sm:$0xff]
    %v3068 = vld [vmem:[#allocation2 + $0x130] sm:$0xff]
    %v3069 = vld [vmem:[#allocation2 + $0x138] sm:$0xff]
    %v3070 = vld [vmem:[#allocation2 + $0x140] sm:$0xff]
    %v3071 = vld [vmem:[#allocation2 + $0x148] sm:$0xff]
    %v3072 = vld [vmem:[#allocation2 + $0x150] sm:$0xff]
    %v3073 = vld [vmem:[#allocation2 + $0x158] sm:$0xff]
    %v3074 = vld [vmem:[#allocation2 + $0x160] sm:$0xff]
    %v3075 = vld [vmem:[#allocation2 + $0x168] sm:$0xff]
    %v3076 = vld [vmem:[#allocation2 + $0x170] sm:$0xff]
    %v3077 = vld [vmem:[#allocation2 + $0x178] sm:$0xff]
    %v3078 = vld [vmem:[#allocation2 + $0x180] sm:$0xff]
    %v3079 = vld [vmem:[#allocation2 + $0x188] sm:$0xff]
    %v3080 = vld [vmem:[#allocation2 + $0x190] sm:$0xff]
    %v3081 = vld [vmem:[#allocation2 + $0x198] sm:$0xff]
    %v3082 = vld [vmem:[#allocation2 + $0x1a0] sm:$0xff]
    %v3083 = vld [vmem:[#allocation2 + $0x1a8] sm:$0xff]
    %v3084 = vld [vmem:[#allocation2 + $0x1b0] sm:$0xff]
    %v3085 = vld [vmem:[#allocation2 + $0x1b8] sm:$0xff]
    %v3086 = vld [vmem:[#allocation2 + $0x1c0] sm:$0xff]
    %v3087 = vld [vmem:[#allocation2 + $0x1c8] sm:$0xff]
    %v3088 = vld [vmem:[#allocation2 + $0x1d0] sm:$0xff]
    %v3089 = vld [vmem:[#allocation2 + $0x1d8] sm:$0xff]
    %v3090 = vld [vmem:[#allocation2 + $0x1e0] sm:$0xff]
    %v3091 = vld [vmem:[#allocation2 + $0x1e8] sm:$0xff]
    %v3092 = vld [vmem:[#allocation2 + $0x1f0] sm:$0xff]
    %v3093 = vld [vmem:[#allocation2 + $0x1f8] sm:$0xff]
    %v3094 = vld [vmem:[#allocation2 + $0x200] sm:$0xff]
    %v3095 = vld [vmem:[#allocation2 + $0x208] sm:$0xff]
    %v3096 = vld [vmem:[#allocation2 + $0x210] sm:$0xff]
    %v3097 = vld [vmem:[#allocation2 + $0x218] sm:$0xff]
    %v3098 = vld [vmem:[#allocation2 + $0x220] sm:$0xff]
    %v3099 = vld [vmem:[#allocation2 + $0x228] sm:$0xff]
    %v3100 = vld [vmem:[#allocation2 + $0x230] sm:$0xff]
    %v3101 = vld [vmem:[#allocation2 + $0x238] sm:$0xff]
    %v3102 = vld [vmem:[#allocation2 + $0x240] sm:$0xff]
    %v3103 = vld [vmem:[#allocation2 + $0x248] sm:$0xff]
    %v3104 = vld [vmem:[#allocation2 + $0x250] sm:$0xff]
    %v3105 = vld [vmem:[#allocation2 + $0x258] sm:$0xff]
    %v3106 = vld [vmem:[#allocation2 + $0x260] sm:$0xff]
    %v3107 = vld [vmem:[#allocation2 + $0x268] sm:$0xff]
    %v3108 = vld [vmem:[#allocation2 + $0x270] sm:$0xff]
    %v3109 = vld [vmem:[#allocation2 + $0x278] sm:$0xff]
    %v3110 = vld [vmem:[#allocation2 + $0x280] sm:$0xff]
    %v3111 = vld [vmem:[#allocation2 + $0x288] sm:$0xff]
    %v3112 = vld [vmem:[#allocation2 + $0x290] sm:$0xff]
    %v3113 = vld [vmem:[#allocation2 + $0x298] sm:$0xff]
    %v3114 = vld [vmem:[#allocation2 + $0x2a0] sm:$0xff]
    %v3115 = vld [vmem:[#allocation2 + $0x2a8] sm:$0xff]
    %v3116 = vld [vmem:[#allocation2 + $0x2b0] sm:$0xff]
    %v3117 = vld [vmem:[#allocation2 + $0x2b8] sm:$0xff]
    %v3118 = vld [vmem:[#allocation2 + $0x2c0] sm:$0xff]
    %v3119 = vld [vmem:[#allocation2 + $0x2c8] sm:$0xff]
    %v3120 = vld [vmem:[#allocation2 + $0x2d0] sm:$0xff]
    %v3121 = vld [vmem:[#allocation2 + $0x2d8] sm:$0xff]
    %v3122 = vld [vmem:[#allocation2 + $0x2e0] sm:$0xff]
    %v3123 = vld [vmem:[#allocation2 + $0x2e8] sm:$0xff]
    %v3124 = vld [vmem:[#allocation2 + $0x2f0] sm:$0xff]
    %v3125 = vld [vmem:[#allocation2 + $0x2f8] sm:$0xff]
    %v3126 = vld [vmem:[#allocation2 + $0x300] sm:$0xff]
    %v3127 = vld [vmem:[#allocation2 + $0x308] sm:$0xff]
    %v3128 = vld [vmem:[#allocation2 + $0x310] sm:$0xff]
    %v3129 = vld [vmem:[#allocation2 + $0x318] sm:$0xff]
    %v3130 = vld [vmem:[#allocation2 + $0x320] sm:$0xff]
    %v3131 = vld [vmem:[#allocation2 + $0x328] sm:$0xff]
    %v3132 = vld [vmem:[#allocation2 + $0x330] sm:$0xff]
    %v3133 = vld [vmem:[#allocation2 + $0x338] sm:$0xff]
    %v3134 = vld [vmem:[#allocation2 + $0x340] sm:$0xff]
    %v3135 = vld [vmem:[#allocation2 + $0x348] sm:$0xff]
    %v3136 = vld [vmem:[#allocation2 + $0x350] sm:$0xff]
    %v3137 = vld [vmem:[#allocation2 + $0x358] sm:$0xff]
    %v3138 = vld [vmem:[#allocation2 + $0x360] sm:$0xff]
    %v3139 = vld [vmem:[#allocation2 + $0x368] sm:$0xff]
    %v3140 = vld [vmem:[#allocation2 + $0x370] sm:$0xff]
    %v3141 = vld [vmem:[#allocation2 + $0x378] sm:$0xff]
    %v3142 = vld [vmem:[#allocation2 + $0x380] sm:$0xff]
    %v3143 = vld [vmem:[#allocation2 + $0x388] sm:$0xff]
    %v3144 = vld [vmem:[#allocation2 + $0x390] sm:$0xff]
    %v3145 = vld [vmem:[#allocation2 + $0x398] sm:$0xff]
    %v3146 = vld [vmem:[#allocation2 + $0x3a0] sm:$0xff]
    %v3147 = vld [vmem:[#allocation2 + $0x3a8] sm:$0xff]
    %v3148 = vld [vmem:[#allocation2 + $0x3b0] sm:$0xff]
    %v3149 = vld [vmem:[#allocation2 + $0x3b8] sm:$0xff]
    %v3150 = vld [vmem:[#allocation2 + $0x3c0] sm:$0xff]
    %v3151 = vld [vmem:[#allocation2 + $0x3c8] sm:$0xff]
    %v3152 = vld [vmem:[#allocation2 + $0x3d0] sm:$0xff]
    %v3153 = vld [vmem:[#allocation2 + $0x3d8] sm:$0xff]
    %v3154 = vld [vmem:[#allocation2 + $0x3e0] sm:$0xff]
    %v3155 = vld [vmem:[#allocation2 + $0x3e8] sm:$0xff]
    %v3156 = vld [vmem:[#allocation2 + $0x3f0] sm:$0xff]
    %v3157 = vld [vmem:[#allocation2 + $0x3f8] sm:$0xff]
    %v3158 = vld [vmem:[#allocation2 + $0x400] sm:$0xff]
    %v3159 = vld [vmem:[#allocation2 + $0x408] sm:$0xff]
    %v3160 = vld [vmem:[#allocation2 + $0x410] sm:$0xff]
    %v3161 = vld [vmem:[#allocation2 + $0x418] sm:$0xff]
    %v3162 = vld [vmem:[#allocation2 + $0x420] sm:$0xff]
    %v3163 = vld [vmem:[#allocation2 + $0x428] sm:$0xff]
    %v3164 = vld [vmem:[#allocation2 + $0x430] sm:$0xff]
    %v3165 = vld [vmem:[#allocation2 + $0x438] sm:$0xff]
    %v3166 = vld [vmem:[#allocation2 + $0x440] sm:$0xff]
    %v3167 = vld [vmem:[#allocation2 + $0x448] sm:$0xff]
    %v3168 = vld [vmem:[#allocation2 + $0x450] sm:$0xff]
    %v3169 = vld [vmem:[#allocation2 + $0x458] sm:$0xff]
    %v3170 = vld [vmem:[#allocation2 + $0x460] sm:$0xff]
    %v3171 = vld [vmem:[#allocation2 + $0x468] sm:$0xff]
    %v3172 = vld [vmem:[#allocation2 + $0x470] sm:$0xff]
    %v3173 = vld [vmem:[#allocation2 + $0x478] sm:$0xff]
    %v3174 = vld [vmem:[#allocation2 + $0x480] sm:$0xff]
    %v3175 = vld [vmem:[#allocation2 + $0x488] sm:$0xff]
    %v3176 = vld [vmem:[#allocation2 + $0x490] sm:$0xff]
    %v3177 = vld [vmem:[#allocation2 + $0x498] sm:$0xff]
    %v3178 = vld [vmem:[#allocation2 + $0x4a0] sm:$0xff]
    %v3179 = vld [vmem:[#allocation2 + $0x4a8] sm:$0xff]
    %v3180 = vld [vmem:[#allocation2 + $0x4b0] sm:$0xff]
    %v3181 = vld [vmem:[#allocation2 + $0x4b8] sm:$0xff]
    %v3182 = vld [vmem:[#allocation2 + $0x4c0] sm:$0xff]
    %v3183 = vld [vmem:[#allocation2 + $0x4c8] sm:$0xff]
    %v3184 = vld [vmem:[#allocation2 + $0x4d0] sm:$0xff]
    %v3185 = vld [vmem:[#allocation2 + $0x4d8] sm:$0xff]
    %v3186 = vld [vmem:[#allocation2 + $0x4e0] sm:$0xff]
    %v3187 = vld [vmem:[#allocation2 + $0x4e8] sm:$0xff]
    %v3188 = vld [vmem:[#allocation2 + $0x4f0] sm:$0xff]
    %v3189 = vld [vmem:[#allocation2 + $0x4f8] sm:$0xff]
    %v3190 = vld [vmem:[#allocation2 + $0x500] sm:$0xff]
    %v3191 = vld [vmem:[#allocation2 + $0x508] sm:$0xff]
    %v3192 = vld [vmem:[#allocation2 + $0x510] sm:$0xff]
    %v3193 = vld [vmem:[#allocation2 + $0x518] sm:$0xff]
    %v3194 = vld [vmem:[#allocation2 + $0x520] sm:$0xff]
    %v3195 = vld [vmem:[#allocation2 + $0x528] sm:$0xff]
    %v3196 = vld [vmem:[#allocation2 + $0x530] sm:$0xff]
    %v3197 = vld [vmem:[#allocation2 + $0x538] sm:$0xff]
    %v3198 = vld [vmem:[#allocation2 + $0x540] sm:$0xff]
    %v3199 = vld [vmem:[#allocation2 + $0x548] sm:$0xff]
    %v3200 = vld [vmem:[#allocation2 + $0x550] sm:$0xff]
    %v3201 = vld [vmem:[#allocation2 + $0x558] sm:$0xff]
    %v3202 = vld [vmem:[#allocation2 + $0x560] sm:$0xff]
    %v3203 = vld [vmem:[#allocation2 + $0x568] sm:$0xff]
    %v3204 = vld [vmem:[#allocation2 + $0x570] sm:$0xff]
    %v3205 = vld [vmem:[#allocation2 + $0x578] sm:$0xff]
    %v3206 = vld [vmem:[#allocation2 + $0x580] sm:$0xff]
    %v3207 = vld [vmem:[#allocation2 + $0x588] sm:$0xff]
    %v3208 = vld [vmem:[#allocation2 + $0x590] sm:$0xff]
    %v3209 = vld [vmem:[#allocation2 + $0x598] sm:$0xff]
    %v3210 = vld [vmem:[#allocation2 + $0x5a0] sm:$0xff]
    %v3211 = vld [vmem:[#allocation2 + $0x5a8] sm:$0xff]
    %v3212 = vld [vmem:[#allocation2 + $0x5b0] sm:$0xff]
    %v3213 = vld [vmem:[#allocation2 + $0x5b8] sm:$0xff]
    %v3214 = vld [vmem:[#allocation2 + $0x5c0] sm:$0xff]
    %v3215 = vld [vmem:[#allocation2 + $0x5c8] sm:$0xff]
    %v3216 = vld [vmem:[#allocation2 + $0x5d0] sm:$0xff]
    %v3217 = vld [vmem:[#allocation2 + $0x5d8] sm:$0xff]
    %v3218 = vld [vmem:[#allocation2 + $0x5e0] sm:$0xff]
    %v3219 = vld [vmem:[#allocation2 + $0x5e8] sm:$0xff]
    %v3220 = vld [vmem:[#allocation2 + $0x5f0] sm:$0xff]
    %v3221 = vld [vmem:[#allocation2 + $0x5f8] sm:$0xff]
    %v3222 = vld [vmem:[#allocation2 + $0x600] sm:$0xff]
    %v3223 = vld [vmem:[#allocation2 + $0x608] sm:$0xff]
    %v3224 = vld [vmem:[#allocation2 + $0x610] sm:$0xff]
    %v3225 = vld [vmem:[#allocation2 + $0x618] sm:$0xff]
    %v3226 = vld [vmem:[#allocation2 + $0x620] sm:$0xff]
    %v3227 = vld [vmem:[#allocation2 + $0x628] sm:$0xff]
    %v3228 = vld [vmem:[#allocation2 + $0x630] sm:$0xff]
    %v3229 = vld [vmem:[#allocation2 + $0x638] sm:$0xff]
    %v3230 = vld [vmem:[#allocation2 + $0x640] sm:$0xff]
    %v3231 = vld [vmem:[#allocation2 + $0x648] sm:$0xff]
    %v3232 = vld [vmem:[#allocation2 + $0x650] sm:$0xff]
    %v3233 = vld [vmem:[#allocation2 + $0x658] sm:$0xff]
    %v3234 = vld [vmem:[#allocation2 + $0x660] sm:$0xff]
    %v3235 = vld [vmem:[#allocation2 + $0x668] sm:$0xff]
    %v3236 = vld [vmem:[#allocation2 + $0x670] sm:$0xff]
    %v3237 = vld [vmem:[#allocation2 + $0x678] sm:$0xff]
    %v3238 = vld [vmem:[#allocation2 + $0x680] sm:$0xff]
    %v3239 = vld [vmem:[#allocation2 + $0x688] sm:$0xff]
    %v3240 = vld [vmem:[#allocation2 + $0x690] sm:$0xff]
    %v3241 = vld [vmem:[#allocation2 + $0x698] sm:$0xff]
    %v3242 = vld [vmem:[#allocation2 + $0x6a0] sm:$0xff]
    %v3243 = vld [vmem:[#allocation2 + $0x6a8] sm:$0xff]
    %v3244 = vld [vmem:[#allocation2 + $0x6b0] sm:$0xff]
    %v3245 = vld [vmem:[#allocation2 + $0x6b8] sm:$0xff]
    %v3246 = vld [vmem:[%s2] sm:$0xff]
    %v3247 = vld [vmem:[%s2 + $0x8] sm:$0xff]
    %v3248 = vld [vmem:[%s2 + $0x10] sm:$0xff]
    %v3249 = vld [vmem:[%s2 + $0x18] sm:$0xff]
    %v3250 = vld [vmem:[%s2 + $0x20] sm:$0xff]
    %v3251 = vld [vmem:[%s2 + $0x28] sm:$0xff]
    %v3252 = vld [vmem:[%s2 + $0x30] sm:$0xff]
    %v3253 = vld [vmem:[%s2 + $0x38] sm:$0xff]
    %3255 = vset.pattern.permute.xlu0 0
    %3256 = vperm.xlu0 %3255, %v3246
    %v3257 = vpop.permute.xlu0 %3256
    %3260 = vset.pattern.permute.xlu0 0
    %3261 = vperm.xlu0 %3260, %v3247
    %v3262 = vpop.permute.xlu0 %3261
    %3265 = vset.pattern.permute.xlu0 0
    %3266 = vperm.xlu0 %3265, %v3248
    %v3267 = vpop.permute.xlu0 %3266
    %3270 = vset.pattern.permute.xlu0 0
    %3271 = vperm.xlu0 %3270, %v3249
    %v3272 = vpop.permute.xlu0 %3271
    %3275 = vset.pattern.permute.xlu0 0
    %3276 = vperm.xlu0 %3275, %v3250
    %v3277 = vpop.permute.xlu0 %3276
    %3280 = vset.pattern.permute.xlu0 0
    %3281 = vperm.xlu0 %3280, %v3251
    %v3282 = vpop.permute.xlu0 %3281
    %3285 = vset.pattern.permute.xlu0 0
    %3286 = vperm.xlu0 %3285, %v3252
    %v3287 = vpop.permute.xlu0 %3286
    %3290 = vset.pattern.permute.xlu0 0
    %3291 = vperm.xlu0 %3290, %v3253
    %v3292 = vpop.permute.xlu0 %3291
    %v3318 = vunpack.c.l.b16 %v3006
    %v3319 = vunpack.c.h.b16 %v3006
    %v3320 = vunpack.c.l.b16 %v3007
    %v3321 = vunpack.c.h.b16 %v3007
    %v3322 = vunpack.c.l.b16 %v3008
    %v3323 = vunpack.c.l.b16 %v3009
    %v3324 = vunpack.c.h.b16 %v3009
    %v3325 = vunpack.c.l.b16 %v3010
    %v3326 = vunpack.c.h.b16 %v3010
    %v3327 = vunpack.c.l.b16 %v3011
    %v3328 = vunpack.c.l.b16 %v3012
    %v3329 = vunpack.c.h.b16 %v3012
    %v3330 = vunpack.c.l.b16 %v3013
    %v3331 = vunpack.c.h.b16 %v3013
    %v3332 = vunpack.c.l.b16 %v3014
    %v3333 = vunpack.c.l.b16 %v3015
    %v3334 = vunpack.c.h.b16 %v3015
    %v3335 = vunpack.c.l.b16 %v3016
    %v3336 = vunpack.c.h.b16 %v3016
    %v3337 = vunpack.c.l.b16 %v3017
    %v3338 = vunpack.c.l.b16 %v3018
    %v3339 = vunpack.c.h.b16 %v3018
    %v3340 = vunpack.c.l.b16 %v3019
    %v3341 = vunpack.c.h.b16 %v3019
    %v3342 = vunpack.c.l.b16 %v3020
    %v3343 = vunpack.c.l.b16 %v3021
    %v3344 = vunpack.c.h.b16 %v3021
    %v3345 = vunpack.c.l.b16 %v3022
    %v3346 = vunpack.c.h.b16 %v3022
    %v3347 = vunpack.c.l.b16 %v3023
    %v3348 = vunpack.c.l.b16 %v3024
    %v3349 = vunpack.c.h.b16 %v3024
    %v3350 = vunpack.c.l.b16 %v3025
    %v3351 = vunpack.c.h.b16 %v3025
    %v3352 = vunpack.c.l.b16 %v3026
    %v3353 = vunpack.c.l.b16 %v3027
    %v3354 = vunpack.c.h.b16 %v3027
    %v3355 = vunpack.c.l.b16 %v3028
    %v3356 = vunpack.c.h.b16 %v3028
    %v3357 = vunpack.c.l.b16 %v3029
    %v3358 = vpack.c.b16 %v3323, %v3318
    %v3359 = vpack.c.b16 %v3324, %v3319
    %v3360 = vpack.c.b16 %v3325, %v3320
    %v3361 = vpack.c.b16 %v3326, %v3321
    %v3362 = vpack.c.b16 %v3327, %v3322
    %v3363 = vpack.c.b16 %v3333, %v3328
    %v3364 = vpack.c.b16 %v3334, %v3329
    %v3365 = vpack.c.b16 %v3335, %v3330
    %v3366 = vpack.c.b16 %v3336, %v3331
    %v3367 = vpack.c.b16 %v3337, %v3332
    %v3368 = vpack.c.b16 %v3343, %v3338
    %v3369 = vpack.c.b16 %v3344, %v3339
    %v3370 = vpack.c.b16 %v3345, %v3340
    %v3371 = vpack.c.b16 %v3346, %v3341
    %v3372 = vpack.c.b16 %v3347, %v3342
    %v3373 = vpack.c.b16 %v3353, %v3348
    %v3374 = vpack.c.b16 %v3354, %v3349
    %v3375 = vpack.c.b16 %v3355, %v3350
    %v3376 = vpack.c.b16 %v3356, %v3351
    %v3377 = vpack.c.b16 %v3357, %v3352
    %v3610 = vunpack.c.l.b16 %v3030
    %v3611 = vunpack.c.h.b16 %v3030
    %v3612 = vunpack.c.l.b16 %v3031
    %v3613 = vunpack.c.h.b16 %v3031
    %v3614 = vunpack.c.l.b16 %v3032
    %v3615 = vunpack.c.h.b16 %v3032
    %v3616 = vunpack.c.l.b16 %v3033
    %v3617 = vunpack.c.h.b16 %v3033
    %v3618 = vunpack.c.l.b16 %v3034
    %v3619 = vunpack.c.h.b16 %v3034
    %v3620 = vunpack.c.l.b16 %v3035
    %v3621 = vunpack.c.h.b16 %v3035
    %v3622 = vunpack.c.l.b16 %v3036
    %v3623 = vunpack.c.h.b16 %v3036
    %v3624 = vunpack.c.l.b16 %v3037
    %v3625 = vunpack.c.h.b16 %v3037
    %v3626 = vunpack.c.l.b16 %v3038
    %v3627 = vunpack.c.h.b16 %v3038
    %v3628 = vunpack.c.l.b16 %v3039
    %v3629 = vunpack.c.h.b16 %v3039
    %v3630 = vunpack.c.l.b16 %v3040
    %v3631 = vunpack.c.h.b16 %v3040
    %v3632 = vunpack.c.l.b16 %v3041
    %v3633 = vunpack.c.h.b16 %v3041
    %v3634 = vunpack.c.l.b16 %v3042
    %v3635 = vunpack.c.h.b16 %v3042
    %v3636 = vunpack.c.l.b16 %v3043
    %v3637 = vunpack.c.h.b16 %v3043
    %v3638 = vunpack.c.l.b16 %v3044
    %v3639 = vunpack.c.h.b16 %v3044
    %v3640 = vunpack.c.l.b16 %v3045
    %v3641 = vunpack.c.h.b16 %v3045
    %v3642 = vunpack.c.l.b16 %v3046
    %v3643 = vunpack.c.h.b16 %v3046
    %v3644 = vunpack.c.l.b16 %v3047
    %v3645 = vunpack.c.h.b16 %v3047
    %v3646 = vunpack.c.l.b16 %v3048
    %v3647 = vunpack.c.h.b16 %v3048
    %v3648 = vunpack.c.l.b16 %v3049
    %v3649 = vunpack.c.h.b16 %v3049
    %v3650 = vunpack.c.l.b16 %v3050
    %v3651 = vunpack.c.h.b16 %v3050
    %v3652 = vunpack.c.l.b16 %v3051
    %v3653 = vunpack.c.h.b16 %v3051
    %v3654 = vunpack.c.l.b16 %v3052
    %v3655 = vunpack.c.h.b16 %v3052
    %v3656 = vunpack.c.l.b16 %v3053
    %v3657 = vunpack.c.h.b16 %v3053
    %v3658 = vunpack.c.l.b16 %v3054
    %v3659 = vunpack.c.h.b16 %v3054
    %v3660 = vunpack.c.l.b16 %v3055
    %v3661 = vunpack.c.h.b16 %v3055
    %v3662 = vunpack.c.l.b16 %v3056
    %v3663 = vunpack.c.h.b16 %v3056
    %v3664 = vunpack.c.l.b16 %v3057
    %v3665 = vunpack.c.h.b16 %v3057
    %v3666 = vunpack.c.l.b16 %v3058
    %v3667 = vunpack.c.h.b16 %v3058
    %v3668 = vunpack.c.l.b16 %v3059
    %v3669 = vunpack.c.h.b16 %v3059
    %v3670 = vunpack.c.l.b16 %v3060
    %v3671 = vunpack.c.h.b16 %v3060
    %v3672 = vunpack.c.l.b16 %v3061
    %v3673 = vunpack.c.h.b16 %v3061
    %v3674 = vunpack.c.l.b16 %v3062
    %v3675 = vunpack.c.h.b16 %v3062
    %v3676 = vunpack.c.l.b16 %v3063
    %v3677 = vunpack.c.h.b16 %v3063
    %v3678 = vunpack.c.l.b16 %v3064
    %v3679 = vunpack.c.h.b16 %v3064
    %v3680 = vunpack.c.l.b16 %v3065
    %v3681 = vunpack.c.h.b16 %v3065
    %v3682 = vunpack.c.l.b16 %v3066
    %v3683 = vunpack.c.h.b16 %v3066
    %v3684 = vunpack.c.l.b16 %v3067
    %v3685 = vunpack.c.h.b16 %v3067
    %v3686 = vunpack.c.l.b16 %v3068
    %v3687 = vunpack.c.h.b16 %v3068
    %v3688 = vunpack.c.l.b16 %v3069
    %v3689 = vunpack.c.h.b16 %v3069
    %v3690 = vunpack.c.l.b16 %v3070
    %v3691 = vunpack.c.h.b16 %v3070
    %v3692 = vunpack.c.l.b16 %v3071
    %v3693 = vunpack.c.h.b16 %v3071
    %v3694 = vunpack.c.l.b16 %v3072
    %v3695 = vunpack.c.h.b16 %v3072
    %v3696 = vunpack.c.l.b16 %v3073
    %v3697 = vunpack.c.h.b16 %v3073
    %v3698 = vunpack.c.l.b16 %v3074
    %v3699 = vunpack.c.h.b16 %v3074
    %v3700 = vunpack.c.l.b16 %v3075
    %v3701 = vunpack.c.h.b16 %v3075
    %v3702 = vunpack.c.l.b16 %v3076
    %v3703 = vunpack.c.h.b16 %v3076
    %v3704 = vunpack.c.l.b16 %v3077
    %v3705 = vunpack.c.h.b16 %v3077
    %v3706 = vunpack.c.l.b16 %v3078
    %v3707 = vunpack.c.h.b16 %v3078
    %v3708 = vunpack.c.l.b16 %v3079
    %v3709 = vunpack.c.h.b16 %v3079
    %v3710 = vunpack.c.l.b16 %v3080
    %v3711 = vunpack.c.h.b16 %v3080
    %v3712 = vunpack.c.l.b16 %v3081
    %v3713 = vunpack.c.h.b16 %v3081
    %v3714 = vunpack.c.l.b16 %v3082
    %v3715 = vunpack.c.h.b16 %v3082
    %v3716 = vunpack.c.l.b16 %v3083
    %v3717 = vunpack.c.h.b16 %v3083
    %v3718 = vunpack.c.l.b16 %v3084
    %v3719 = vunpack.c.h.b16 %v3084
    %v3720 = vunpack.c.l.b16 %v3085
    %v3721 = vunpack.c.h.b16 %v3085
    %v3722 = vunpack.c.l.b16 %v3086
    %v3723 = vunpack.c.h.b16 %v3086
    %v3724 = vunpack.c.l.b16 %v3087
    %v3725 = vunpack.c.h.b16 %v3087
    %v3726 = vunpack.c.l.b16 %v3088
    %v3727 = vunpack.c.h.b16 %v3088
    %v3728 = vunpack.c.l.b16 %v3089
    %v3729 = vunpack.c.h.b16 %v3089
    %v3730 = vunpack.c.l.b16 %v3090
    %v3731 = vunpack.c.h.b16 %v3090
    %v3732 = vunpack.c.l.b16 %v3091
    %v3733 = vunpack.c.h.b16 %v3091
    %v3734 = vunpack.c.l.b16 %v3092
    %v3735 = vunpack.c.h.b16 %v3092
    %v3736 = vunpack.c.l.b16 %v3093
    %v3737 = vunpack.c.h.b16 %v3093
    %v3738 = vunpack.c.l.b16 %v3094
    %v3739 = vunpack.c.h.b16 %v3094
    %v3740 = vunpack.c.l.b16 %v3095
    %v3741 = vunpack.c.h.b16 %v3095
    %v3742 = vunpack.c.l.b16 %v3096
    %v3743 = vunpack.c.h.b16 %v3096
    %v3744 = vunpack.c.l.b16 %v3097
    %v3745 = vunpack.c.h.b16 %v3097
    %v3746 = vunpack.c.l.b16 %v3098
    %v3747 = vunpack.c.h.b16 %v3098
    %v3748 = vunpack.c.l.b16 %v3099
    %v3749 = vunpack.c.h.b16 %v3099
    %v3750 = vunpack.c.l.b16 %v3100
    %v3751 = vunpack.c.h.b16 %v3100
    %v3752 = vunpack.c.l.b16 %v3101
    %v3753 = vunpack.c.h.b16 %v3101
    %v3754 = vunpack.c.l.b16 %v3102
    %v3755 = vunpack.c.h.b16 %v3102
    %v3756 = vunpack.c.l.b16 %v3103
    %v3757 = vunpack.c.h.b16 %v3103
    %v3758 = vunpack.c.l.b16 %v3104
    %v3759 = vunpack.c.h.b16 %v3104
    %v3760 = vunpack.c.l.b16 %v3105
    %v3761 = vunpack.c.h.b16 %v3105
    %v3762 = vunpack.c.l.b16 %v3106
    %v3763 = vunpack.c.h.b16 %v3106
    %v3764 = vunpack.c.l.b16 %v3107
    %v3765 = vunpack.c.h.b16 %v3107
    %v3766 = vunpack.c.l.b16 %v3108
    %v3767 = vunpack.c.h.b16 %v3108
    %v3768 = vunpack.c.l.b16 %v3109
    %v3769 = vunpack.c.h.b16 %v3109
    %v3770 = vunpack.c.l.b16 %v3110
    %v3771 = vunpack.c.h.b16 %v3110
    %v3772 = vunpack.c.l.b16 %v3111
    %v3773 = vunpack.c.h.b16 %v3111
    %v3774 = vunpack.c.l.b16 %v3112
    %v3775 = vunpack.c.h.b16 %v3112
    %v3776 = vunpack.c.l.b16 %v3113
    %v3777 = vunpack.c.h.b16 %v3113
    %v3778 = vunpack.c.l.b16 %v3114
    %v3779 = vunpack.c.h.b16 %v3114
    %v3780 = vunpack.c.l.b16 %v3115
    %v3781 = vunpack.c.h.b16 %v3115
    %v3782 = vunpack.c.l.b16 %v3116
    %v3783 = vunpack.c.h.b16 %v3116
    %v3784 = vunpack.c.l.b16 %v3117
    %v3785 = vunpack.c.h.b16 %v3117
    %v3786 = vunpack.c.l.b16 %v3118
    %v3787 = vunpack.c.h.b16 %v3118
    %v3788 = vunpack.c.l.b16 %v3119
    %v3789 = vunpack.c.h.b16 %v3119
    %v3790 = vunpack.c.l.b16 %v3120
    %v3791 = vunpack.c.h.b16 %v3120
    %v3792 = vunpack.c.l.b16 %v3121
    %v3793 = vunpack.c.h.b16 %v3121
    %v3794 = vunpack.c.l.b16 %v3122
    %v3795 = vunpack.c.h.b16 %v3122
    %v3796 = vunpack.c.l.b16 %v3123
    %v3797 = vunpack.c.h.b16 %v3123
    %v3798 = vunpack.c.l.b16 %v3124
    %v3799 = vunpack.c.h.b16 %v3124
    %v3800 = vunpack.c.l.b16 %v3125
    %v3801 = vunpack.c.h.b16 %v3125
    %v3802 = vunpack.c.l.b16 %v3126
    %v3803 = vunpack.c.h.b16 %v3126
    %v3804 = vunpack.c.l.b16 %v3127
    %v3805 = vunpack.c.h.b16 %v3127
    %v3806 = vunpack.c.l.b16 %v3128
    %v3807 = vunpack.c.h.b16 %v3128
    %v3808 = vunpack.c.l.b16 %v3129
    %v3809 = vunpack.c.h.b16 %v3129
    %v3810 = vunpack.c.l.b16 %v3130
    %v3811 = vunpack.c.h.b16 %v3130
    %v3812 = vunpack.c.l.b16 %v3131
    %v3813 = vunpack.c.h.b16 %v3131
    %v3814 = vunpack.c.l.b16 %v3132
    %v3815 = vunpack.c.h.b16 %v3132
    %v3816 = vunpack.c.l.b16 %v3133
    %v3817 = vunpack.c.h.b16 %v3133
    %v3818 = vunpack.c.l.b16 %v3134
    %v3819 = vunpack.c.h.b16 %v3134
    %v3820 = vunpack.c.l.b16 %v3135
    %v3821 = vunpack.c.h.b16 %v3135
    %v3822 = vunpack.c.l.b16 %v3136
    %v3823 = vunpack.c.h.b16 %v3136
    %v3824 = vunpack.c.l.b16 %v3137
    %v3825 = vunpack.c.h.b16 %v3137
    %v3826 = vunpack.c.l.b16 %v3138
    %v3827 = vunpack.c.h.b16 %v3138
    %v3828 = vunpack.c.l.b16 %v3139
    %v3829 = vunpack.c.h.b16 %v3139
    %v3830 = vunpack.c.l.b16 %v3140
    %v3831 = vunpack.c.h.b16 %v3140
    %v3832 = vunpack.c.l.b16 %v3141
    %v3833 = vunpack.c.h.b16 %v3141
    %v3834 = vunpack.c.l.b16 %v3142
    %v3835 = vunpack.c.h.b16 %v3142
    %v3836 = vunpack.c.l.b16 %v3143
    %v3837 = vunpack.c.h.b16 %v3143
    %v3838 = vunpack.c.l.b16 %v3144
    %v3839 = vunpack.c.h.b16 %v3144
    %v3840 = vunpack.c.l.b16 %v3145
    %v3841 = vunpack.c.h.b16 %v3145
    %v3842 = vunpack.c.l.b16 %v3146
    %v3843 = vunpack.c.h.b16 %v3146
    %v3844 = vunpack.c.l.b16 %v3147
    %v3845 = vunpack.c.h.b16 %v3147
    %v3846 = vunpack.c.l.b16 %v3148
    %v3847 = vunpack.c.h.b16 %v3148
    %v3848 = vunpack.c.l.b16 %v3149
    %v3849 = vunpack.c.h.b16 %v3149
    %v3850 = vunpack.c.l.b16 %v3150
    %v3851 = vunpack.c.h.b16 %v3150
    %v3852 = vunpack.c.l.b16 %v3151
    %v3853 = vunpack.c.h.b16 %v3151
    %v3854 = vunpack.c.l.b16 %v3152
    %v3855 = vunpack.c.h.b16 %v3152
    %v3856 = vunpack.c.l.b16 %v3153
    %v3857 = vunpack.c.h.b16 %v3153
    %v3858 = vunpack.c.l.b16 %v3154
    %v3859 = vunpack.c.h.b16 %v3154
    %v3860 = vunpack.c.l.b16 %v3155
    %v3861 = vunpack.c.h.b16 %v3155
    %v3862 = vunpack.c.l.b16 %v3156
    %v3863 = vunpack.c.h.b16 %v3156
    %v3864 = vunpack.c.l.b16 %v3157
    %v3865 = vunpack.c.h.b16 %v3157
    %v3866 = vunpack.c.l.b16 %v3158
    %v3867 = vunpack.c.h.b16 %v3158
    %v3868 = vunpack.c.l.b16 %v3159
    %v3869 = vunpack.c.h.b16 %v3159
    %v3870 = vunpack.c.l.b16 %v3160
    %v3871 = vunpack.c.h.b16 %v3160
    %v3872 = vunpack.c.l.b16 %v3161
    %v3873 = vunpack.c.h.b16 %v3161
    %v3874 = vunpack.c.l.b16 %v3162
    %v3875 = vunpack.c.h.b16 %v3162
    %v3876 = vunpack.c.l.b16 %v3163
    %v3877 = vunpack.c.h.b16 %v3163
    %v3878 = vunpack.c.l.b16 %v3164
    %v3879 = vunpack.c.h.b16 %v3164
    %v3880 = vunpack.c.l.b16 %v3165
    %v3881 = vunpack.c.h.b16 %v3165
    %v3882 = vunpack.c.l.b16 %v3166
    %v3883 = vunpack.c.h.b16 %v3166
    %v3884 = vunpack.c.l.b16 %v3167
    %v3885 = vunpack.c.h.b16 %v3167
    %v3886 = vunpack.c.l.b16 %v3168
    %v3887 = vunpack.c.h.b16 %v3168
    %v3888 = vunpack.c.l.b16 %v3169
    %v3889 = vunpack.c.h.b16 %v3169
    %v3890 = vunpack.c.l.b16 %v3170
    %v3891 = vunpack.c.h.b16 %v3170
    %v3892 = vunpack.c.l.b16 %v3171
    %v3893 = vunpack.c.h.b16 %v3171
    %v3894 = vunpack.c.l.b16 %v3172
    %v3895 = vunpack.c.h.b16 %v3172
    %v3896 = vunpack.c.l.b16 %v3173
    %v3897 = vunpack.c.h.b16 %v3173
    %v3898 = vunpack.c.l.b16 %v3174
    %v3899 = vunpack.c.h.b16 %v3174
    %v3900 = vunpack.c.l.b16 %v3175
    %v3901 = vunpack.c.h.b16 %v3175
    %v3902 = vunpack.c.l.b16 %v3176
    %v3903 = vunpack.c.h.b16 %v3176
    %v3904 = vunpack.c.l.b16 %v3177
    %v3905 = vunpack.c.h.b16 %v3177
    %v3906 = vunpack.c.l.b16 %v3178
    %v3907 = vunpack.c.h.b16 %v3178
    %v3908 = vunpack.c.l.b16 %v3179
    %v3909 = vunpack.c.h.b16 %v3179
    %v3910 = vunpack.c.l.b16 %v3180
    %v3911 = vunpack.c.h.b16 %v3180
    %v3912 = vunpack.c.l.b16 %v3181
    %v3913 = vunpack.c.h.b16 %v3181
    %v3914 = vunpack.c.l.b16 %v3182
    %v3915 = vunpack.c.h.b16 %v3182
    %v3916 = vunpack.c.l.b16 %v3183
    %v3917 = vunpack.c.h.b16 %v3183
    %v3918 = vunpack.c.l.b16 %v3184
    %v3919 = vunpack.c.h.b16 %v3184
    %v3920 = vunpack.c.l.b16 %v3185
    %v3921 = vunpack.c.h.b16 %v3185
    %v3922 = vunpack.c.l.b16 %v3186
    %v3923 = vunpack.c.h.b16 %v3186
    %v3924 = vunpack.c.l.b16 %v3187
    %v3925 = vunpack.c.h.b16 %v3187
    %v3926 = vunpack.c.l.b16 %v3188
    %v3927 = vunpack.c.h.b16 %v3188
    %v3928 = vunpack.c.l.b16 %v3189
    %v3929 = vunpack.c.h.b16 %v3189
    %v3930 = vunpack.c.l.b16 %v3190
    %v3931 = vunpack.c.h.b16 %v3190
    %v3932 = vunpack.c.l.b16 %v3191
    %v3933 = vunpack.c.h.b16 %v3191
    %v3934 = vunpack.c.l.b16 %v3192
    %v3935 = vunpack.c.h.b16 %v3192
    %v3936 = vunpack.c.l.b16 %v3193
    %v3937 = vunpack.c.h.b16 %v3193
    %v3938 = vunpack.c.l.b16 %v3194
    %v3939 = vunpack.c.h.b16 %v3194
    %v3940 = vunpack.c.l.b16 %v3195
    %v3941 = vunpack.c.h.b16 %v3195
    %v3942 = vunpack.c.l.b16 %v3196
    %v3943 = vunpack.c.h.b16 %v3196
    %v3944 = vunpack.c.l.b16 %v3197
    %v3945 = vunpack.c.h.b16 %v3197
    %v3946 = vunpack.c.l.b16 %v3198
    %v3947 = vunpack.c.h.b16 %v3198
    %v3948 = vunpack.c.l.b16 %v3199
    %v3949 = vunpack.c.h.b16 %v3199
    %v3950 = vunpack.c.l.b16 %v3200
    %v3951 = vunpack.c.h.b16 %v3200
    %v3952 = vunpack.c.l.b16 %v3201
    %v3953 = vunpack.c.h.b16 %v3201
    %v3954 = vunpack.c.l.b16 %v3202
    %v3955 = vunpack.c.h.b16 %v3202
    %v3956 = vunpack.c.l.b16 %v3203
    %v3957 = vunpack.c.h.b16 %v3203
    %v3958 = vunpack.c.l.b16 %v3204
    %v3959 = vunpack.c.h.b16 %v3204
    %v3960 = vunpack.c.l.b16 %v3205
    %v3961 = vunpack.c.h.b16 %v3205
    %v3962 = vunpack.c.l.b16 %v3206
    %v3963 = vunpack.c.h.b16 %v3206
    %v3964 = vunpack.c.l.b16 %v3207
    %v3965 = vunpack.c.h.b16 %v3207
    %v3966 = vunpack.c.l.b16 %v3208
    %v3967 = vunpack.c.h.b16 %v3208
    %v3968 = vunpack.c.l.b16 %v3209
    %v3969 = vunpack.c.h.b16 %v3209
    %v3970 = vunpack.c.l.b16 %v3210
    %v3971 = vunpack.c.h.b16 %v3210
    %v3972 = vunpack.c.l.b16 %v3211
    %v3973 = vunpack.c.h.b16 %v3211
    %v3974 = vunpack.c.l.b16 %v3212
    %v3975 = vunpack.c.h.b16 %v3212
    %v3976 = vunpack.c.l.b16 %v3213
    %v3977 = vunpack.c.h.b16 %v3213
    %v3978 = vunpack.c.l.b16 %v3214
    %v3979 = vunpack.c.h.b16 %v3214
    %v3980 = vunpack.c.l.b16 %v3215
    %v3981 = vunpack.c.h.b16 %v3215
    %v3982 = vunpack.c.l.b16 %v3216
    %v3983 = vunpack.c.h.b16 %v3216
    %v3984 = vunpack.c.l.b16 %v3217
    %v3985 = vunpack.c.h.b16 %v3217
    %v3986 = vunpack.c.l.b16 %v3218
    %v3987 = vunpack.c.h.b16 %v3218
    %v3988 = vunpack.c.l.b16 %v3219
    %v3989 = vunpack.c.h.b16 %v3219
    %v3990 = vunpack.c.l.b16 %v3220
    %v3991 = vunpack.c.h.b16 %v3220
    %v3992 = vunpack.c.l.b16 %v3221
    %v3993 = vunpack.c.h.b16 %v3221
    %v3994 = vunpack.c.l.b16 %v3222
    %v3995 = vunpack.c.h.b16 %v3222
    %v3996 = vunpack.c.l.b16 %v3223
    %v3997 = vunpack.c.h.b16 %v3223
    %v3998 = vunpack.c.l.b16 %v3224
    %v3999 = vunpack.c.h.b16 %v3224
    %v4000 = vunpack.c.l.b16 %v3225
    %v4001 = vunpack.c.h.b16 %v3225
    %v4002 = vunpack.c.l.b16 %v3226
    %v4003 = vunpack.c.h.b16 %v3226
    %v4004 = vunpack.c.l.b16 %v3227
    %v4005 = vunpack.c.h.b16 %v3227
    %v4006 = vunpack.c.l.b16 %v3228
    %v4007 = vunpack.c.h.b16 %v3228
    %v4008 = vunpack.c.l.b16 %v3229
    %v4009 = vunpack.c.h.b16 %v3229
    %v4010 = vunpack.c.l.b16 %v3230
    %v4011 = vunpack.c.h.b16 %v3230
    %v4012 = vunpack.c.l.b16 %v3231
    %v4013 = vunpack.c.h.b16 %v3231
    %v4014 = vunpack.c.l.b16 %v3232
    %v4015 = vunpack.c.h.b16 %v3232
    %v4016 = vunpack.c.l.b16 %v3233
    %v4017 = vunpack.c.h.b16 %v3233
    %v4018 = vunpack.c.l.b16 %v3234
    %v4019 = vunpack.c.h.b16 %v3234
    %v4020 = vunpack.c.l.b16 %v3235
    %v4021 = vunpack.c.h.b16 %v3235
    %v4022 = vunpack.c.l.b16 %v3236
    %v4023 = vunpack.c.h.b16 %v3236
    %v4024 = vunpack.c.l.b16 %v3237
    %v4025 = vunpack.c.h.b16 %v3237
    %v4026 = vunpack.c.l.b16 %v3238
    %v4027 = vunpack.c.h.b16 %v3238
    %v4028 = vunpack.c.l.b16 %v3239
    %v4029 = vunpack.c.h.b16 %v3239
    %v4030 = vunpack.c.l.b16 %v3240
    %v4031 = vunpack.c.h.b16 %v3240
    %v4032 = vunpack.c.l.b16 %v3241
    %v4033 = vunpack.c.h.b16 %v3241
    %v4034 = vunpack.c.l.b16 %v3242
    %v4035 = vunpack.c.h.b16 %v3242
    %v4036 = vunpack.c.l.b16 %v3243
    %v4037 = vunpack.c.h.b16 %v3243
    %v4038 = vunpack.c.l.b16 %v3244
    %v4039 = vunpack.c.h.b16 %v3244
    %v4040 = vunpack.c.l.b16 %v3245
    %v4041 = vunpack.c.h.b16 %v3245
    %v4042 = vpack.c.b16 %v3616, %v3610
    %v4043 = vpack.c.b16 %v3617, %v3611
    %v4044 = vpack.c.b16 %v3618, %v3612
    %v4045 = vpack.c.b16 %v3619, %v3613
    %v4046 = vpack.c.b16 %v3620, %v3614
    %v4047 = vpack.c.b16 %v3621, %v3615
    %v4048 = vpack.c.b16 %v3628, %v3622
    %v4049 = vpack.c.b16 %v3629, %v3623
    %v4050 = vpack.c.b16 %v3630, %v3624
    %v4051 = vpack.c.b16 %v3631, %v3625
    %v4052 = vpack.c.b16 %v3632, %v3626
    %v4053 = vpack.c.b16 %v3633, %v3627
    %v4054 = vpack.c.b16 %v3640, %v3634
    %v4055 = vpack.c.b16 %v3641, %v3635
    %v4056 = vpack.c.b16 %v3642, %v3636
    %v4057 = vpack.c.b16 %v3643, %v3637
    %v4058 = vpack.c.b16 %v3644, %v3638
    %v4059 = vpack.c.b16 %v3645, %v3639
    %v4060 = vpack.c.b16 %v3652, %v3646
    %v4061 = vpack.c.b16 %v3653, %v3647
    %v4062 = vpack.c.b16 %v3654, %v3648
    %v4063 = vpack.c.b16 %v3655, %v3649
    %v4064 = vpack.c.b16 %v3656, %v3650
    %v4065 = vpack.c.b16 %v3657, %v3651
    %v4066 = vpack.c.b16 %v3664, %v3658
    %v4067 = vpack.c.b16 %v3665, %v3659
    %v4068 = vpack.c.b16 %v3666, %v3660
    %v4069 = vpack.c.b16 %v3667, %v3661
    %v4070 = vpack.c.b16 %v3668, %v3662
    %v4071 = vpack.c.b16 %v3669, %v3663
    %v4072 = vpack.c.b16 %v3676, %v3670
    %v4073 = vpack.c.b16 %v3677, %v3671
    %v4074 = vpack.c.b16 %v3678, %v3672
    %v4075 = vpack.c.b16 %v3679, %v3673
    %v4076 = vpack.c.b16 %v3680, %v3674
    %v4077 = vpack.c.b16 %v3681, %v3675
    %v4078 = vpack.c.b16 %v3688, %v3682
    %v4079 = vpack.c.b16 %v3689, %v3683
    %v4080 = vpack.c.b16 %v3690, %v3684
    %v4081 = vpack.c.b16 %v3691, %v3685
    %v4082 = vpack.c.b16 %v3692, %v3686
    %v4083 = vpack.c.b16 %v3693, %v3687
    %v4084 = vpack.c.b16 %v3700, %v3694
    %v4085 = vpack.c.b16 %v3701, %v3695
    %v4086 = vpack.c.b16 %v3702, %v3696
    %v4087 = vpack.c.b16 %v3703, %v3697
    %v4088 = vpack.c.b16 %v3704, %v3698
    %v4089 = vpack.c.b16 %v3705, %v3699
    %v4090 = vpack.c.b16 %v3712, %v3706
    %v4091 = vpack.c.b16 %v3713, %v3707
    %v4092 = vpack.c.b16 %v3714, %v3708
    %v4093 = vpack.c.b16 %v3715, %v3709
    %v4094 = vpack.c.b16 %v3716, %v3710
    %v4095 = vpack.c.b16 %v3717, %v3711
    %v4096 = vpack.c.b16 %v3724, %v3718
    %v4097 = vpack.c.b16 %v3725, %v3719
    %v4098 = vpack.c.b16 %v3726, %v3720
    %v4099 = vpack.c.b16 %v3727, %v3721
    %v4100 = vpack.c.b16 %v3728, %v3722
    %v4101 = vpack.c.b16 %v3729, %v3723
    %v4102 = vpack.c.b16 %v3736, %v3730
    %v4103 = vpack.c.b16 %v3737, %v3731
    %v4104 = vpack.c.b16 %v3738, %v3732
    %v4105 = vpack.c.b16 %v3739, %v3733
    %v4106 = vpack.c.b16 %v3740, %v3734
    %v4107 = vpack.c.b16 %v3741, %v3735
    %v4108 = vpack.c.b16 %v3748, %v3742
    %v4109 = vpack.c.b16 %v3749, %v3743
    %v4110 = vpack.c.b16 %v3750, %v3744
    %v4111 = vpack.c.b16 %v3751, %v3745
    %v4112 = vpack.c.b16 %v3752, %v3746
    %v4113 = vpack.c.b16 %v3753, %v3747
    %v4114 = vpack.c.b16 %v3760, %v3754
    %v4115 = vpack.c.b16 %v3761, %v3755
    %v4116 = vpack.c.b16 %v3762, %v3756
    %v4117 = vpack.c.b16 %v3763, %v3757
    %v4118 = vpack.c.b16 %v3764, %v3758
    %v4119 = vpack.c.b16 %v3765, %v3759
    %v4120 = vpack.c.b16 %v3772, %v3766
    %v4121 = vpack.c.b16 %v3773, %v3767
    %v4122 = vpack.c.b16 %v3774, %v3768
    %v4123 = vpack.c.b16 %v3775, %v3769
    %v4124 = vpack.c.b16 %v3776, %v3770
    %v4125 = vpack.c.b16 %v3777, %v3771
    %v4126 = vpack.c.b16 %v3784, %v3778
    %v4127 = vpack.c.b16 %v3785, %v3779
    %v4128 = vpack.c.b16 %v3786, %v3780
    %v4129 = vpack.c.b16 %v3787, %v3781
    %v4130 = vpack.c.b16 %v3788, %v3782
    %v4131 = vpack.c.b16 %v3789, %v3783
    %v4132 = vpack.c.b16 %v3796, %v3790
    %v4133 = vpack.c.b16 %v3797, %v3791
    %v4134 = vpack.c.b16 %v3798, %v3792
    %v4135 = vpack.c.b16 %v3799, %v3793
    %v4136 = vpack.c.b16 %v3800, %v3794
    %v4137 = vpack.c.b16 %v3801, %v3795
    %v4138 = vpack.c.b16 %v3808, %v3802
    %v4139 = vpack.c.b16 %v3809, %v3803
    %v4140 = vpack.c.b16 %v3810, %v3804
    %v4141 = vpack.c.b16 %v3811, %v3805
    %v4142 = vpack.c.b16 %v3812, %v3806
    %v4143 = vpack.c.b16 %v3813, %v3807
    %v4144 = vpack.c.b16 %v3820, %v3814
    %v4145 = vpack.c.b16 %v3821, %v3815
    %v4146 = vpack.c.b16 %v3822, %v3816
    %v4147 = vpack.c.b16 %v3823, %v3817
    %v4148 = vpack.c.b16 %v3824, %v3818
    %v4149 = vpack.c.b16 %v3825, %v3819
    %v4150 = vpack.c.b16 %v3832, %v3826
    %v4151 = vpack.c.b16 %v3833, %v3827
    %v4152 = vpack.c.b16 %v3834, %v3828
    %v4153 = vpack.c.b16 %v3835, %v3829
    %v4154 = vpack.c.b16 %v3836, %v3830
    %v4155 = vpack.c.b16 %v3837, %v3831
    %v4156 = vpack.c.b16 %v3844, %v3838
    %v4157 = vpack.c.b16 %v3845, %v3839
    %v4158 = vpack.c.b16 %v3846, %v3840
    %v4159 = vpack.c.b16 %v3847, %v3841
    %v4160 = vpack.c.b16 %v3848, %v3842
    %v4161 = vpack.c.b16 %v3849, %v3843
    %v4162 = vpack.c.b16 %v3856, %v3850
    %v4163 = vpack.c.b16 %v3857, %v3851
    %v4164 = vpack.c.b16 %v3858, %v3852
    %v4165 = vpack.c.b16 %v3859, %v3853
    %v4166 = vpack.c.b16 %v3860, %v3854
    %v4167 = vpack.c.b16 %v3861, %v3855
    %v4168 = vpack.c.b16 %v3868, %v3862
    %v4169 = vpack.c.b16 %v3869, %v3863
    %v4170 = vpack.c.b16 %v3870, %v3864
    %v4171 = vpack.c.b16 %v3871, %v3865
    %v4172 = vpack.c.b16 %v3872, %v3866
    %v4173 = vpack.c.b16 %v3873, %v3867
    %v4174 = vpack.c.b16 %v3880, %v3874
    %v4175 = vpack.c.b16 %v3881, %v3875
    %v4176 = vpack.c.b16 %v3882, %v3876
    %v4177 = vpack.c.b16 %v3883, %v3877
    %v4178 = vpack.c.b16 %v3884, %v3878
    %v4179 = vpack.c.b16 %v3885, %v3879
    %v4180 = vpack.c.b16 %v3892, %v3886
    %v4181 = vpack.c.b16 %v3893, %v3887
    %v4182 = vpack.c.b16 %v3894, %v3888
    %v4183 = vpack.c.b16 %v3895, %v3889
    %v4184 = vpack.c.b16 %v3896, %v3890
    %v4185 = vpack.c.b16 %v3897, %v3891
    %v4186 = vpack.c.b16 %v3904, %v3898
    %v4187 = vpack.c.b16 %v3905, %v3899
    %v4188 = vpack.c.b16 %v3906, %v3900
    %v4189 = vpack.c.b16 %v3907, %v3901
    %v4190 = vpack.c.b16 %v3908, %v3902
    %v4191 = vpack.c.b16 %v3909, %v3903
    %v4192 = vpack.c.b16 %v3916, %v3910
    %v4193 = vpack.c.b16 %v3917, %v3911
    %v4194 = vpack.c.b16 %v3918, %v3912
    %v4195 = vpack.c.b16 %v3919, %v3913
    %v4196 = vpack.c.b16 %v3920, %v3914
    %v4197 = vpack.c.b16 %v3921, %v3915
    %v4198 = vpack.c.b16 %v3928, %v3922
    %v4199 = vpack.c.b16 %v3929, %v3923
    %v4200 = vpack.c.b16 %v3930, %v3924
    %v4201 = vpack.c.b16 %v3931, %v3925
    %v4202 = vpack.c.b16 %v3932, %v3926
    %v4203 = vpack.c.b16 %v3933, %v3927
    %v4204 = vpack.c.b16 %v3940, %v3934
    %v4205 = vpack.c.b16 %v3941, %v3935
    %v4206 = vpack.c.b16 %v3942, %v3936
    %v4207 = vpack.c.b16 %v3943, %v3937
    %v4208 = vpack.c.b16 %v3944, %v3938
    %v4209 = vpack.c.b16 %v3945, %v3939
    %v4210 = vpack.c.b16 %v3952, %v3946
    %v4211 = vpack.c.b16 %v3953, %v3947
    %v4212 = vpack.c.b16 %v3954, %v3948
    %v4213 = vpack.c.b16 %v3955, %v3949
    %v4214 = vpack.c.b16 %v3956, %v3950
    %v4215 = vpack.c.b16 %v3957, %v3951
    %v4216 = vpack.c.b16 %v3964, %v3958
    %v4217 = vpack.c.b16 %v3965, %v3959
    %v4218 = vpack.c.b16 %v3966, %v3960
    %v4219 = vpack.c.b16 %v3967, %v3961
    %v4220 = vpack.c.b16 %v3968, %v3962
    %v4221 = vpack.c.b16 %v3969, %v3963
    %v4222 = vpack.c.b16 %v3976, %v3970
    %v4223 = vpack.c.b16 %v3977, %v3971
    %v4224 = vpack.c.b16 %v3978, %v3972
    %v4225 = vpack.c.b16 %v3979, %v3973
    %v4226 = vpack.c.b16 %v3980, %v3974
    %v4227 = vpack.c.b16 %v3981, %v3975
    %v4228 = vpack.c.b16 %v3988, %v3982
    %v4229 = vpack.c.b16 %v3989, %v3983
    %v4230 = vpack.c.b16 %v3990, %v3984
    %v4231 = vpack.c.b16 %v3991, %v3985
    %v4232 = vpack.c.b16 %v3992, %v3986
    %v4233 = vpack.c.b16 %v3993, %v3987
    %v4234 = vpack.c.b16 %v4000, %v3994
    %v4235 = vpack.c.b16 %v4001, %v3995
    %v4236 = vpack.c.b16 %v4002, %v3996
    %v4237 = vpack.c.b16 %v4003, %v3997
    %v4238 = vpack.c.b16 %v4004, %v3998
    %v4239 = vpack.c.b16 %v4005, %v3999
    %v4240 = vpack.c.b16 %v4012, %v4006
    %v4241 = vpack.c.b16 %v4013, %v4007
    %v4242 = vpack.c.b16 %v4014, %v4008
    %v4243 = vpack.c.b16 %v4015, %v4009
    %v4244 = vpack.c.b16 %v4016, %v4010
    %v4245 = vpack.c.b16 %v4017, %v4011
    %v4246 = vpack.c.b16 %v4024, %v4018
    %v4247 = vpack.c.b16 %v4025, %v4019
    %v4248 = vpack.c.b16 %v4026, %v4020
    %v4249 = vpack.c.b16 %v4027, %v4021
    %v4250 = vpack.c.b16 %v4028, %v4022
    %v4251 = vpack.c.b16 %v4029, %v4023
    %v4252 = vpack.c.b16 %v4036, %v4030
    %v4253 = vpack.c.b16 %v4037, %v4031
    %v4254 = vpack.c.b16 %v4038, %v4032
    %v4255 = vpack.c.b16 %v4039, %v4033
    %v4256 = vpack.c.b16 %v4040, %v4034
    %v4257 = vpack.c.b16 %v4041, %v4035
    %vm4474 = vcmask 523264
    %v4476 = vsel %vm4474, %v3362, 0
    %v4479 = vsel %vm4474, %v3367, 0
    %v4482 = vsel %vm4474, %v3372, 0
    %v4485 = vsel %vm4474, %v3377, 0
    %4487 = vmatprep.subr.bf16.mxu0 %v4085
    %4488 = vmatpush1.bf16.msra.mxu0 %v4084
    %4489 = vmatprep.subr.bf16.mxu0 %v4079
    %4490 = vmatpush1.bf16.msra.mxu0 %v4078
    %4491 = vmatprep.subr.bf16.mxu0 %v4073
    %4492 = vmatpush1.bf16.msra.mxu0 %v4072
    %4493 = vmatprep.subr.bf16.mxu0 %v4067
    %4494 = vmatpush1.bf16.msra.mxu0 %v4066
    %4495 = vmatprep.subr.bf16.mxu0 %v4061
    %4496 = vmatpush1.bf16.msra.mxu0 %v4060
    %4497 = vmatprep.subr.bf16.mxu0 %v4055
    %4498 = vmatpush1.bf16.msra.mxu0 %v4054
    %4499 = vmatprep.subr.bf16.mxu0 %v4049
    %4500 = vmatpush1.bf16.msra.mxu0 %v4048
    %4501 = vmatprep.subr.bf16.mxu0 %v4043
    %4502 = vmatpush1.bf16.msra.mxu0 %v4042
    %4503 = vmatprep.subr.bf16.mxu0 %v4133
    %4504 = vmatpush2.bf16.msra.mxu0 %v4132
    %4505 = vmatprep.subr.bf16.mxu0 %v4127
    %4506 = vmatpush2.bf16.msra.mxu0 %v4126
    %4507 = vmatprep.subr.bf16.mxu0 %v4121
    %4508 = vmatpush2.bf16.msra.mxu0 %v4120
    %4509 = vmatprep.subr.bf16.mxu0 %v4115
    %4510 = vmatpush2.bf16.msra.mxu0 %v4114
    %4511 = vmatprep.subr.bf16.mxu0 %v4109
    %4512 = vmatpush2.bf16.msra.mxu0 %v4108
    %4513 = vmatprep.subr.bf16.mxu0 %v4103
    %4514 = vmatpush2.bf16.msra.mxu0 %v4102
    %4515 = vmatprep.subr.bf16.mxu0 %v4097
    %4516 = vmatpush2.bf16.msra.mxu0 %v4096
    %4517 = vmatprep.subr.bf16.mxu0 %v4091
    %4518 = vmatpush2.bf16.msra.mxu0 %v4090
    %4519 = vmatprep.mubr.bf16.mxu0 %v3359
    %4520 = vmatmul.mubr.bf16.gmra.mxu0 %v3358
    %v4521 = vpop.f32.mrf.mxu0
    %v4522 = vadd.f32 %v3257, %v4521
    %v4523 = vpop.f32.mrf.mxu0
    %v4524 = vadd.f32 %v3257, %v4523
    %v4525 = vpop.f32.mrf.mxu0
    %v4526 = vadd.f32 %v3262, %v4525
    %v4527 = vpop.f32.mrf.mxu0
    %v4528 = vadd.f32 %v3262, %v4527
    %4529 = vmatprep.mubr.bf16.mxu0 %v3364
    %4530 = vmatmul.mubr.bf16.gmra.mxu0 %v3363
    %v4531 = vpop.f32.mrf.mxu0
    %v4532 = vadd.f32 %v3267, %v4531
    %v4533 = vpop.f32.mrf.mxu0
    %v4534 = vadd.f32 %v3267, %v4533
    %v4535 = vpop.f32.mrf.mxu0
    %v4536 = vadd.f32 %v3272, %v4535
    %v4537 = vpop.f32.mrf.mxu0
    %v4538 = vadd.f32 %v3272, %v4537
    %4539 = vmatprep.mubr.bf16.mxu0 %v3369
    %4540 = vmatmul.mubr.bf16.gmra.mxu0 %v3368
    %v4541 = vpop.f32.mrf.mxu0
    %v4542 = vadd.f32 %v3277, %v4541
    %v4543 = vpop.f32.mrf.mxu0
    %v4544 = vadd.f32 %v3277, %v4543
    %v4545 = vpop.f32.mrf.mxu0
    %v4546 = vadd.f32 %v3282, %v4545
    %v4547 = vpop.f32.mrf.mxu0
    %v4548 = vadd.f32 %v3282, %v4547
    %4549 = vmatprep.mubr.bf16.mxu0 %v3374
    %4550 = vmatmul.mubr.bf16.gmra.mxu0 %v3373
    %v4551 = vpop.f32.mrf.mxu0
    %v4552 = vadd.f32 %v3287, %v4551
    %v4553 = vpop.f32.mrf.mxu0
    %v4554 = vadd.f32 %v3287, %v4553
    %v4555 = vpop.f32.mrf.mxu0
    %v4556 = vadd.f32 %v3292, %v4555
    %v4557 = vpop.f32.mrf.mxu0
    %v4558 = vadd.f32 %v3292, %v4557
    %4559 = vdwg.mxu0
    %4560 = vmatprep.subr.bf16.mxu0 %v4181
    %4561 = vmatpush1.bf16.msra.mxu0 %v4180
    %4562 = vmatprep.subr.bf16.mxu0 %v4175
    %4563 = vmatpush1.bf16.msra.mxu0 %v4174
    %4564 = vmatprep.subr.bf16.mxu0 %v4169
    %4565 = vmatpush1.bf16.msra.mxu0 %v4168
    %4566 = vmatprep.subr.bf16.mxu0 %v4163
    %4567 = vmatpush1.bf16.msra.mxu0 %v4162
    %4568 = vmatprep.subr.bf16.mxu0 %v4157
    %4569 = vmatpush1.bf16.msra.mxu0 %v4156
    %4570 = vmatprep.subr.bf16.mxu0 %v4151
    %4571 = vmatpush1.bf16.msra.mxu0 %v4150
    %4572 = vmatprep.subr.bf16.mxu0 %v4145
    %4573 = vmatpush1.bf16.msra.mxu0 %v4144
    %4574 = vmatprep.subr.bf16.mxu0 %v4139
    %4575 = vmatpush1.bf16.msra.mxu0 %v4138
    %4576 = vmatprep.subr.bf16.mxu0 %v4229
    %4577 = vmatpush2.bf16.msra.mxu0 %v4228
    %4578 = vmatprep.subr.bf16.mxu0 %v4223
    %4579 = vmatpush2.bf16.msra.mxu0 %v4222
    %4580 = vmatprep.subr.bf16.mxu0 %v4217
    %4581 = vmatpush2.bf16.msra.mxu0 %v4216
    %4582 = vmatprep.subr.bf16.mxu0 %v4211
    %4583 = vmatpush2.bf16.msra.mxu0 %v4210
    %4584 = vmatprep.subr.bf16.mxu0 %v4205
    %4585 = vmatpush2.bf16.msra.mxu0 %v4204
    %4586 = vmatprep.subr.bf16.mxu0 %v4199
    %4587 = vmatpush2.bf16.msra.mxu0 %v4198
    %4588 = vmatprep.subr.bf16.mxu0 %v4193
    %4589 = vmatpush2.bf16.msra.mxu0 %v4192
    %4590 = vmatprep.subr.bf16.mxu0 %v4187
    %4591 = vmatpush2.bf16.msra.mxu0 %v4186
    %4592 = vmatprep.mubr.bf16.mxu0 %v3361
    %4593 = vmatmul.mubr.bf16.gmra.mxu0 %v3360
    %v4594 = vpop.f32.mrf.mxu0
    %v4595 = vadd.f32 %v4522, %v4594
    %v4596 = vpop.f32.mrf.mxu0
    %v4597 = vadd.f32 %v4524, %v4596
    %v4598 = vpop.f32.mrf.mxu0
    %v4599 = vadd.f32 %v4526, %v4598
    %v4600 = vpop.f32.mrf.mxu0
    %v4601 = vadd.f32 %v4528, %v4600
    %4602 = vmatprep.mubr.bf16.mxu0 %v3366
    %4603 = vmatmul.mubr.bf16.gmra.mxu0 %v3365
    %v4604 = vpop.f32.mrf.mxu0
    %v4605 = vadd.f32 %v4532, %v4604
    %v4606 = vpop.f32.mrf.mxu0
    %v4607 = vadd.f32 %v4534, %v4606
    %v4608 = vpop.f32.mrf.mxu0
    %v4609 = vadd.f32 %v4536, %v4608
    %v4610 = vpop.f32.mrf.mxu0
    %v4611 = vadd.f32 %v4538, %v4610
    %4612 = vmatprep.mubr.bf16.mxu0 %v3371
    %4613 = vmatmul.mubr.bf16.gmra.mxu0 %v3370
    %v4614 = vpop.f32.mrf.mxu0
    %v4615 = vadd.f32 %v4542, %v4614
    %v4616 = vpop.f32.mrf.mxu0
    %v4617 = vadd.f32 %v4544, %v4616
    %v4618 = vpop.f32.mrf.mxu0
    %v4619 = vadd.f32 %v4546, %v4618
    %v4620 = vpop.f32.mrf.mxu0
    %v4621 = vadd.f32 %v4548, %v4620
    %4622 = vmatprep.mubr.bf16.mxu0 %v3376
    %4623 = vmatmul.mubr.bf16.gmra.mxu0 %v3375
    %v4624 = vpop.f32.mrf.mxu0
    %v4625 = vadd.f32 %v4552, %v4624
    %v4626 = vpop.f32.mrf.mxu0
    %v4627 = vadd.f32 %v4554, %v4626
    %v4628 = vpop.f32.mrf.mxu0
    %v4629 = vadd.f32 %v4556, %v4628
    %v4630 = vpop.f32.mrf.mxu0
    %v4631 = vadd.f32 %v4558, %v4630
    %4632 = vdwg.mxu0
    %4633 = vmatprep.subr.bf16.mxu0 0
    %4634 = vmatpush1.bf16.msra.mxu0 0
    %4635 = vmatprep.subr.bf16.mxu0 0
    %4636 = vmatpush1.bf16.msra.mxu0 0
    %4637 = vmatprep.subr.bf16.mxu0 0
    %4638 = vmatpush1.bf16.msra.mxu0 0
    %4639 = vmatprep.subr.bf16.mxu0 0
    %4640 = vmatpush1.bf16.msra.mxu0 0
    %4641 = vmatprep.subr.bf16.mxu0 %v4253
    %4642 = vmatpush1.bf16.msra.mxu0 %v4252
    %4643 = vmatprep.subr.bf16.mxu0 %v4247
    %4644 = vmatpush1.bf16.msra.mxu0 %v4246
    %4645 = vmatprep.subr.bf16.mxu0 %v4241
    %4646 = vmatpush1.bf16.msra.mxu0 %v4240
    %4647 = vmatprep.subr.bf16.mxu0 %v4235
    %4648 = vmatpush1.bf16.msra.mxu0 %v4234
    %4649 = vmatprep.subr.bf16.mxu0 0
    %4650 = vmatpush2.bf16.msra.mxu0 0
    %4651 = vmatprep.subr.bf16.mxu0 0
    %4652 = vmatpush2.bf16.msra.mxu0 0
    %4653 = vmatprep.subr.bf16.mxu0 0
    %4654 = vmatpush2.bf16.msra.mxu0 0
    %4655 = vmatprep.subr.bf16.mxu0 0
    %4656 = vmatpush2.bf16.msra.mxu0 0
    %4657 = vmatprep.subr.bf16.mxu0 0
    %4658 = vmatpush2.bf16.msra.mxu0 0
    %4659 = vmatprep.subr.bf16.mxu0 0
    %4660 = vmatpush2.bf16.msra.mxu0 0
    %4661 = vmatprep.subr.bf16.mxu0 0
    %4662 = vmatpush2.bf16.msra.mxu0 0
    %4663 = vmatprep.subr.bf16.mxu0 0
    %4664 = vmatpush2.bf16.msra.mxu0 0
    %4665 = vmatprep.mubr.bf16.mxu0 0
    %4666 = vmatmul.mubr.bf16.gmra.mxu0 %v4476
    %v4667 = vpop.f32.mrf.mxu0
    %v4668 = vadd.f32 %v4595, %v4667
    %v4669 = vpop.f32.mrf.mxu0
    %v4670 = vadd.f32 %v4597, %v4669
    %v4671 = vpop.f32.mrf.mxu0
    %v4672 = vadd.f32 %v4599, %v4671
    %v4673 = vpop.f32.mrf.mxu0
    %v4674 = vadd.f32 %v4601, %v4673
    %4675 = vmatprep.mubr.bf16.mxu0 0
    %4676 = vmatmul.mubr.bf16.gmra.mxu0 %v4479
    %v4677 = vpop.f32.mrf.mxu0
    %v4678 = vadd.f32 %v4605, %v4677
    %v4679 = vpop.f32.mrf.mxu0
    %v4680 = vadd.f32 %v4607, %v4679
    %v4681 = vpop.f32.mrf.mxu0
    %v4682 = vadd.f32 %v4609, %v4681
    %v4683 = vpop.f32.mrf.mxu0
    %v4684 = vadd.f32 %v4611, %v4683
    %4685 = vmatprep.mubr.bf16.mxu0 0
    %4686 = vmatmul.mubr.bf16.gmra.mxu0 %v4482
    %v4687 = vpop.f32.mrf.mxu0
    %v4688 = vadd.f32 %v4615, %v4687
    %v4689 = vpop.f32.mrf.mxu0
    %v4690 = vadd.f32 %v4617, %v4689
    %v4691 = vpop.f32.mrf.mxu0
    %v4692 = vadd.f32 %v4619, %v4691
    %v4693 = vpop.f32.mrf.mxu0
    %v4694 = vadd.f32 %v4621, %v4693
    %4695 = vmatprep.mubr.bf16.mxu0 0
    %4696 = vmatmul.mubr.bf16.gmra.mxu0 %v4485
    %v4697 = vpop.f32.mrf.mxu0
    %v4698 = vadd.f32 %v4625, %v4697
    %v4699 = vpop.f32.mrf.mxu0
    %v4700 = vadd.f32 %v4627, %v4699
    %v4701 = vpop.f32.mrf.mxu0
    %v4702 = vadd.f32 %v4629, %v4701
    %v4703 = vpop.f32.mrf.mxu0
    %v4704 = vadd.f32 %v4631, %v4703
    %4705 = vdwg.mxu0
    %4706 = vmatprep.subr.bf16.mxu0 %v4087
    %4707 = vmatpush1.bf16.msra.mxu0 %v4086
    %4708 = vmatprep.subr.bf16.mxu0 %v4081
    %4709 = vmatpush1.bf16.msra.mxu0 %v4080
    %4710 = vmatprep.subr.bf16.mxu0 %v4075
    %4711 = vmatpush1.bf16.msra.mxu0 %v4074
    %4712 = vmatprep.subr.bf16.mxu0 %v4069
    %4713 = vmatpush1.bf16.msra.mxu0 %v4068
    %4714 = vmatprep.subr.bf16.mxu0 %v4063
    %4715 = vmatpush1.bf16.msra.mxu0 %v4062
    %4716 = vmatprep.subr.bf16.mxu0 %v4057
    %4717 = vmatpush1.bf16.msra.mxu0 %v4056
    %4718 = vmatprep.subr.bf16.mxu0 %v4051
    %4719 = vmatpush1.bf16.msra.mxu0 %v4050
    %4720 = vmatprep.subr.bf16.mxu0 %v4045
    %4721 = vmatpush1.bf16.msra.mxu0 %v4044
    %4722 = vmatprep.subr.bf16.mxu0 %v4135
    %4723 = vmatpush2.bf16.msra.mxu0 %v4134
    %4724 = vmatprep.subr.bf16.mxu0 %v4129
    %4725 = vmatpush2.bf16.msra.mxu0 %v4128
    %4726 = vmatprep.subr.bf16.mxu0 %v4123
    %4727 = vmatpush2.bf16.msra.mxu0 %v4122
    %4728 = vmatprep.subr.bf16.mxu0 %v4117
    %4729 = vmatpush2.bf16.msra.mxu0 %v4116
    %4730 = vmatprep.subr.bf16.mxu0 %v4111
    %4731 = vmatpush2.bf16.msra.mxu0 %v4110
    %4732 = vmatprep.subr.bf16.mxu0 %v4105
    %4733 = vmatpush2.bf16.msra.mxu0 %v4104
    %4734 = vmatprep.subr.bf16.mxu0 %v4099
    %4735 = vmatpush2.bf16.msra.mxu0 %v4098
    %4736 = vmatprep.subr.bf16.mxu0 %v4093
    %4737 = vmatpush2.bf16.msra.mxu0 %v4092
    %4738 = vmatprep.mubr.bf16.mxu0 %v3359
    %4739 = vmatmul.mubr.bf16.gmra.mxu0 %v3358
    %v4740 = vpop.f32.mrf.mxu0
    %v4741 = vadd.f32 %v3257, %v4740
    %v4742 = vpop.f32.mrf.mxu0
    %v4743 = vadd.f32 %v3257, %v4742
    %v4744 = vpop.f32.mrf.mxu0
    %v4745 = vadd.f32 %v3262, %v4744
    %v4746 = vpop.f32.mrf.mxu0
    %v4747 = vadd.f32 %v3262, %v4746
    %4748 = vmatprep.mubr.bf16.mxu0 %v3364
    %4749 = vmatmul.mubr.bf16.gmra.mxu0 %v3363
    %v4750 = vpop.f32.mrf.mxu0
    %v4751 = vadd.f32 %v3267, %v4750
    %v4752 = vpop.f32.mrf.mxu0
    %v4753 = vadd.f32 %v3267, %v4752
    %v4754 = vpop.f32.mrf.mxu0
    %v4755 = vadd.f32 %v3272, %v4754
    %v4756 = vpop.f32.mrf.mxu0
    %v4757 = vadd.f32 %v3272, %v4756
    %4758 = vmatprep.mubr.bf16.mxu0 %v3369
    %4759 = vmatmul.mubr.bf16.gmra.mxu0 %v3368
    %v4760 = vpop.f32.mrf.mxu0
    %v4761 = vadd.f32 %v3277, %v4760
    %v4762 = vpop.f32.mrf.mxu0
    %v4763 = vadd.f32 %v3277, %v4762
    %v4764 = vpop.f32.mrf.mxu0
    %v4765 = vadd.f32 %v3282, %v4764
    %v4766 = vpop.f32.mrf.mxu0
    %v4767 = vadd.f32 %v3282, %v4766
    %4768 = vmatprep.mubr.bf16.mxu0 %v3374
    %4769 = vmatmul.mubr.bf16.gmra.mxu0 %v3373
    %v4770 = vpop.f32.mrf.mxu0
    %v4771 = vadd.f32 %v3287, %v4770
    %v4772 = vpop.f32.mrf.mxu0
    %v4773 = vadd.f32 %v3287, %v4772
    %v4774 = vpop.f32.mrf.mxu0
    %v4775 = vadd.f32 %v3292, %v4774
    %v4776 = vpop.f32.mrf.mxu0
    %v4777 = vadd.f32 %v3292, %v4776
    %4778 = vdwg.mxu0
    %4779 = vmatprep.subr.bf16.mxu0 %v4183
    %4780 = vmatpush1.bf16.msra.mxu0 %v4182
    %4781 = vmatprep.subr.bf16.mxu0 %v4177
    %4782 = vmatpush1.bf16.msra.mxu0 %v4176
    %4783 = vmatprep.subr.bf16.mxu0 %v4171
    %4784 = vmatpush1.bf16.msra.mxu0 %v4170
    %4785 = vmatprep.subr.bf16.mxu0 %v4165
    %4786 = vmatpush1.bf16.msra.mxu0 %v4164
    %4787 = vmatprep.subr.bf16.mxu0 %v4159
    %4788 = vmatpush1.bf16.msra.mxu0 %v4158
    %4789 = vmatprep.subr.bf16.mxu0 %v4153
    %4790 = vmatpush1.bf16.msra.mxu0 %v4152
    %4791 = vmatprep.subr.bf16.mxu0 %v4147
    %4792 = vmatpush1.bf16.msra.mxu0 %v4146
    %4793 = vmatprep.subr.bf16.mxu0 %v4141
    %4794 = vmatpush1.bf16.msra.mxu0 %v4140
    %4795 = vmatprep.subr.bf16.mxu0 %v4231
    %4796 = vmatpush2.bf16.msra.mxu0 %v4230
    %4797 = vmatprep.subr.bf16.mxu0 %v4225
    %4798 = vmatpush2.bf16.msra.mxu0 %v4224
    %4799 = vmatprep.subr.bf16.mxu0 %v4219
    %4800 = vmatpush2.bf16.msra.mxu0 %v4218
    %4801 = vmatprep.subr.bf16.mxu0 %v4213
    %4802 = vmatpush2.bf16.msra.mxu0 %v4212
    %4803 = vmatprep.subr.bf16.mxu0 %v4207
    %4804 = vmatpush2.bf16.msra.mxu0 %v4206
    %4805 = vmatprep.subr.bf16.mxu0 %v4201
    %4806 = vmatpush2.bf16.msra.mxu0 %v4200
    %4807 = vmatprep.subr.bf16.mxu0 %v4195
    %4808 = vmatpush2.bf16.msra.mxu0 %v4194
    %4809 = vmatprep.subr.bf16.mxu0 %v4189
    %4810 = vmatpush2.bf16.msra.mxu0 %v4188
    %4811 = vmatprep.mubr.bf16.mxu0 %v3361
    %4812 = vmatmul.mubr.bf16.gmra.mxu0 %v3360
    %v4813 = vpop.f32.mrf.mxu0
    %v4814 = vadd.f32 %v4741, %v4813
    %v4815 = vpop.f32.mrf.mxu0
    %v4816 = vadd.f32 %v4743, %v4815
    %v4817 = vpop.f32.mrf.mxu0
    %v4818 = vadd.f32 %v4745, %v4817
    %v4819 = vpop.f32.mrf.mxu0
    %v4820 = vadd.f32 %v4747, %v4819
    %4821 = vmatprep.mubr.bf16.mxu0 %v3366
    %4822 = vmatmul.mubr.bf16.gmra.mxu0 %v3365
    %v4823 = vpop.f32.mrf.mxu0
    %v4824 = vadd.f32 %v4751, %v4823
    %v4825 = vpop.f32.mrf.mxu0
    %v4826 = vadd.f32 %v4753, %v4825
    %v4827 = vpop.f32.mrf.mxu0
    %v4828 = vadd.f32 %v4755, %v4827
    %v4829 = vpop.f32.mrf.mxu0
    %v4830 = vadd.f32 %v4757, %v4829
    %4831 = vmatprep.mubr.bf16.mxu0 %v3371
    %4832 = vmatmul.mubr.bf16.gmra.mxu0 %v3370
    %v4833 = vpop.f32.mrf.mxu0
    %v4834 = vadd.f32 %v4761, %v4833
    %v4835 = vpop.f32.mrf.mxu0
    %v4836 = vadd.f32 %v4763, %v4835
    %v4837 = vpop.f32.mrf.mxu0
    %v4838 = vadd.f32 %v4765, %v4837
    %v4839 = vpop.f32.mrf.mxu0
    %v4840 = vadd.f32 %v4767, %v4839
    %4841 = vmatprep.mubr.bf16.mxu0 %v3376
    %4842 = vmatmul.mubr.bf16.gmra.mxu0 %v3375
    %v4843 = vpop.f32.mrf.mxu0
    %v4844 = vadd.f32 %v4771, %v4843
    %v4845 = vpop.f32.mrf.mxu0
    %v4846 = vadd.f32 %v4773, %v4845
    %v4847 = vpop.f32.mrf.mxu0
    %v4848 = vadd.f32 %v4775, %v4847
    %v4849 = vpop.f32.mrf.mxu0
    %v4850 = vadd.f32 %v4777, %v4849
    %4851 = vdwg.mxu0
    %4852 = vmatprep.subr.bf16.mxu0 0
    %4853 = vmatpush1.bf16.msra.mxu0 0
    %4854 = vmatprep.subr.bf16.mxu0 0
    %4855 = vmatpush1.bf16.msra.mxu0 0
    %4856 = vmatprep.subr.bf16.mxu0 0
    %4857 = vmatpush1.bf16.msra.mxu0 0
    %4858 = vmatprep.subr.bf16.mxu0 0
    %4859 = vmatpush1.bf16.msra.mxu0 0
    %4860 = vmatprep.subr.bf16.mxu0 %v4255
    %4861 = vmatpush1.bf16.msra.mxu0 %v4254
    %4862 = vmatprep.subr.bf16.mxu0 %v4249
    %4863 = vmatpush1.bf16.msra.mxu0 %v4248
    %4864 = vmatprep.subr.bf16.mxu0 %v4243
    %4865 = vmatpush1.bf16.msra.mxu0 %v4242
    %4866 = vmatprep.subr.bf16.mxu0 %v4237
    %4867 = vmatpush1.bf16.msra.mxu0 %v4236
    %4868 = vmatprep.subr.bf16.mxu0 0
    %4869 = vmatpush2.bf16.msra.mxu0 0
    %4870 = vmatprep.subr.bf16.mxu0 0
    %4871 = vmatpush2.bf16.msra.mxu0 0
    %4872 = vmatprep.subr.bf16.mxu0 0
    %4873 = vmatpush2.bf16.msra.mxu0 0
    %4874 = vmatprep.subr.bf16.mxu0 0
    %4875 = vmatpush2.bf16.msra.mxu0 0
    %4876 = vmatprep.subr.bf16.mxu0 0
    %4877 = vmatpush2.bf16.msra.mxu0 0
    %4878 = vmatprep.subr.bf16.mxu0 0
    %4879 = vmatpush2.bf16.msra.mxu0 0
    %4880 = vmatprep.subr.bf16.mxu0 0
    %4881 = vmatpush2.bf16.msra.mxu0 0
    %4882 = vmatprep.subr.bf16.mxu0 0
    %4883 = vmatpush2.bf16.msra.mxu0 0
    %4884 = vmatprep.mubr.bf16.mxu0 0
    %4885 = vmatmul.mubr.bf16.gmra.mxu0 %v4476
    %v4886 = vpop.f32.mrf.mxu0
    %v4887 = vadd.f32 %v4814, %v4886
    %v4888 = vpop.f32.mrf.mxu0
    %v4889 = vadd.f32 %v4816, %v4888
    %v4890 = vpop.f32.mrf.mxu0
    %v4891 = vadd.f32 %v4818, %v4890
    %v4892 = vpop.f32.mrf.mxu0
    %v4893 = vadd.f32 %v4820, %v4892
    %4894 = vmatprep.mubr.bf16.mxu0 0
    %4895 = vmatmul.mubr.bf16.gmra.mxu0 %v4479
    %v4896 = vpop.f32.mrf.mxu0
    %v4897 = vadd.f32 %v4824, %v4896
    %v4898 = vpop.f32.mrf.mxu0
    %v4899 = vadd.f32 %v4826, %v4898
    %v4900 = vpop.f32.mrf.mxu0
    %v4901 = vadd.f32 %v4828, %v4900
    %v4902 = vpop.f32.mrf.mxu0
    %v4903 = vadd.f32 %v4830, %v4902
    %4904 = vmatprep.mubr.bf16.mxu0 0
    %4905 = vmatmul.mubr.bf16.gmra.mxu0 %v4482
    %v4906 = vpop.f32.mrf.mxu0
    %v4907 = vadd.f32 %v4834, %v4906
    %v4908 = vpop.f32.mrf.mxu0
    %v4909 = vadd.f32 %v4836, %v4908
    %v4910 = vpop.f32.mrf.mxu0
    %v4911 = vadd.f32 %v4838, %v4910
    %v4912 = vpop.f32.mrf.mxu0
    %v4913 = vadd.f32 %v4840, %v4912
    %4914 = vmatprep.mubr.bf16.mxu0 0
    %4915 = vmatmul.mubr.bf16.gmra.mxu0 %v4485
    %v4916 = vpop.f32.mrf.mxu0
    %v4917 = vadd.f32 %v4844, %v4916
    %v4918 = vpop.f32.mrf.mxu0
    %v4919 = vadd.f32 %v4846, %v4918
    %v4920 = vpop.f32.mrf.mxu0
    %v4921 = vadd.f32 %v4848, %v4920
    %v4922 = vpop.f32.mrf.mxu0
    %v4923 = vadd.f32 %v4850, %v4922
    %4924 = vdwg.mxu0
    %4925 = vmatprep.subr.bf16.mxu0 %v4089
    %4926 = vmatpush1.bf16.msra.mxu0 %v4088
    %4927 = vmatprep.subr.bf16.mxu0 %v4083
    %4928 = vmatpush1.bf16.msra.mxu0 %v4082
    %4929 = vmatprep.subr.bf16.mxu0 %v4077
    %4930 = vmatpush1.bf16.msra.mxu0 %v4076
    %4931 = vmatprep.subr.bf16.mxu0 %v4071
    %4932 = vmatpush1.bf16.msra.mxu0 %v4070
    %4933 = vmatprep.subr.bf16.mxu0 %v4065
    %4934 = vmatpush1.bf16.msra.mxu0 %v4064
    %4935 = vmatprep.subr.bf16.mxu0 %v4059
    %4936 = vmatpush1.bf16.msra.mxu0 %v4058
    %4937 = vmatprep.subr.bf16.mxu0 %v4053
    %4938 = vmatpush1.bf16.msra.mxu0 %v4052
    %4939 = vmatprep.subr.bf16.mxu0 %v4047
    %4940 = vmatpush1.bf16.msra.mxu0 %v4046
    %4941 = vmatprep.subr.bf16.mxu0 %v4137
    %4942 = vmatpush2.bf16.msra.mxu0 %v4136
    %4943 = vmatprep.subr.bf16.mxu0 %v4131
    %4944 = vmatpush2.bf16.msra.mxu0 %v4130
    %4945 = vmatprep.subr.bf16.mxu0 %v4125
    %4946 = vmatpush2.bf16.msra.mxu0 %v4124
    %4947 = vmatprep.subr.bf16.mxu0 %v4119
    %4948 = vmatpush2.bf16.msra.mxu0 %v4118
    %4949 = vmatprep.subr.bf16.mxu0 %v4113
    %4950 = vmatpush2.bf16.msra.mxu0 %v4112
    %4951 = vmatprep.subr.bf16.mxu0 %v4107
    %4952 = vmatpush2.bf16.msra.mxu0 %v4106
    %4953 = vmatprep.subr.bf16.mxu0 %v4101
    %4954 = vmatpush2.bf16.msra.mxu0 %v4100
    %4955 = vmatprep.subr.bf16.mxu0 %v4095
    %4956 = vmatpush2.bf16.msra.mxu0 %v4094
    %4957 = vmatprep.mubr.bf16.mxu0 %v3359
    %4958 = vmatmul.mubr.bf16.gmra.mxu0 %v3358
    %v4959 = vpop.f32.mrf.mxu0
    %v4960 = vadd.f32 %v3257, %v4959
    %v4961 = vpop.f32.mrf.mxu0
    %v4962 = vadd.f32 %v3257, %v4961
    %v4963 = vpop.f32.mrf.mxu0
    %v4964 = vadd.f32 %v3262, %v4963
    %v4965 = vpop.f32.mrf.mxu0
    %v4966 = vadd.f32 %v3262, %v4965
    %4967 = vmatprep.mubr.bf16.mxu0 %v3364
    %4968 = vmatmul.mubr.bf16.gmra.mxu0 %v3363
    %v4969 = vpop.f32.mrf.mxu0
    %v4970 = vadd.f32 %v3267, %v4969
    %v4971 = vpop.f32.mrf.mxu0
    %v4972 = vadd.f32 %v3267, %v4971
    %v4973 = vpop.f32.mrf.mxu0
    %v4974 = vadd.f32 %v3272, %v4973
    %v4975 = vpop.f32.mrf.mxu0
    %v4976 = vadd.f32 %v3272, %v4975
    %4977 = vmatprep.mubr.bf16.mxu0 %v3369
    %4978 = vmatmul.mubr.bf16.gmra.mxu0 %v3368
    %v4979 = vpop.f32.mrf.mxu0
    %v4980 = vadd.f32 %v3277, %v4979
    %v4981 = vpop.f32.mrf.mxu0
    %v4982 = vadd.f32 %v3277, %v4981
    %v4983 = vpop.f32.mrf.mxu0
    %v4984 = vadd.f32 %v3282, %v4983
    %v4985 = vpop.f32.mrf.mxu0
    %v4986 = vadd.f32 %v3282, %v4985
    %4987 = vmatprep.mubr.bf16.mxu0 %v3374
    %4988 = vmatmul.mubr.bf16.gmra.mxu0 %v3373
    %v4989 = vpop.f32.mrf.mxu0
    %v4990 = vadd.f32 %v3287, %v4989
    %v4991 = vpop.f32.mrf.mxu0
    %v4992 = vadd.f32 %v3287, %v4991
    %v4993 = vpop.f32.mrf.mxu0
    %v4994 = vadd.f32 %v3292, %v4993
    %v4995 = vpop.f32.mrf.mxu0
    %v4996 = vadd.f32 %v3292, %v4995
    %4997 = vdwg.mxu0
    %4998 = vmatprep.subr.bf16.mxu0 %v4185
    %4999 = vmatpush1.bf16.msra.mxu0 %v4184
    %5000 = vmatprep.subr.bf16.mxu0 %v4179
    %5001 = vmatpush1.bf16.msra.mxu0 %v4178
    %5002 = vmatprep.subr.bf16.mxu0 %v4173
    %5003 = vmatpush1.bf16.msra.mxu0 %v4172
    %5004 = vmatprep.subr.bf16.mxu0 %v4167
    %5005 = vmatpush1.bf16.msra.mxu0 %v4166
    %5006 = vmatprep.subr.bf16.mxu0 %v4161
    %5007 = vmatpush1.bf16.msra.mxu0 %v4160
    %5008 = vmatprep.subr.bf16.mxu0 %v4155
    %5009 = vmatpush1.bf16.msra.mxu0 %v4154
    %5010 = vmatprep.subr.bf16.mxu0 %v4149
    %5011 = vmatpush1.bf16.msra.mxu0 %v4148
    %5012 = vmatprep.subr.bf16.mxu0 %v4143
    %5013 = vmatpush1.bf16.msra.mxu0 %v4142
    %5014 = vmatprep.subr.bf16.mxu0 %v4233
    %5015 = vmatpush2.bf16.msra.mxu0 %v4232
    %5016 = vmatprep.subr.bf16.mxu0 %v4227
    %5017 = vmatpush2.bf16.msra.mxu0 %v4226
    %5018 = vmatprep.subr.bf16.mxu0 %v4221
    %5019 = vmatpush2.bf16.msra.mxu0 %v4220
    %5020 = vmatprep.subr.bf16.mxu0 %v4215
    %5021 = vmatpush2.bf16.msra.mxu0 %v4214
    %5022 = vmatprep.subr.bf16.mxu0 %v4209
    %5023 = vmatpush2.bf16.msra.mxu0 %v4208
    %5024 = vmatprep.subr.bf16.mxu0 %v4203
    %5025 = vmatpush2.bf16.msra.mxu0 %v4202
    %5026 = vmatprep.subr.bf16.mxu0 %v4197
    %5027 = vmatpush2.bf16.msra.mxu0 %v4196
    %5028 = vmatprep.subr.bf16.mxu0 %v4191
    %5029 = vmatpush2.bf16.msra.mxu0 %v4190
    %5030 = vmatprep.mubr.bf16.mxu0 %v3361
    %5031 = vmatmul.mubr.bf16.gmra.mxu0 %v3360
    %v5032 = vpop.f32.mrf.mxu0
    %v5033 = vadd.f32 %v4960, %v5032
    %v5034 = vpop.f32.mrf.mxu0
    %v5035 = vadd.f32 %v4962, %v5034
    %v5036 = vpop.f32.mrf.mxu0
    %v5037 = vadd.f32 %v4964, %v5036
    %v5038 = vpop.f32.mrf.mxu0
    %v5039 = vadd.f32 %v4966, %v5038
    %5040 = vmatprep.mubr.bf16.mxu0 %v3366
    %5041 = vmatmul.mubr.bf16.gmra.mxu0 %v3365
    %v5042 = vpop.f32.mrf.mxu0
    %v5043 = vadd.f32 %v4970, %v5042
    %v5044 = vpop.f32.mrf.mxu0
    %v5045 = vadd.f32 %v4972, %v5044
    %v5046 = vpop.f32.mrf.mxu0
    %v5047 = vadd.f32 %v4974, %v5046
    %v5048 = vpop.f32.mrf.mxu0
    %v5049 = vadd.f32 %v4976, %v5048
    %5050 = vmatprep.mubr.bf16.mxu0 %v3371
    %5051 = vmatmul.mubr.bf16.gmra.mxu0 %v3370
    %v5052 = vpop.f32.mrf.mxu0
    %v5053 = vadd.f32 %v4980, %v5052
    %v5054 = vpop.f32.mrf.mxu0
    %v5055 = vadd.f32 %v4982, %v5054
    %v5056 = vpop.f32.mrf.mxu0
    %v5057 = vadd.f32 %v4984, %v5056
    %v5058 = vpop.f32.mrf.mxu0
    %v5059 = vadd.f32 %v4986, %v5058
    %5060 = vmatprep.mubr.bf16.mxu0 %v3376
    %5061 = vmatmul.mubr.bf16.gmra.mxu0 %v3375
    %v5062 = vpop.f32.mrf.mxu0
    %v5063 = vadd.f32 %v4990, %v5062
    %v5064 = vpop.f32.mrf.mxu0
    %v5065 = vadd.f32 %v4992, %v5064
    %v5066 = vpop.f32.mrf.mxu0
    %v5067 = vadd.f32 %v4994, %v5066
    %v5068 = vpop.f32.mrf.mxu0
    %v5069 = vadd.f32 %v4996, %v5068
    %5070 = vdwg.mxu0
    %5071 = vmatprep.subr.bf16.mxu0 0
    %5072 = vmatpush1.bf16.msra.mxu0 0
    %5073 = vmatprep.subr.bf16.mxu0 0
    %5074 = vmatpush1.bf16.msra.mxu0 0
    %5075 = vmatprep.subr.bf16.mxu0 0
    %5076 = vmatpush1.bf16.msra.mxu0 0
    %5077 = vmatprep.subr.bf16.mxu0 0
    %5078 = vmatpush1.bf16.msra.mxu0 0
    %5079 = vmatprep.subr.bf16.mxu0 %v4257
    %5080 = vmatpush1.bf16.msra.mxu0 %v4256
    %5081 = vmatprep.subr.bf16.mxu0 %v4251
    %5082 = vmatpush1.bf16.msra.mxu0 %v4250
    %5083 = vmatprep.subr.bf16.mxu0 %v4245
    %5084 = vmatpush1.bf16.msra.mxu0 %v4244
    %5085 = vmatprep.subr.bf16.mxu0 %v4239
    %5086 = vmatpush1.bf16.msra.mxu0 %v4238
    %5087 = vmatprep.subr.bf16.mxu0 0
    %5088 = vmatpush2.bf16.msra.mxu0 0
    %5089 = vmatprep.subr.bf16.mxu0 0
    %5090 = vmatpush2.bf16.msra.mxu0 0
    %5091 = vmatprep.subr.bf16.mxu0 0
    %5092 = vmatpush2.bf16.msra.mxu0 0
    %5093 = vmatprep.subr.bf16.mxu0 0
    %5094 = vmatpush2.bf16.msra.mxu0 0
    %5095 = vmatprep.subr.bf16.mxu0 0
    %5096 = vmatpush2.bf16.msra.mxu0 0
    %5097 = vmatprep.subr.bf16.mxu0 0
    %5098 = vmatpush2.bf16.msra.mxu0 0
    %5099 = vmatprep.subr.bf16.mxu0 0
    %5100 = vmatpush2.bf16.msra.mxu0 0
    %5101 = vmatprep.subr.bf16.mxu0 0
    %5102 = vmatpush2.bf16.msra.mxu0 0
    %5103 = vmatprep.mubr.bf16.mxu0 0
    %5104 = vmatmul.mubr.bf16.gmra.mxu0 %v4476
    %v5105 = vpop.f32.mrf.mxu0
    %v5106 = vadd.f32 %v5033, %v5105
    %v5107 = vpop.f32.mrf.mxu0
    %v5108 = vadd.f32 %v5035, %v5107
    %v5109 = vpop.f32.mrf.mxu0
    %v5110 = vadd.f32 %v5037, %v5109
    %v5111 = vpop.f32.mrf.mxu0
    %v5112 = vadd.f32 %v5039, %v5111
    %5113 = vmatprep.mubr.bf16.mxu0 0
    %5114 = vmatmul.mubr.bf16.gmra.mxu0 %v4479
    %v5115 = vpop.f32.mrf.mxu0
    %v5116 = vadd.f32 %v5043, %v5115
    %v5117 = vpop.f32.mrf.mxu0
    %v5118 = vadd.f32 %v5045, %v5117
    %v5119 = vpop.f32.mrf.mxu0
    %v5120 = vadd.f32 %v5047, %v5119
    %v5121 = vpop.f32.mrf.mxu0
    %v5122 = vadd.f32 %v5049, %v5121
    %5123 = vmatprep.mubr.bf16.mxu0 0
    %5124 = vmatmul.mubr.bf16.gmra.mxu0 %v4482
    %v5125 = vpop.f32.mrf.mxu0
    %v5126 = vadd.f32 %v5053, %v5125
    %v5127 = vpop.f32.mrf.mxu0
    %v5128 = vadd.f32 %v5055, %v5127
    %v5129 = vpop.f32.mrf.mxu0
    %v5130 = vadd.f32 %v5057, %v5129
    %v5131 = vpop.f32.mrf.mxu0
    %v5132 = vadd.f32 %v5059, %v5131
    %5133 = vmatprep.mubr.bf16.mxu0 0
    %5134 = vmatmul.mubr.bf16.gmra.mxu0 %v4485
    %v5135 = vpop.f32.mrf.mxu0
    %v5136 = vadd.f32 %v5063, %v5135
    %v5137 = vpop.f32.mrf.mxu0
    %v5138 = vadd.f32 %v5065, %v5137
    %v5139 = vpop.f32.mrf.mxu0
    %v5140 = vadd.f32 %v5067, %v5139
    %v5141 = vpop.f32.mrf.mxu0
    %v5142 = vadd.f32 %v5069, %v5141
    %5143 = vdwg.mxu0
    %v5144 = vmax.f32 %v4668, 0.0
    %v5145 = vmax.f32 %v4670, 0.0
    %v5146 = vmax.f32 %v4887, 0.0
    %v5147 = vmax.f32 %v4889, 0.0
    %v5148 = vmax.f32 %v5106, 0.0
    %v5149 = vmax.f32 %v5108, 0.0
    %v5150 = vmax.f32 %v4672, 0.0
    %v5151 = vmax.f32 %v4674, 0.0
    %v5152 = vmax.f32 %v4891, 0.0
    %v5153 = vmax.f32 %v4893, 0.0
    %v5154 = vmax.f32 %v5110, 0.0
    %v5155 = vmax.f32 %v5112, 0.0
    %v5156 = vmax.f32 %v4678, 0.0
    %v5157 = vmax.f32 %v4680, 0.0
    %v5158 = vmax.f32 %v4897, 0.0
    %v5159 = vmax.f32 %v4899, 0.0
    %v5160 = vmax.f32 %v5116, 0.0
    %v5161 = vmax.f32 %v5118, 0.0
    %v5162 = vmax.f32 %v4682, 0.0
    %v5163 = vmax.f32 %v4684, 0.0
    %v5164 = vmax.f32 %v4901, 0.0
    %v5165 = vmax.f32 %v4903, 0.0
    %v5166 = vmax.f32 %v5120, 0.0
    %v5167 = vmax.f32 %v5122, 0.0
    %v5168 = vmax.f32 %v4688, 0.0
    %v5169 = vmax.f32 %v4690, 0.0
    %v5170 = vmax.f32 %v4907, 0.0
    %v5171 = vmax.f32 %v4909, 0.0
    %v5172 = vmax.f32 %v5126, 0.0
    %v5173 = vmax.f32 %v5128, 0.0
    %v5174 = vmax.f32 %v4692, 0.0
    %v5175 = vmax.f32 %v4694, 0.0
    %v5176 = vmax.f32 %v4911, 0.0
    %v5177 = vmax.f32 %v4913, 0.0
    %v5178 = vmax.f32 %v5130, 0.0
    %v5179 = vmax.f32 %v5132, 0.0
    %v5180 = vmax.f32 %v4698, 0.0
    %v5181 = vmax.f32 %v4700, 0.0
    %v5182 = vmax.f32 %v4917, 0.0
    %v5183 = vmax.f32 %v4919, 0.0
    %v5184 = vmax.f32 %v5136, 0.0
    %v5185 = vmax.f32 %v5138, 0.0
    %v5186 = vmax.f32 %v4702, 0.0
    %v5187 = vmax.f32 %v4704, 0.0
    %v5188 = vmax.f32 %v4921, 0.0
    %v5189 = vmax.f32 %v4923, 0.0
    %v5190 = vmax.f32 %v5140, 0.0
    %v5191 = vmax.f32 %v5142, 0.0
    %v5193 = vlaneseq
    %v5194 = vshrl.u32 %v5193, 7
    %v5195 = vsub.s32 0, %v5194
    %v5196 = vrot.slane %v66, %v5195
    %v5197 = vlaneseq
    %v5198 = vshrl.u32 %v5197, 7
    %v5199 = vsub.s32 1, %v5198
    %v5200 = vrot.slane %v66, %v5199
    %v5201 = vlaneseq
    %v5202 = vshrl.u32 %v5201, 7
    %v5203 = vsub.s32 2, %v5202
    %v5204 = vrot.slane %v66, %v5203
    %v5208 = vmul.f32 %v5144, %v5196
    %v5209 = vmul.f32 %v5145, %v5200
    %v5210 = vmul.f32 %v5146, %v5204
    %v5211 = vmul.f32 %v5150, %v5196
    %v5212 = vmul.f32 %v5151, %v5200
    %v5213 = vmul.f32 %v5152, %v5204
    %v5214 = vmul.f32 %v5156, %v5196
    %v5215 = vmul.f32 %v5157, %v5200
    %v5216 = vmul.f32 %v5158, %v5204
    %v5217 = vmul.f32 %v5162, %v5196
    %v5218 = vmul.f32 %v5163, %v5200
    %v5219 = vmul.f32 %v5164, %v5204
    %v5220 = vmul.f32 %v5168, %v5196
    %v5221 = vmul.f32 %v5169, %v5200
    %v5222 = vmul.f32 %v5170, %v5204
    %v5223 = vmul.f32 %v5174, %v5196
    %v5224 = vmul.f32 %v5175, %v5200
    %v5225 = vmul.f32 %v5176, %v5204
    %v5226 = vmul.f32 %v5180, %v5196
    %v5227 = vmul.f32 %v5181, %v5200
    %v5228 = vmul.f32 %v5182, %v5204
    %v5229 = vmul.f32 %v5186, %v5196
    %v5230 = vmul.f32 %v5187, %v5200
    %v5231 = vmul.f32 %v5188, %v5204
    %5232 = vrot.lane.b32.xlu0 %v5208, 19
    %v5233 = vpop.permute.xlu0 %5232
    %5234 = vrot.lane.b32.xlu0 %v5211, 19
    %v5235 = vpop.permute.xlu0 %5234
    %5236 = vrot.lane.b32.xlu0 %v5214, 19
    %v5237 = vpop.permute.xlu0 %5236
    %5238 = vrot.lane.b32.xlu0 %v5217, 19
    %v5239 = vpop.permute.xlu0 %5238
    %5240 = vrot.lane.b32.xlu0 %v5220, 19
    %v5241 = vpop.permute.xlu0 %5240
    %5242 = vrot.lane.b32.xlu0 %v5223, 19
    %v5243 = vpop.permute.xlu0 %5242
    %5244 = vrot.lane.b32.xlu0 %v5226, 19
    %v5245 = vpop.permute.xlu0 %5244
    %5246 = vrot.lane.b32.xlu0 %v5229, 19
    %v5247 = vpop.permute.xlu0 %5246
    %5248 = vrot.lane.b32.xlu0 %v5209, 19
    %v5249 = vpop.permute.xlu0 %5248
    %5250 = vrot.lane.b32.xlu0 %v5212, 19
    %v5251 = vpop.permute.xlu0 %5250
    %5252 = vrot.lane.b32.xlu0 %v5215, 19
    %v5253 = vpop.permute.xlu0 %5252
    %5254 = vrot.lane.b32.xlu0 %v5218, 19
    %v5255 = vpop.permute.xlu0 %5254
    %5256 = vrot.lane.b32.xlu0 %v5221, 19
    %v5257 = vpop.permute.xlu0 %5256
    %5258 = vrot.lane.b32.xlu0 %v5224, 19
    %v5259 = vpop.permute.xlu0 %5258
    %5260 = vrot.lane.b32.xlu0 %v5227, 19
    %v5261 = vpop.permute.xlu0 %5260
    %5262 = vrot.lane.b32.xlu0 %v5230, 19
    %v5263 = vpop.permute.xlu0 %5262
    %5264 = vrot.lane.b32.xlu0 %v5210, 19
    %v5265 = vpop.permute.xlu0 %5264
    %5266 = vrot.lane.b32.xlu0 %v5213, 19
    %v5267 = vpop.permute.xlu0 %5266
    %5268 = vrot.lane.b32.xlu0 %v5216, 19
    %v5269 = vpop.permute.xlu0 %5268
    %5270 = vrot.lane.b32.xlu0 %v5219, 19
    %v5271 = vpop.permute.xlu0 %5270
    %5272 = vrot.lane.b32.xlu0 %v5222, 19
    %v5273 = vpop.permute.xlu0 %5272
    %5274 = vrot.lane.b32.xlu0 %v5225, 19
    %v5275 = vpop.permute.xlu0 %5274
    %5276 = vrot.lane.b32.xlu0 %v5228, 19
    %v5277 = vpop.permute.xlu0 %5276
    %5278 = vrot.lane.b32.xlu0 %v5231, 19
    %v5279 = vpop.permute.xlu0 %5278
    %v5280 = vsel %vm141, %v5249, %v5265
    %v5281 = vsel %vm141, %v5251, %v5267
    %v5282 = vsel %vm141, %v5253, %v5269
    %v5283 = vsel %vm141, %v5255, %v5271
    %v5284 = vsel %vm141, %v5257, %v5273
    %v5285 = vsel %vm141, %v5259, %v5275
    %v5286 = vsel %vm141, %v5261, %v5277
    %v5287 = vsel %vm141, %v5263, %v5279
    %v5288 = vsel %vm141, %v5233, %v5249
    %v5289 = vsel %vm141, %v5235, %v5251
    %v5290 = vsel %vm141, %v5237, %v5253
    %v5291 = vsel %vm141, %v5239, %v5255
    %v5292 = vsel %vm141, %v5241, %v5257
    %v5293 = vsel %vm141, %v5243, %v5259
    %v5294 = vsel %vm141, %v5245, %v5261
    %v5295 = vsel %vm141, %v5247, %v5263
    %v5296 = vsel %vm141, %v5265, %v5233
    %v5297 = vsel %vm141, %v5267, %v5235
    %v5298 = vsel %vm141, %v5269, %v5237
    %v5299 = vsel %vm141, %v5271, %v5239
    %v5300 = vsel %vm141, %v5273, %v5241
    %v5301 = vsel %vm141, %v5275, %v5243
    %v5302 = vsel %vm141, %v5277, %v5245
    %v5303 = vsel %vm141, %v5279, %v5247
    %v5304 = vpack.c.bf16 %v5297, %v5296
    %v5305 = vpack.c.bf16 %v5289, %v5288
    %v5306 = vpack.c.bf16 %v5281, %v5280
    %v5307 = vpack.c.bf16 %v5299, %v5298
    %v5308 = vpack.c.bf16 %v5291, %v5290
    %v5309 = vpack.c.bf16 %v5283, %v5282
    %v5310 = vpack.c.bf16 %v5301, %v5300
    %v5311 = vpack.c.bf16 %v5293, %v5292
    %v5312 = vpack.c.bf16 %v5285, %v5284
    %v5313 = vpack.c.bf16 %v5303, %v5302
    %v5314 = vpack.c.bf16 %v5295, %v5294
    %v5315 = vpack.c.bf16 %v5287, %v5286
    %v5328 = vunpack.c.l.b16 %v5304
    %v5329 = vunpack.c.l.b16 %v5305
    %v5330 = vunpack.c.l.b16 %v5306
    %v5331 = vunpack.c.h.b16 %v5304
    %v5332 = vunpack.c.h.b16 %v5305
    %v5333 = vunpack.c.h.b16 %v5306
    %v5334 = vunpack.c.l.b16 %v5307
    %v5335 = vunpack.c.l.b16 %v5308
    %v5336 = vunpack.c.l.b16 %v5309
    %v5337 = vunpack.c.h.b16 %v5307
    %v5338 = vunpack.c.h.b16 %v5308
    %v5339 = vunpack.c.h.b16 %v5309
    %v5340 = vunpack.c.l.b16 %v5310
    %v5341 = vunpack.c.l.b16 %v5311
    %v5342 = vunpack.c.l.b16 %v5312
    %v5343 = vunpack.c.h.b16 %v5310
    %v5344 = vunpack.c.h.b16 %v5311
    %v5345 = vunpack.c.h.b16 %v5312
    %v5346 = vunpack.c.l.b16 %v5313
    %v5347 = vunpack.c.l.b16 %v5314
    %v5348 = vunpack.c.l.b16 %v5315
    %v5349 = vunpack.c.h.b16 %v5313
    %v5350 = vunpack.c.h.b16 %v5314
    %v5351 = vunpack.c.h.b16 %v5315
    %v5352 = vpack.c.b16 %v5329, %v5328
    %v5353 = vpack.c.b16 %v5330, %v5330
    %v5354 = vpack.c.b16 %v5332, %v5331
    %v5355 = vpack.c.b16 %v5333, %v5333
    %v5356 = vpack.c.b16 %v5335, %v5334
    %v5357 = vpack.c.b16 %v5336, %v5336
    %v5358 = vpack.c.b16 %v5338, %v5337
    %v5359 = vpack.c.b16 %v5339, %v5339
    %v5360 = vpack.c.b16 %v5341, %v5340
    %v5361 = vpack.c.b16 %v5342, %v5342
    %v5362 = vpack.c.b16 %v5344, %v5343
    %v5363 = vpack.c.b16 %v5345, %v5345
    %v5364 = vpack.c.b16 %v5347, %v5346
    %v5365 = vpack.c.b16 %v5348, %v5348
    %v5366 = vpack.c.b16 %v5350, %v5349
    %v5367 = vpack.c.b16 %v5351, %v5351
    %5384 = vst [vmem:[#allocation2] sm:$0xff] %v5352
    %5385 = vst [vmem:[#allocation2 + $0x8] sm:$0xf] %v5353
    %5386 = vst [vmem:[#allocation2 + $0x18] sm:$0xff] %v5354
    %5387 = vst [vmem:[#allocation2 + $0x20] sm:$0xf] %v5355
    %5388 = vst [vmem:[#allocation2 + $0x30] sm:$0xff] %v5356
    %5389 = vst [vmem:[#allocation2 + $0x38] sm:$0xf] %v5357
    %5390 = vst [vmem:[#allocation2 + $0x48] sm:$0xff] %v5358
    %5391 = vst [vmem:[#allocation2 + $0x50] sm:$0xf] %v5359
    %5392 = vst [vmem:[#allocation2 + $0x60] sm:$0xff] %v5360
    %5393 = vst [vmem:[#allocation2 + $0x68] sm:$0xf] %v5361
    %5394 = vst [vmem:[#allocation2 + $0x78] sm:$0xff] %v5362
    %5395 = vst [vmem:[#allocation2 + $0x80] sm:$0xf] %v5363
    %5396 = vst [vmem:[#allocation2 + $0x90] sm:$0xff] %v5364
    %5397 = vst [vmem:[#allocation2 + $0x98] sm:$0xf] %v5365
    %5398 = vst [vmem:[#allocation2 + $0xa8] sm:$0xff] %v5366
    %5399 = vst [vmem:[#allocation2 + $0xb0] sm:$0xf] %v5367
    %5400 = vrot.lane.b32.xlu0 %v5208, 18
    %v5401 = vpop.permute.xlu0 %5400
    %5402 = vrot.lane.b32.xlu0 %v5211, 18
    %v5403 = vpop.permute.xlu0 %5402
    %5404 = vrot.lane.b32.xlu0 %v5214, 18
    %v5405 = vpop.permute.xlu0 %5404
    %5406 = vrot.lane.b32.xlu0 %v5217, 18
    %v5407 = vpop.permute.xlu0 %5406
    %5408 = vrot.lane.b32.xlu0 %v5220, 18
    %v5409 = vpop.permute.xlu0 %5408
    %5410 = vrot.lane.b32.xlu0 %v5223, 18
    %v5411 = vpop.permute.xlu0 %5410
    %5412 = vrot.lane.b32.xlu0 %v5226, 18
    %v5413 = vpop.permute.xlu0 %5412
    %5414 = vrot.lane.b32.xlu0 %v5229, 18
    %v5415 = vpop.permute.xlu0 %5414
    %5416 = vrot.lane.b32.xlu0 %v5209, 18
    %v5417 = vpop.permute.xlu0 %5416
    %5418 = vrot.lane.b32.xlu0 %v5212, 18
    %v5419 = vpop.permute.xlu0 %5418
    %5420 = vrot.lane.b32.xlu0 %v5215, 18
    %v5421 = vpop.permute.xlu0 %5420
    %5422 = vrot.lane.b32.xlu0 %v5218, 18
    %v5423 = vpop.permute.xlu0 %5422
    %5424 = vrot.lane.b32.xlu0 %v5221, 18
    %v5425 = vpop.permute.xlu0 %5424
    %5426 = vrot.lane.b32.xlu0 %v5224, 18
    %v5427 = vpop.permute.xlu0 %5426
    %5428 = vrot.lane.b32.xlu0 %v5227, 18
    %v5429 = vpop.permute.xlu0 %5428
    %5430 = vrot.lane.b32.xlu0 %v5230, 18
    %v5431 = vpop.permute.xlu0 %5430
    %5432 = vrot.lane.b32.xlu0 %v5210, 18
    %v5433 = vpop.permute.xlu0 %5432
    %5434 = vrot.lane.b32.xlu0 %v5213, 18
    %v5435 = vpop.permute.xlu0 %5434
    %5436 = vrot.lane.b32.xlu0 %v5216, 18
    %v5437 = vpop.permute.xlu0 %5436
    %5438 = vrot.lane.b32.xlu0 %v5219, 18
    %v5439 = vpop.permute.xlu0 %5438
    %5440 = vrot.lane.b32.xlu0 %v5222, 18
    %v5441 = vpop.permute.xlu0 %5440
    %5442 = vrot.lane.b32.xlu0 %v5225, 18
    %v5443 = vpop.permute.xlu0 %5442
    %5444 = vrot.lane.b32.xlu0 %v5228, 18
    %v5445 = vpop.permute.xlu0 %5444
    %5446 = vrot.lane.b32.xlu0 %v5231, 18
    %v5447 = vpop.permute.xlu0 %5446
    %v5448 = vsel %vm310, %v5417, %v5433
    %v5449 = vsel %vm310, %v5419, %v5435
    %v5450 = vsel %vm310, %v5421, %v5437
    %v5451 = vsel %vm310, %v5423, %v5439
    %v5452 = vsel %vm310, %v5425, %v5441
    %v5453 = vsel %vm310, %v5427, %v5443
    %v5454 = vsel %vm310, %v5429, %v5445
    %v5455 = vsel %vm310, %v5431, %v5447
    %v5456 = vsel %vm310, %v5401, %v5417
    %v5457 = vsel %vm310, %v5403, %v5419
    %v5458 = vsel %vm310, %v5405, %v5421
    %v5459 = vsel %vm310, %v5407, %v5423
    %v5460 = vsel %vm310, %v5409, %v5425
    %v5461 = vsel %vm310, %v5411, %v5427
    %v5462 = vsel %vm310, %v5413, %v5429
    %v5463 = vsel %vm310, %v5415, %v5431
    %v5464 = vsel %vm310, %v5433, %v5401
    %v5465 = vsel %vm310, %v5435, %v5403
    %v5466 = vsel %vm310, %v5437, %v5405
    %v5467 = vsel %vm310, %v5439, %v5407
    %v5468 = vsel %vm310, %v5441, %v5409
    %v5469 = vsel %vm310, %v5443, %v5411
    %v5470 = vsel %vm310, %v5445, %v5413
    %v5471 = vsel %vm310, %v5447, %v5415
    %v5472 = vpack.c.bf16 %v5465, %v5464
    %v5473 = vpack.c.bf16 %v5457, %v5456
    %v5474 = vpack.c.bf16 %v5449, %v5448
    %v5475 = vpack.c.bf16 %v5467, %v5466
    %v5476 = vpack.c.bf16 %v5459, %v5458
    %v5477 = vpack.c.bf16 %v5451, %v5450
    %v5478 = vpack.c.bf16 %v5469, %v5468
    %v5479 = vpack.c.bf16 %v5461, %v5460
    %v5480 = vpack.c.bf16 %v5453, %v5452
    %v5481 = vpack.c.bf16 %v5471, %v5470
    %v5482 = vpack.c.bf16 %v5463, %v5462
    %v5483 = vpack.c.bf16 %v5455, %v5454
    %v5496 = vunpack.c.l.b16 %v5472
    %v5497 = vunpack.c.l.b16 %v5473
    %v5498 = vunpack.c.l.b16 %v5474
    %v5499 = vunpack.c.h.b16 %v5472
    %v5500 = vunpack.c.h.b16 %v5473
    %v5501 = vunpack.c.h.b16 %v5474
    %v5502 = vunpack.c.l.b16 %v5475
    %v5503 = vunpack.c.l.b16 %v5476
    %v5504 = vunpack.c.l.b16 %v5477
    %v5505 = vunpack.c.h.b16 %v5475
    %v5506 = vunpack.c.h.b16 %v5476
    %v5507 = vunpack.c.h.b16 %v5477
    %v5508 = vunpack.c.l.b16 %v5478
    %v5509 = vunpack.c.l.b16 %v5479
    %v5510 = vunpack.c.l.b16 %v5480
    %v5511 = vunpack.c.h.b16 %v5478
    %v5512 = vunpack.c.h.b16 %v5479
    %v5513 = vunpack.c.h.b16 %v5480
    %v5514 = vunpack.c.l.b16 %v5481
    %v5515 = vunpack.c.l.b16 %v5482
    %v5516 = vunpack.c.l.b16 %v5483
    %v5517 = vunpack.c.h.b16 %v5481
    %v5518 = vunpack.c.h.b16 %v5482
    %v5519 = vunpack.c.h.b16 %v5483
    %v5520 = vpack.c.b16 %v5497, %v5496
    %v5521 = vpack.c.b16 %v5498, %v5498
    %v5522 = vpack.c.b16 %v5500, %v5499
    %v5523 = vpack.c.b16 %v5501, %v5501
    %v5524 = vpack.c.b16 %v5503, %v5502
    %v5525 = vpack.c.b16 %v5504, %v5504
    %v5526 = vpack.c.b16 %v5506, %v5505
    %v5527 = vpack.c.b16 %v5507, %v5507
    %v5528 = vpack.c.b16 %v5509, %v5508
    %v5529 = vpack.c.b16 %v5510, %v5510
    %v5530 = vpack.c.b16 %v5512, %v5511
    %v5531 = vpack.c.b16 %v5513, %v5513
    %v5532 = vpack.c.b16 %v5515, %v5514
    %v5533 = vpack.c.b16 %v5516, %v5516
    %v5534 = vpack.c.b16 %v5518, %v5517
    %v5535 = vpack.c.b16 %v5519, %v5519
    %5552 = vst [vmem:[#allocation2 + $0xc0] sm:$0xff] %v5520
    %5553 = vst [vmem:[#allocation2 + $0xc8] sm:$0xf] %v5521
    %5554 = vst [vmem:[#allocation2 + $0xd8] sm:$0xff] %v5522
    %5555 = vst [vmem:[#allocation2 + $0xe0] sm:$0xf] %v5523
    %5556 = vst [vmem:[#allocation2 + $0xf0] sm:$0xff] %v5524
    %5557 = vst [vmem:[#allocation2 + $0xf8] sm:$0xf] %v5525
    %5558 = vst [vmem:[#allocation2 + $0x108] sm:$0xff] %v5526
    %5559 = vst [vmem:[#allocation2 + $0x110] sm:$0xf] %v5527
    %5560 = vst [vmem:[#allocation2 + $0x120] sm:$0xff] %v5528
    %5561 = vst [vmem:[#allocation2 + $0x128] sm:$0xf] %v5529
    %5562 = vst [vmem:[#allocation2 + $0x138] sm:$0xff] %v5530
    %5563 = vst [vmem:[#allocation2 + $0x140] sm:$0xf] %v5531
    %5564 = vst [vmem:[#allocation2 + $0x150] sm:$0xff] %v5532
    %5565 = vst [vmem:[#allocation2 + $0x158] sm:$0xf] %v5533
    %5566 = vst [vmem:[#allocation2 + $0x168] sm:$0xff] %v5534
    %5567 = vst [vmem:[#allocation2 + $0x170] sm:$0xf] %v5535
    %5568 = vrot.lane.b32.xlu0 %v5208, 17
    %v5569 = vpop.permute.xlu0 %5568
    %5570 = vrot.lane.b32.xlu0 %v5211, 17
    %v5571 = vpop.permute.xlu0 %5570
    %5572 = vrot.lane.b32.xlu0 %v5214, 17
    %v5573 = vpop.permute.xlu0 %5572
    %5574 = vrot.lane.b32.xlu0 %v5217, 17
    %v5575 = vpop.permute.xlu0 %5574
    %5576 = vrot.lane.b32.xlu0 %v5220, 17
    %v5577 = vpop.permute.xlu0 %5576
    %5578 = vrot.lane.b32.xlu0 %v5223, 17
    %v5579 = vpop.permute.xlu0 %5578
    %5580 = vrot.lane.b32.xlu0 %v5226, 17
    %v5581 = vpop.permute.xlu0 %5580
    %5582 = vrot.lane.b32.xlu0 %v5229, 17
    %v5583 = vpop.permute.xlu0 %5582
    %5584 = vrot.lane.b32.xlu0 %v5209, 17
    %v5585 = vpop.permute.xlu0 %5584
    %5586 = vrot.lane.b32.xlu0 %v5212, 17
    %v5587 = vpop.permute.xlu0 %5586
    %5588 = vrot.lane.b32.xlu0 %v5215, 17
    %v5589 = vpop.permute.xlu0 %5588
    %5590 = vrot.lane.b32.xlu0 %v5218, 17
    %v5591 = vpop.permute.xlu0 %5590
    %5592 = vrot.lane.b32.xlu0 %v5221, 17
    %v5593 = vpop.permute.xlu0 %5592
    %5594 = vrot.lane.b32.xlu0 %v5224, 17
    %v5595 = vpop.permute.xlu0 %5594
    %5596 = vrot.lane.b32.xlu0 %v5227, 17
    %v5597 = vpop.permute.xlu0 %5596
    %5598 = vrot.lane.b32.xlu0 %v5230, 17
    %v5599 = vpop.permute.xlu0 %5598
    %5600 = vrot.lane.b32.xlu0 %v5210, 17
    %v5601 = vpop.permute.xlu0 %5600
    %5602 = vrot.lane.b32.xlu0 %v5213, 17
    %v5603 = vpop.permute.xlu0 %5602
    %5604 = vrot.lane.b32.xlu0 %v5216, 17
    %v5605 = vpop.permute.xlu0 %5604
    %5606 = vrot.lane.b32.xlu0 %v5219, 17
    %v5607 = vpop.permute.xlu0 %5606
    %5608 = vrot.lane.b32.xlu0 %v5222, 17
    %v5609 = vpop.permute.xlu0 %5608
    %5610 = vrot.lane.b32.xlu0 %v5225, 17
    %v5611 = vpop.permute.xlu0 %5610
    %5612 = vrot.lane.b32.xlu0 %v5228, 17
    %v5613 = vpop.permute.xlu0 %5612
    %5614 = vrot.lane.b32.xlu0 %v5231, 17
    %v5615 = vpop.permute.xlu0 %5614
    %v5616 = vsel %vm479, %v5585, %v5601
    %v5617 = vsel %vm479, %v5587, %v5603
    %v5618 = vsel %vm479, %v5589, %v5605
    %v5619 = vsel %vm479, %v5591, %v5607
    %v5620 = vsel %vm479, %v5593, %v5609
    %v5621 = vsel %vm479, %v5595, %v5611
    %v5622 = vsel %vm479, %v5597, %v5613
    %v5623 = vsel %vm479, %v5599, %v5615
    %v5624 = vsel %vm479, %v5569, %v5585
    %v5625 = vsel %vm479, %v5571, %v5587
    %v5626 = vsel %vm479, %v5573, %v5589
    %v5627 = vsel %vm479, %v5575, %v5591
    %v5628 = vsel %vm479, %v5577, %v5593
    %v5629 = vsel %vm479, %v5579, %v5595
    %v5630 = vsel %vm479, %v5581, %v5597
    %v5631 = vsel %vm479, %v5583, %v5599
    %v5632 = vsel %vm479, %v5601, %v5569
    %v5633 = vsel %vm479, %v5603, %v5571
    %v5634 = vsel %vm479, %v5605, %v5573
    %v5635 = vsel %vm479, %v5607, %v5575
    %v5636 = vsel %vm479, %v5609, %v5577
    %v5637 = vsel %vm479, %v5611, %v5579
    %v5638 = vsel %vm479, %v5613, %v5581
    %v5639 = vsel %vm479, %v5615, %v5583
    %v5640 = vpack.c.bf16 %v5633, %v5632
    %v5641 = vpack.c.bf16 %v5625, %v5624
    %v5642 = vpack.c.bf16 %v5617, %v5616
    %v5643 = vpack.c.bf16 %v5635, %v5634
    %v5644 = vpack.c.bf16 %v5627, %v5626
    %v5645 = vpack.c.bf16 %v5619, %v5618
    %v5646 = vpack.c.bf16 %v5637, %v5636
    %v5647 = vpack.c.bf16 %v5629, %v5628
    %v5648 = vpack.c.bf16 %v5621, %v5620
    %v5649 = vpack.c.bf16 %v5639, %v5638
    %v5650 = vpack.c.bf16 %v5631, %v5630
    %v5651 = vpack.c.bf16 %v5623, %v5622
    %v5664 = vunpack.c.l.b16 %v5640
    %v5665 = vunpack.c.l.b16 %v5641
    %v5666 = vunpack.c.l.b16 %v5642
    %v5667 = vunpack.c.h.b16 %v5640
    %v5668 = vunpack.c.h.b16 %v5641
    %v5669 = vunpack.c.h.b16 %v5642
    %v5670 = vunpack.c.l.b16 %v5643
    %v5671 = vunpack.c.l.b16 %v5644
    %v5672 = vunpack.c.l.b16 %v5645
    %v5673 = vunpack.c.h.b16 %v5643
    %v5674 = vunpack.c.h.b16 %v5644
    %v5675 = vunpack.c.h.b16 %v5645
    %v5676 = vunpack.c.l.b16 %v5646
    %v5677 = vunpack.c.l.b16 %v5647
    %v5678 = vunpack.c.l.b16 %v5648
    %v5679 = vunpack.c.h.b16 %v5646
    %v5680 = vunpack.c.h.b16 %v5647
    %v5681 = vunpack.c.h.b16 %v5648
    %v5682 = vunpack.c.l.b16 %v5649
    %v5683 = vunpack.c.l.b16 %v5650
    %v5684 = vunpack.c.l.b16 %v5651
    %v5685 = vunpack.c.h.b16 %v5649
    %v5686 = vunpack.c.h.b16 %v5650
    %v5687 = vunpack.c.h.b16 %v5651
    %v5688 = vpack.c.b16 %v5665, %v5664
    %v5689 = vpack.c.b16 %v5666, %v5666
    %v5690 = vpack.c.b16 %v5668, %v5667
    %v5691 = vpack.c.b16 %v5669, %v5669
    %v5692 = vpack.c.b16 %v5671, %v5670
    %v5693 = vpack.c.b16 %v5672, %v5672
    %v5694 = vpack.c.b16 %v5674, %v5673
    %v5695 = vpack.c.b16 %v5675, %v5675
    %v5696 = vpack.c.b16 %v5677, %v5676
    %v5697 = vpack.c.b16 %v5678, %v5678
    %v5698 = vpack.c.b16 %v5680, %v5679
    %v5699 = vpack.c.b16 %v5681, %v5681
    %v5700 = vpack.c.b16 %v5683, %v5682
    %v5701 = vpack.c.b16 %v5684, %v5684
    %v5702 = vpack.c.b16 %v5686, %v5685
    %v5703 = vpack.c.b16 %v5687, %v5687
    %5720 = vst [vmem:[#allocation2 + $0x180] sm:$0xff] %v5688
    %5721 = vst [vmem:[#allocation2 + $0x188] sm:$0xf] %v5689
    %5722 = vst [vmem:[#allocation2 + $0x198] sm:$0xff] %v5690
    %5723 = vst [vmem:[#allocation2 + $0x1a0] sm:$0xf] %v5691
    %5724 = vst [vmem:[#allocation2 + $0x1b0] sm:$0xff] %v5692
    %5725 = vst [vmem:[#allocation2 + $0x1b8] sm:$0xf] %v5693
    %5726 = vst [vmem:[#allocation2 + $0x1c8] sm:$0xff] %v5694
    %5727 = vst [vmem:[#allocation2 + $0x1d0] sm:$0xf] %v5695
    %5728 = vst [vmem:[#allocation2 + $0x1e0] sm:$0xff] %v5696
    %5729 = vst [vmem:[#allocation2 + $0x1e8] sm:$0xf] %v5697
    %5730 = vst [vmem:[#allocation2 + $0x1f8] sm:$0xff] %v5698
    %5731 = vst [vmem:[#allocation2 + $0x200] sm:$0xf] %v5699
    %5732 = vst [vmem:[#allocation2 + $0x210] sm:$0xff] %v5700
    %5733 = vst [vmem:[#allocation2 + $0x218] sm:$0xf] %v5701
    %5734 = vst [vmem:[#allocation2 + $0x228] sm:$0xff] %v5702
    %5735 = vst [vmem:[#allocation2 + $0x230] sm:$0xf] %v5703
    %5736 = vrot.lane.b32.xlu0 %v5208, 1
    %v5737 = vpop.permute.xlu0 %5736
    %5738 = vrot.lane.b32.xlu0 %v5211, 1
    %v5739 = vpop.permute.xlu0 %5738
    %5740 = vrot.lane.b32.xlu0 %v5214, 1
    %v5741 = vpop.permute.xlu0 %5740
    %5742 = vrot.lane.b32.xlu0 %v5217, 1
    %v5743 = vpop.permute.xlu0 %5742
    %5744 = vrot.lane.b32.xlu0 %v5220, 1
    %v5745 = vpop.permute.xlu0 %5744
    %5746 = vrot.lane.b32.xlu0 %v5223, 1
    %v5747 = vpop.permute.xlu0 %5746
    %5748 = vrot.lane.b32.xlu0 %v5226, 1
    %v5749 = vpop.permute.xlu0 %5748
    %5750 = vrot.lane.b32.xlu0 %v5229, 1
    %v5751 = vpop.permute.xlu0 %5750
    %5752 = vrot.lane.b32.xlu0 %v5209, 1
    %v5753 = vpop.permute.xlu0 %5752
    %5754 = vrot.lane.b32.xlu0 %v5212, 1
    %v5755 = vpop.permute.xlu0 %5754
    %5756 = vrot.lane.b32.xlu0 %v5215, 1
    %v5757 = vpop.permute.xlu0 %5756
    %5758 = vrot.lane.b32.xlu0 %v5218, 1
    %v5759 = vpop.permute.xlu0 %5758
    %5760 = vrot.lane.b32.xlu0 %v5221, 1
    %v5761 = vpop.permute.xlu0 %5760
    %5762 = vrot.lane.b32.xlu0 %v5224, 1
    %v5763 = vpop.permute.xlu0 %5762
    %5764 = vrot.lane.b32.xlu0 %v5227, 1
    %v5765 = vpop.permute.xlu0 %5764
    %5766 = vrot.lane.b32.xlu0 %v5230, 1
    %v5767 = vpop.permute.xlu0 %5766
    %5768 = vrot.lane.b32.xlu0 %v5210, 1
    %v5769 = vpop.permute.xlu0 %5768
    %5770 = vrot.lane.b32.xlu0 %v5213, 1
    %v5771 = vpop.permute.xlu0 %5770
    %5772 = vrot.lane.b32.xlu0 %v5216, 1
    %v5773 = vpop.permute.xlu0 %5772
    %5774 = vrot.lane.b32.xlu0 %v5219, 1
    %v5775 = vpop.permute.xlu0 %5774
    %5776 = vrot.lane.b32.xlu0 %v5222, 1
    %v5777 = vpop.permute.xlu0 %5776
    %5778 = vrot.lane.b32.xlu0 %v5225, 1
    %v5779 = vpop.permute.xlu0 %5778
    %5780 = vrot.lane.b32.xlu0 %v5228, 1
    %v5781 = vpop.permute.xlu0 %5780
    %5782 = vrot.lane.b32.xlu0 %v5231, 1
    %v5783 = vpop.permute.xlu0 %5782
    %v5784 = vsel %vm648, %v5753, %v5769
    %v5785 = vsel %vm648, %v5755, %v5771
    %v5786 = vsel %vm648, %v5757, %v5773
    %v5787 = vsel %vm648, %v5759, %v5775
    %v5788 = vsel %vm648, %v5761, %v5777
    %v5789 = vsel %vm648, %v5763, %v5779
    %v5790 = vsel %vm648, %v5765, %v5781
    %v5791 = vsel %vm648, %v5767, %v5783
    %v5792 = vsel %vm648, %v5737, %v5753
    %v5793 = vsel %vm648, %v5739, %v5755
    %v5794 = vsel %vm648, %v5741, %v5757
    %v5795 = vsel %vm648, %v5743, %v5759
    %v5796 = vsel %vm648, %v5745, %v5761
    %v5797 = vsel %vm648, %v5747, %v5763
    %v5798 = vsel %vm648, %v5749, %v5765
    %v5799 = vsel %vm648, %v5751, %v5767
    %v5800 = vsel %vm648, %v5769, %v5737
    %v5801 = vsel %vm648, %v5771, %v5739
    %v5802 = vsel %vm648, %v5773, %v5741
    %v5803 = vsel %vm648, %v5775, %v5743
    %v5804 = vsel %vm648, %v5777, %v5745
    %v5805 = vsel %vm648, %v5779, %v5747
    %v5806 = vsel %vm648, %v5781, %v5749
    %v5807 = vsel %vm648, %v5783, %v5751
    %v5808 = vpack.c.bf16 %v5801, %v5800
    %v5809 = vpack.c.bf16 %v5793, %v5792
    %v5810 = vpack.c.bf16 %v5785, %v5784
    %v5811 = vpack.c.bf16 %v5803, %v5802
    %v5812 = vpack.c.bf16 %v5795, %v5794
    %v5813 = vpack.c.bf16 %v5787, %v5786
    %v5814 = vpack.c.bf16 %v5805, %v5804
    %v5815 = vpack.c.bf16 %v5797, %v5796
    %v5816 = vpack.c.bf16 %v5789, %v5788
    %v5817 = vpack.c.bf16 %v5807, %v5806
    %v5818 = vpack.c.bf16 %v5799, %v5798
    %v5819 = vpack.c.bf16 %v5791, %v5790
    %v5832 = vunpack.c.l.b16 %v5808
    %v5833 = vunpack.c.l.b16 %v5809
    %v5834 = vunpack.c.l.b16 %v5810
    %v5835 = vunpack.c.h.b16 %v5808
    %v5836 = vunpack.c.h.b16 %v5809
    %v5837 = vunpack.c.h.b16 %v5810
    %v5838 = vunpack.c.l.b16 %v5811
    %v5839 = vunpack.c.l.b16 %v5812
    %v5840 = vunpack.c.l.b16 %v5813
    %v5841 = vunpack.c.h.b16 %v5811
    %v5842 = vunpack.c.h.b16 %v5812
    %v5843 = vunpack.c.h.b16 %v5813
    %v5844 = vunpack.c.l.b16 %v5814
    %v5845 = vunpack.c.l.b16 %v5815
    %v5846 = vunpack.c.l.b16 %v5816
    %v5847 = vunpack.c.h.b16 %v5814
    %v5848 = vunpack.c.h.b16 %v5815
    %v5849 = vunpack.c.h.b16 %v5816
    %v5850 = vunpack.c.l.b16 %v5817
    %v5851 = vunpack.c.l.b16 %v5818
    %v5852 = vunpack.c.l.b16 %v5819
    %v5853 = vunpack.c.h.b16 %v5817
    %v5854 = vunpack.c.h.b16 %v5818
    %v5855 = vunpack.c.h.b16 %v5819
    %v5856 = vpack.c.b16 %v5833, %v5832
    %v5857 = vpack.c.b16 %v5834, %v5834
    %v5858 = vpack.c.b16 %v5836, %v5835
    %v5859 = vpack.c.b16 %v5837, %v5837
    %v5860 = vpack.c.b16 %v5839, %v5838
    %v5861 = vpack.c.b16 %v5840, %v5840
    %v5862 = vpack.c.b16 %v5842, %v5841
    %v5863 = vpack.c.b16 %v5843, %v5843
    %v5864 = vpack.c.b16 %v5845, %v5844
    %v5865 = vpack.c.b16 %v5846, %v5846
    %v5866 = vpack.c.b16 %v5848, %v5847
    %v5867 = vpack.c.b16 %v5849, %v5849
    %v5868 = vpack.c.b16 %v5851, %v5850
    %v5869 = vpack.c.b16 %v5852, %v5852
    %v5870 = vpack.c.b16 %v5854, %v5853
    %v5871 = vpack.c.b16 %v5855, %v5855
    %5888 = vst [vmem:[#allocation2 + $0x240] sm:$0xff] %v5856
    %5889 = vst [vmem:[#allocation2 + $0x248] sm:$0xf] %v5857
    %5890 = vst [vmem:[#allocation2 + $0x258] sm:$0xff] %v5858
    %5891 = vst [vmem:[#allocation2 + $0x260] sm:$0xf] %v5859
    %5892 = vst [vmem:[#allocation2 + $0x270] sm:$0xff] %v5860
    %5893 = vst [vmem:[#allocation2 + $0x278] sm:$0xf] %v5861
    %5894 = vst [vmem:[#allocation2 + $0x288] sm:$0xff] %v5862
    %5895 = vst [vmem:[#allocation2 + $0x290] sm:$0xf] %v5863
    %5896 = vst [vmem:[#allocation2 + $0x2a0] sm:$0xff] %v5864
    %5897 = vst [vmem:[#allocation2 + $0x2a8] sm:$0xf] %v5865
    %5898 = vst [vmem:[#allocation2 + $0x2b8] sm:$0xff] %v5866
    %5899 = vst [vmem:[#allocation2 + $0x2c0] sm:$0xf] %v5867
    %5900 = vst [vmem:[#allocation2 + $0x2d0] sm:$0xff] %v5868
    %5901 = vst [vmem:[#allocation2 + $0x2d8] sm:$0xf] %v5869
    %5902 = vst [vmem:[#allocation2 + $0x2e8] sm:$0xff] %v5870
    %5903 = vst [vmem:[#allocation2 + $0x2f0] sm:$0xf] %v5871
    %v5904 = vpack.c.bf16 %v5211, %v5208
    %v5905 = vpack.c.bf16 %v5212, %v5209
    %v5906 = vpack.c.bf16 %v5213, %v5210
    %v5907 = vpack.c.bf16 %v5217, %v5214
    %v5908 = vpack.c.bf16 %v5218, %v5215
    %v5909 = vpack.c.bf16 %v5219, %v5216
    %v5910 = vpack.c.bf16 %v5223, %v5220
    %v5911 = vpack.c.bf16 %v5224, %v5221
    %v5912 = vpack.c.bf16 %v5225, %v5222
    %v5913 = vpack.c.bf16 %v5229, %v5226
    %v5914 = vpack.c.bf16 %v5230, %v5227
    %v5915 = vpack.c.bf16 %v5231, %v5228
    %v5928 = vunpack.c.l.b16 %v5904
    %v5929 = vunpack.c.l.b16 %v5905
    %v5930 = vunpack.c.l.b16 %v5906
    %v5931 = vunpack.c.h.b16 %v5904
    %v5932 = vunpack.c.h.b16 %v5905
    %v5933 = vunpack.c.h.b16 %v5906
    %v5934 = vunpack.c.l.b16 %v5907
    %v5935 = vunpack.c.l.b16 %v5908
    %v5936 = vunpack.c.l.b16 %v5909
    %v5937 = vunpack.c.h.b16 %v5907
    %v5938 = vunpack.c.h.b16 %v5908
    %v5939 = vunpack.c.h.b16 %v5909
    %v5940 = vunpack.c.l.b16 %v5910
    %v5941 = vunpack.c.l.b16 %v5911
    %v5942 = vunpack.c.l.b16 %v5912
    %v5943 = vunpack.c.h.b16 %v5910
    %v5944 = vunpack.c.h.b16 %v5911
    %v5945 = vunpack.c.h.b16 %v5912
    %v5946 = vunpack.c.l.b16 %v5913
    %v5947 = vunpack.c.l.b16 %v5914
    %v5948 = vunpack.c.l.b16 %v5915
    %v5949 = vunpack.c.h.b16 %v5913
    %v5950 = vunpack.c.h.b16 %v5914
    %v5951 = vunpack.c.h.b16 %v5915
    %v5952 = vpack.c.b16 %v5929, %v5928
    %v5953 = vpack.c.b16 %v5930, %v5930
    %v5954 = vpack.c.b16 %v5932, %v5931
    %v5955 = vpack.c.b16 %v5933, %v5933
    %v5956 = vpack.c.b16 %v5935, %v5934
    %v5957 = vpack.c.b16 %v5936, %v5936
    %v5958 = vpack.c.b16 %v5938, %v5937
    %v5959 = vpack.c.b16 %v5939, %v5939
    %v5960 = vpack.c.b16 %v5941, %v5940
    %v5961 = vpack.c.b16 %v5942, %v5942
    %v5962 = vpack.c.b16 %v5944, %v5943
    %v5963 = vpack.c.b16 %v5945, %v5945
    %v5964 = vpack.c.b16 %v5947, %v5946
    %v5965 = vpack.c.b16 %v5948, %v5948
    %v5966 = vpack.c.b16 %v5950, %v5949
    %v5967 = vpack.c.b16 %v5951, %v5951
    %5984 = vst [vmem:[#allocation2 + $0x300] sm:$0xff] %v5952
    %5985 = vst [vmem:[#allocation2 + $0x308] sm:$0xf] %v5953
    %5986 = vst [vmem:[#allocation2 + $0x318] sm:$0xff] %v5954
    %5987 = vst [vmem:[#allocation2 + $0x320] sm:$0xf] %v5955
    %5988 = vst [vmem:[#allocation2 + $0x330] sm:$0xff] %v5956
    %5989 = vst [vmem:[#allocation2 + $0x338] sm:$0xf] %v5957
    %5990 = vst [vmem:[#allocation2 + $0x348] sm:$0xff] %v5958
    %5991 = vst [vmem:[#allocation2 + $0x350] sm:$0xf] %v5959
    %5992 = vst [vmem:[#allocation2 + $0x360] sm:$0xff] %v5960
    %5993 = vst [vmem:[#allocation2 + $0x368] sm:$0xf] %v5961
    %5994 = vst [vmem:[#allocation2 + $0x378] sm:$0xff] %v5962
    %5995 = vst [vmem:[#allocation2 + $0x380] sm:$0xf] %v5963
    %5996 = vst [vmem:[#allocation2 + $0x390] sm:$0xff] %v5964
    %5997 = vst [vmem:[#allocation2 + $0x398] sm:$0xf] %v5965
    %5998 = vst [vmem:[#allocation2 + $0x3a8] sm:$0xff] %v5966
    %5999 = vst [vmem:[#allocation2 + $0x3b0] sm:$0xf] %v5967
    %6000 = vrot.lane.b32.xlu0 %v5208, 127
    %v6001 = vpop.permute.xlu0 %6000
    %6002 = vrot.lane.b32.xlu0 %v5211, 127
    %v6003 = vpop.permute.xlu0 %6002
    %6004 = vrot.lane.b32.xlu0 %v5214, 127
    %v6005 = vpop.permute.xlu0 %6004
    %6006 = vrot.lane.b32.xlu0 %v5217, 127
    %v6007 = vpop.permute.xlu0 %6006
    %6008 = vrot.lane.b32.xlu0 %v5220, 127
    %v6009 = vpop.permute.xlu0 %6008
    %6010 = vrot.lane.b32.xlu0 %v5223, 127
    %v6011 = vpop.permute.xlu0 %6010
    %6012 = vrot.lane.b32.xlu0 %v5226, 127
    %v6013 = vpop.permute.xlu0 %6012
    %6014 = vrot.lane.b32.xlu0 %v5229, 127
    %v6015 = vpop.permute.xlu0 %6014
    %6016 = vrot.lane.b32.xlu0 %v5209, 127
    %v6017 = vpop.permute.xlu0 %6016
    %6018 = vrot.lane.b32.xlu0 %v5212, 127
    %v6019 = vpop.permute.xlu0 %6018
    %6020 = vrot.lane.b32.xlu0 %v5215, 127
    %v6021 = vpop.permute.xlu0 %6020
    %6022 = vrot.lane.b32.xlu0 %v5218, 127
    %v6023 = vpop.permute.xlu0 %6022
    %6024 = vrot.lane.b32.xlu0 %v5221, 127
    %v6025 = vpop.permute.xlu0 %6024
    %6026 = vrot.lane.b32.xlu0 %v5224, 127
    %v6027 = vpop.permute.xlu0 %6026
    %6028 = vrot.lane.b32.xlu0 %v5227, 127
    %v6029 = vpop.permute.xlu0 %6028
    %6030 = vrot.lane.b32.xlu0 %v5230, 127
    %v6031 = vpop.permute.xlu0 %6030
    %6032 = vrot.lane.b32.xlu0 %v5210, 127
    %v6033 = vpop.permute.xlu0 %6032
    %6034 = vrot.lane.b32.xlu0 %v5213, 127
    %v6035 = vpop.permute.xlu0 %6034
    %6036 = vrot.lane.b32.xlu0 %v5216, 127
    %v6037 = vpop.permute.xlu0 %6036
    %6038 = vrot.lane.b32.xlu0 %v5219, 127
    %v6039 = vpop.permute.xlu0 %6038
    %6040 = vrot.lane.b32.xlu0 %v5222, 127
    %v6041 = vpop.permute.xlu0 %6040
    %6042 = vrot.lane.b32.xlu0 %v5225, 127
    %v6043 = vpop.permute.xlu0 %6042
    %6044 = vrot.lane.b32.xlu0 %v5228, 127
    %v6045 = vpop.permute.xlu0 %6044
    %6046 = vrot.lane.b32.xlu0 %v5231, 127
    %v6047 = vpop.permute.xlu0 %6046
    %v6048 = vsel %vm913, %v6017, %v6033
    %v6049 = vsel %vm913, %v6019, %v6035
    %v6050 = vsel %vm913, %v6021, %v6037
    %v6051 = vsel %vm913, %v6023, %v6039
    %v6052 = vsel %vm913, %v6025, %v6041
    %v6053 = vsel %vm913, %v6027, %v6043
    %v6054 = vsel %vm913, %v6029, %v6045
    %v6055 = vsel %vm913, %v6031, %v6047
    %v6056 = vsel %vm913, %v6001, %v6017
    %v6057 = vsel %vm913, %v6003, %v6019
    %v6058 = vsel %vm913, %v6005, %v6021
    %v6059 = vsel %vm913, %v6007, %v6023
    %v6060 = vsel %vm913, %v6009, %v6025
    %v6061 = vsel %vm913, %v6011, %v6027
    %v6062 = vsel %vm913, %v6013, %v6029
    %v6063 = vsel %vm913, %v6015, %v6031
    %v6064 = vsel %vm913, %v6033, %v6001
    %v6065 = vsel %vm913, %v6035, %v6003
    %v6066 = vsel %vm913, %v6037, %v6005
    %v6067 = vsel %vm913, %v6039, %v6007
    %v6068 = vsel %vm913, %v6041, %v6009
    %v6069 = vsel %vm913, %v6043, %v6011
    %v6070 = vsel %vm913, %v6045, %v6013
    %v6071 = vsel %vm913, %v6047, %v6015
    %v6072 = vpack.c.bf16 %v6057, %v6056
    %v6073 = vpack.c.bf16 %v6049, %v6048
    %v6074 = vpack.c.bf16 %v6065, %v6064
    %v6075 = vpack.c.bf16 %v6059, %v6058
    %v6076 = vpack.c.bf16 %v6051, %v6050
    %v6077 = vpack.c.bf16 %v6067, %v6066
    %v6078 = vpack.c.bf16 %v6061, %v6060
    %v6079 = vpack.c.bf16 %v6053, %v6052
    %v6080 = vpack.c.bf16 %v6069, %v6068
    %v6081 = vpack.c.bf16 %v6063, %v6062
    %v6082 = vpack.c.bf16 %v6055, %v6054
    %v6083 = vpack.c.bf16 %v6071, %v6070
    %v6096 = vunpack.c.l.b16 %v6072
    %v6097 = vunpack.c.l.b16 %v6073
    %v6098 = vunpack.c.l.b16 %v6074
    %v6099 = vunpack.c.h.b16 %v6072
    %v6100 = vunpack.c.h.b16 %v6073
    %v6101 = vunpack.c.h.b16 %v6074
    %v6102 = vunpack.c.l.b16 %v6075
    %v6103 = vunpack.c.l.b16 %v6076
    %v6104 = vunpack.c.l.b16 %v6077
    %v6105 = vunpack.c.h.b16 %v6075
    %v6106 = vunpack.c.h.b16 %v6076
    %v6107 = vunpack.c.h.b16 %v6077
    %v6108 = vunpack.c.l.b16 %v6078
    %v6109 = vunpack.c.l.b16 %v6079
    %v6110 = vunpack.c.l.b16 %v6080
    %v6111 = vunpack.c.h.b16 %v6078
    %v6112 = vunpack.c.h.b16 %v6079
    %v6113 = vunpack.c.h.b16 %v6080
    %v6114 = vunpack.c.l.b16 %v6081
    %v6115 = vunpack.c.l.b16 %v6082
    %v6116 = vunpack.c.l.b16 %v6083
    %v6117 = vunpack.c.h.b16 %v6081
    %v6118 = vunpack.c.h.b16 %v6082
    %v6119 = vunpack.c.h.b16 %v6083
    %v6120 = vpack.c.b16 %v6097, %v6096
    %v6121 = vpack.c.b16 %v6098, %v6098
    %v6122 = vpack.c.b16 %v6100, %v6099
    %v6123 = vpack.c.b16 %v6101, %v6101
    %v6124 = vpack.c.b16 %v6103, %v6102
    %v6125 = vpack.c.b16 %v6104, %v6104
    %v6126 = vpack.c.b16 %v6106, %v6105
    %v6127 = vpack.c.b16 %v6107, %v6107
    %v6128 = vpack.c.b16 %v6109, %v6108
    %v6129 = vpack.c.b16 %v6110, %v6110
    %v6130 = vpack.c.b16 %v6112, %v6111
    %v6131 = vpack.c.b16 %v6113, %v6113
    %v6132 = vpack.c.b16 %v6115, %v6114
    %v6133 = vpack.c.b16 %v6116, %v6116
    %v6134 = vpack.c.b16 %v6118, %v6117
    %v6135 = vpack.c.b16 %v6119, %v6119
    %6152 = vst [vmem:[#allocation2 + $0x3c0] sm:$0xff] %v6120
    %6153 = vst [vmem:[#allocation2 + $0x3c8] sm:$0xf] %v6121
    %6154 = vst [vmem:[#allocation2 + $0x3d8] sm:$0xff] %v6122
    %6155 = vst [vmem:[#allocation2 + $0x3e0] sm:$0xf] %v6123
    %6156 = vst [vmem:[#allocation2 + $0x3f0] sm:$0xff] %v6124
    %6157 = vst [vmem:[#allocation2 + $0x3f8] sm:$0xf] %v6125
    %6158 = vst [vmem:[#allocation2 + $0x408] sm:$0xff] %v6126
    %6159 = vst [vmem:[#allocation2 + $0x410] sm:$0xf] %v6127
    %6160 = vst [vmem:[#allocation2 + $0x420] sm:$0xff] %v6128
    %6161 = vst [vmem:[#allocation2 + $0x428] sm:$0xf] %v6129
    %6162 = vst [vmem:[#allocation2 + $0x438] sm:$0xff] %v6130
    %6163 = vst [vmem:[#allocation2 + $0x440] sm:$0xf] %v6131
    %6164 = vst [vmem:[#allocation2 + $0x450] sm:$0xff] %v6132
    %6165 = vst [vmem:[#allocation2 + $0x458] sm:$0xf] %v6133
    %6166 = vst [vmem:[#allocation2 + $0x468] sm:$0xff] %v6134
    %6167 = vst [vmem:[#allocation2 + $0x470] sm:$0xf] %v6135
    %6168 = vrot.lane.b32.xlu0 %v5208, 111
    %v6169 = vpop.permute.xlu0 %6168
    %6170 = vrot.lane.b32.xlu0 %v5211, 111
    %v6171 = vpop.permute.xlu0 %6170
    %6172 = vrot.lane.b32.xlu0 %v5214, 111
    %v6173 = vpop.permute.xlu0 %6172
    %6174 = vrot.lane.b32.xlu0 %v5217, 111
    %v6175 = vpop.permute.xlu0 %6174
    %6176 = vrot.lane.b32.xlu0 %v5220, 111
    %v6177 = vpop.permute.xlu0 %6176
    %6178 = vrot.lane.b32.xlu0 %v5223, 111
    %v6179 = vpop.permute.xlu0 %6178
    %6180 = vrot.lane.b32.xlu0 %v5226, 111
    %v6181 = vpop.permute.xlu0 %6180
    %6182 = vrot.lane.b32.xlu0 %v5229, 111
    %v6183 = vpop.permute.xlu0 %6182
    %6184 = vrot.lane.b32.xlu0 %v5209, 111
    %v6185 = vpop.permute.xlu0 %6184
    %6186 = vrot.lane.b32.xlu0 %v5212, 111
    %v6187 = vpop.permute.xlu0 %6186
    %6188 = vrot.lane.b32.xlu0 %v5215, 111
    %v6189 = vpop.permute.xlu0 %6188
    %6190 = vrot.lane.b32.xlu0 %v5218, 111
    %v6191 = vpop.permute.xlu0 %6190
    %6192 = vrot.lane.b32.xlu0 %v5221, 111
    %v6193 = vpop.permute.xlu0 %6192
    %6194 = vrot.lane.b32.xlu0 %v5224, 111
    %v6195 = vpop.permute.xlu0 %6194
    %6196 = vrot.lane.b32.xlu0 %v5227, 111
    %v6197 = vpop.permute.xlu0 %6196
    %6198 = vrot.lane.b32.xlu0 %v5230, 111
    %v6199 = vpop.permute.xlu0 %6198
    %6200 = vrot.lane.b32.xlu0 %v5210, 111
    %v6201 = vpop.permute.xlu0 %6200
    %6202 = vrot.lane.b32.xlu0 %v5213, 111
    %v6203 = vpop.permute.xlu0 %6202
    %6204 = vrot.lane.b32.xlu0 %v5216, 111
    %v6205 = vpop.permute.xlu0 %6204
    %6206 = vrot.lane.b32.xlu0 %v5219, 111
    %v6207 = vpop.permute.xlu0 %6206
    %6208 = vrot.lane.b32.xlu0 %v5222, 111
    %v6209 = vpop.permute.xlu0 %6208
    %6210 = vrot.lane.b32.xlu0 %v5225, 111
    %v6211 = vpop.permute.xlu0 %6210
    %6212 = vrot.lane.b32.xlu0 %v5228, 111
    %v6213 = vpop.permute.xlu0 %6212
    %6214 = vrot.lane.b32.xlu0 %v5231, 111
    %v6215 = vpop.permute.xlu0 %6214
    %v6216 = vsel %vm1082, %v6185, %v6201
    %v6217 = vsel %vm1082, %v6187, %v6203
    %v6218 = vsel %vm1082, %v6189, %v6205
    %v6219 = vsel %vm1082, %v6191, %v6207
    %v6220 = vsel %vm1082, %v6193, %v6209
    %v6221 = vsel %vm1082, %v6195, %v6211
    %v6222 = vsel %vm1082, %v6197, %v6213
    %v6223 = vsel %vm1082, %v6199, %v6215
    %v6224 = vsel %vm1082, %v6169, %v6185
    %v6225 = vsel %vm1082, %v6171, %v6187
    %v6226 = vsel %vm1082, %v6173, %v6189
    %v6227 = vsel %vm1082, %v6175, %v6191
    %v6228 = vsel %vm1082, %v6177, %v6193
    %v6229 = vsel %vm1082, %v6179, %v6195
    %v6230 = vsel %vm1082, %v6181, %v6197
    %v6231 = vsel %vm1082, %v6183, %v6199
    %v6232 = vsel %vm1082, %v6201, %v6169
    %v6233 = vsel %vm1082, %v6203, %v6171
    %v6234 = vsel %vm1082, %v6205, %v6173
    %v6235 = vsel %vm1082, %v6207, %v6175
    %v6236 = vsel %vm1082, %v6209, %v6177
    %v6237 = vsel %vm1082, %v6211, %v6179
    %v6238 = vsel %vm1082, %v6213, %v6181
    %v6239 = vsel %vm1082, %v6215, %v6183
    %v6240 = vpack.c.bf16 %v6225, %v6224
    %v6241 = vpack.c.bf16 %v6217, %v6216
    %v6242 = vpack.c.bf16 %v6233, %v6232
    %v6243 = vpack.c.bf16 %v6227, %v6226
    %v6244 = vpack.c.bf16 %v6219, %v6218
    %v6245 = vpack.c.bf16 %v6235, %v6234
    %v6246 = vpack.c.bf16 %v6229, %v6228
    %v6247 = vpack.c.bf16 %v6221, %v6220
    %v6248 = vpack.c.bf16 %v6237, %v6236
    %v6249 = vpack.c.bf16 %v6231, %v6230
    %v6250 = vpack.c.bf16 %v6223, %v6222
    %v6251 = vpack.c.bf16 %v6239, %v6238
    %v6264 = vunpack.c.l.b16 %v6240
    %v6265 = vunpack.c.l.b16 %v6241
    %v6266 = vunpack.c.l.b16 %v6242
    %v6267 = vunpack.c.h.b16 %v6240
    %v6268 = vunpack.c.h.b16 %v6241
    %v6269 = vunpack.c.h.b16 %v6242
    %v6270 = vunpack.c.l.b16 %v6243
    %v6271 = vunpack.c.l.b16 %v6244
    %v6272 = vunpack.c.l.b16 %v6245
    %v6273 = vunpack.c.h.b16 %v6243
    %v6274 = vunpack.c.h.b16 %v6244
    %v6275 = vunpack.c.h.b16 %v6245
    %v6276 = vunpack.c.l.b16 %v6246
    %v6277 = vunpack.c.l.b16 %v6247
    %v6278 = vunpack.c.l.b16 %v6248
    %v6279 = vunpack.c.h.b16 %v6246
    %v6280 = vunpack.c.h.b16 %v6247
    %v6281 = vunpack.c.h.b16 %v6248
    %v6282 = vunpack.c.l.b16 %v6249
    %v6283 = vunpack.c.l.b16 %v6250
    %v6284 = vunpack.c.l.b16 %v6251
    %v6285 = vunpack.c.h.b16 %v6249
    %v6286 = vunpack.c.h.b16 %v6250
    %v6287 = vunpack.c.h.b16 %v6251
    %v6288 = vpack.c.b16 %v6265, %v6264
    %v6289 = vpack.c.b16 %v6266, %v6266
    %v6290 = vpack.c.b16 %v6268, %v6267
    %v6291 = vpack.c.b16 %v6269, %v6269
    %v6292 = vpack.c.b16 %v6271, %v6270
    %v6293 = vpack.c.b16 %v6272, %v6272
    %v6294 = vpack.c.b16 %v6274, %v6273
    %v6295 = vpack.c.b16 %v6275, %v6275
    %v6296 = vpack.c.b16 %v6277, %v6276
    %v6297 = vpack.c.b16 %v6278, %v6278
    %v6298 = vpack.c.b16 %v6280, %v6279
    %v6299 = vpack.c.b16 %v6281, %v6281
    %v6300 = vpack.c.b16 %v6283, %v6282
    %v6301 = vpack.c.b16 %v6284, %v6284
    %v6302 = vpack.c.b16 %v6286, %v6285
    %v6303 = vpack.c.b16 %v6287, %v6287
    %6320 = vst [vmem:[#allocation2 + $0x480] sm:$0xff] %v6288
    %6321 = vst [vmem:[#allocation2 + $0x488] sm:$0xf] %v6289
    %6322 = vst [vmem:[#allocation2 + $0x498] sm:$0xff] %v6290
    %6323 = vst [vmem:[#allocation2 + $0x4a0] sm:$0xf] %v6291
    %6324 = vst [vmem:[#allocation2 + $0x4b0] sm:$0xff] %v6292
    %6325 = vst [vmem:[#allocation2 + $0x4b8] sm:$0xf] %v6293
    %6326 = vst [vmem:[#allocation2 + $0x4c8] sm:$0xff] %v6294
    %6327 = vst [vmem:[#allocation2 + $0x4d0] sm:$0xf] %v6295
    %6328 = vst [vmem:[#allocation2 + $0x4e0] sm:$0xff] %v6296
    %6329 = vst [vmem:[#allocation2 + $0x4e8] sm:$0xf] %v6297
    %6330 = vst [vmem:[#allocation2 + $0x4f8] sm:$0xff] %v6298
    %6331 = vst [vmem:[#allocation2 + $0x500] sm:$0xf] %v6299
    %6332 = vst [vmem:[#allocation2 + $0x510] sm:$0xff] %v6300
    %6333 = vst [vmem:[#allocation2 + $0x518] sm:$0xf] %v6301
    %6334 = vst [vmem:[#allocation2 + $0x528] sm:$0xff] %v6302
    %6335 = vst [vmem:[#allocation2 + $0x530] sm:$0xf] %v6303
    %6336 = vrot.lane.b32.xlu0 %v5208, 110
    %v6337 = vpop.permute.xlu0 %6336
    %6338 = vrot.lane.b32.xlu0 %v5211, 110
    %v6339 = vpop.permute.xlu0 %6338
    %6340 = vrot.lane.b32.xlu0 %v5214, 110
    %v6341 = vpop.permute.xlu0 %6340
    %6342 = vrot.lane.b32.xlu0 %v5217, 110
    %v6343 = vpop.permute.xlu0 %6342
    %6344 = vrot.lane.b32.xlu0 %v5220, 110
    %v6345 = vpop.permute.xlu0 %6344
    %6346 = vrot.lane.b32.xlu0 %v5223, 110
    %v6347 = vpop.permute.xlu0 %6346
    %6348 = vrot.lane.b32.xlu0 %v5226, 110
    %v6349 = vpop.permute.xlu0 %6348
    %6350 = vrot.lane.b32.xlu0 %v5229, 110
    %v6351 = vpop.permute.xlu0 %6350
    %6352 = vrot.lane.b32.xlu0 %v5209, 110
    %v6353 = vpop.permute.xlu0 %6352
    %6354 = vrot.lane.b32.xlu0 %v5212, 110
    %v6355 = vpop.permute.xlu0 %6354
    %6356 = vrot.lane.b32.xlu0 %v5215, 110
    %v6357 = vpop.permute.xlu0 %6356
    %6358 = vrot.lane.b32.xlu0 %v5218, 110
    %v6359 = vpop.permute.xlu0 %6358
    %6360 = vrot.lane.b32.xlu0 %v5221, 110
    %v6361 = vpop.permute.xlu0 %6360
    %6362 = vrot.lane.b32.xlu0 %v5224, 110
    %v6363 = vpop.permute.xlu0 %6362
    %6364 = vrot.lane.b32.xlu0 %v5227, 110
    %v6365 = vpop.permute.xlu0 %6364
    %6366 = vrot.lane.b32.xlu0 %v5230, 110
    %v6367 = vpop.permute.xlu0 %6366
    %6368 = vrot.lane.b32.xlu0 %v5210, 110
    %v6369 = vpop.permute.xlu0 %6368
    %6370 = vrot.lane.b32.xlu0 %v5213, 110
    %v6371 = vpop.permute.xlu0 %6370
    %6372 = vrot.lane.b32.xlu0 %v5216, 110
    %v6373 = vpop.permute.xlu0 %6372
    %6374 = vrot.lane.b32.xlu0 %v5219, 110
    %v6375 = vpop.permute.xlu0 %6374
    %6376 = vrot.lane.b32.xlu0 %v5222, 110
    %v6377 = vpop.permute.xlu0 %6376
    %6378 = vrot.lane.b32.xlu0 %v5225, 110
    %v6379 = vpop.permute.xlu0 %6378
    %6380 = vrot.lane.b32.xlu0 %v5228, 110
    %v6381 = vpop.permute.xlu0 %6380
    %6382 = vrot.lane.b32.xlu0 %v5231, 110
    %v6383 = vpop.permute.xlu0 %6382
    %v6384 = vsel %vm1251, %v6353, %v6369
    %v6385 = vsel %vm1251, %v6355, %v6371
    %v6386 = vsel %vm1251, %v6357, %v6373
    %v6387 = vsel %vm1251, %v6359, %v6375
    %v6388 = vsel %vm1251, %v6361, %v6377
    %v6389 = vsel %vm1251, %v6363, %v6379
    %v6390 = vsel %vm1251, %v6365, %v6381
    %v6391 = vsel %vm1251, %v6367, %v6383
    %v6392 = vsel %vm1251, %v6337, %v6353
    %v6393 = vsel %vm1251, %v6339, %v6355
    %v6394 = vsel %vm1251, %v6341, %v6357
    %v6395 = vsel %vm1251, %v6343, %v6359
    %v6396 = vsel %vm1251, %v6345, %v6361
    %v6397 = vsel %vm1251, %v6347, %v6363
    %v6398 = vsel %vm1251, %v6349, %v6365
    %v6399 = vsel %vm1251, %v6351, %v6367
    %v6400 = vsel %vm1251, %v6369, %v6337
    %v6401 = vsel %vm1251, %v6371, %v6339
    %v6402 = vsel %vm1251, %v6373, %v6341
    %v6403 = vsel %vm1251, %v6375, %v6343
    %v6404 = vsel %vm1251, %v6377, %v6345
    %v6405 = vsel %vm1251, %v6379, %v6347
    %v6406 = vsel %vm1251, %v6381, %v6349
    %v6407 = vsel %vm1251, %v6383, %v6351
    %v6408 = vpack.c.bf16 %v6393, %v6392
    %v6409 = vpack.c.bf16 %v6385, %v6384
    %v6410 = vpack.c.bf16 %v6401, %v6400
    %v6411 = vpack.c.bf16 %v6395, %v6394
    %v6412 = vpack.c.bf16 %v6387, %v6386
    %v6413 = vpack.c.bf16 %v6403, %v6402
    %v6414 = vpack.c.bf16 %v6397, %v6396
    %v6415 = vpack.c.bf16 %v6389, %v6388
    %v6416 = vpack.c.bf16 %v6405, %v6404
    %v6417 = vpack.c.bf16 %v6399, %v6398
    %v6418 = vpack.c.bf16 %v6391, %v6390
    %v6419 = vpack.c.bf16 %v6407, %v6406
    %v6432 = vunpack.c.l.b16 %v6408
    %v6433 = vunpack.c.l.b16 %v6409
    %v6434 = vunpack.c.l.b16 %v6410
    %v6435 = vunpack.c.h.b16 %v6408
    %v6436 = vunpack.c.h.b16 %v6409
    %v6437 = vunpack.c.h.b16 %v6410
    %v6438 = vunpack.c.l.b16 %v6411
    %v6439 = vunpack.c.l.b16 %v6412
    %v6440 = vunpack.c.l.b16 %v6413
    %v6441 = vunpack.c.h.b16 %v6411
    %v6442 = vunpack.c.h.b16 %v6412
    %v6443 = vunpack.c.h.b16 %v6413
    %v6444 = vunpack.c.l.b16 %v6414
    %v6445 = vunpack.c.l.b16 %v6415
    %v6446 = vunpack.c.l.b16 %v6416
    %v6447 = vunpack.c.h.b16 %v6414
    %v6448 = vunpack.c.h.b16 %v6415
    %v6449 = vunpack.c.h.b16 %v6416
    %v6450 = vunpack.c.l.b16 %v6417
    %v6451 = vunpack.c.l.b16 %v6418
    %v6452 = vunpack.c.l.b16 %v6419
    %v6453 = vunpack.c.h.b16 %v6417
    %v6454 = vunpack.c.h.b16 %v6418
    %v6455 = vunpack.c.h.b16 %v6419
    %v6456 = vpack.c.b16 %v6433, %v6432
    %v6457 = vpack.c.b16 %v6434, %v6434
    %v6458 = vpack.c.b16 %v6436, %v6435
    %v6459 = vpack.c.b16 %v6437, %v6437
    %v6460 = vpack.c.b16 %v6439, %v6438
    %v6461 = vpack.c.b16 %v6440, %v6440
    %v6462 = vpack.c.b16 %v6442, %v6441
    %v6463 = vpack.c.b16 %v6443, %v6443
    %v6464 = vpack.c.b16 %v6445, %v6444
    %v6465 = vpack.c.b16 %v6446, %v6446
    %v6466 = vpack.c.b16 %v6448, %v6447
    %v6467 = vpack.c.b16 %v6449, %v6449
    %v6468 = vpack.c.b16 %v6451, %v6450
    %v6469 = vpack.c.b16 %v6452, %v6452
    %v6470 = vpack.c.b16 %v6454, %v6453
    %v6471 = vpack.c.b16 %v6455, %v6455
    %6488 = vst [vmem:[#allocation2 + $0x540] sm:$0xff] %v6456
    %6489 = vst [vmem:[#allocation2 + $0x548] sm:$0xf] %v6457
    %6490 = vst [vmem:[#allocation2 + $0x558] sm:$0xff] %v6458
    %6491 = vst [vmem:[#allocation2 + $0x560] sm:$0xf] %v6459
    %6492 = vst [vmem:[#allocation2 + $0x570] sm:$0xff] %v6460
    %6493 = vst [vmem:[#allocation2 + $0x578] sm:$0xf] %v6461
    %6494 = vst [vmem:[#allocation2 + $0x588] sm:$0xff] %v6462
    %6495 = vst [vmem:[#allocation2 + $0x590] sm:$0xf] %v6463
    %6496 = vst [vmem:[#allocation2 + $0x5a0] sm:$0xff] %v6464
    %6497 = vst [vmem:[#allocation2 + $0x5a8] sm:$0xf] %v6465
    %6498 = vst [vmem:[#allocation2 + $0x5b8] sm:$0xff] %v6466
    %6499 = vst [vmem:[#allocation2 + $0x5c0] sm:$0xf] %v6467
    %6500 = vst [vmem:[#allocation2 + $0x5d0] sm:$0xff] %v6468
    %6501 = vst [vmem:[#allocation2 + $0x5d8] sm:$0xf] %v6469
    %6502 = vst [vmem:[#allocation2 + $0x5e8] sm:$0xff] %v6470
    %6503 = vst [vmem:[#allocation2 + $0x5f0] sm:$0xf] %v6471
    %6504 = vrot.lane.b32.xlu0 %v5208, 109
    %v6505 = vpop.permute.xlu0 %6504
    %6506 = vrot.lane.b32.xlu0 %v5211, 109
    %v6507 = vpop.permute.xlu0 %6506
    %6508 = vrot.lane.b32.xlu0 %v5214, 109
    %v6509 = vpop.permute.xlu0 %6508
    %6510 = vrot.lane.b32.xlu0 %v5217, 109
    %v6511 = vpop.permute.xlu0 %6510
    %6512 = vrot.lane.b32.xlu0 %v5220, 109
    %v6513 = vpop.permute.xlu0 %6512
    %6514 = vrot.lane.b32.xlu0 %v5223, 109
    %v6515 = vpop.permute.xlu0 %6514
    %6516 = vrot.lane.b32.xlu0 %v5226, 109
    %v6517 = vpop.permute.xlu0 %6516
    %6518 = vrot.lane.b32.xlu0 %v5229, 109
    %v6519 = vpop.permute.xlu0 %6518
    %6520 = vrot.lane.b32.xlu0 %v5209, 109
    %v6521 = vpop.permute.xlu0 %6520
    %6522 = vrot.lane.b32.xlu0 %v5212, 109
    %v6523 = vpop.permute.xlu0 %6522
    %6524 = vrot.lane.b32.xlu0 %v5215, 109
    %v6525 = vpop.permute.xlu0 %6524
    %6526 = vrot.lane.b32.xlu0 %v5218, 109
    %v6527 = vpop.permute.xlu0 %6526
    %6528 = vrot.lane.b32.xlu0 %v5221, 109
    %v6529 = vpop.permute.xlu0 %6528
    %6530 = vrot.lane.b32.xlu0 %v5224, 109
    %v6531 = vpop.permute.xlu0 %6530
    %6532 = vrot.lane.b32.xlu0 %v5227, 109
    %v6533 = vpop.permute.xlu0 %6532
    %6534 = vrot.lane.b32.xlu0 %v5230, 109
    %v6535 = vpop.permute.xlu0 %6534
    %6536 = vrot.lane.b32.xlu0 %v5210, 109
    %v6537 = vpop.permute.xlu0 %6536
    %6538 = vrot.lane.b32.xlu0 %v5213, 109
    %v6539 = vpop.permute.xlu0 %6538
    %6540 = vrot.lane.b32.xlu0 %v5216, 109
    %v6541 = vpop.permute.xlu0 %6540
    %6542 = vrot.lane.b32.xlu0 %v5219, 109
    %v6543 = vpop.permute.xlu0 %6542
    %6544 = vrot.lane.b32.xlu0 %v5222, 109
    %v6545 = vpop.permute.xlu0 %6544
    %6546 = vrot.lane.b32.xlu0 %v5225, 109
    %v6547 = vpop.permute.xlu0 %6546
    %6548 = vrot.lane.b32.xlu0 %v5228, 109
    %v6549 = vpop.permute.xlu0 %6548
    %6550 = vrot.lane.b32.xlu0 %v5231, 109
    %v6551 = vpop.permute.xlu0 %6550
    %v6552 = vsel %vm1420, %v6521, %v6537
    %v6553 = vsel %vm1420, %v6523, %v6539
    %v6554 = vsel %vm1420, %v6525, %v6541
    %v6555 = vsel %vm1420, %v6527, %v6543
    %v6556 = vsel %vm1420, %v6529, %v6545
    %v6557 = vsel %vm1420, %v6531, %v6547
    %v6558 = vsel %vm1420, %v6533, %v6549
    %v6559 = vsel %vm1420, %v6535, %v6551
    %v6560 = vsel %vm1420, %v6505, %v6521
    %v6561 = vsel %vm1420, %v6507, %v6523
    %v6562 = vsel %vm1420, %v6509, %v6525
    %v6563 = vsel %vm1420, %v6511, %v6527
    %v6564 = vsel %vm1420, %v6513, %v6529
    %v6565 = vsel %vm1420, %v6515, %v6531
    %v6566 = vsel %vm1420, %v6517, %v6533
    %v6567 = vsel %vm1420, %v6519, %v6535
    %v6568 = vsel %vm1420, %v6537, %v6505
    %v6569 = vsel %vm1420, %v6539, %v6507
    %v6570 = vsel %vm1420, %v6541, %v6509
    %v6571 = vsel %vm1420, %v6543, %v6511
    %v6572 = vsel %vm1420, %v6545, %v6513
    %v6573 = vsel %vm1420, %v6547, %v6515
    %v6574 = vsel %vm1420, %v6549, %v6517
    %v6575 = vsel %vm1420, %v6551, %v6519
    %v6576 = vpack.c.bf16 %v6561, %v6560
    %v6577 = vpack.c.bf16 %v6553, %v6552
    %v6578 = vpack.c.bf16 %v6569, %v6568
    %v6579 = vpack.c.bf16 %v6563, %v6562
    %v6580 = vpack.c.bf16 %v6555, %v6554
    %v6581 = vpack.c.bf16 %v6571, %v6570
    %v6582 = vpack.c.bf16 %v6565, %v6564
    %v6583 = vpack.c.bf16 %v6557, %v6556
    %v6584 = vpack.c.bf16 %v6573, %v6572
    %v6585 = vpack.c.bf16 %v6567, %v6566
    %v6586 = vpack.c.bf16 %v6559, %v6558
    %v6587 = vpack.c.bf16 %v6575, %v6574
    %v6600 = vunpack.c.l.b16 %v6576
    %v6601 = vunpack.c.l.b16 %v6577
    %v6602 = vunpack.c.l.b16 %v6578
    %v6603 = vunpack.c.h.b16 %v6576
    %v6604 = vunpack.c.h.b16 %v6577
    %v6605 = vunpack.c.h.b16 %v6578
    %v6606 = vunpack.c.l.b16 %v6579
    %v6607 = vunpack.c.l.b16 %v6580
    %v6608 = vunpack.c.l.b16 %v6581
    %v6609 = vunpack.c.h.b16 %v6579
    %v6610 = vunpack.c.h.b16 %v6580
    %v6611 = vunpack.c.h.b16 %v6581
    %v6612 = vunpack.c.l.b16 %v6582
    %v6613 = vunpack.c.l.b16 %v6583
    %v6614 = vunpack.c.l.b16 %v6584
    %v6615 = vunpack.c.h.b16 %v6582
    %v6616 = vunpack.c.h.b16 %v6583
    %v6617 = vunpack.c.h.b16 %v6584
    %v6618 = vunpack.c.l.b16 %v6585
    %v6619 = vunpack.c.l.b16 %v6586
    %v6620 = vunpack.c.l.b16 %v6587
    %v6621 = vunpack.c.h.b16 %v6585
    %v6622 = vunpack.c.h.b16 %v6586
    %v6623 = vunpack.c.h.b16 %v6587
    %v6624 = vpack.c.b16 %v6601, %v6600
    %v6625 = vpack.c.b16 %v6602, %v6602
    %v6626 = vpack.c.b16 %v6604, %v6603
    %v6627 = vpack.c.b16 %v6605, %v6605
    %v6628 = vpack.c.b16 %v6607, %v6606
    %v6629 = vpack.c.b16 %v6608, %v6608
    %v6630 = vpack.c.b16 %v6610, %v6609
    %v6631 = vpack.c.b16 %v6611, %v6611
    %v6632 = vpack.c.b16 %v6613, %v6612
    %v6633 = vpack.c.b16 %v6614, %v6614
    %v6634 = vpack.c.b16 %v6616, %v6615
    %v6635 = vpack.c.b16 %v6617, %v6617
    %v6636 = vpack.c.b16 %v6619, %v6618
    %v6637 = vpack.c.b16 %v6620, %v6620
    %v6638 = vpack.c.b16 %v6622, %v6621
    %v6639 = vpack.c.b16 %v6623, %v6623
    %6656 = vst [vmem:[#allocation2 + $0x600] sm:$0xff] %v6624
    %6657 = vst [vmem:[#allocation2 + $0x608] sm:$0xf] %v6625
    %6658 = vst [vmem:[#allocation2 + $0x618] sm:$0xff] %v6626
    %6659 = vst [vmem:[#allocation2 + $0x620] sm:$0xf] %v6627
    %6660 = vst [vmem:[#allocation2 + $0x630] sm:$0xff] %v6628
    %6661 = vst [vmem:[#allocation2 + $0x638] sm:$0xf] %v6629
    %6662 = vst [vmem:[#allocation2 + $0x648] sm:$0xff] %v6630
    %6663 = vst [vmem:[#allocation2 + $0x650] sm:$0xf] %v6631
    %6664 = vst [vmem:[#allocation2 + $0x660] sm:$0xff] %v6632
    %6665 = vst [vmem:[#allocation2 + $0x668] sm:$0xf] %v6633
    %6666 = vst [vmem:[#allocation2 + $0x678] sm:$0xff] %v6634
    %6667 = vst [vmem:[#allocation2 + $0x680] sm:$0xf] %v6635
    %6668 = vst [vmem:[#allocation2 + $0x690] sm:$0xff] %v6636
    %6669 = vst [vmem:[#allocation2 + $0x698] sm:$0xf] %v6637
    %6670 = vst [vmem:[#allocation2 + $0x6a8] sm:$0xff] %v6638
    %6671 = vst [vmem:[#allocation2 + $0x6b0] sm:$0xf] %v6639
    %v6672 = vmul.f32 %v5147, %v5196
    %v6673 = vmul.f32 %v5148, %v5200
    %v6674 = vmul.f32 %v5149, %v5204
    %v6675 = vmul.f32 %v5153, %v5196
    %v6676 = vmul.f32 %v5154, %v5200
    %v6677 = vmul.f32 %v5155, %v5204
    %v6678 = vmul.f32 %v5159, %v5196
    %v6679 = vmul.f32 %v5160, %v5200
    %v6680 = vmul.f32 %v5161, %v5204
    %v6681 = vmul.f32 %v5165, %v5196
    %v6682 = vmul.f32 %v5166, %v5200
    %v6683 = vmul.f32 %v5167, %v5204
    %v6684 = vmul.f32 %v5171, %v5196
    %v6685 = vmul.f32 %v5172, %v5200
    %v6686 = vmul.f32 %v5173, %v5204
    %v6687 = vmul.f32 %v5177, %v5196
    %v6688 = vmul.f32 %v5178, %v5200
    %v6689 = vmul.f32 %v5179, %v5204
    %v6690 = vmul.f32 %v5183, %v5196
    %v6691 = vmul.f32 %v5184, %v5200
    %v6692 = vmul.f32 %v5185, %v5204
    %v6693 = vmul.f32 %v5189, %v5196
    %v6694 = vmul.f32 %v5190, %v5200
    %v6695 = vmul.f32 %v5191, %v5204
    %6696 = vrot.lane.b32.xlu0 %v6672, 19
    %v6697 = vpop.permute.xlu0 %6696
    %6698 = vrot.lane.b32.xlu0 %v6675, 19
    %v6699 = vpop.permute.xlu0 %6698
    %6700 = vrot.lane.b32.xlu0 %v6678, 19
    %v6701 = vpop.permute.xlu0 %6700
    %6702 = vrot.lane.b32.xlu0 %v6681, 19
    %v6703 = vpop.permute.xlu0 %6702
    %6704 = vrot.lane.b32.xlu0 %v6684, 19
    %v6705 = vpop.permute.xlu0 %6704
    %6706 = vrot.lane.b32.xlu0 %v6687, 19
    %v6707 = vpop.permute.xlu0 %6706
    %6708 = vrot.lane.b32.xlu0 %v6690, 19
    %v6709 = vpop.permute.xlu0 %6708
    %6710 = vrot.lane.b32.xlu0 %v6693, 19
    %v6711 = vpop.permute.xlu0 %6710
    %6712 = vrot.lane.b32.xlu0 %v6673, 19
    %v6713 = vpop.permute.xlu0 %6712
    %6714 = vrot.lane.b32.xlu0 %v6676, 19
    %v6715 = vpop.permute.xlu0 %6714
    %6716 = vrot.lane.b32.xlu0 %v6679, 19
    %v6717 = vpop.permute.xlu0 %6716
    %6718 = vrot.lane.b32.xlu0 %v6682, 19
    %v6719 = vpop.permute.xlu0 %6718
    %6720 = vrot.lane.b32.xlu0 %v6685, 19
    %v6721 = vpop.permute.xlu0 %6720
    %6722 = vrot.lane.b32.xlu0 %v6688, 19
    %v6723 = vpop.permute.xlu0 %6722
    %6724 = vrot.lane.b32.xlu0 %v6691, 19
    %v6725 = vpop.permute.xlu0 %6724
    %6726 = vrot.lane.b32.xlu0 %v6694, 19
    %v6727 = vpop.permute.xlu0 %6726
    %6728 = vrot.lane.b32.xlu0 %v6674, 19
    %v6729 = vpop.permute.xlu0 %6728
    %6730 = vrot.lane.b32.xlu0 %v6677, 19
    %v6731 = vpop.permute.xlu0 %6730
    %6732 = vrot.lane.b32.xlu0 %v6680, 19
    %v6733 = vpop.permute.xlu0 %6732
    %6734 = vrot.lane.b32.xlu0 %v6683, 19
    %v6735 = vpop.permute.xlu0 %6734
    %6736 = vrot.lane.b32.xlu0 %v6686, 19
    %v6737 = vpop.permute.xlu0 %6736
    %6738 = vrot.lane.b32.xlu0 %v6689, 19
    %v6739 = vpop.permute.xlu0 %6738
    %6740 = vrot.lane.b32.xlu0 %v6692, 19
    %v6741 = vpop.permute.xlu0 %6740
    %6742 = vrot.lane.b32.xlu0 %v6695, 19
    %v6743 = vpop.permute.xlu0 %6742
    %v6744 = vsel %vm141, %v6713, %v6729
    %v6745 = vsel %vm141, %v6715, %v6731
    %v6746 = vsel %vm141, %v6717, %v6733
    %v6747 = vsel %vm141, %v6719, %v6735
    %v6748 = vsel %vm141, %v6721, %v6737
    %v6749 = vsel %vm141, %v6723, %v6739
    %v6750 = vsel %vm141, %v6725, %v6741
    %v6751 = vsel %vm141, %v6727, %v6743
    %v6752 = vsel %vm141, %v6697, %v6713
    %v6753 = vsel %vm141, %v6699, %v6715
    %v6754 = vsel %vm141, %v6701, %v6717
    %v6755 = vsel %vm141, %v6703, %v6719
    %v6756 = vsel %vm141, %v6705, %v6721
    %v6757 = vsel %vm141, %v6707, %v6723
    %v6758 = vsel %vm141, %v6709, %v6725
    %v6759 = vsel %vm141, %v6711, %v6727
    %v6760 = vsel %vm141, %v6729, %v6697
    %v6761 = vsel %vm141, %v6731, %v6699
    %v6762 = vsel %vm141, %v6733, %v6701
    %v6763 = vsel %vm141, %v6735, %v6703
    %v6764 = vsel %vm141, %v6737, %v6705
    %v6765 = vsel %vm141, %v6739, %v6707
    %v6766 = vsel %vm141, %v6741, %v6709
    %v6767 = vsel %vm141, %v6743, %v6711
    %v6768 = vpack.c.bf16 %v6761, %v6760
    %v6769 = vpack.c.bf16 %v6753, %v6752
    %v6770 = vpack.c.bf16 %v6745, %v6744
    %v6771 = vpack.c.bf16 %v6763, %v6762
    %v6772 = vpack.c.bf16 %v6755, %v6754
    %v6773 = vpack.c.bf16 %v6747, %v6746
    %v6774 = vpack.c.bf16 %v6765, %v6764
    %v6775 = vpack.c.bf16 %v6757, %v6756
    %v6776 = vpack.c.bf16 %v6749, %v6748
    %v6777 = vpack.c.bf16 %v6767, %v6766
    %v6778 = vpack.c.bf16 %v6759, %v6758
    %v6779 = vpack.c.bf16 %v6751, %v6750
    %v6792 = vunpack.c.l.b16 %v6768
    %v6793 = vunpack.c.l.b16 %v6769
    %v6794 = vunpack.c.l.b16 %v6770
    %v6795 = vunpack.c.h.b16 %v6768
    %v6796 = vunpack.c.h.b16 %v6769
    %v6797 = vunpack.c.h.b16 %v6770
    %v6798 = vunpack.c.l.b16 %v6771
    %v6799 = vunpack.c.l.b16 %v6772
    %v6800 = vunpack.c.l.b16 %v6773
    %v6801 = vunpack.c.h.b16 %v6771
    %v6802 = vunpack.c.h.b16 %v6772
    %v6803 = vunpack.c.h.b16 %v6773
    %v6804 = vunpack.c.l.b16 %v6774
    %v6805 = vunpack.c.l.b16 %v6775
    %v6806 = vunpack.c.l.b16 %v6776
    %v6807 = vunpack.c.h.b16 %v6774
    %v6808 = vunpack.c.h.b16 %v6775
    %v6809 = vunpack.c.h.b16 %v6776
    %v6810 = vunpack.c.l.b16 %v6777
    %v6811 = vunpack.c.l.b16 %v6778
    %v6812 = vunpack.c.l.b16 %v6779
    %v6813 = vunpack.c.h.b16 %v6777
    %v6814 = vunpack.c.h.b16 %v6778
    %v6815 = vunpack.c.h.b16 %v6779
    %v6816 = vpack.c.b16 %v6793, %v6792
    %v6817 = vpack.c.b16 %v6794, %v6794
    %v6818 = vpack.c.b16 %v6796, %v6795
    %v6819 = vpack.c.b16 %v6797, %v6797
    %v6820 = vpack.c.b16 %v6799, %v6798
    %v6821 = vpack.c.b16 %v6800, %v6800
    %v6822 = vpack.c.b16 %v6802, %v6801
    %v6823 = vpack.c.b16 %v6803, %v6803
    %v6824 = vpack.c.b16 %v6805, %v6804
    %v6825 = vpack.c.b16 %v6806, %v6806
    %v6826 = vpack.c.b16 %v6808, %v6807
    %v6827 = vpack.c.b16 %v6809, %v6809
    %v6828 = vpack.c.b16 %v6811, %v6810
    %v6829 = vpack.c.b16 %v6812, %v6812
    %v6830 = vpack.c.b16 %v6814, %v6813
    %v6831 = vpack.c.b16 %v6815, %v6815
    %6848 = vst [vmem:[#allocation2 + $0xc] sm:$0xff] %v6816
    %6849 = vst [vmem:[#allocation2 + $0x14] sm:$0xf] %v6817
    %6850 = vst [vmem:[#allocation2 + $0x24] sm:$0xff] %v6818
    %6851 = vst [vmem:[#allocation2 + $0x2c] sm:$0xf] %v6819
    %6852 = vst [vmem:[#allocation2 + $0x3c] sm:$0xff] %v6820
    %6853 = vst [vmem:[#allocation2 + $0x44] sm:$0xf] %v6821
    %6854 = vst [vmem:[#allocation2 + $0x54] sm:$0xff] %v6822
    %6855 = vst [vmem:[#allocation2 + $0x5c] sm:$0xf] %v6823
    %6856 = vst [vmem:[#allocation2 + $0x6c] sm:$0xff] %v6824
    %6857 = vst [vmem:[#allocation2 + $0x74] sm:$0xf] %v6825
    %6858 = vst [vmem:[#allocation2 + $0x84] sm:$0xff] %v6826
    %6859 = vst [vmem:[#allocation2 + $0x8c] sm:$0xf] %v6827
    %6860 = vst [vmem:[#allocation2 + $0x9c] sm:$0xff] %v6828
    %6861 = vst [vmem:[#allocation2 + $0xa4] sm:$0xf] %v6829
    %6862 = vst [vmem:[#allocation2 + $0xb4] sm:$0xff] %v6830
    %6863 = vst [vmem:[#allocation2 + $0xbc] sm:$0xf] %v6831
    %6864 = vrot.lane.b32.xlu0 %v6672, 18
    %v6865 = vpop.permute.xlu0 %6864
    %6866 = vrot.lane.b32.xlu0 %v6675, 18
    %v6867 = vpop.permute.xlu0 %6866
    %6868 = vrot.lane.b32.xlu0 %v6678, 18
    %v6869 = vpop.permute.xlu0 %6868
    %6870 = vrot.lane.b32.xlu0 %v6681, 18
    %v6871 = vpop.permute.xlu0 %6870
    %6872 = vrot.lane.b32.xlu0 %v6684, 18
    %v6873 = vpop.permute.xlu0 %6872
    %6874 = vrot.lane.b32.xlu0 %v6687, 18
    %v6875 = vpop.permute.xlu0 %6874
    %6876 = vrot.lane.b32.xlu0 %v6690, 18
    %v6877 = vpop.permute.xlu0 %6876
    %6878 = vrot.lane.b32.xlu0 %v6693, 18
    %v6879 = vpop.permute.xlu0 %6878
    %6880 = vrot.lane.b32.xlu0 %v6673, 18
    %v6881 = vpop.permute.xlu0 %6880
    %6882 = vrot.lane.b32.xlu0 %v6676, 18
    %v6883 = vpop.permute.xlu0 %6882
    %6884 = vrot.lane.b32.xlu0 %v6679, 18
    %v6885 = vpop.permute.xlu0 %6884
    %6886 = vrot.lane.b32.xlu0 %v6682, 18
    %v6887 = vpop.permute.xlu0 %6886
    %6888 = vrot.lane.b32.xlu0 %v6685, 18
    %v6889 = vpop.permute.xlu0 %6888
    %6890 = vrot.lane.b32.xlu0 %v6688, 18
    %v6891 = vpop.permute.xlu0 %6890
    %6892 = vrot.lane.b32.xlu0 %v6691, 18
    %v6893 = vpop.permute.xlu0 %6892
    %6894 = vrot.lane.b32.xlu0 %v6694, 18
    %v6895 = vpop.permute.xlu0 %6894
    %6896 = vrot.lane.b32.xlu0 %v6674, 18
    %v6897 = vpop.permute.xlu0 %6896
    %6898 = vrot.lane.b32.xlu0 %v6677, 18
    %v6899 = vpop.permute.xlu0 %6898
    %6900 = vrot.lane.b32.xlu0 %v6680, 18
    %v6901 = vpop.permute.xlu0 %6900
    %6902 = vrot.lane.b32.xlu0 %v6683, 18
    %v6903 = vpop.permute.xlu0 %6902
    %6904 = vrot.lane.b32.xlu0 %v6686, 18
    %v6905 = vpop.permute.xlu0 %6904
    %6906 = vrot.lane.b32.xlu0 %v6689, 18
    %v6907 = vpop.permute.xlu0 %6906
    %6908 = vrot.lane.b32.xlu0 %v6692, 18
    %v6909 = vpop.permute.xlu0 %6908
    %6910 = vrot.lane.b32.xlu0 %v6695, 18
    %v6911 = vpop.permute.xlu0 %6910
    %v6912 = vsel %vm310, %v6881, %v6897
    %v6913 = vsel %vm310, %v6883, %v6899
    %v6914 = vsel %vm310, %v6885, %v6901
    %v6915 = vsel %vm310, %v6887, %v6903
    %v6916 = vsel %vm310, %v6889, %v6905
    %v6917 = vsel %vm310, %v6891, %v6907
    %v6918 = vsel %vm310, %v6893, %v6909
    %v6919 = vsel %vm310, %v6895, %v6911
    %v6920 = vsel %vm310, %v6865, %v6881
    %v6921 = vsel %vm310, %v6867, %v6883
    %v6922 = vsel %vm310, %v6869, %v6885
    %v6923 = vsel %vm310, %v6871, %v6887
    %v6924 = vsel %vm310, %v6873, %v6889
    %v6925 = vsel %vm310, %v6875, %v6891
    %v6926 = vsel %vm310, %v6877, %v6893
    %v6927 = vsel %vm310, %v6879, %v6895
    %v6928 = vsel %vm310, %v6897, %v6865
    %v6929 = vsel %vm310, %v6899, %v6867
    %v6930 = vsel %vm310, %v6901, %v6869
    %v6931 = vsel %vm310, %v6903, %v6871
    %v6932 = vsel %vm310, %v6905, %v6873
    %v6933 = vsel %vm310, %v6907, %v6875
    %v6934 = vsel %vm310, %v6909, %v6877
    %v6935 = vsel %vm310, %v6911, %v6879
    %v6936 = vpack.c.bf16 %v6929, %v6928
    %v6937 = vpack.c.bf16 %v6921, %v6920
    %v6938 = vpack.c.bf16 %v6913, %v6912
    %v6939 = vpack.c.bf16 %v6931, %v6930
    %v6940 = vpack.c.bf16 %v6923, %v6922
    %v6941 = vpack.c.bf16 %v6915, %v6914
    %v6942 = vpack.c.bf16 %v6933, %v6932
    %v6943 = vpack.c.bf16 %v6925, %v6924
    %v6944 = vpack.c.bf16 %v6917, %v6916
    %v6945 = vpack.c.bf16 %v6935, %v6934
    %v6946 = vpack.c.bf16 %v6927, %v6926
    %v6947 = vpack.c.bf16 %v6919, %v6918
    %v6960 = vunpack.c.l.b16 %v6936
    %v6961 = vunpack.c.l.b16 %v6937
    %v6962 = vunpack.c.l.b16 %v6938
    %v6963 = vunpack.c.h.b16 %v6936
    %v6964 = vunpack.c.h.b16 %v6937
    %v6965 = vunpack.c.h.b16 %v6938
    %v6966 = vunpack.c.l.b16 %v6939
    %v6967 = vunpack.c.l.b16 %v6940
    %v6968 = vunpack.c.l.b16 %v6941
    %v6969 = vunpack.c.h.b16 %v6939
    %v6970 = vunpack.c.h.b16 %v6940
    %v6971 = vunpack.c.h.b16 %v6941
    %v6972 = vunpack.c.l.b16 %v6942
    %v6973 = vunpack.c.l.b16 %v6943
    %v6974 = vunpack.c.l.b16 %v6944
    %v6975 = vunpack.c.h.b16 %v6942
    %v6976 = vunpack.c.h.b16 %v6943
    %v6977 = vunpack.c.h.b16 %v6944
    %v6978 = vunpack.c.l.b16 %v6945
    %v6979 = vunpack.c.l.b16 %v6946
    %v6980 = vunpack.c.l.b16 %v6947
    %v6981 = vunpack.c.h.b16 %v6945
    %v6982 = vunpack.c.h.b16 %v6946
    %v6983 = vunpack.c.h.b16 %v6947
    %v6984 = vpack.c.b16 %v6961, %v6960
    %v6985 = vpack.c.b16 %v6962, %v6962
    %v6986 = vpack.c.b16 %v6964, %v6963
    %v6987 = vpack.c.b16 %v6965, %v6965
    %v6988 = vpack.c.b16 %v6967, %v6966
    %v6989 = vpack.c.b16 %v6968, %v6968
    %v6990 = vpack.c.b16 %v6970, %v6969
    %v6991 = vpack.c.b16 %v6971, %v6971
    %v6992 = vpack.c.b16 %v6973, %v6972
    %v6993 = vpack.c.b16 %v6974, %v6974
    %v6994 = vpack.c.b16 %v6976, %v6975
    %v6995 = vpack.c.b16 %v6977, %v6977
    %v6996 = vpack.c.b16 %v6979, %v6978
    %v6997 = vpack.c.b16 %v6980, %v6980
    %v6998 = vpack.c.b16 %v6982, %v6981
    %v6999 = vpack.c.b16 %v6983, %v6983
    %7016 = vst [vmem:[#allocation2 + $0xcc] sm:$0xff] %v6984
    %7017 = vst [vmem:[#allocation2 + $0xd4] sm:$0xf] %v6985
    %7018 = vst [vmem:[#allocation2 + $0xe4] sm:$0xff] %v6986
    %7019 = vst [vmem:[#allocation2 + $0xec] sm:$0xf] %v6987
    %7020 = vst [vmem:[#allocation2 + $0xfc] sm:$0xff] %v6988
    %7021 = vst [vmem:[#allocation2 + $0x104] sm:$0xf] %v6989
    %7022 = vst [vmem:[#allocation2 + $0x114] sm:$0xff] %v6990
    %7023 = vst [vmem:[#allocation2 + $0x11c] sm:$0xf] %v6991
    %7024 = vst [vmem:[#allocation2 + $0x12c] sm:$0xff] %v6992
    %7025 = vst [vmem:[#allocation2 + $0x134] sm:$0xf] %v6993
    %7026 = vst [vmem:[#allocation2 + $0x144] sm:$0xff] %v6994
    %7027 = vst [vmem:[#allocation2 + $0x14c] sm:$0xf] %v6995
    %7028 = vst [vmem:[#allocation2 + $0x15c] sm:$0xff] %v6996
    %7029 = vst [vmem:[#allocation2 + $0x164] sm:$0xf] %v6997
    %7030 = vst [vmem:[#allocation2 + $0x174] sm:$0xff] %v6998
    %7031 = vst [vmem:[#allocation2 + $0x17c] sm:$0xf] %v6999
    %7032 = vrot.lane.b32.xlu0 %v6672, 17
    %v7033 = vpop.permute.xlu0 %7032
    %7034 = vrot.lane.b32.xlu0 %v6675, 17
    %v7035 = vpop.permute.xlu0 %7034
    %7036 = vrot.lane.b32.xlu0 %v6678, 17
    %v7037 = vpop.permute.xlu0 %7036
    %7038 = vrot.lane.b32.xlu0 %v6681, 17
    %v7039 = vpop.permute.xlu0 %7038
    %7040 = vrot.lane.b32.xlu0 %v6684, 17
    %v7041 = vpop.permute.xlu0 %7040
    %7042 = vrot.lane.b32.xlu0 %v6687, 17
    %v7043 = vpop.permute.xlu0 %7042
    %7044 = vrot.lane.b32.xlu0 %v6690, 17
    %v7045 = vpop.permute.xlu0 %7044
    %7046 = vrot.lane.b32.xlu0 %v6693, 17
    %v7047 = vpop.permute.xlu0 %7046
    %7048 = vrot.lane.b32.xlu0 %v6673, 17
    %v7049 = vpop.permute.xlu0 %7048
    %7050 = vrot.lane.b32.xlu0 %v6676, 17
    %v7051 = vpop.permute.xlu0 %7050
    %7052 = vrot.lane.b32.xlu0 %v6679, 17
    %v7053 = vpop.permute.xlu0 %7052
    %7054 = vrot.lane.b32.xlu0 %v6682, 17
    %v7055 = vpop.permute.xlu0 %7054
    %7056 = vrot.lane.b32.xlu0 %v6685, 17
    %v7057 = vpop.permute.xlu0 %7056
    %7058 = vrot.lane.b32.xlu0 %v6688, 17
    %v7059 = vpop.permute.xlu0 %7058
    %7060 = vrot.lane.b32.xlu0 %v6691, 17
    %v7061 = vpop.permute.xlu0 %7060
    %7062 = vrot.lane.b32.xlu0 %v6694, 17
    %v7063 = vpop.permute.xlu0 %7062
    %7064 = vrot.lane.b32.xlu0 %v6674, 17
    %v7065 = vpop.permute.xlu0 %7064
    %7066 = vrot.lane.b32.xlu0 %v6677, 17
    %v7067 = vpop.permute.xlu0 %7066
    %7068 = vrot.lane.b32.xlu0 %v6680, 17
    %v7069 = vpop.permute.xlu0 %7068
    %7070 = vrot.lane.b32.xlu0 %v6683, 17
    %v7071 = vpop.permute.xlu0 %7070
    %7072 = vrot.lane.b32.xlu0 %v6686, 17
    %v7073 = vpop.permute.xlu0 %7072
    %7074 = vrot.lane.b32.xlu0 %v6689, 17
    %v7075 = vpop.permute.xlu0 %7074
    %7076 = vrot.lane.b32.xlu0 %v6692, 17
    %v7077 = vpop.permute.xlu0 %7076
    %7078 = vrot.lane.b32.xlu0 %v6695, 17
    %v7079 = vpop.permute.xlu0 %7078
    %v7080 = vsel %vm479, %v7049, %v7065
    %v7081 = vsel %vm479, %v7051, %v7067
    %v7082 = vsel %vm479, %v7053, %v7069
    %v7083 = vsel %vm479, %v7055, %v7071
    %v7084 = vsel %vm479, %v7057, %v7073
    %v7085 = vsel %vm479, %v7059, %v7075
    %v7086 = vsel %vm479, %v7061, %v7077
    %v7087 = vsel %vm479, %v7063, %v7079
    %v7088 = vsel %vm479, %v7033, %v7049
    %v7089 = vsel %vm479, %v7035, %v7051
    %v7090 = vsel %vm479, %v7037, %v7053
    %v7091 = vsel %vm479, %v7039, %v7055
    %v7092 = vsel %vm479, %v7041, %v7057
    %v7093 = vsel %vm479, %v7043, %v7059
    %v7094 = vsel %vm479, %v7045, %v7061
    %v7095 = vsel %vm479, %v7047, %v7063
    %v7096 = vsel %vm479, %v7065, %v7033
    %v7097 = vsel %vm479, %v7067, %v7035
    %v7098 = vsel %vm479, %v7069, %v7037
    %v7099 = vsel %vm479, %v7071, %v7039
    %v7100 = vsel %vm479, %v7073, %v7041
    %v7101 = vsel %vm479, %v7075, %v7043
    %v7102 = vsel %vm479, %v7077, %v7045
    %v7103 = vsel %vm479, %v7079, %v7047
    %v7104 = vpack.c.bf16 %v7097, %v7096
    %v7105 = vpack.c.bf16 %v7089, %v7088
    %v7106 = vpack.c.bf16 %v7081, %v7080
    %v7107 = vpack.c.bf16 %v7099, %v7098
    %v7108 = vpack.c.bf16 %v7091, %v7090
    %v7109 = vpack.c.bf16 %v7083, %v7082
    %v7110 = vpack.c.bf16 %v7101, %v7100
    %v7111 = vpack.c.bf16 %v7093, %v7092
    %v7112 = vpack.c.bf16 %v7085, %v7084
    %v7113 = vpack.c.bf16 %v7103, %v7102
    %v7114 = vpack.c.bf16 %v7095, %v7094
    %v7115 = vpack.c.bf16 %v7087, %v7086
    %v7128 = vunpack.c.l.b16 %v7104
    %v7129 = vunpack.c.l.b16 %v7105
    %v7130 = vunpack.c.l.b16 %v7106
    %v7131 = vunpack.c.h.b16 %v7104
    %v7132 = vunpack.c.h.b16 %v7105
    %v7133 = vunpack.c.h.b16 %v7106
    %v7134 = vunpack.c.l.b16 %v7107
    %v7135 = vunpack.c.l.b16 %v7108
    %v7136 = vunpack.c.l.b16 %v7109
    %v7137 = vunpack.c.h.b16 %v7107
    %v7138 = vunpack.c.h.b16 %v7108
    %v7139 = vunpack.c.h.b16 %v7109
    %v7140 = vunpack.c.l.b16 %v7110
    %v7141 = vunpack.c.l.b16 %v7111
    %v7142 = vunpack.c.l.b16 %v7112
    %v7143 = vunpack.c.h.b16 %v7110
    %v7144 = vunpack.c.h.b16 %v7111
    %v7145 = vunpack.c.h.b16 %v7112
    %v7146 = vunpack.c.l.b16 %v7113
    %v7147 = vunpack.c.l.b16 %v7114
    %v7148 = vunpack.c.l.b16 %v7115
    %v7149 = vunpack.c.h.b16 %v7113
    %v7150 = vunpack.c.h.b16 %v7114
    %v7151 = vunpack.c.h.b16 %v7115
    %v7152 = vpack.c.b16 %v7129, %v7128
    %v7153 = vpack.c.b16 %v7130, %v7130
    %v7154 = vpack.c.b16 %v7132, %v7131
    %v7155 = vpack.c.b16 %v7133, %v7133
    %v7156 = vpack.c.b16 %v7135, %v7134
    %v7157 = vpack.c.b16 %v7136, %v7136
    %v7158 = vpack.c.b16 %v7138, %v7137
    %v7159 = vpack.c.b16 %v7139, %v7139
    %v7160 = vpack.c.b16 %v7141, %v7140
    %v7161 = vpack.c.b16 %v7142, %v7142
    %v7162 = vpack.c.b16 %v7144, %v7143
    %v7163 = vpack.c.b16 %v7145, %v7145
    %v7164 = vpack.c.b16 %v7147, %v7146
    %v7165 = vpack.c.b16 %v7148, %v7148
    %v7166 = vpack.c.b16 %v7150, %v7149
    %v7167 = vpack.c.b16 %v7151, %v7151
    %7184 = vst [vmem:[#allocation2 + $0x18c] sm:$0xff] %v7152
    %7185 = vst [vmem:[#allocation2 + $0x194] sm:$0xf] %v7153
    %7186 = vst [vmem:[#allocation2 + $0x1a4] sm:$0xff] %v7154
    %7187 = vst [vmem:[#allocation2 + $0x1ac] sm:$0xf] %v7155
    %7188 = vst [vmem:[#allocation2 + $0x1bc] sm:$0xff] %v7156
    %7189 = vst [vmem:[#allocation2 + $0x1c4] sm:$0xf] %v7157
    %7190 = vst [vmem:[#allocation2 + $0x1d4] sm:$0xff] %v7158
    %7191 = vst [vmem:[#allocation2 + $0x1dc] sm:$0xf] %v7159
    %7192 = vst [vmem:[#allocation2 + $0x1ec] sm:$0xff] %v7160
    %7193 = vst [vmem:[#allocation2 + $0x1f4] sm:$0xf] %v7161
    %7194 = vst [vmem:[#allocation2 + $0x204] sm:$0xff] %v7162
    %7195 = vst [vmem:[#allocation2 + $0x20c] sm:$0xf] %v7163
    %7196 = vst [vmem:[#allocation2 + $0x21c] sm:$0xff] %v7164
    %7197 = vst [vmem:[#allocation2 + $0x224] sm:$0xf] %v7165
    %7198 = vst [vmem:[#allocation2 + $0x234] sm:$0xff] %v7166
    %7199 = vst [vmem:[#allocation2 + $0x23c] sm:$0xf] %v7167
    %7200 = vrot.lane.b32.xlu0 %v6672, 1
    %v7201 = vpop.permute.xlu0 %7200
    %7202 = vrot.lane.b32.xlu0 %v6675, 1
    %v7203 = vpop.permute.xlu0 %7202
    %7204 = vrot.lane.b32.xlu0 %v6678, 1
    %v7205 = vpop.permute.xlu0 %7204
    %7206 = vrot.lane.b32.xlu0 %v6681, 1
    %v7207 = vpop.permute.xlu0 %7206
    %7208 = vrot.lane.b32.xlu0 %v6684, 1
    %v7209 = vpop.permute.xlu0 %7208
    %7210 = vrot.lane.b32.xlu0 %v6687, 1
    %v7211 = vpop.permute.xlu0 %7210
    %7212 = vrot.lane.b32.xlu0 %v6690, 1
    %v7213 = vpop.permute.xlu0 %7212
    %7214 = vrot.lane.b32.xlu0 %v6693, 1
    %v7215 = vpop.permute.xlu0 %7214
    %7216 = vrot.lane.b32.xlu0 %v6673, 1
    %v7217 = vpop.permute.xlu0 %7216
    %7218 = vrot.lane.b32.xlu0 %v6676, 1
    %v7219 = vpop.permute.xlu0 %7218
    %7220 = vrot.lane.b32.xlu0 %v6679, 1
    %v7221 = vpop.permute.xlu0 %7220
    %7222 = vrot.lane.b32.xlu0 %v6682, 1
    %v7223 = vpop.permute.xlu0 %7222
    %7224 = vrot.lane.b32.xlu0 %v6685, 1
    %v7225 = vpop.permute.xlu0 %7224
    %7226 = vrot.lane.b32.xlu0 %v6688, 1
    %v7227 = vpop.permute.xlu0 %7226
    %7228 = vrot.lane.b32.xlu0 %v6691, 1
    %v7229 = vpop.permute.xlu0 %7228
    %7230 = vrot.lane.b32.xlu0 %v6694, 1
    %v7231 = vpop.permute.xlu0 %7230
    %7232 = vrot.lane.b32.xlu0 %v6674, 1
    %v7233 = vpop.permute.xlu0 %7232
    %7234 = vrot.lane.b32.xlu0 %v6677, 1
    %v7235 = vpop.permute.xlu0 %7234
    %7236 = vrot.lane.b32.xlu0 %v6680, 1
    %v7237 = vpop.permute.xlu0 %7236
    %7238 = vrot.lane.b32.xlu0 %v6683, 1
    %v7239 = vpop.permute.xlu0 %7238
    %7240 = vrot.lane.b32.xlu0 %v6686, 1
    %v7241 = vpop.permute.xlu0 %7240
    %7242 = vrot.lane.b32.xlu0 %v6689, 1
    %v7243 = vpop.permute.xlu0 %7242
    %7244 = vrot.lane.b32.xlu0 %v6692, 1
    %v7245 = vpop.permute.xlu0 %7244
    %7246 = vrot.lane.b32.xlu0 %v6695, 1
    %v7247 = vpop.permute.xlu0 %7246
    %v7248 = vsel %vm648, %v7217, %v7233
    %v7249 = vsel %vm648, %v7219, %v7235
    %v7250 = vsel %vm648, %v7221, %v7237
    %v7251 = vsel %vm648, %v7223, %v7239
    %v7252 = vsel %vm648, %v7225, %v7241
    %v7253 = vsel %vm648, %v7227, %v7243
    %v7254 = vsel %vm648, %v7229, %v7245
    %v7255 = vsel %vm648, %v7231, %v7247
    %v7256 = vsel %vm648, %v7201, %v7217
    %v7257 = vsel %vm648, %v7203, %v7219
    %v7258 = vsel %vm648, %v7205, %v7221
    %v7259 = vsel %vm648, %v7207, %v7223
    %v7260 = vsel %vm648, %v7209, %v7225
    %v7261 = vsel %vm648, %v7211, %v7227
    %v7262 = vsel %vm648, %v7213, %v7229
    %v7263 = vsel %vm648, %v7215, %v7231
    %v7264 = vsel %vm648, %v7233, %v7201
    %v7265 = vsel %vm648, %v7235, %v7203
    %v7266 = vsel %vm648, %v7237, %v7205
    %v7267 = vsel %vm648, %v7239, %v7207
    %v7268 = vsel %vm648, %v7241, %v7209
    %v7269 = vsel %vm648, %v7243, %v7211
    %v7270 = vsel %vm648, %v7245, %v7213
    %v7271 = vsel %vm648, %v7247, %v7215
    %v7272 = vpack.c.bf16 %v7265, %v7264
    %v7273 = vpack.c.bf16 %v7257, %v7256
    %v7274 = vpack.c.bf16 %v7249, %v7248
    %v7275 = vpack.c.bf16 %v7267, %v7266
    %v7276 = vpack.c.bf16 %v7259, %v7258
    %v7277 = vpack.c.bf16 %v7251, %v7250
    %v7278 = vpack.c.bf16 %v7269, %v7268
    %v7279 = vpack.c.bf16 %v7261, %v7260
    %v7280 = vpack.c.bf16 %v7253, %v7252
    %v7281 = vpack.c.bf16 %v7271, %v7270
    %v7282 = vpack.c.bf16 %v7263, %v7262
    %v7283 = vpack.c.bf16 %v7255, %v7254
    %v7296 = vunpack.c.l.b16 %v7272
    %v7297 = vunpack.c.l.b16 %v7273
    %v7298 = vunpack.c.l.b16 %v7274
    %v7299 = vunpack.c.h.b16 %v7272
    %v7300 = vunpack.c.h.b16 %v7273
    %v7301 = vunpack.c.h.b16 %v7274
    %v7302 = vunpack.c.l.b16 %v7275
    %v7303 = vunpack.c.l.b16 %v7276
    %v7304 = vunpack.c.l.b16 %v7277
    %v7305 = vunpack.c.h.b16 %v7275
    %v7306 = vunpack.c.h.b16 %v7276
    %v7307 = vunpack.c.h.b16 %v7277
    %v7308 = vunpack.c.l.b16 %v7278
    %v7309 = vunpack.c.l.b16 %v7279
    %v7310 = vunpack.c.l.b16 %v7280
    %v7311 = vunpack.c.h.b16 %v7278
    %v7312 = vunpack.c.h.b16 %v7279
    %v7313 = vunpack.c.h.b16 %v7280
    %v7314 = vunpack.c.l.b16 %v7281
    %v7315 = vunpack.c.l.b16 %v7282
    %v7316 = vunpack.c.l.b16 %v7283
    %v7317 = vunpack.c.h.b16 %v7281
    %v7318 = vunpack.c.h.b16 %v7282
    %v7319 = vunpack.c.h.b16 %v7283
    %v7320 = vpack.c.b16 %v7297, %v7296
    %v7321 = vpack.c.b16 %v7298, %v7298
    %v7322 = vpack.c.b16 %v7300, %v7299
    %v7323 = vpack.c.b16 %v7301, %v7301
    %v7324 = vpack.c.b16 %v7303, %v7302
    %v7325 = vpack.c.b16 %v7304, %v7304
    %v7326 = vpack.c.b16 %v7306, %v7305
    %v7327 = vpack.c.b16 %v7307, %v7307
    %v7328 = vpack.c.b16 %v7309, %v7308
    %v7329 = vpack.c.b16 %v7310, %v7310
    %v7330 = vpack.c.b16 %v7312, %v7311
    %v7331 = vpack.c.b16 %v7313, %v7313
    %v7332 = vpack.c.b16 %v7315, %v7314
    %v7333 = vpack.c.b16 %v7316, %v7316
    %v7334 = vpack.c.b16 %v7318, %v7317
    %v7335 = vpack.c.b16 %v7319, %v7319
    %7352 = vst [vmem:[#allocation2 + $0x24c] sm:$0xff] %v7320
    %7353 = vst [vmem:[#allocation2 + $0x254] sm:$0xf] %v7321
    %7354 = vst [vmem:[#allocation2 + $0x264] sm:$0xff] %v7322
    %7355 = vst [vmem:[#allocation2 + $0x26c] sm:$0xf] %v7323
    %7356 = vst [vmem:[#allocation2 + $0x27c] sm:$0xff] %v7324
    %7357 = vst [vmem:[#allocation2 + $0x284] sm:$0xf] %v7325
    %7358 = vst [vmem:[#allocation2 + $0x294] sm:$0xff] %v7326
    %7359 = vst [vmem:[#allocation2 + $0x29c] sm:$0xf] %v7327
    %7360 = vst [vmem:[#allocation2 + $0x2ac] sm:$0xff] %v7328
    %7361 = vst [vmem:[#allocation2 + $0x2b4] sm:$0xf] %v7329
    %7362 = vst [vmem:[#allocation2 + $0x2c4] sm:$0xff] %v7330
    %7363 = vst [vmem:[#allocation2 + $0x2cc] sm:$0xf] %v7331
    %7364 = vst [vmem:[#allocation2 + $0x2dc] sm:$0xff] %v7332
    %7365 = vst [vmem:[#allocation2 + $0x2e4] sm:$0xf] %v7333
    %7366 = vst [vmem:[#allocation2 + $0x2f4] sm:$0xff] %v7334
    %7367 = vst [vmem:[#allocation2 + $0x2fc] sm:$0xf] %v7335
    %v7368 = vpack.c.bf16 %v6675, %v6672
    %v7369 = vpack.c.bf16 %v6676, %v6673
    %v7370 = vpack.c.bf16 %v6677, %v6674
    %v7371 = vpack.c.bf16 %v6681, %v6678
    %v7372 = vpack.c.bf16 %v6682, %v6679
    %v7373 = vpack.c.bf16 %v6683, %v6680
    %v7374 = vpack.c.bf16 %v6687, %v6684
    %v7375 = vpack.c.bf16 %v6688, %v6685
    %v7376 = vpack.c.bf16 %v6689, %v6686
    %v7377 = vpack.c.bf16 %v6693, %v6690
    %v7378 = vpack.c.bf16 %v6694, %v6691
    %v7379 = vpack.c.bf16 %v6695, %v6692
    %v7392 = vunpack.c.l.b16 %v7368
    %v7393 = vunpack.c.l.b16 %v7369
    %v7394 = vunpack.c.l.b16 %v7370
    %v7395 = vunpack.c.h.b16 %v7368
    %v7396 = vunpack.c.h.b16 %v7369
    %v7397 = vunpack.c.h.b16 %v7370
    %v7398 = vunpack.c.l.b16 %v7371
    %v7399 = vunpack.c.l.b16 %v7372
    %v7400 = vunpack.c.l.b16 %v7373
    %v7401 = vunpack.c.h.b16 %v7371
    %v7402 = vunpack.c.h.b16 %v7372
    %v7403 = vunpack.c.h.b16 %v7373
    %v7404 = vunpack.c.l.b16 %v7374
    %v7405 = vunpack.c.l.b16 %v7375
    %v7406 = vunpack.c.l.b16 %v7376
    %v7407 = vunpack.c.h.b16 %v7374
    %v7408 = vunpack.c.h.b16 %v7375
    %v7409 = vunpack.c.h.b16 %v7376
    %v7410 = vunpack.c.l.b16 %v7377
    %v7411 = vunpack.c.l.b16 %v7378
    %v7412 = vunpack.c.l.b16 %v7379
    %v7413 = vunpack.c.h.b16 %v7377
    %v7414 = vunpack.c.h.b16 %v7378
    %v7415 = vunpack.c.h.b16 %v7379
    %v7416 = vpack.c.b16 %v7393, %v7392
    %v7417 = vpack.c.b16 %v7394, %v7394
    %v7418 = vpack.c.b16 %v7396, %v7395
    %v7419 = vpack.c.b16 %v7397, %v7397
    %v7420 = vpack.c.b16 %v7399, %v7398
    %v7421 = vpack.c.b16 %v7400, %v7400
    %v7422 = vpack.c.b16 %v7402, %v7401
    %v7423 = vpack.c.b16 %v7403, %v7403
    %v7424 = vpack.c.b16 %v7405, %v7404
    %v7425 = vpack.c.b16 %v7406, %v7406
    %v7426 = vpack.c.b16 %v7408, %v7407
    %v7427 = vpack.c.b16 %v7409, %v7409
    %v7428 = vpack.c.b16 %v7411, %v7410
    %v7429 = vpack.c.b16 %v7412, %v7412
    %v7430 = vpack.c.b16 %v7414, %v7413
    %v7431 = vpack.c.b16 %v7415, %v7415
    %7448 = vst [vmem:[#allocation2 + $0x30c] sm:$0xff] %v7416
    %7449 = vst [vmem:[#allocation2 + $0x314] sm:$0xf] %v7417
    %7450 = vst [vmem:[#allocation2 + $0x324] sm:$0xff] %v7418
    %7451 = vst [vmem:[#allocation2 + $0x32c] sm:$0xf] %v7419
    %7452 = vst [vmem:[#allocation2 + $0x33c] sm:$0xff] %v7420
    %7453 = vst [vmem:[#allocation2 + $0x344] sm:$0xf] %v7421
    %7454 = vst [vmem:[#allocation2 + $0x354] sm:$0xff] %v7422
    %7455 = vst [vmem:[#allocation2 + $0x35c] sm:$0xf] %v7423
    %7456 = vst [vmem:[#allocation2 + $0x36c] sm:$0xff] %v7424
    %7457 = vst [vmem:[#allocation2 + $0x374] sm:$0xf] %v7425
    %7458 = vst [vmem:[#allocation2 + $0x384] sm:$0xff] %v7426
    %7459 = vst [vmem:[#allocation2 + $0x38c] sm:$0xf] %v7427
    %7460 = vst [vmem:[#allocation2 + $0x39c] sm:$0xff] %v7428
    %7461 = vst [vmem:[#allocation2 + $0x3a4] sm:$0xf] %v7429
    %7462 = vst [vmem:[#allocation2 + $0x3b4] sm:$0xff] %v7430
    %7463 = vst [vmem:[#allocation2 + $0x3bc] sm:$0xf] %v7431
    %7464 = vrot.lane.b32.xlu0 %v6672, 127
    %v7465 = vpop.permute.xlu0 %7464
    %7466 = vrot.lane.b32.xlu0 %v6675, 127
    %v7467 = vpop.permute.xlu0 %7466
    %7468 = vrot.lane.b32.xlu0 %v6678, 127
    %v7469 = vpop.permute.xlu0 %7468
    %7470 = vrot.lane.b32.xlu0 %v6681, 127
    %v7471 = vpop.permute.xlu0 %7470
    %7472 = vrot.lane.b32.xlu0 %v6684, 127
    %v7473 = vpop.permute.xlu0 %7472
    %7474 = vrot.lane.b32.xlu0 %v6687, 127
    %v7475 = vpop.permute.xlu0 %7474
    %7476 = vrot.lane.b32.xlu0 %v6690, 127
    %v7477 = vpop.permute.xlu0 %7476
    %7478 = vrot.lane.b32.xlu0 %v6693, 127
    %v7479 = vpop.permute.xlu0 %7478
    %7480 = vrot.lane.b32.xlu0 %v6673, 127
    %v7481 = vpop.permute.xlu0 %7480
    %7482 = vrot.lane.b32.xlu0 %v6676, 127
    %v7483 = vpop.permute.xlu0 %7482
    %7484 = vrot.lane.b32.xlu0 %v6679, 127
    %v7485 = vpop.permute.xlu0 %7484
    %7486 = vrot.lane.b32.xlu0 %v6682, 127
    %v7487 = vpop.permute.xlu0 %7486
    %7488 = vrot.lane.b32.xlu0 %v6685, 127
    %v7489 = vpop.permute.xlu0 %7488
    %7490 = vrot.lane.b32.xlu0 %v6688, 127
    %v7491 = vpop.permute.xlu0 %7490
    %7492 = vrot.lane.b32.xlu0 %v6691, 127
    %v7493 = vpop.permute.xlu0 %7492
    %7494 = vrot.lane.b32.xlu0 %v6694, 127
    %v7495 = vpop.permute.xlu0 %7494
    %7496 = vrot.lane.b32.xlu0 %v6674, 127
    %v7497 = vpop.permute.xlu0 %7496
    %7498 = vrot.lane.b32.xlu0 %v6677, 127
    %v7499 = vpop.permute.xlu0 %7498
    %7500 = vrot.lane.b32.xlu0 %v6680, 127
    %v7501 = vpop.permute.xlu0 %7500
    %7502 = vrot.lane.b32.xlu0 %v6683, 127
    %v7503 = vpop.permute.xlu0 %7502
    %7504 = vrot.lane.b32.xlu0 %v6686, 127
    %v7505 = vpop.permute.xlu0 %7504
    %7506 = vrot.lane.b32.xlu0 %v6689, 127
    %v7507 = vpop.permute.xlu0 %7506
    %7508 = vrot.lane.b32.xlu0 %v6692, 127
    %v7509 = vpop.permute.xlu0 %7508
    %7510 = vrot.lane.b32.xlu0 %v6695, 127
    %v7511 = vpop.permute.xlu0 %7510
    %v7512 = vsel %vm913, %v7481, %v7497
    %v7513 = vsel %vm913, %v7483, %v7499
    %v7514 = vsel %vm913, %v7485, %v7501
    %v7515 = vsel %vm913, %v7487, %v7503
    %v7516 = vsel %vm913, %v7489, %v7505
    %v7517 = vsel %vm913, %v7491, %v7507
    %v7518 = vsel %vm913, %v7493, %v7509
    %v7519 = vsel %vm913, %v7495, %v7511
    %v7520 = vsel %vm913, %v7465, %v7481
    %v7521 = vsel %vm913, %v7467, %v7483
    %v7522 = vsel %vm913, %v7469, %v7485
    %v7523 = vsel %vm913, %v7471, %v7487
    %v7524 = vsel %vm913, %v7473, %v7489
    %v7525 = vsel %vm913, %v7475, %v7491
    %v7526 = vsel %vm913, %v7477, %v7493
    %v7527 = vsel %vm913, %v7479, %v7495
    %v7528 = vsel %vm913, %v7497, %v7465
    %v7529 = vsel %vm913, %v7499, %v7467
    %v7530 = vsel %vm913, %v7501, %v7469
    %v7531 = vsel %vm913, %v7503, %v7471
    %v7532 = vsel %vm913, %v7505, %v7473
    %v7533 = vsel %vm913, %v7507, %v7475
    %v7534 = vsel %vm913, %v7509, %v7477
    %v7535 = vsel %vm913, %v7511, %v7479
    %v7536 = vpack.c.bf16 %v7521, %v7520
    %v7537 = vpack.c.bf16 %v7513, %v7512
    %v7538 = vpack.c.bf16 %v7529, %v7528
    %v7539 = vpack.c.bf16 %v7523, %v7522
    %v7540 = vpack.c.bf16 %v7515, %v7514
    %v7541 = vpack.c.bf16 %v7531, %v7530
    %v7542 = vpack.c.bf16 %v7525, %v7524
    %v7543 = vpack.c.bf16 %v7517, %v7516
    %v7544 = vpack.c.bf16 %v7533, %v7532
    %v7545 = vpack.c.bf16 %v7527, %v7526
    %v7546 = vpack.c.bf16 %v7519, %v7518
    %v7547 = vpack.c.bf16 %v7535, %v7534
    %v7560 = vunpack.c.l.b16 %v7536
    %v7561 = vunpack.c.l.b16 %v7537
    %v7562 = vunpack.c.l.b16 %v7538
    %v7563 = vunpack.c.h.b16 %v7536
    %v7564 = vunpack.c.h.b16 %v7537
    %v7565 = vunpack.c.h.b16 %v7538
    %v7566 = vunpack.c.l.b16 %v7539
    %v7567 = vunpack.c.l.b16 %v7540
    %v7568 = vunpack.c.l.b16 %v7541
    %v7569 = vunpack.c.h.b16 %v7539
    %v7570 = vunpack.c.h.b16 %v7540
    %v7571 = vunpack.c.h.b16 %v7541
    %v7572 = vunpack.c.l.b16 %v7542
    %v7573 = vunpack.c.l.b16 %v7543
    %v7574 = vunpack.c.l.b16 %v7544
    %v7575 = vunpack.c.h.b16 %v7542
    %v7576 = vunpack.c.h.b16 %v7543
    %v7577 = vunpack.c.h.b16 %v7544
    %v7578 = vunpack.c.l.b16 %v7545
    %v7579 = vunpack.c.l.b16 %v7546
    %v7580 = vunpack.c.l.b16 %v7547
    %v7581 = vunpack.c.h.b16 %v7545
    %v7582 = vunpack.c.h.b16 %v7546
    %v7583 = vunpack.c.h.b16 %v7547
    %v7584 = vpack.c.b16 %v7561, %v7560
    %v7585 = vpack.c.b16 %v7562, %v7562
    %v7586 = vpack.c.b16 %v7564, %v7563
    %v7587 = vpack.c.b16 %v7565, %v7565
    %v7588 = vpack.c.b16 %v7567, %v7566
    %v7589 = vpack.c.b16 %v7568, %v7568
    %v7590 = vpack.c.b16 %v7570, %v7569
    %v7591 = vpack.c.b16 %v7571, %v7571
    %v7592 = vpack.c.b16 %v7573, %v7572
    %v7593 = vpack.c.b16 %v7574, %v7574
    %v7594 = vpack.c.b16 %v7576, %v7575
    %v7595 = vpack.c.b16 %v7577, %v7577
    %v7596 = vpack.c.b16 %v7579, %v7578
    %v7597 = vpack.c.b16 %v7580, %v7580
    %v7598 = vpack.c.b16 %v7582, %v7581
    %v7599 = vpack.c.b16 %v7583, %v7583
    %7616 = vst [vmem:[#allocation2 + $0x3cc] sm:$0xff] %v7584
    %7617 = vst [vmem:[#allocation2 + $0x3d4] sm:$0xf] %v7585
    %7618 = vst [vmem:[#allocation2 + $0x3e4] sm:$0xff] %v7586
    %7619 = vst [vmem:[#allocation2 + $0x3ec] sm:$0xf] %v7587
    %7620 = vst [vmem:[#allocation2 + $0x3fc] sm:$0xff] %v7588
    %7621 = vst [vmem:[#allocation2 + $0x404] sm:$0xf] %v7589
    %7622 = vst [vmem:[#allocation2 + $0x414] sm:$0xff] %v7590
    %7623 = vst [vmem:[#allocation2 + $0x41c] sm:$0xf] %v7591
    %7624 = vst [vmem:[#allocation2 + $0x42c] sm:$0xff] %v7592
    %7625 = vst [vmem:[#allocation2 + $0x434] sm:$0xf] %v7593
    %7626 = vst [vmem:[#allocation2 + $0x444] sm:$0xff] %v7594
    %7627 = vst [vmem:[#allocation2 + $0x44c] sm:$0xf] %v7595
    %7628 = vst [vmem:[#allocation2 + $0x45c] sm:$0xff] %v7596
    %7629 = vst [vmem:[#allocation2 + $0x464] sm:$0xf] %v7597
    %7630 = vst [vmem:[#allocation2 + $0x474] sm:$0xff] %v7598
    %7631 = vst [vmem:[#allocation2 + $0x47c] sm:$0xf] %v7599
    %7632 = vrot.lane.b32.xlu0 %v6672, 111
    %v7633 = vpop.permute.xlu0 %7632
    %7634 = vrot.lane.b32.xlu0 %v6675, 111
    %v7635 = vpop.permute.xlu0 %7634
    %7636 = vrot.lane.b32.xlu0 %v6678, 111
    %v7637 = vpop.permute.xlu0 %7636
    %7638 = vrot.lane.b32.xlu0 %v6681, 111
    %v7639 = vpop.permute.xlu0 %7638
    %7640 = vrot.lane.b32.xlu0 %v6684, 111
    %v7641 = vpop.permute.xlu0 %7640
    %7642 = vrot.lane.b32.xlu0 %v6687, 111
    %v7643 = vpop.permute.xlu0 %7642
    %7644 = vrot.lane.b32.xlu0 %v6690, 111
    %v7645 = vpop.permute.xlu0 %7644
    %7646 = vrot.lane.b32.xlu0 %v6693, 111
    %v7647 = vpop.permute.xlu0 %7646
    %7648 = vrot.lane.b32.xlu0 %v6673, 111
    %v7649 = vpop.permute.xlu0 %7648
    %7650 = vrot.lane.b32.xlu0 %v6676, 111
    %v7651 = vpop.permute.xlu0 %7650
    %7652 = vrot.lane.b32.xlu0 %v6679, 111
    %v7653 = vpop.permute.xlu0 %7652
    %7654 = vrot.lane.b32.xlu0 %v6682, 111
    %v7655 = vpop.permute.xlu0 %7654
    %7656 = vrot.lane.b32.xlu0 %v6685, 111
    %v7657 = vpop.permute.xlu0 %7656
    %7658 = vrot.lane.b32.xlu0 %v6688, 111
    %v7659 = vpop.permute.xlu0 %7658
    %7660 = vrot.lane.b32.xlu0 %v6691, 111
    %v7661 = vpop.permute.xlu0 %7660
    %7662 = vrot.lane.b32.xlu0 %v6694, 111
    %v7663 = vpop.permute.xlu0 %7662
    %7664 = vrot.lane.b32.xlu0 %v6674, 111
    %v7665 = vpop.permute.xlu0 %7664
    %7666 = vrot.lane.b32.xlu0 %v6677, 111
    %v7667 = vpop.permute.xlu0 %7666
    %7668 = vrot.lane.b32.xlu0 %v6680, 111
    %v7669 = vpop.permute.xlu0 %7668
    %7670 = vrot.lane.b32.xlu0 %v6683, 111
    %v7671 = vpop.permute.xlu0 %7670
    %7672 = vrot.lane.b32.xlu0 %v6686, 111
    %v7673 = vpop.permute.xlu0 %7672
    %7674 = vrot.lane.b32.xlu0 %v6689, 111
    %v7675 = vpop.permute.xlu0 %7674
    %7676 = vrot.lane.b32.xlu0 %v6692, 111
    %v7677 = vpop.permute.xlu0 %7676
    %7678 = vrot.lane.b32.xlu0 %v6695, 111
    %v7679 = vpop.permute.xlu0 %7678
    %v7680 = vsel %vm1082, %v7649, %v7665
    %v7681 = vsel %vm1082, %v7651, %v7667
    %v7682 = vsel %vm1082, %v7653, %v7669
    %v7683 = vsel %vm1082, %v7655, %v7671
    %v7684 = vsel %vm1082, %v7657, %v7673
    %v7685 = vsel %vm1082, %v7659, %v7675
    %v7686 = vsel %vm1082, %v7661, %v7677
    %v7687 = vsel %vm1082, %v7663, %v7679
    %v7688 = vsel %vm1082, %v7633, %v7649
    %v7689 = vsel %vm1082, %v7635, %v7651
    %v7690 = vsel %vm1082, %v7637, %v7653
    %v7691 = vsel %vm1082, %v7639, %v7655
    %v7692 = vsel %vm1082, %v7641, %v7657
    %v7693 = vsel %vm1082, %v7643, %v7659
    %v7694 = vsel %vm1082, %v7645, %v7661
    %v7695 = vsel %vm1082, %v7647, %v7663
    %v7696 = vsel %vm1082, %v7665, %v7633
    %v7697 = vsel %vm1082, %v7667, %v7635
    %v7698 = vsel %vm1082, %v7669, %v7637
    %v7699 = vsel %vm1082, %v7671, %v7639
    %v7700 = vsel %vm1082, %v7673, %v7641
    %v7701 = vsel %vm1082, %v7675, %v7643
    %v7702 = vsel %vm1082, %v7677, %v7645
    %v7703 = vsel %vm1082, %v7679, %v7647
    %v7704 = vpack.c.bf16 %v7689, %v7688
    %v7705 = vpack.c.bf16 %v7681, %v7680
    %v7706 = vpack.c.bf16 %v7697, %v7696
    %v7707 = vpack.c.bf16 %v7691, %v7690
    %v7708 = vpack.c.bf16 %v7683, %v7682
    %v7709 = vpack.c.bf16 %v7699, %v7698
    %v7710 = vpack.c.bf16 %v7693, %v7692
    %v7711 = vpack.c.bf16 %v7685, %v7684
    %v7712 = vpack.c.bf16 %v7701, %v7700
    %v7713 = vpack.c.bf16 %v7695, %v7694
    %v7714 = vpack.c.bf16 %v7687, %v7686
    %v7715 = vpack.c.bf16 %v7703, %v7702
    %v7728 = vunpack.c.l.b16 %v7704
    %v7729 = vunpack.c.l.b16 %v7705
    %v7730 = vunpack.c.l.b16 %v7706
    %v7731 = vunpack.c.h.b16 %v7704
    %v7732 = vunpack.c.h.b16 %v7705
    %v7733 = vunpack.c.h.b16 %v7706
    %v7734 = vunpack.c.l.b16 %v7707
    %v7735 = vunpack.c.l.b16 %v7708
    %v7736 = vunpack.c.l.b16 %v7709
    %v7737 = vunpack.c.h.b16 %v7707
    %v7738 = vunpack.c.h.b16 %v7708
    %v7739 = vunpack.c.h.b16 %v7709
    %v7740 = vunpack.c.l.b16 %v7710
    %v7741 = vunpack.c.l.b16 %v7711
    %v7742 = vunpack.c.l.b16 %v7712
    %v7743 = vunpack.c.h.b16 %v7710
    %v7744 = vunpack.c.h.b16 %v7711
    %v7745 = vunpack.c.h.b16 %v7712
    %v7746 = vunpack.c.l.b16 %v7713
    %v7747 = vunpack.c.l.b16 %v7714
    %v7748 = vunpack.c.l.b16 %v7715
    %v7749 = vunpack.c.h.b16 %v7713
    %v7750 = vunpack.c.h.b16 %v7714
    %v7751 = vunpack.c.h.b16 %v7715
    %v7752 = vpack.c.b16 %v7729, %v7728
    %v7753 = vpack.c.b16 %v7730, %v7730
    %v7754 = vpack.c.b16 %v7732, %v7731
    %v7755 = vpack.c.b16 %v7733, %v7733
    %v7756 = vpack.c.b16 %v7735, %v7734
    %v7757 = vpack.c.b16 %v7736, %v7736
    %v7758 = vpack.c.b16 %v7738, %v7737
    %v7759 = vpack.c.b16 %v7739, %v7739
    %v7760 = vpack.c.b16 %v7741, %v7740
    %v7761 = vpack.c.b16 %v7742, %v7742
    %v7762 = vpack.c.b16 %v7744, %v7743
    %v7763 = vpack.c.b16 %v7745, %v7745
    %v7764 = vpack.c.b16 %v7747, %v7746
    %v7765 = vpack.c.b16 %v7748, %v7748
    %v7766 = vpack.c.b16 %v7750, %v7749
    %v7767 = vpack.c.b16 %v7751, %v7751
    %7784 = vst [vmem:[#allocation2 + $0x48c] sm:$0xff] %v7752
    %7785 = vst [vmem:[#allocation2 + $0x494] sm:$0xf] %v7753
    %7786 = vst [vmem:[#allocation2 + $0x4a4] sm:$0xff] %v7754
    %7787 = vst [vmem:[#allocation2 + $0x4ac] sm:$0xf] %v7755
    %7788 = vst [vmem:[#allocation2 + $0x4bc] sm:$0xff] %v7756
    %7789 = vst [vmem:[#allocation2 + $0x4c4] sm:$0xf] %v7757
    %7790 = vst [vmem:[#allocation2 + $0x4d4] sm:$0xff] %v7758
    %7791 = vst [vmem:[#allocation2 + $0x4dc] sm:$0xf] %v7759
    %7792 = vst [vmem:[#allocation2 + $0x4ec] sm:$0xff] %v7760
    %7793 = vst [vmem:[#allocation2 + $0x4f4] sm:$0xf] %v7761
    %7794 = vst [vmem:[#allocation2 + $0x504] sm:$0xff] %v7762
    %7795 = vst [vmem:[#allocation2 + $0x50c] sm:$0xf] %v7763
    %7796 = vst [vmem:[#allocation2 + $0x51c] sm:$0xff] %v7764
    %7797 = vst [vmem:[#allocation2 + $0x524] sm:$0xf] %v7765
    %7798 = vst [vmem:[#allocation2 + $0x534] sm:$0xff] %v7766
    %7799 = vst [vmem:[#allocation2 + $0x53c] sm:$0xf] %v7767
    %7800 = vrot.lane.b32.xlu0 %v6672, 110
    %v7801 = vpop.permute.xlu0 %7800
    %7802 = vrot.lane.b32.xlu0 %v6675, 110
    %v7803 = vpop.permute.xlu0 %7802
    %7804 = vrot.lane.b32.xlu0 %v6678, 110
    %v7805 = vpop.permute.xlu0 %7804
    %7806 = vrot.lane.b32.xlu0 %v6681, 110
    %v7807 = vpop.permute.xlu0 %7806
    %7808 = vrot.lane.b32.xlu0 %v6684, 110
    %v7809 = vpop.permute.xlu0 %7808
    %7810 = vrot.lane.b32.xlu0 %v6687, 110
    %v7811 = vpop.permute.xlu0 %7810
    %7812 = vrot.lane.b32.xlu0 %v6690, 110
    %v7813 = vpop.permute.xlu0 %7812
    %7814 = vrot.lane.b32.xlu0 %v6693, 110
    %v7815 = vpop.permute.xlu0 %7814
    %7816 = vrot.lane.b32.xlu0 %v6673, 110
    %v7817 = vpop.permute.xlu0 %7816
    %7818 = vrot.lane.b32.xlu0 %v6676, 110
    %v7819 = vpop.permute.xlu0 %7818
    %7820 = vrot.lane.b32.xlu0 %v6679, 110
    %v7821 = vpop.permute.xlu0 %7820
    %7822 = vrot.lane.b32.xlu0 %v6682, 110
    %v7823 = vpop.permute.xlu0 %7822
    %7824 = vrot.lane.b32.xlu0 %v6685, 110
    %v7825 = vpop.permute.xlu0 %7824
    %7826 = vrot.lane.b32.xlu0 %v6688, 110
    %v7827 = vpop.permute.xlu0 %7826
    %7828 = vrot.lane.b32.xlu0 %v6691, 110
    %v7829 = vpop.permute.xlu0 %7828
    %7830 = vrot.lane.b32.xlu0 %v6694, 110
    %v7831 = vpop.permute.xlu0 %7830
    %7832 = vrot.lane.b32.xlu0 %v6674, 110
    %v7833 = vpop.permute.xlu0 %7832
    %7834 = vrot.lane.b32.xlu0 %v6677, 110
    %v7835 = vpop.permute.xlu0 %7834
    %7836 = vrot.lane.b32.xlu0 %v6680, 110
    %v7837 = vpop.permute.xlu0 %7836
    %7838 = vrot.lane.b32.xlu0 %v6683, 110
    %v7839 = vpop.permute.xlu0 %7838
    %7840 = vrot.lane.b32.xlu0 %v6686, 110
    %v7841 = vpop.permute.xlu0 %7840
    %7842 = vrot.lane.b32.xlu0 %v6689, 110
    %v7843 = vpop.permute.xlu0 %7842
    %7844 = vrot.lane.b32.xlu0 %v6692, 110
    %v7845 = vpop.permute.xlu0 %7844
    %7846 = vrot.lane.b32.xlu0 %v6695, 110
    %v7847 = vpop.permute.xlu0 %7846
    %v7848 = vsel %vm1251, %v7817, %v7833
    %v7849 = vsel %vm1251, %v7819, %v7835
    %v7850 = vsel %vm1251, %v7821, %v7837
    %v7851 = vsel %vm1251, %v7823, %v7839
    %v7852 = vsel %vm1251, %v7825, %v7841
    %v7853 = vsel %vm1251, %v7827, %v7843
    %v7854 = vsel %vm1251, %v7829, %v7845
    %v7855 = vsel %vm1251, %v7831, %v7847
    %v7856 = vsel %vm1251, %v7801, %v7817
    %v7857 = vsel %vm1251, %v7803, %v7819
    %v7858 = vsel %vm1251, %v7805, %v7821
    %v7859 = vsel %vm1251, %v7807, %v7823
    %v7860 = vsel %vm1251, %v7809, %v7825
    %v7861 = vsel %vm1251, %v7811, %v7827
    %v7862 = vsel %vm1251, %v7813, %v7829
    %v7863 = vsel %vm1251, %v7815, %v7831
    %v7864 = vsel %vm1251, %v7833, %v7801
    %v7865 = vsel %vm1251, %v7835, %v7803
    %v7866 = vsel %vm1251, %v7837, %v7805
    %v7867 = vsel %vm1251, %v7839, %v7807
    %v7868 = vsel %vm1251, %v7841, %v7809
    %v7869 = vsel %vm1251, %v7843, %v7811
    %v7870 = vsel %vm1251, %v7845, %v7813
    %v7871 = vsel %vm1251, %v7847, %v7815
    %v7872 = vpack.c.bf16 %v7857, %v7856
    %v7873 = vpack.c.bf16 %v7849, %v7848
    %v7874 = vpack.c.bf16 %v7865, %v7864
    %v7875 = vpack.c.bf16 %v7859, %v7858
    %v7876 = vpack.c.bf16 %v7851, %v7850
    %v7877 = vpack.c.bf16 %v7867, %v7866
    %v7878 = vpack.c.bf16 %v7861, %v7860
    %v7879 = vpack.c.bf16 %v7853, %v7852
    %v7880 = vpack.c.bf16 %v7869, %v7868
    %v7881 = vpack.c.bf16 %v7863, %v7862
    %v7882 = vpack.c.bf16 %v7855, %v7854
    %v7883 = vpack.c.bf16 %v7871, %v7870
    %v7896 = vunpack.c.l.b16 %v7872
    %v7897 = vunpack.c.l.b16 %v7873
    %v7898 = vunpack.c.l.b16 %v7874
    %v7899 = vunpack.c.h.b16 %v7872
    %v7900 = vunpack.c.h.b16 %v7873
    %v7901 = vunpack.c.h.b16 %v7874
    %v7902 = vunpack.c.l.b16 %v7875
    %v7903 = vunpack.c.l.b16 %v7876
    %v7904 = vunpack.c.l.b16 %v7877
    %v7905 = vunpack.c.h.b16 %v7875
    %v7906 = vunpack.c.h.b16 %v7876
    %v7907 = vunpack.c.h.b16 %v7877
    %v7908 = vunpack.c.l.b16 %v7878
    %v7909 = vunpack.c.l.b16 %v7879
    %v7910 = vunpack.c.l.b16 %v7880
    %v7911 = vunpack.c.h.b16 %v7878
    %v7912 = vunpack.c.h.b16 %v7879
    %v7913 = vunpack.c.h.b16 %v7880
    %v7914 = vunpack.c.l.b16 %v7881
    %v7915 = vunpack.c.l.b16 %v7882
    %v7916 = vunpack.c.l.b16 %v7883
    %v7917 = vunpack.c.h.b16 %v7881
    %v7918 = vunpack.c.h.b16 %v7882
    %v7919 = vunpack.c.h.b16 %v7883
    %v7920 = vpack.c.b16 %v7897, %v7896
    %v7921 = vpack.c.b16 %v7898, %v7898
    %v7922 = vpack.c.b16 %v7900, %v7899
    %v7923 = vpack.c.b16 %v7901, %v7901
    %v7924 = vpack.c.b16 %v7903, %v7902
    %v7925 = vpack.c.b16 %v7904, %v7904
    %v7926 = vpack.c.b16 %v7906, %v7905
    %v7927 = vpack.c.b16 %v7907, %v7907
    %v7928 = vpack.c.b16 %v7909, %v7908
    %v7929 = vpack.c.b16 %v7910, %v7910
    %v7930 = vpack.c.b16 %v7912, %v7911
    %v7931 = vpack.c.b16 %v7913, %v7913
    %v7932 = vpack.c.b16 %v7915, %v7914
    %v7933 = vpack.c.b16 %v7916, %v7916
    %v7934 = vpack.c.b16 %v7918, %v7917
    %v7935 = vpack.c.b16 %v7919, %v7919
    %7952 = vst [vmem:[#allocation2 + $0x54c] sm:$0xff] %v7920
    %7953 = vst [vmem:[#allocation2 + $0x554] sm:$0xf] %v7921
    %7954 = vst [vmem:[#allocation2 + $0x564] sm:$0xff] %v7922
    %7955 = vst [vmem:[#allocation2 + $0x56c] sm:$0xf] %v7923
    %7956 = vst [vmem:[#allocation2 + $0x57c] sm:$0xff] %v7924
    %7957 = vst [vmem:[#allocation2 + $0x584] sm:$0xf] %v7925
    %7958 = vst [vmem:[#allocation2 + $0x594] sm:$0xff] %v7926
    %7959 = vst [vmem:[#allocation2 + $0x59c] sm:$0xf] %v7927
    %7960 = vst [vmem:[#allocation2 + $0x5ac] sm:$0xff] %v7928
    %7961 = vst [vmem:[#allocation2 + $0x5b4] sm:$0xf] %v7929
    %7962 = vst [vmem:[#allocation2 + $0x5c4] sm:$0xff] %v7930
    %7963 = vst [vmem:[#allocation2 + $0x5cc] sm:$0xf] %v7931
    %7964 = vst [vmem:[#allocation2 + $0x5dc] sm:$0xff] %v7932
    %7965 = vst [vmem:[#allocation2 + $0x5e4] sm:$0xf] %v7933
    %7966 = vst [vmem:[#allocation2 + $0x5f4] sm:$0xff] %v7934
    %7967 = vst [vmem:[#allocation2 + $0x5fc] sm:$0xf] %v7935
    %7968 = vrot.lane.b32.xlu0 %v6672, 109
    %v7969 = vpop.permute.xlu0 %7968
    %7970 = vrot.lane.b32.xlu0 %v6675, 109
    %v7971 = vpop.permute.xlu0 %7970
    %7972 = vrot.lane.b32.xlu0 %v6678, 109
    %v7973 = vpop.permute.xlu0 %7972
    %7974 = vrot.lane.b32.xlu0 %v6681, 109
    %v7975 = vpop.permute.xlu0 %7974
    %7976 = vrot.lane.b32.xlu0 %v6684, 109
    %v7977 = vpop.permute.xlu0 %7976
    %7978 = vrot.lane.b32.xlu0 %v6687, 109
    %v7979 = vpop.permute.xlu0 %7978
    %7980 = vrot.lane.b32.xlu0 %v6690, 109
    %v7981 = vpop.permute.xlu0 %7980
    %7982 = vrot.lane.b32.xlu0 %v6693, 109
    %v7983 = vpop.permute.xlu0 %7982
    %7984 = vrot.lane.b32.xlu0 %v6673, 109
    %v7985 = vpop.permute.xlu0 %7984
    %7986 = vrot.lane.b32.xlu0 %v6676, 109
    %v7987 = vpop.permute.xlu0 %7986
    %7988 = vrot.lane.b32.xlu0 %v6679, 109
    %v7989 = vpop.permute.xlu0 %7988
    %7990 = vrot.lane.b32.xlu0 %v6682, 109
    %v7991 = vpop.permute.xlu0 %7990
    %7992 = vrot.lane.b32.xlu0 %v6685, 109
    %v7993 = vpop.permute.xlu0 %7992
    %7994 = vrot.lane.b32.xlu0 %v6688, 109
    %v7995 = vpop.permute.xlu0 %7994
    %7996 = vrot.lane.b32.xlu0 %v6691, 109
    %v7997 = vpop.permute.xlu0 %7996
    %7998 = vrot.lane.b32.xlu0 %v6694, 109
    %v7999 = vpop.permute.xlu0 %7998
    %8000 = vrot.lane.b32.xlu0 %v6674, 109
    %v8001 = vpop.permute.xlu0 %8000
    %8002 = vrot.lane.b32.xlu0 %v6677, 109
    %v8003 = vpop.permute.xlu0 %8002
    %8004 = vrot.lane.b32.xlu0 %v6680, 109
    %v8005 = vpop.permute.xlu0 %8004
    %8006 = vrot.lane.b32.xlu0 %v6683, 109
    %v8007 = vpop.permute.xlu0 %8006
    %8008 = vrot.lane.b32.xlu0 %v6686, 109
    %v8009 = vpop.permute.xlu0 %8008
    %8010 = vrot.lane.b32.xlu0 %v6689, 109
    %v8011 = vpop.permute.xlu0 %8010
    %8012 = vrot.lane.b32.xlu0 %v6692, 109
    %v8013 = vpop.permute.xlu0 %8012
    %8014 = vrot.lane.b32.xlu0 %v6695, 109
    %v8015 = vpop.permute.xlu0 %8014
    %v8016 = vsel %vm1420, %v7985, %v8001
    %v8017 = vsel %vm1420, %v7987, %v8003
    %v8018 = vsel %vm1420, %v7989, %v8005
    %v8019 = vsel %vm1420, %v7991, %v8007
    %v8020 = vsel %vm1420, %v7993, %v8009
    %v8021 = vsel %vm1420, %v7995, %v8011
    %v8022 = vsel %vm1420, %v7997, %v8013
    %v8023 = vsel %vm1420, %v7999, %v8015
    %v8024 = vsel %vm1420, %v7969, %v7985
    %v8025 = vsel %vm1420, %v7971, %v7987
    %v8026 = vsel %vm1420, %v7973, %v7989
    %v8027 = vsel %vm1420, %v7975, %v7991
    %v8028 = vsel %vm1420, %v7977, %v7993
    %v8029 = vsel %vm1420, %v7979, %v7995
    %v8030 = vsel %vm1420, %v7981, %v7997
    %v8031 = vsel %vm1420, %v7983, %v7999
    %v8032 = vsel %vm1420, %v8001, %v7969
    %v8033 = vsel %vm1420, %v8003, %v7971
    %v8034 = vsel %vm1420, %v8005, %v7973
    %v8035 = vsel %vm1420, %v8007, %v7975
    %v8036 = vsel %vm1420, %v8009, %v7977
    %v8037 = vsel %vm1420, %v8011, %v7979
    %v8038 = vsel %vm1420, %v8013, %v7981
    %v8039 = vsel %vm1420, %v8015, %v7983
    %v8040 = vpack.c.bf16 %v8025, %v8024
    %v8041 = vpack.c.bf16 %v8017, %v8016
    %v8042 = vpack.c.bf16 %v8033, %v8032
    %v8043 = vpack.c.bf16 %v8027, %v8026
    %v8044 = vpack.c.bf16 %v8019, %v8018
    %v8045 = vpack.c.bf16 %v8035, %v8034
    %v8046 = vpack.c.bf16 %v8029, %v8028
    %v8047 = vpack.c.bf16 %v8021, %v8020
    %v8048 = vpack.c.bf16 %v8037, %v8036
    %v8049 = vpack.c.bf16 %v8031, %v8030
    %v8050 = vpack.c.bf16 %v8023, %v8022
    %v8051 = vpack.c.bf16 %v8039, %v8038
    %v8064 = vunpack.c.l.b16 %v8040
    %v8065 = vunpack.c.l.b16 %v8041
    %v8066 = vunpack.c.l.b16 %v8042
    %v8067 = vunpack.c.h.b16 %v8040
    %v8068 = vunpack.c.h.b16 %v8041
    %v8069 = vunpack.c.h.b16 %v8042
    %v8070 = vunpack.c.l.b16 %v8043
    %v8071 = vunpack.c.l.b16 %v8044
    %v8072 = vunpack.c.l.b16 %v8045
    %v8073 = vunpack.c.h.b16 %v8043
    %v8074 = vunpack.c.h.b16 %v8044
    %v8075 = vunpack.c.h.b16 %v8045
    %v8076 = vunpack.c.l.b16 %v8046
    %v8077 = vunpack.c.l.b16 %v8047
    %v8078 = vunpack.c.l.b16 %v8048
    %v8079 = vunpack.c.h.b16 %v8046
    %v8080 = vunpack.c.h.b16 %v8047
    %v8081 = vunpack.c.h.b16 %v8048
    %v8082 = vunpack.c.l.b16 %v8049
    %v8083 = vunpack.c.l.b16 %v8050
    %v8084 = vunpack.c.l.b16 %v8051
    %v8085 = vunpack.c.h.b16 %v8049
    %v8086 = vunpack.c.h.b16 %v8050
    %v8087 = vunpack.c.h.b16 %v8051
    %v8088 = vpack.c.b16 %v8065, %v8064
    %v8089 = vpack.c.b16 %v8066, %v8066
    %v8090 = vpack.c.b16 %v8068, %v8067
    %v8091 = vpack.c.b16 %v8069, %v8069
    %v8092 = vpack.c.b16 %v8071, %v8070
    %v8093 = vpack.c.b16 %v8072, %v8072
    %v8094 = vpack.c.b16 %v8074, %v8073
    %v8095 = vpack.c.b16 %v8075, %v8075
    %v8096 = vpack.c.b16 %v8077, %v8076
    %v8097 = vpack.c.b16 %v8078, %v8078
    %v8098 = vpack.c.b16 %v8080, %v8079
    %v8099 = vpack.c.b16 %v8081, %v8081
    %v8100 = vpack.c.b16 %v8083, %v8082
    %v8101 = vpack.c.b16 %v8084, %v8084
    %v8102 = vpack.c.b16 %v8086, %v8085
    %v8103 = vpack.c.b16 %v8087, %v8087
    %8120 = vst [vmem:[#allocation2 + $0x60c] sm:$0xff] %v8088
    %8121 = vst [vmem:[#allocation2 + $0x614] sm:$0xf] %v8089
    %8122 = vst [vmem:[#allocation2 + $0x624] sm:$0xff] %v8090
    %8123 = vst [vmem:[#allocation2 + $0x62c] sm:$0xf] %v8091
    %8124 = vst [vmem:[#allocation2 + $0x63c] sm:$0xff] %v8092
    %8125 = vst [vmem:[#allocation2 + $0x644] sm:$0xf] %v8093
    %8126 = vst [vmem:[#allocation2 + $0x654] sm:$0xff] %v8094
    %8127 = vst [vmem:[#allocation2 + $0x65c] sm:$0xf] %v8095
    %8128 = vst [vmem:[#allocation2 + $0x66c] sm:$0xff] %v8096
    %8129 = vst [vmem:[#allocation2 + $0x674] sm:$0xf] %v8097
    %8130 = vst [vmem:[#allocation2 + $0x684] sm:$0xff] %v8098
    %8131 = vst [vmem:[#allocation2 + $0x68c] sm:$0xf] %v8099
    %8132 = vst [vmem:[#allocation2 + $0x69c] sm:$0xff] %v8100
    %8133 = vst [vmem:[#allocation2 + $0x6a4] sm:$0xf] %v8101
    %8134 = vst [vmem:[#allocation2 + $0x6b4] sm:$0xff] %v8102
    %8135 = vst [vmem:[#allocation2 + $0x6bc] sm:$0xf] %v8103
    %v8136 = vld [vmem:[#allocation8] sm:$0xff]
    %v8137 = vld [vmem:[#allocation8 + $0x8] sm:$0xff]
    %v8138 = vld [vmem:[#allocation8 + $0x10] sm:$0xf]
    %v8139 = vld [vmem:[#allocation8 + $0x14] sm:$0xff]
    %v8140 = vld [vmem:[#allocation8 + $0x1c] sm:$0xff]
    %v8141 = vld [vmem:[#allocation8 + $0x24] sm:$0xf]
    %v8142 = vld [vmem:[#allocation8 + $0x28] sm:$0xff]
    %v8143 = vld [vmem:[#allocation8 + $0x30] sm:$0xff]
    %v8144 = vld [vmem:[#allocation8 + $0x38] sm:$0xf]
    %v8145 = vld [vmem:[#allocation8 + $0x3c] sm:$0xff]
    %v8146 = vld [vmem:[#allocation8 + $0x44] sm:$0xff]
    %v8147 = vld [vmem:[#allocation8 + $0x4c] sm:$0xf]
    %v8148 = vld [vmem:[#allocation8 + $0x50] sm:$0xff]
    %v8149 = vld [vmem:[#allocation8 + $0x58] sm:$0xff]
    %v8150 = vld [vmem:[#allocation8 + $0x60] sm:$0xf]
    %v8151 = vld [vmem:[#allocation8 + $0x64] sm:$0xff]
    %v8152 = vld [vmem:[#allocation8 + $0x6c] sm:$0xff]
    %v8153 = vld [vmem:[#allocation8 + $0x74] sm:$0xf]
    %v8154 = vld [vmem:[#allocation8 + $0x78] sm:$0xff]
    %v8155 = vld [vmem:[#allocation8 + $0x80] sm:$0xff]
    %v8156 = vld [vmem:[#allocation8 + $0x88] sm:$0xf]
    %v8157 = vld [vmem:[#allocation8 + $0x8c] sm:$0xff]
    %v8158 = vld [vmem:[#allocation8 + $0x94] sm:$0xff]
    %v8159 = vld [vmem:[#allocation8 + $0x9c] sm:$0xf]
    %v8160 = vld [vmem:[#allocation2] sm:$0xff]
    %v8161 = vld [vmem:[#allocation2 + $0x8] sm:$0xff]
    %v8162 = vld [vmem:[#allocation2 + $0x10] sm:$0xff]
    %v8163 = vld [vmem:[#allocation2 + $0x18] sm:$0xff]
    %v8164 = vld [vmem:[#allocation2 + $0x20] sm:$0xff]
    %v8165 = vld [vmem:[#allocation2 + $0x28] sm:$0xff]
    %v8166 = vld [vmem:[#allocation2 + $0x30] sm:$0xff]
    %v8167 = vld [vmem:[#allocation2 + $0x38] sm:$0xff]
    %v8168 = vld [vmem:[#allocation2 + $0x40] sm:$0xff]
    %v8169 = vld [vmem:[#allocation2 + $0x48] sm:$0xff]
    %v8170 = vld [vmem:[#allocation2 + $0x50] sm:$0xff]
    %v8171 = vld [vmem:[#allocation2 + $0x58] sm:$0xff]
    %v8172 = vld [vmem:[#allocation2 + $0x60] sm:$0xff]
    %v8173 = vld [vmem:[#allocation2 + $0x68] sm:$0xff]
    %v8174 = vld [vmem:[#allocation2 + $0x70] sm:$0xff]
    %v8175 = vld [vmem:[#allocation2 + $0x78] sm:$0xff]
    %v8176 = vld [vmem:[#allocation2 + $0x80] sm:$0xff]
    %v8177 = vld [vmem:[#allocation2 + $0x88] sm:$0xff]
    %v8178 = vld [vmem:[#allocation2 + $0x90] sm:$0xff]
    %v8179 = vld [vmem:[#allocation2 + $0x98] sm:$0xff]
    %v8180 = vld [vmem:[#allocation2 + $0xa0] sm:$0xff]
    %v8181 = vld [vmem:[#allocation2 + $0xa8] sm:$0xff]
    %v8182 = vld [vmem:[#allocation2 + $0xb0] sm:$0xff]
    %v8183 = vld [vmem:[#allocation2 + $0xb8] sm:$0xff]
    %v8184 = vld [vmem:[#allocation2 + $0xc0] sm:$0xff]
    %v8185 = vld [vmem:[#allocation2 + $0xc8] sm:$0xff]
    %v8186 = vld [vmem:[#allocation2 + $0xd0] sm:$0xff]
    %v8187 = vld [vmem:[#allocation2 + $0xd8] sm:$0xff]
    %v8188 = vld [vmem:[#allocation2 + $0xe0] sm:$0xff]
    %v8189 = vld [vmem:[#allocation2 + $0xe8] sm:$0xff]
    %v8190 = vld [vmem:[#allocation2 + $0xf0] sm:$0xff]
    %v8191 = vld [vmem:[#allocation2 + $0xf8] sm:$0xff]
    %v8192 = vld [vmem:[#allocation2 + $0x100] sm:$0xff]
    %v8193 = vld [vmem:[#allocation2 + $0x108] sm:$0xff]
    %v8194 = vld [vmem:[#allocation2 + $0x110] sm:$0xff]
    %v8195 = vld [vmem:[#allocation2 + $0x118] sm:$0xff]
    %v8196 = vld [vmem:[#allocation2 + $0x120] sm:$0xff]
    %v8197 = vld [vmem:[#allocation2 + $0x128] sm:$0xff]
    %v8198 = vld [vmem:[#allocation2 + $0x130] sm:$0xff]
    %v8199 = vld [vmem:[#allocation2 + $0x138] sm:$0xff]
    %v8200 = vld [vmem:[#allocation2 + $0x140] sm:$0xff]
    %v8201 = vld [vmem:[#allocation2 + $0x148] sm:$0xff]
    %v8202 = vld [vmem:[#allocation2 + $0x150] sm:$0xff]
    %v8203 = vld [vmem:[#allocation2 + $0x158] sm:$0xff]
    %v8204 = vld [vmem:[#allocation2 + $0x160] sm:$0xff]
    %v8205 = vld [vmem:[#allocation2 + $0x168] sm:$0xff]
    %v8206 = vld [vmem:[#allocation2 + $0x170] sm:$0xff]
    %v8207 = vld [vmem:[#allocation2 + $0x178] sm:$0xff]
    %v8208 = vld [vmem:[#allocation2 + $0x180] sm:$0xff]
    %v8209 = vld [vmem:[#allocation2 + $0x188] sm:$0xff]
    %v8210 = vld [vmem:[#allocation2 + $0x190] sm:$0xff]
    %v8211 = vld [vmem:[#allocation2 + $0x198] sm:$0xff]
    %v8212 = vld [vmem:[#allocation2 + $0x1a0] sm:$0xff]
    %v8213 = vld [vmem:[#allocation2 + $0x1a8] sm:$0xff]
    %v8214 = vld [vmem:[#allocation2 + $0x1b0] sm:$0xff]
    %v8215 = vld [vmem:[#allocation2 + $0x1b8] sm:$0xff]
    %v8216 = vld [vmem:[#allocation2 + $0x1c0] sm:$0xff]
    %v8217 = vld [vmem:[#allocation2 + $0x1c8] sm:$0xff]
    %v8218 = vld [vmem:[#allocation2 + $0x1d0] sm:$0xff]
    %v8219 = vld [vmem:[#allocation2 + $0x1d8] sm:$0xff]
    %v8220 = vld [vmem:[#allocation2 + $0x1e0] sm:$0xff]
    %v8221 = vld [vmem:[#allocation2 + $0x1e8] sm:$0xff]
    %v8222 = vld [vmem:[#allocation2 + $0x1f0] sm:$0xff]
    %v8223 = vld [vmem:[#allocation2 + $0x1f8] sm:$0xff]
    %v8224 = vld [vmem:[#allocation2 + $0x200] sm:$0xff]
    %v8225 = vld [vmem:[#allocation2 + $0x208] sm:$0xff]
    %v8226 = vld [vmem:[#allocation2 + $0x210] sm:$0xff]
    %v8227 = vld [vmem:[#allocation2 + $0x218] sm:$0xff]
    %v8228 = vld [vmem:[#allocation2 + $0x220] sm:$0xff]
    %v8229 = vld [vmem:[#allocation2 + $0x228] sm:$0xff]
    %v8230 = vld [vmem:[#allocation2 + $0x230] sm:$0xff]
    %v8231 = vld [vmem:[#allocation2 + $0x238] sm:$0xff]
    %v8232 = vld [vmem:[#allocation2 + $0x240] sm:$0xff]
    %v8233 = vld [vmem:[#allocation2 + $0x248] sm:$0xff]
    %v8234 = vld [vmem:[#allocation2 + $0x250] sm:$0xff]
    %v8235 = vld [vmem:[#allocation2 + $0x258] sm:$0xff]
    %v8236 = vld [vmem:[#allocation2 + $0x260] sm:$0xff]
    %v8237 = vld [vmem:[#allocation2 + $0x268] sm:$0xff]
    %v8238 = vld [vmem:[#allocation2 + $0x270] sm:$0xff]
    %v8239 = vld [vmem:[#allocation2 + $0x278] sm:$0xff]
    %v8240 = vld [vmem:[#allocation2 + $0x280] sm:$0xff]
    %v8241 = vld [vmem:[#allocation2 + $0x288] sm:$0xff]
    %v8242 = vld [vmem:[#allocation2 + $0x290] sm:$0xff]
    %v8243 = vld [vmem:[#allocation2 + $0x298] sm:$0xff]
    %v8244 = vld [vmem:[#allocation2 + $0x2a0] sm:$0xff]
    %v8245 = vld [vmem:[#allocation2 + $0x2a8] sm:$0xff]
    %v8246 = vld [vmem:[#allocation2 + $0x2b0] sm:$0xff]
    %v8247 = vld [vmem:[#allocation2 + $0x2b8] sm:$0xff]
    %v8248 = vld [vmem:[#allocation2 + $0x2c0] sm:$0xff]
    %v8249 = vld [vmem:[#allocation2 + $0x2c8] sm:$0xff]
    %v8250 = vld [vmem:[#allocation2 + $0x2d0] sm:$0xff]
    %v8251 = vld [vmem:[#allocation2 + $0x2d8] sm:$0xff]
    %v8252 = vld [vmem:[#allocation2 + $0x2e0] sm:$0xff]
    %v8253 = vld [vmem:[#allocation2 + $0x2e8] sm:$0xff]
    %v8254 = vld [vmem:[#allocation2 + $0x2f0] sm:$0xff]
    %v8255 = vld [vmem:[#allocation2 + $0x2f8] sm:$0xff]
    %v8256 = vld [vmem:[#allocation2 + $0x300] sm:$0xff]
    %v8257 = vld [vmem:[#allocation2 + $0x308] sm:$0xff]
    %v8258 = vld [vmem:[#allocation2 + $0x310] sm:$0xff]
    %v8259 = vld [vmem:[#allocation2 + $0x318] sm:$0xff]
    %v8260 = vld [vmem:[#allocation2 + $0x320] sm:$0xff]
    %v8261 = vld [vmem:[#allocation2 + $0x328] sm:$0xff]
    %v8262 = vld [vmem:[#allocation2 + $0x330] sm:$0xff]
    %v8263 = vld [vmem:[#allocation2 + $0x338] sm:$0xff]
    %v8264 = vld [vmem:[#allocation2 + $0x340] sm:$0xff]
    %v8265 = vld [vmem:[#allocation2 + $0x348] sm:$0xff]
    %v8266 = vld [vmem:[#allocation2 + $0x350] sm:$0xff]
    %v8267 = vld [vmem:[#allocation2 + $0x358] sm:$0xff]
    %v8268 = vld [vmem:[#allocation2 + $0x360] sm:$0xff]
    %v8269 = vld [vmem:[#allocation2 + $0x368] sm:$0xff]
    %v8270 = vld [vmem:[#allocation2 + $0x370] sm:$0xff]
    %v8271 = vld [vmem:[#allocation2 + $0x378] sm:$0xff]
    %v8272 = vld [vmem:[#allocation2 + $0x380] sm:$0xff]
    %v8273 = vld [vmem:[#allocation2 + $0x388] sm:$0xff]
    %v8274 = vld [vmem:[#allocation2 + $0x390] sm:$0xff]
    %v8275 = vld [vmem:[#allocation2 + $0x398] sm:$0xff]
    %v8276 = vld [vmem:[#allocation2 + $0x3a0] sm:$0xff]
    %v8277 = vld [vmem:[#allocation2 + $0x3a8] sm:$0xff]
    %v8278 = vld [vmem:[#allocation2 + $0x3b0] sm:$0xff]
    %v8279 = vld [vmem:[#allocation2 + $0x3b8] sm:$0xff]
    %v8280 = vld [vmem:[#allocation2 + $0x3c0] sm:$0xff]
    %v8281 = vld [vmem:[#allocation2 + $0x3c8] sm:$0xff]
    %v8282 = vld [vmem:[#allocation2 + $0x3d0] sm:$0xff]
    %v8283 = vld [vmem:[#allocation2 + $0x3d8] sm:$0xff]
    %v8284 = vld [vmem:[#allocation2 + $0x3e0] sm:$0xff]
    %v8285 = vld [vmem:[#allocation2 + $0x3e8] sm:$0xff]
    %v8286 = vld [vmem:[#allocation2 + $0x3f0] sm:$0xff]
    %v8287 = vld [vmem:[#allocation2 + $0x3f8] sm:$0xff]
    %v8288 = vld [vmem:[#allocation2 + $0x400] sm:$0xff]
    %v8289 = vld [vmem:[#allocation2 + $0x408] sm:$0xff]
    %v8290 = vld [vmem:[#allocation2 + $0x410] sm:$0xff]
    %v8291 = vld [vmem:[#allocation2 + $0x418] sm:$0xff]
    %v8292 = vld [vmem:[#allocation2 + $0x420] sm:$0xff]
    %v8293 = vld [vmem:[#allocation2 + $0x428] sm:$0xff]
    %v8294 = vld [vmem:[#allocation2 + $0x430] sm:$0xff]
    %v8295 = vld [vmem:[#allocation2 + $0x438] sm:$0xff]
    %v8296 = vld [vmem:[#allocation2 + $0x440] sm:$0xff]
    %v8297 = vld [vmem:[#allocation2 + $0x448] sm:$0xff]
    %v8298 = vld [vmem:[#allocation2 + $0x450] sm:$0xff]
    %v8299 = vld [vmem:[#allocation2 + $0x458] sm:$0xff]
    %v8300 = vld [vmem:[#allocation2 + $0x460] sm:$0xff]
    %v8301 = vld [vmem:[#allocation2 + $0x468] sm:$0xff]
    %v8302 = vld [vmem:[#allocation2 + $0x470] sm:$0xff]
    %v8303 = vld [vmem:[#allocation2 + $0x478] sm:$0xff]
    %v8304 = vld [vmem:[#allocation2 + $0x480] sm:$0xff]
    %v8305 = vld [vmem:[#allocation2 + $0x488] sm:$0xff]
    %v8306 = vld [vmem:[#allocation2 + $0x490] sm:$0xff]
    %v8307 = vld [vmem:[#allocation2 + $0x498] sm:$0xff]
    %v8308 = vld [vmem:[#allocation2 + $0x4a0] sm:$0xff]
    %v8309 = vld [vmem:[#allocation2 + $0x4a8] sm:$0xff]
    %v8310 = vld [vmem:[#allocation2 + $0x4b0] sm:$0xff]
    %v8311 = vld [vmem:[#allocation2 + $0x4b8] sm:$0xff]
    %v8312 = vld [vmem:[#allocation2 + $0x4c0] sm:$0xff]
    %v8313 = vld [vmem:[#allocation2 + $0x4c8] sm:$0xff]
    %v8314 = vld [vmem:[#allocation2 + $0x4d0] sm:$0xff]
    %v8315 = vld [vmem:[#allocation2 + $0x4d8] sm:$0xff]
    %v8316 = vld [vmem:[#allocation2 + $0x4e0] sm:$0xff]
    %v8317 = vld [vmem:[#allocation2 + $0x4e8] sm:$0xff]
    %v8318 = vld [vmem:[#allocation2 + $0x4f0] sm:$0xff]
    %v8319 = vld [vmem:[#allocation2 + $0x4f8] sm:$0xff]
    %v8320 = vld [vmem:[#allocation2 + $0x500] sm:$0xff]
    %v8321 = vld [vmem:[#allocation2 + $0x508] sm:$0xff]
    %v8322 = vld [vmem:[#allocation2 + $0x510] sm:$0xff]
    %v8323 = vld [vmem:[#allocation2 + $0x518] sm:$0xff]
    %v8324 = vld [vmem:[#allocation2 + $0x520] sm:$0xff]
    %v8325 = vld [vmem:[#allocation2 + $0x528] sm:$0xff]
    %v8326 = vld [vmem:[#allocation2 + $0x530] sm:$0xff]
    %v8327 = vld [vmem:[#allocation2 + $0x538] sm:$0xff]
    %v8328 = vld [vmem:[#allocation2 + $0x540] sm:$0xff]
    %v8329 = vld [vmem:[#allocation2 + $0x548] sm:$0xff]
    %v8330 = vld [vmem:[#allocation2 + $0x550] sm:$0xff]
    %v8331 = vld [vmem:[#allocation2 + $0x558] sm:$0xff]
    %v8332 = vld [vmem:[#allocation2 + $0x560] sm:$0xff]
    %v8333 = vld [vmem:[#allocation2 + $0x568] sm:$0xff]
    %v8334 = vld [vmem:[#allocation2 + $0x570] sm:$0xff]
    %v8335 = vld [vmem:[#allocation2 + $0x578] sm:$0xff]
    %v8336 = vld [vmem:[#allocation2 + $0x580] sm:$0xff]
    %v8337 = vld [vmem:[#allocation2 + $0x588] sm:$0xff]
    %v8338 = vld [vmem:[#allocation2 + $0x590] sm:$0xff]
    %v8339 = vld [vmem:[#allocation2 + $0x598] sm:$0xff]
    %v8340 = vld [vmem:[#allocation2 + $0x5a0] sm:$0xff]
    %v8341 = vld [vmem:[#allocation2 + $0x5a8] sm:$0xff]
    %v8342 = vld [vmem:[#allocation2 + $0x5b0] sm:$0xff]
    %v8343 = vld [vmem:[#allocation2 + $0x5b8] sm:$0xff]
    %v8344 = vld [vmem:[#allocation2 + $0x5c0] sm:$0xff]
    %v8345 = vld [vmem:[#allocation2 + $0x5c8] sm:$0xff]
    %v8346 = vld [vmem:[#allocation2 + $0x5d0] sm:$0xff]
    %v8347 = vld [vmem:[#allocation2 + $0x5d8] sm:$0xff]
    %v8348 = vld [vmem:[#allocation2 + $0x5e0] sm:$0xff]
    %v8349 = vld [vmem:[#allocation2 + $0x5e8] sm:$0xff]
    %v8350 = vld [vmem:[#allocation2 + $0x5f0] sm:$0xff]
    %v8351 = vld [vmem:[#allocation2 + $0x5f8] sm:$0xff]
    %v8352 = vld [vmem:[#allocation2 + $0x600] sm:$0xff]
    %v8353 = vld [vmem:[#allocation2 + $0x608] sm:$0xff]
    %v8354 = vld [vmem:[#allocation2 + $0x610] sm:$0xff]
    %v8355 = vld [vmem:[#allocation2 + $0x618] sm:$0xff]
    %v8356 = vld [vmem:[#allocation2 + $0x620] sm:$0xff]
    %v8357 = vld [vmem:[#allocation2 + $0x628] sm:$0xff]
    %v8358 = vld [vmem:[#allocation2 + $0x630] sm:$0xff]
    %v8359 = vld [vmem:[#allocation2 + $0x638] sm:$0xff]
    %v8360 = vld [vmem:[#allocation2 + $0x640] sm:$0xff]
    %v8361 = vld [vmem:[#allocation2 + $0x648] sm:$0xff]
    %v8362 = vld [vmem:[#allocation2 + $0x650] sm:$0xff]
    %v8363 = vld [vmem:[#allocation2 + $0x658] sm:$0xff]
    %v8364 = vld [vmem:[#allocation2 + $0x660] sm:$0xff]
    %v8365 = vld [vmem:[#allocation2 + $0x668] sm:$0xff]
    %v8366 = vld [vmem:[#allocation2 + $0x670] sm:$0xff]
    %v8367 = vld [vmem:[#allocation2 + $0x678] sm:$0xff]
    %v8368 = vld [vmem:[#allocation2 + $0x680] sm:$0xff]
    %v8369 = vld [vmem:[#allocation2 + $0x688] sm:$0xff]
    %v8370 = vld [vmem:[#allocation2 + $0x690] sm:$0xff]
    %v8371 = vld [vmem:[#allocation2 + $0x698] sm:$0xff]
    %v8372 = vld [vmem:[#allocation2 + $0x6a0] sm:$0xff]
    %v8373 = vld [vmem:[#allocation2 + $0x6a8] sm:$0xff]
    %v8374 = vld [vmem:[#allocation2 + $0x6b0] sm:$0xff]
    %v8375 = vld [vmem:[#allocation2 + $0x6b8] sm:$0xff]
    %v8376 = vld [vmem:[%s4] sm:$0xff]
    %v8377 = vld [vmem:[%s4 + $0x8] sm:$0xff]
    %v8378 = vld [vmem:[%s4 + $0x10] sm:$0xff]
    %v8379 = vld [vmem:[%s4 + $0x18] sm:$0xff]
    %v8380 = vld [vmem:[%s4 + $0x20] sm:$0xff]
    %v8381 = vld [vmem:[%s4 + $0x28] sm:$0xff]
    %v8382 = vld [vmem:[%s4 + $0x30] sm:$0xff]
    %v8383 = vld [vmem:[%s4 + $0x38] sm:$0xff]
    %8385 = vset.pattern.permute.xlu0 0
    %8386 = vperm.xlu0 %8385, %v8376
    %v8387 = vpop.permute.xlu0 %8386
    %8390 = vset.pattern.permute.xlu0 0
    %8391 = vperm.xlu0 %8390, %v8377
    %v8392 = vpop.permute.xlu0 %8391
    %8395 = vset.pattern.permute.xlu0 0
    %8396 = vperm.xlu0 %8395, %v8378
    %v8397 = vpop.permute.xlu0 %8396
    %8400 = vset.pattern.permute.xlu0 0
    %8401 = vperm.xlu0 %8400, %v8379
    %v8402 = vpop.permute.xlu0 %8401
    %8405 = vset.pattern.permute.xlu0 0
    %8406 = vperm.xlu0 %8405, %v8380
    %v8407 = vpop.permute.xlu0 %8406
    %8410 = vset.pattern.permute.xlu0 0
    %8411 = vperm.xlu0 %8410, %v8381
    %v8412 = vpop.permute.xlu0 %8411
    %8415 = vset.pattern.permute.xlu0 0
    %8416 = vperm.xlu0 %8415, %v8382
    %v8417 = vpop.permute.xlu0 %8416
    %8420 = vset.pattern.permute.xlu0 0
    %8421 = vperm.xlu0 %8420, %v8383
    %v8422 = vpop.permute.xlu0 %8421
    %v8448 = vunpack.c.l.b16 %v8136
    %v8449 = vunpack.c.h.b16 %v8136
    %v8450 = vunpack.c.l.b16 %v8137
    %v8451 = vunpack.c.h.b16 %v8137
    %v8452 = vunpack.c.l.b16 %v8138
    %v8453 = vunpack.c.l.b16 %v8139
    %v8454 = vunpack.c.h.b16 %v8139
    %v8455 = vunpack.c.l.b16 %v8140
    %v8456 = vunpack.c.h.b16 %v8140
    %v8457 = vunpack.c.l.b16 %v8141
    %v8458 = vunpack.c.l.b16 %v8142
    %v8459 = vunpack.c.h.b16 %v8142
    %v8460 = vunpack.c.l.b16 %v8143
    %v8461 = vunpack.c.h.b16 %v8143
    %v8462 = vunpack.c.l.b16 %v8144
    %v8463 = vunpack.c.l.b16 %v8145
    %v8464 = vunpack.c.h.b16 %v8145
    %v8465 = vunpack.c.l.b16 %v8146
    %v8466 = vunpack.c.h.b16 %v8146
    %v8467 = vunpack.c.l.b16 %v8147
    %v8468 = vunpack.c.l.b16 %v8148
    %v8469 = vunpack.c.h.b16 %v8148
    %v8470 = vunpack.c.l.b16 %v8149
    %v8471 = vunpack.c.h.b16 %v8149
    %v8472 = vunpack.c.l.b16 %v8150
    %v8473 = vunpack.c.l.b16 %v8151
    %v8474 = vunpack.c.h.b16 %v8151
    %v8475 = vunpack.c.l.b16 %v8152
    %v8476 = vunpack.c.h.b16 %v8152
    %v8477 = vunpack.c.l.b16 %v8153
    %v8478 = vunpack.c.l.b16 %v8154
    %v8479 = vunpack.c.h.b16 %v8154
    %v8480 = vunpack.c.l.b16 %v8155
    %v8481 = vunpack.c.h.b16 %v8155
    %v8482 = vunpack.c.l.b16 %v8156
    %v8483 = vunpack.c.l.b16 %v8157
    %v8484 = vunpack.c.h.b16 %v8157
    %v8485 = vunpack.c.l.b16 %v8158
    %v8486 = vunpack.c.h.b16 %v8158
    %v8487 = vunpack.c.l.b16 %v8159
    %v8488 = vpack.c.b16 %v8453, %v8448
    %v8489 = vpack.c.b16 %v8454, %v8449
    %v8490 = vpack.c.b16 %v8455, %v8450
    %v8491 = vpack.c.b16 %v8456, %v8451
    %v8492 = vpack.c.b16 %v8457, %v8452
    %v8493 = vpack.c.b16 %v8463, %v8458
    %v8494 = vpack.c.b16 %v8464, %v8459
    %v8495 = vpack.c.b16 %v8465, %v8460
    %v8496 = vpack.c.b16 %v8466, %v8461
    %v8497 = vpack.c.b16 %v8467, %v8462
    %v8498 = vpack.c.b16 %v8473, %v8468
    %v8499 = vpack.c.b16 %v8474, %v8469
    %v8500 = vpack.c.b16 %v8475, %v8470
    %v8501 = vpack.c.b16 %v8476, %v8471
    %v8502 = vpack.c.b16 %v8477, %v8472
    %v8503 = vpack.c.b16 %v8483, %v8478
    %v8504 = vpack.c.b16 %v8484, %v8479
    %v8505 = vpack.c.b16 %v8485, %v8480
    %v8506 = vpack.c.b16 %v8486, %v8481
    %v8507 = vpack.c.b16 %v8487, %v8482
    %v8740 = vunpack.c.l.b16 %v8160
    %v8741 = vunpack.c.h.b16 %v8160
    %v8742 = vunpack.c.l.b16 %v8161
    %v8743 = vunpack.c.h.b16 %v8161
    %v8744 = vunpack.c.l.b16 %v8162
    %v8745 = vunpack.c.h.b16 %v8162
    %v8746 = vunpack.c.l.b16 %v8163
    %v8747 = vunpack.c.h.b16 %v8163
    %v8748 = vunpack.c.l.b16 %v8164
    %v8749 = vunpack.c.h.b16 %v8164
    %v8750 = vunpack.c.l.b16 %v8165
    %v8751 = vunpack.c.h.b16 %v8165
    %v8752 = vunpack.c.l.b16 %v8166
    %v8753 = vunpack.c.h.b16 %v8166
    %v8754 = vunpack.c.l.b16 %v8167
    %v8755 = vunpack.c.h.b16 %v8167
    %v8756 = vunpack.c.l.b16 %v8168
    %v8757 = vunpack.c.h.b16 %v8168
    %v8758 = vunpack.c.l.b16 %v8169
    %v8759 = vunpack.c.h.b16 %v8169
    %v8760 = vunpack.c.l.b16 %v8170
    %v8761 = vunpack.c.h.b16 %v8170
    %v8762 = vunpack.c.l.b16 %v8171
    %v8763 = vunpack.c.h.b16 %v8171
    %v8764 = vunpack.c.l.b16 %v8172
    %v8765 = vunpack.c.h.b16 %v8172
    %v8766 = vunpack.c.l.b16 %v8173
    %v8767 = vunpack.c.h.b16 %v8173
    %v8768 = vunpack.c.l.b16 %v8174
    %v8769 = vunpack.c.h.b16 %v8174
    %v8770 = vunpack.c.l.b16 %v8175
    %v8771 = vunpack.c.h.b16 %v8175
    %v8772 = vunpack.c.l.b16 %v8176
    %v8773 = vunpack.c.h.b16 %v8176
    %v8774 = vunpack.c.l.b16 %v8177
    %v8775 = vunpack.c.h.b16 %v8177
    %v8776 = vunpack.c.l.b16 %v8178
    %v8777 = vunpack.c.h.b16 %v8178
    %v8778 = vunpack.c.l.b16 %v8179
    %v8779 = vunpack.c.h.b16 %v8179
    %v8780 = vunpack.c.l.b16 %v8180
    %v8781 = vunpack.c.h.b16 %v8180
    %v8782 = vunpack.c.l.b16 %v8181
    %v8783 = vunpack.c.h.b16 %v8181
    %v8784 = vunpack.c.l.b16 %v8182
    %v8785 = vunpack.c.h.b16 %v8182
    %v8786 = vunpack.c.l.b16 %v8183
    %v8787 = vunpack.c.h.b16 %v8183
    %v8788 = vunpack.c.l.b16 %v8184
    %v8789 = vunpack.c.h.b16 %v8184
    %v8790 = vunpack.c.l.b16 %v8185
    %v8791 = vunpack.c.h.b16 %v8185
    %v8792 = vunpack.c.l.b16 %v8186
    %v8793 = vunpack.c.h.b16 %v8186
    %v8794 = vunpack.c.l.b16 %v8187
    %v8795 = vunpack.c.h.b16 %v8187
    %v8796 = vunpack.c.l.b16 %v8188
    %v8797 = vunpack.c.h.b16 %v8188
    %v8798 = vunpack.c.l.b16 %v8189
    %v8799 = vunpack.c.h.b16 %v8189
    %v8800 = vunpack.c.l.b16 %v8190
    %v8801 = vunpack.c.h.b16 %v8190
    %v8802 = vunpack.c.l.b16 %v8191
    %v8803 = vunpack.c.h.b16 %v8191
    %v8804 = vunpack.c.l.b16 %v8192
    %v8805 = vunpack.c.h.b16 %v8192
    %v8806 = vunpack.c.l.b16 %v8193
    %v8807 = vunpack.c.h.b16 %v8193
    %v8808 = vunpack.c.l.b16 %v8194
    %v8809 = vunpack.c.h.b16 %v8194
    %v8810 = vunpack.c.l.b16 %v8195
    %v8811 = vunpack.c.h.b16 %v8195
    %v8812 = vunpack.c.l.b16 %v8196
    %v8813 = vunpack.c.h.b16 %v8196
    %v8814 = vunpack.c.l.b16 %v8197
    %v8815 = vunpack.c.h.b16 %v8197
    %v8816 = vunpack.c.l.b16 %v8198
    %v8817 = vunpack.c.h.b16 %v8198
    %v8818 = vunpack.c.l.b16 %v8199
    %v8819 = vunpack.c.h.b16 %v8199
    %v8820 = vunpack.c.l.b16 %v8200
    %v8821 = vunpack.c.h.b16 %v8200
    %v8822 = vunpack.c.l.b16 %v8201
    %v8823 = vunpack.c.h.b16 %v8201
    %v8824 = vunpack.c.l.b16 %v8202
    %v8825 = vunpack.c.h.b16 %v8202
    %v8826 = vunpack.c.l.b16 %v8203
    %v8827 = vunpack.c.h.b16 %v8203
    %v8828 = vunpack.c.l.b16 %v8204
    %v8829 = vunpack.c.h.b16 %v8204
    %v8830 = vunpack.c.l.b16 %v8205
    %v8831 = vunpack.c.h.b16 %v8205
    %v8832 = vunpack.c.l.b16 %v8206
    %v8833 = vunpack.c.h.b16 %v8206
    %v8834 = vunpack.c.l.b16 %v8207
    %v8835 = vunpack.c.h.b16 %v8207
    %v8836 = vunpack.c.l.b16 %v8208
    %v8837 = vunpack.c.h.b16 %v8208
    %v8838 = vunpack.c.l.b16 %v8209
    %v8839 = vunpack.c.h.b16 %v8209
    %v8840 = vunpack.c.l.b16 %v8210
    %v8841 = vunpack.c.h.b16 %v8210
    %v8842 = vunpack.c.l.b16 %v8211
    %v8843 = vunpack.c.h.b16 %v8211
    %v8844 = vunpack.c.l.b16 %v8212
    %v8845 = vunpack.c.h.b16 %v8212
    %v8846 = vunpack.c.l.b16 %v8213
    %v8847 = vunpack.c.h.b16 %v8213
    %v8848 = vunpack.c.l.b16 %v8214
    %v8849 = vunpack.c.h.b16 %v8214
    %v8850 = vunpack.c.l.b16 %v8215
    %v8851 = vunpack.c.h.b16 %v8215
    %v8852 = vunpack.c.l.b16 %v8216
    %v8853 = vunpack.c.h.b16 %v8216
    %v8854 = vunpack.c.l.b16 %v8217
    %v8855 = vunpack.c.h.b16 %v8217
    %v8856 = vunpack.c.l.b16 %v8218
    %v8857 = vunpack.c.h.b16 %v8218
    %v8858 = vunpack.c.l.b16 %v8219
    %v8859 = vunpack.c.h.b16 %v8219
    %v8860 = vunpack.c.l.b16 %v8220
    %v8861 = vunpack.c.h.b16 %v8220
    %v8862 = vunpack.c.l.b16 %v8221
    %v8863 = vunpack.c.h.b16 %v8221
    %v8864 = vunpack.c.l.b16 %v8222
    %v8865 = vunpack.c.h.b16 %v8222
    %v8866 = vunpack.c.l.b16 %v8223
    %v8867 = vunpack.c.h.b16 %v8223
    %v8868 = vunpack.c.l.b16 %v8224
    %v8869 = vunpack.c.h.b16 %v8224
    %v8870 = vunpack.c.l.b16 %v8225
    %v8871 = vunpack.c.h.b16 %v8225
    %v8872 = vunpack.c.l.b16 %v8226
    %v8873 = vunpack.c.h.b16 %v8226
    %v8874 = vunpack.c.l.b16 %v8227
    %v8875 = vunpack.c.h.b16 %v8227
    %v8876 = vunpack.c.l.b16 %v8228
    %v8877 = vunpack.c.h.b16 %v8228
    %v8878 = vunpack.c.l.b16 %v8229
    %v8879 = vunpack.c.h.b16 %v8229
    %v8880 = vunpack.c.l.b16 %v8230
    %v8881 = vunpack.c.h.b16 %v8230
    %v8882 = vunpack.c.l.b16 %v8231
    %v8883 = vunpack.c.h.b16 %v8231
    %v8884 = vunpack.c.l.b16 %v8232
    %v8885 = vunpack.c.h.b16 %v8232
    %v8886 = vunpack.c.l.b16 %v8233
    %v8887 = vunpack.c.h.b16 %v8233
    %v8888 = vunpack.c.l.b16 %v8234
    %v8889 = vunpack.c.h.b16 %v8234
    %v8890 = vunpack.c.l.b16 %v8235
    %v8891 = vunpack.c.h.b16 %v8235
    %v8892 = vunpack.c.l.b16 %v8236
    %v8893 = vunpack.c.h.b16 %v8236
    %v8894 = vunpack.c.l.b16 %v8237
    %v8895 = vunpack.c.h.b16 %v8237
    %v8896 = vunpack.c.l.b16 %v8238
    %v8897 = vunpack.c.h.b16 %v8238
    %v8898 = vunpack.c.l.b16 %v8239
    %v8899 = vunpack.c.h.b16 %v8239
    %v8900 = vunpack.c.l.b16 %v8240
    %v8901 = vunpack.c.h.b16 %v8240
    %v8902 = vunpack.c.l.b16 %v8241
    %v8903 = vunpack.c.h.b16 %v8241
    %v8904 = vunpack.c.l.b16 %v8242
    %v8905 = vunpack.c.h.b16 %v8242
    %v8906 = vunpack.c.l.b16 %v8243
    %v8907 = vunpack.c.h.b16 %v8243
    %v8908 = vunpack.c.l.b16 %v8244
    %v8909 = vunpack.c.h.b16 %v8244
    %v8910 = vunpack.c.l.b16 %v8245
    %v8911 = vunpack.c.h.b16 %v8245
    %v8912 = vunpack.c.l.b16 %v8246
    %v8913 = vunpack.c.h.b16 %v8246
    %v8914 = vunpack.c.l.b16 %v8247
    %v8915 = vunpack.c.h.b16 %v8247
    %v8916 = vunpack.c.l.b16 %v8248
    %v8917 = vunpack.c.h.b16 %v8248
    %v8918 = vunpack.c.l.b16 %v8249
    %v8919 = vunpack.c.h.b16 %v8249
    %v8920 = vunpack.c.l.b16 %v8250
    %v8921 = vunpack.c.h.b16 %v8250
    %v8922 = vunpack.c.l.b16 %v8251
    %v8923 = vunpack.c.h.b16 %v8251
    %v8924 = vunpack.c.l.b16 %v8252
    %v8925 = vunpack.c.h.b16 %v8252
    %v8926 = vunpack.c.l.b16 %v8253
    %v8927 = vunpack.c.h.b16 %v8253
    %v8928 = vunpack.c.l.b16 %v8254
    %v8929 = vunpack.c.h.b16 %v8254
    %v8930 = vunpack.c.l.b16 %v8255
    %v8931 = vunpack.c.h.b16 %v8255
    %v8932 = vunpack.c.l.b16 %v8256
    %v8933 = vunpack.c.h.b16 %v8256
    %v8934 = vunpack.c.l.b16 %v8257
    %v8935 = vunpack.c.h.b16 %v8257
    %v8936 = vunpack.c.l.b16 %v8258
    %v8937 = vunpack.c.h.b16 %v8258
    %v8938 = vunpack.c.l.b16 %v8259
    %v8939 = vunpack.c.h.b16 %v8259
    %v8940 = vunpack.c.l.b16 %v8260
    %v8941 = vunpack.c.h.b16 %v8260
    %v8942 = vunpack.c.l.b16 %v8261
    %v8943 = vunpack.c.h.b16 %v8261
    %v8944 = vunpack.c.l.b16 %v8262
    %v8945 = vunpack.c.h.b16 %v8262
    %v8946 = vunpack.c.l.b16 %v8263
    %v8947 = vunpack.c.h.b16 %v8263
    %v8948 = vunpack.c.l.b16 %v8264
    %v8949 = vunpack.c.h.b16 %v8264
    %v8950 = vunpack.c.l.b16 %v8265
    %v8951 = vunpack.c.h.b16 %v8265
    %v8952 = vunpack.c.l.b16 %v8266
    %v8953 = vunpack.c.h.b16 %v8266
    %v8954 = vunpack.c.l.b16 %v8267
    %v8955 = vunpack.c.h.b16 %v8267
    %v8956 = vunpack.c.l.b16 %v8268
    %v8957 = vunpack.c.h.b16 %v8268
    %v8958 = vunpack.c.l.b16 %v8269
    %v8959 = vunpack.c.h.b16 %v8269
    %v8960 = vunpack.c.l.b16 %v8270
    %v8961 = vunpack.c.h.b16 %v8270
    %v8962 = vunpack.c.l.b16 %v8271
    %v8963 = vunpack.c.h.b16 %v8271
    %v8964 = vunpack.c.l.b16 %v8272
    %v8965 = vunpack.c.h.b16 %v8272
    %v8966 = vunpack.c.l.b16 %v8273
    %v8967 = vunpack.c.h.b16 %v8273
    %v8968 = vunpack.c.l.b16 %v8274
    %v8969 = vunpack.c.h.b16 %v8274
    %v8970 = vunpack.c.l.b16 %v8275
    %v8971 = vunpack.c.h.b16 %v8275
    %v8972 = vunpack.c.l.b16 %v8276
    %v8973 = vunpack.c.h.b16 %v8276
    %v8974 = vunpack.c.l.b16 %v8277
    %v8975 = vunpack.c.h.b16 %v8277
    %v8976 = vunpack.c.l.b16 %v8278
    %v8977 = vunpack.c.h.b16 %v8278
    %v8978 = vunpack.c.l.b16 %v8279
    %v8979 = vunpack.c.h.b16 %v8279
    %v8980 = vunpack.c.l.b16 %v8280
    %v8981 = vunpack.c.h.b16 %v8280
    %v8982 = vunpack.c.l.b16 %v8281
    %v8983 = vunpack.c.h.b16 %v8281
    %v8984 = vunpack.c.l.b16 %v8282
    %v8985 = vunpack.c.h.b16 %v8282
    %v8986 = vunpack.c.l.b16 %v8283
    %v8987 = vunpack.c.h.b16 %v8283
    %v8988 = vunpack.c.l.b16 %v8284
    %v8989 = vunpack.c.h.b16 %v8284
    %v8990 = vunpack.c.l.b16 %v8285
    %v8991 = vunpack.c.h.b16 %v8285
    %v8992 = vunpack.c.l.b16 %v8286
    %v8993 = vunpack.c.h.b16 %v8286
    %v8994 = vunpack.c.l.b16 %v8287
    %v8995 = vunpack.c.h.b16 %v8287
    %v8996 = vunpack.c.l.b16 %v8288
    %v8997 = vunpack.c.h.b16 %v8288
    %v8998 = vunpack.c.l.b16 %v8289
    %v8999 = vunpack.c.h.b16 %v8289
    %v9000 = vunpack.c.l.b16 %v8290
    %v9001 = vunpack.c.h.b16 %v8290
    %v9002 = vunpack.c.l.b16 %v8291
    %v9003 = vunpack.c.h.b16 %v8291
    %v9004 = vunpack.c.l.b16 %v8292
    %v9005 = vunpack.c.h.b16 %v8292
    %v9006 = vunpack.c.l.b16 %v8293
    %v9007 = vunpack.c.h.b16 %v8293
    %v9008 = vunpack.c.l.b16 %v8294
    %v9009 = vunpack.c.h.b16 %v8294
    %v9010 = vunpack.c.l.b16 %v8295
    %v9011 = vunpack.c.h.b16 %v8295
    %v9012 = vunpack.c.l.b16 %v8296
    %v9013 = vunpack.c.h.b16 %v8296
    %v9014 = vunpack.c.l.b16 %v8297
    %v9015 = vunpack.c.h.b16 %v8297
    %v9016 = vunpack.c.l.b16 %v8298
    %v9017 = vunpack.c.h.b16 %v8298
    %v9018 = vunpack.c.l.b16 %v8299
    %v9019 = vunpack.c.h.b16 %v8299
    %v9020 = vunpack.c.l.b16 %v8300
    %v9021 = vunpack.c.h.b16 %v8300
    %v9022 = vunpack.c.l.b16 %v8301
    %v9023 = vunpack.c.h.b16 %v8301
    %v9024 = vunpack.c.l.b16 %v8302
    %v9025 = vunpack.c.h.b16 %v8302
    %v9026 = vunpack.c.l.b16 %v8303
    %v9027 = vunpack.c.h.b16 %v8303
    %v9028 = vunpack.c.l.b16 %v8304
    %v9029 = vunpack.c.h.b16 %v8304
    %v9030 = vunpack.c.l.b16 %v8305
    %v9031 = vunpack.c.h.b16 %v8305
    %v9032 = vunpack.c.l.b16 %v8306
    %v9033 = vunpack.c.h.b16 %v8306
    %v9034 = vunpack.c.l.b16 %v8307
    %v9035 = vunpack.c.h.b16 %v8307
    %v9036 = vunpack.c.l.b16 %v8308
    %v9037 = vunpack.c.h.b16 %v8308
    %v9038 = vunpack.c.l.b16 %v8309
    %v9039 = vunpack.c.h.b16 %v8309
    %v9040 = vunpack.c.l.b16 %v8310
    %v9041 = vunpack.c.h.b16 %v8310
    %v9042 = vunpack.c.l.b16 %v8311
    %v9043 = vunpack.c.h.b16 %v8311
    %v9044 = vunpack.c.l.b16 %v8312
    %v9045 = vunpack.c.h.b16 %v8312
    %v9046 = vunpack.c.l.b16 %v8313
    %v9047 = vunpack.c.h.b16 %v8313
    %v9048 = vunpack.c.l.b16 %v8314
    %v9049 = vunpack.c.h.b16 %v8314
    %v9050 = vunpack.c.l.b16 %v8315
    %v9051 = vunpack.c.h.b16 %v8315
    %v9052 = vunpack.c.l.b16 %v8316
    %v9053 = vunpack.c.h.b16 %v8316
    %v9054 = vunpack.c.l.b16 %v8317
    %v9055 = vunpack.c.h.b16 %v8317
    %v9056 = vunpack.c.l.b16 %v8318
    %v9057 = vunpack.c.h.b16 %v8318
    %v9058 = vunpack.c.l.b16 %v8319
    %v9059 = vunpack.c.h.b16 %v8319
    %v9060 = vunpack.c.l.b16 %v8320
    %v9061 = vunpack.c.h.b16 %v8320
    %v9062 = vunpack.c.l.b16 %v8321
    %v9063 = vunpack.c.h.b16 %v8321
    %v9064 = vunpack.c.l.b16 %v8322
    %v9065 = vunpack.c.h.b16 %v8322
    %v9066 = vunpack.c.l.b16 %v8323
    %v9067 = vunpack.c.h.b16 %v8323
    %v9068 = vunpack.c.l.b16 %v8324
    %v9069 = vunpack.c.h.b16 %v8324
    %v9070 = vunpack.c.l.b16 %v8325
    %v9071 = vunpack.c.h.b16 %v8325
    %v9072 = vunpack.c.l.b16 %v8326
    %v9073 = vunpack.c.h.b16 %v8326
    %v9074 = vunpack.c.l.b16 %v8327
    %v9075 = vunpack.c.h.b16 %v8327
    %v9076 = vunpack.c.l.b16 %v8328
    %v9077 = vunpack.c.h.b16 %v8328
    %v9078 = vunpack.c.l.b16 %v8329
    %v9079 = vunpack.c.h.b16 %v8329
    %v9080 = vunpack.c.l.b16 %v8330
    %v9081 = vunpack.c.h.b16 %v8330
    %v9082 = vunpack.c.l.b16 %v8331
    %v9083 = vunpack.c.h.b16 %v8331
    %v9084 = vunpack.c.l.b16 %v8332
    %v9085 = vunpack.c.h.b16 %v8332
    %v9086 = vunpack.c.l.b16 %v8333
    %v9087 = vunpack.c.h.b16 %v8333
    %v9088 = vunpack.c.l.b16 %v8334
    %v9089 = vunpack.c.h.b16 %v8334
    %v9090 = vunpack.c.l.b16 %v8335
    %v9091 = vunpack.c.h.b16 %v8335
    %v9092 = vunpack.c.l.b16 %v8336
    %v9093 = vunpack.c.h.b16 %v8336
    %v9094 = vunpack.c.l.b16 %v8337
    %v9095 = vunpack.c.h.b16 %v8337
    %v9096 = vunpack.c.l.b16 %v8338
    %v9097 = vunpack.c.h.b16 %v8338
    %v9098 = vunpack.c.l.b16 %v8339
    %v9099 = vunpack.c.h.b16 %v8339
    %v9100 = vunpack.c.l.b16 %v8340
    %v9101 = vunpack.c.h.b16 %v8340
    %v9102 = vunpack.c.l.b16 %v8341
    %v9103 = vunpack.c.h.b16 %v8341
    %v9104 = vunpack.c.l.b16 %v8342
    %v9105 = vunpack.c.h.b16 %v8342
    %v9106 = vunpack.c.l.b16 %v8343
    %v9107 = vunpack.c.h.b16 %v8343
    %v9108 = vunpack.c.l.b16 %v8344
    %v9109 = vunpack.c.h.b16 %v8344
    %v9110 = vunpack.c.l.b16 %v8345
    %v9111 = vunpack.c.h.b16 %v8345
    %v9112 = vunpack.c.l.b16 %v8346
    %v9113 = vunpack.c.h.b16 %v8346
    %v9114 = vunpack.c.l.b16 %v8347
    %v9115 = vunpack.c.h.b16 %v8347
    %v9116 = vunpack.c.l.b16 %v8348
    %v9117 = vunpack.c.h.b16 %v8348
    %v9118 = vunpack.c.l.b16 %v8349
    %v9119 = vunpack.c.h.b16 %v8349
    %v9120 = vunpack.c.l.b16 %v8350
    %v9121 = vunpack.c.h.b16 %v8350
    %v9122 = vunpack.c.l.b16 %v8351
    %v9123 = vunpack.c.h.b16 %v8351
    %v9124 = vunpack.c.l.b16 %v8352
    %v9125 = vunpack.c.h.b16 %v8352
    %v9126 = vunpack.c.l.b16 %v8353
    %v9127 = vunpack.c.h.b16 %v8353
    %v9128 = vunpack.c.l.b16 %v8354
    %v9129 = vunpack.c.h.b16 %v8354
    %v9130 = vunpack.c.l.b16 %v8355
    %v9131 = vunpack.c.h.b16 %v8355
    %v9132 = vunpack.c.l.b16 %v8356
    %v9133 = vunpack.c.h.b16 %v8356
    %v9134 = vunpack.c.l.b16 %v8357
    %v9135 = vunpack.c.h.b16 %v8357
    %v9136 = vunpack.c.l.b16 %v8358
    %v9137 = vunpack.c.h.b16 %v8358
    %v9138 = vunpack.c.l.b16 %v8359
    %v9139 = vunpack.c.h.b16 %v8359
    %v9140 = vunpack.c.l.b16 %v8360
    %v9141 = vunpack.c.h.b16 %v8360
    %v9142 = vunpack.c.l.b16 %v8361
    %v9143 = vunpack.c.h.b16 %v8361
    %v9144 = vunpack.c.l.b16 %v8362
    %v9145 = vunpack.c.h.b16 %v8362
    %v9146 = vunpack.c.l.b16 %v8363
    %v9147 = vunpack.c.h.b16 %v8363
    %v9148 = vunpack.c.l.b16 %v8364
    %v9149 = vunpack.c.h.b16 %v8364
    %v9150 = vunpack.c.l.b16 %v8365
    %v9151 = vunpack.c.h.b16 %v8365
    %v9152 = vunpack.c.l.b16 %v8366
    %v9153 = vunpack.c.h.b16 %v8366
    %v9154 = vunpack.c.l.b16 %v8367
    %v9155 = vunpack.c.h.b16 %v8367
    %v9156 = vunpack.c.l.b16 %v8368
    %v9157 = vunpack.c.h.b16 %v8368
    %v9158 = vunpack.c.l.b16 %v8369
    %v9159 = vunpack.c.h.b16 %v8369
    %v9160 = vunpack.c.l.b16 %v8370
    %v9161 = vunpack.c.h.b16 %v8370
    %v9162 = vunpack.c.l.b16 %v8371
    %v9163 = vunpack.c.h.b16 %v8371
    %v9164 = vunpack.c.l.b16 %v8372
    %v9165 = vunpack.c.h.b16 %v8372
    %v9166 = vunpack.c.l.b16 %v8373
    %v9167 = vunpack.c.h.b16 %v8373
    %v9168 = vunpack.c.l.b16 %v8374
    %v9169 = vunpack.c.h.b16 %v8374
    %v9170 = vunpack.c.l.b16 %v8375
    %v9171 = vunpack.c.h.b16 %v8375
    %v9172 = vpack.c.b16 %v8746, %v8740
    %v9173 = vpack.c.b16 %v8747, %v8741
    %v9174 = vpack.c.b16 %v8748, %v8742
    %v9175 = vpack.c.b16 %v8749, %v8743
    %v9176 = vpack.c.b16 %v8750, %v8744
    %v9177 = vpack.c.b16 %v8751, %v8745
    %v9178 = vpack.c.b16 %v8758, %v8752
    %v9179 = vpack.c.b16 %v8759, %v8753
    %v9180 = vpack.c.b16 %v8760, %v8754
    %v9181 = vpack.c.b16 %v8761, %v8755
    %v9182 = vpack.c.b16 %v8762, %v8756
    %v9183 = vpack.c.b16 %v8763, %v8757
    %v9184 = vpack.c.b16 %v8770, %v8764
    %v9185 = vpack.c.b16 %v8771, %v8765
    %v9186 = vpack.c.b16 %v8772, %v8766
    %v9187 = vpack.c.b16 %v8773, %v8767
    %v9188 = vpack.c.b16 %v8774, %v8768
    %v9189 = vpack.c.b16 %v8775, %v8769
    %v9190 = vpack.c.b16 %v8782, %v8776
    %v9191 = vpack.c.b16 %v8783, %v8777
    %v9192 = vpack.c.b16 %v8784, %v8778
    %v9193 = vpack.c.b16 %v8785, %v8779
    %v9194 = vpack.c.b16 %v8786, %v8780
    %v9195 = vpack.c.b16 %v8787, %v8781
    %v9196 = vpack.c.b16 %v8794, %v8788
    %v9197 = vpack.c.b16 %v8795, %v8789
    %v9198 = vpack.c.b16 %v8796, %v8790
    %v9199 = vpack.c.b16 %v8797, %v8791
    %v9200 = vpack.c.b16 %v8798, %v8792
    %v9201 = vpack.c.b16 %v8799, %v8793
    %v9202 = vpack.c.b16 %v8806, %v8800
    %v9203 = vpack.c.b16 %v8807, %v8801
    %v9204 = vpack.c.b16 %v8808, %v8802
    %v9205 = vpack.c.b16 %v8809, %v8803
    %v9206 = vpack.c.b16 %v8810, %v8804
    %v9207 = vpack.c.b16 %v8811, %v8805
    %v9208 = vpack.c.b16 %v8818, %v8812
    %v9209 = vpack.c.b16 %v8819, %v8813
    %v9210 = vpack.c.b16 %v8820, %v8814
    %v9211 = vpack.c.b16 %v8821, %v8815
    %v9212 = vpack.c.b16 %v8822, %v8816
    %v9213 = vpack.c.b16 %v8823, %v8817
    %v9214 = vpack.c.b16 %v8830, %v8824
    %v9215 = vpack.c.b16 %v8831, %v8825
    %v9216 = vpack.c.b16 %v8832, %v8826
    %v9217 = vpack.c.b16 %v8833, %v8827
    %v9218 = vpack.c.b16 %v8834, %v8828
    %v9219 = vpack.c.b16 %v8835, %v8829
    %v9220 = vpack.c.b16 %v8842, %v8836
    %v9221 = vpack.c.b16 %v8843, %v8837
    %v9222 = vpack.c.b16 %v8844, %v8838
    %v9223 = vpack.c.b16 %v8845, %v8839
    %v9224 = vpack.c.b16 %v8846, %v8840
    %v9225 = vpack.c.b16 %v8847, %v8841
    %v9226 = vpack.c.b16 %v8854, %v8848
    %v9227 = vpack.c.b16 %v8855, %v8849
    %v9228 = vpack.c.b16 %v8856, %v8850
    %v9229 = vpack.c.b16 %v8857, %v8851
    %v9230 = vpack.c.b16 %v8858, %v8852
    %v9231 = vpack.c.b16 %v8859, %v8853
    %v9232 = vpack.c.b16 %v8866, %v8860
    %v9233 = vpack.c.b16 %v8867, %v8861
    %v9234 = vpack.c.b16 %v8868, %v8862
    %v9235 = vpack.c.b16 %v8869, %v8863
    %v9236 = vpack.c.b16 %v8870, %v8864
    %v9237 = vpack.c.b16 %v8871, %v8865
    %v9238 = vpack.c.b16 %v8878, %v8872
    %v9239 = vpack.c.b16 %v8879, %v8873
    %v9240 = vpack.c.b16 %v8880, %v8874
    %v9241 = vpack.c.b16 %v8881, %v8875
    %v9242 = vpack.c.b16 %v8882, %v8876
    %v9243 = vpack.c.b16 %v8883, %v8877
    %v9244 = vpack.c.b16 %v8890, %v8884
    %v9245 = vpack.c.b16 %v8891, %v8885
    %v9246 = vpack.c.b16 %v8892, %v8886
    %v9247 = vpack.c.b16 %v8893, %v8887
    %v9248 = vpack.c.b16 %v8894, %v8888
    %v9249 = vpack.c.b16 %v8895, %v8889
    %v9250 = vpack.c.b16 %v8902, %v8896
    %v9251 = vpack.c.b16 %v8903, %v8897
    %v9252 = vpack.c.b16 %v8904, %v8898
    %v9253 = vpack.c.b16 %v8905, %v8899
    %v9254 = vpack.c.b16 %v8906, %v8900
    %v9255 = vpack.c.b16 %v8907, %v8901
    %v9256 = vpack.c.b16 %v8914, %v8908
    %v9257 = vpack.c.b16 %v8915, %v8909
    %v9258 = vpack.c.b16 %v8916, %v8910
    %v9259 = vpack.c.b16 %v8917, %v8911
    %v9260 = vpack.c.b16 %v8918, %v8912
    %v9261 = vpack.c.b16 %v8919, %v8913
    %v9262 = vpack.c.b16 %v8926, %v8920
    %v9263 = vpack.c.b16 %v8927, %v8921
    %v9264 = vpack.c.b16 %v8928, %v8922
    %v9265 = vpack.c.b16 %v8929, %v8923
    %v9266 = vpack.c.b16 %v8930, %v8924
    %v9267 = vpack.c.b16 %v8931, %v8925
    %v9268 = vpack.c.b16 %v8938, %v8932
    %v9269 = vpack.c.b16 %v8939, %v8933
    %v9270 = vpack.c.b16 %v8940, %v8934
    %v9271 = vpack.c.b16 %v8941, %v8935
    %v9272 = vpack.c.b16 %v8942, %v8936
    %v9273 = vpack.c.b16 %v8943, %v8937
    %v9274 = vpack.c.b16 %v8950, %v8944
    %v9275 = vpack.c.b16 %v8951, %v8945
    %v9276 = vpack.c.b16 %v8952, %v8946
    %v9277 = vpack.c.b16 %v8953, %v8947
    %v9278 = vpack.c.b16 %v8954, %v8948
    %v9279 = vpack.c.b16 %v8955, %v8949
    %v9280 = vpack.c.b16 %v8962, %v8956
    %v9281 = vpack.c.b16 %v8963, %v8957
    %v9282 = vpack.c.b16 %v8964, %v8958
    %v9283 = vpack.c.b16 %v8965, %v8959
    %v9284 = vpack.c.b16 %v8966, %v8960
    %v9285 = vpack.c.b16 %v8967, %v8961
    %v9286 = vpack.c.b16 %v8974, %v8968
    %v9287 = vpack.c.b16 %v8975, %v8969
    %v9288 = vpack.c.b16 %v8976, %v8970
    %v9289 = vpack.c.b16 %v8977, %v8971
    %v9290 = vpack.c.b16 %v8978, %v8972
    %v9291 = vpack.c.b16 %v8979, %v8973
    %v9292 = vpack.c.b16 %v8986, %v8980
    %v9293 = vpack.c.b16 %v8987, %v8981
    %v9294 = vpack.c.b16 %v8988, %v8982
    %v9295 = vpack.c.b16 %v8989, %v8983
    %v9296 = vpack.c.b16 %v8990, %v8984
    %v9297 = vpack.c.b16 %v8991, %v8985
    %v9298 = vpack.c.b16 %v8998, %v8992
    %v9299 = vpack.c.b16 %v8999, %v8993
    %v9300 = vpack.c.b16 %v9000, %v8994
    %v9301 = vpack.c.b16 %v9001, %v8995
    %v9302 = vpack.c.b16 %v9002, %v8996
    %v9303 = vpack.c.b16 %v9003, %v8997
    %v9304 = vpack.c.b16 %v9010, %v9004
    %v9305 = vpack.c.b16 %v9011, %v9005
    %v9306 = vpack.c.b16 %v9012, %v9006
    %v9307 = vpack.c.b16 %v9013, %v9007
    %v9308 = vpack.c.b16 %v9014, %v9008
    %v9309 = vpack.c.b16 %v9015, %v9009
    %v9310 = vpack.c.b16 %v9022, %v9016
    %v9311 = vpack.c.b16 %v9023, %v9017
    %v9312 = vpack.c.b16 %v9024, %v9018
    %v9313 = vpack.c.b16 %v9025, %v9019
    %v9314 = vpack.c.b16 %v9026, %v9020
    %v9315 = vpack.c.b16 %v9027, %v9021
    %v9316 = vpack.c.b16 %v9034, %v9028
    %v9317 = vpack.c.b16 %v9035, %v9029
    %v9318 = vpack.c.b16 %v9036, %v9030
    %v9319 = vpack.c.b16 %v9037, %v9031
    %v9320 = vpack.c.b16 %v9038, %v9032
    %v9321 = vpack.c.b16 %v9039, %v9033
    %v9322 = vpack.c.b16 %v9046, %v9040
    %v9323 = vpack.c.b16 %v9047, %v9041
    %v9324 = vpack.c.b16 %v9048, %v9042
    %v9325 = vpack.c.b16 %v9049, %v9043
    %v9326 = vpack.c.b16 %v9050, %v9044
    %v9327 = vpack.c.b16 %v9051, %v9045
    %v9328 = vpack.c.b16 %v9058, %v9052
    %v9329 = vpack.c.b16 %v9059, %v9053
    %v9330 = vpack.c.b16 %v9060, %v9054
    %v9331 = vpack.c.b16 %v9061, %v9055
    %v9332 = vpack.c.b16 %v9062, %v9056
    %v9333 = vpack.c.b16 %v9063, %v9057
    %v9334 = vpack.c.b16 %v9070, %v9064
    %v9335 = vpack.c.b16 %v9071, %v9065
    %v9336 = vpack.c.b16 %v9072, %v9066
    %v9337 = vpack.c.b16 %v9073, %v9067
    %v9338 = vpack.c.b16 %v9074, %v9068
    %v9339 = vpack.c.b16 %v9075, %v9069
    %v9340 = vpack.c.b16 %v9082, %v9076
    %v9341 = vpack.c.b16 %v9083, %v9077
    %v9342 = vpack.c.b16 %v9084, %v9078
    %v9343 = vpack.c.b16 %v9085, %v9079
    %v9344 = vpack.c.b16 %v9086, %v9080
    %v9345 = vpack.c.b16 %v9087, %v9081
    %v9346 = vpack.c.b16 %v9094, %v9088
    %v9347 = vpack.c.b16 %v9095, %v9089
    %v9348 = vpack.c.b16 %v9096, %v9090
    %v9349 = vpack.c.b16 %v9097, %v9091
    %v9350 = vpack.c.b16 %v9098, %v9092
    %v9351 = vpack.c.b16 %v9099, %v9093
    %v9352 = vpack.c.b16 %v9106, %v9100
    %v9353 = vpack.c.b16 %v9107, %v9101
    %v9354 = vpack.c.b16 %v9108, %v9102
    %v9355 = vpack.c.b16 %v9109, %v9103
    %v9356 = vpack.c.b16 %v9110, %v9104
    %v9357 = vpack.c.b16 %v9111, %v9105
    %v9358 = vpack.c.b16 %v9118, %v9112
    %v9359 = vpack.c.b16 %v9119, %v9113
    %v9360 = vpack.c.b16 %v9120, %v9114
    %v9361 = vpack.c.b16 %v9121, %v9115
    %v9362 = vpack.c.b16 %v9122, %v9116
    %v9363 = vpack.c.b16 %v9123, %v9117
    %v9364 = vpack.c.b16 %v9130, %v9124
    %v9365 = vpack.c.b16 %v9131, %v9125
    %v9366 = vpack.c.b16 %v9132, %v9126
    %v9367 = vpack.c.b16 %v9133, %v9127
    %v9368 = vpack.c.b16 %v9134, %v9128
    %v9369 = vpack.c.b16 %v9135, %v9129
    %v9370 = vpack.c.b16 %v9142, %v9136
    %v9371 = vpack.c.b16 %v9143, %v9137
    %v9372 = vpack.c.b16 %v9144, %v9138
    %v9373 = vpack.c.b16 %v9145, %v9139
    %v9374 = vpack.c.b16 %v9146, %v9140
    %v9375 = vpack.c.b16 %v9147, %v9141
    %v9376 = vpack.c.b16 %v9154, %v9148
    %v9377 = vpack.c.b16 %v9155, %v9149
    %v9378 = vpack.c.b16 %v9156, %v9150
    %v9379 = vpack.c.b16 %v9157, %v9151
    %v9380 = vpack.c.b16 %v9158, %v9152
    %v9381 = vpack.c.b16 %v9159, %v9153
    %v9382 = vpack.c.b16 %v9166, %v9160
    %v9383 = vpack.c.b16 %v9167, %v9161
    %v9384 = vpack.c.b16 %v9168, %v9162
    %v9385 = vpack.c.b16 %v9169, %v9163
    %v9386 = vpack.c.b16 %v9170, %v9164
    %v9387 = vpack.c.b16 %v9171, %v9165
    %v9605 = vsel %vm4474, %v8492, 0
    %v9608 = vsel %vm4474, %v8497, 0
    %v9611 = vsel %vm4474, %v8502, 0
    %v9614 = vsel %vm4474, %v8507, 0
    %9616 = vmatprep.subr.bf16.mxu0 %v9215
    %9617 = vmatpush1.bf16.msra.mxu0 %v9214
    %9618 = vmatprep.subr.bf16.mxu0 %v9209
    %9619 = vmatpush1.bf16.msra.mxu0 %v9208
    %9620 = vmatprep.subr.bf16.mxu0 %v9203
    %9621 = vmatpush1.bf16.msra.mxu0 %v9202
    %9622 = vmatprep.subr.bf16.mxu0 %v9197
    %9623 = vmatpush1.bf16.msra.mxu0 %v9196
    %9624 = vmatprep.subr.bf16.mxu0 %v9191
    %9625 = vmatpush1.bf16.msra.mxu0 %v9190
    %9626 = vmatprep.subr.bf16.mxu0 %v9185
    %9627 = vmatpush1.bf16.msra.mxu0 %v9184
    %9628 = vmatprep.subr.bf16.mxu0 %v9179
    %9629 = vmatpush1.bf16.msra.mxu0 %v9178
    %9630 = vmatprep.subr.bf16.mxu0 %v9173
    %9631 = vmatpush1.bf16.msra.mxu0 %v9172
    %9632 = vmatprep.subr.bf16.mxu0 %v9263
    %9633 = vmatpush2.bf16.msra.mxu0 %v9262
    %9634 = vmatprep.subr.bf16.mxu0 %v9257
    %9635 = vmatpush2.bf16.msra.mxu0 %v9256
    %9636 = vmatprep.subr.bf16.mxu0 %v9251
    %9637 = vmatpush2.bf16.msra.mxu0 %v9250
    %9638 = vmatprep.subr.bf16.mxu0 %v9245
    %9639 = vmatpush2.bf16.msra.mxu0 %v9244
    %9640 = vmatprep.subr.bf16.mxu0 %v9239
    %9641 = vmatpush2.bf16.msra.mxu0 %v9238
    %9642 = vmatprep.subr.bf16.mxu0 %v9233
    %9643 = vmatpush2.bf16.msra.mxu0 %v9232
    %9644 = vmatprep.subr.bf16.mxu0 %v9227
    %9645 = vmatpush2.bf16.msra.mxu0 %v9226
    %9646 = vmatprep.subr.bf16.mxu0 %v9221
    %9647 = vmatpush2.bf16.msra.mxu0 %v9220
    %9648 = vmatprep.mubr.bf16.mxu0 %v8489
    %9649 = vmatmul.mubr.bf16.gmra.mxu0 %v8488
    %v9650 = vpop.f32.mrf.mxu0
    %v9651 = vadd.f32 %v8387, %v9650
    %v9652 = vpop.f32.mrf.mxu0
    %v9653 = vadd.f32 %v8387, %v9652
    %v9654 = vpop.f32.mrf.mxu0
    %v9655 = vadd.f32 %v8392, %v9654
    %v9656 = vpop.f32.mrf.mxu0
    %v9657 = vadd.f32 %v8392, %v9656
    %9658 = vmatprep.mubr.bf16.mxu0 %v8494
    %9659 = vmatmul.mubr.bf16.gmra.mxu0 %v8493
    %v9660 = vpop.f32.mrf.mxu0
    %v9661 = vadd.f32 %v8397, %v9660
    %v9662 = vpop.f32.mrf.mxu0
    %v9663 = vadd.f32 %v8397, %v9662
    %v9664 = vpop.f32.mrf.mxu0
    %v9665 = vadd.f32 %v8402, %v9664
    %v9666 = vpop.f32.mrf.mxu0
    %v9667 = vadd.f32 %v8402, %v9666
    %9668 = vmatprep.mubr.bf16.mxu0 %v8499
    %9669 = vmatmul.mubr.bf16.gmra.mxu0 %v8498
    %v9670 = vpop.f32.mrf.mxu0
    %v9671 = vadd.f32 %v8407, %v9670
    %v9672 = vpop.f32.mrf.mxu0
    %v9673 = vadd.f32 %v8407, %v9672
    %v9674 = vpop.f32.mrf.mxu0
    %v9675 = vadd.f32 %v8412, %v9674
    %v9676 = vpop.f32.mrf.mxu0
    %v9677 = vadd.f32 %v8412, %v9676
    %9678 = vmatprep.mubr.bf16.mxu0 %v8504
    %9679 = vmatmul.mubr.bf16.gmra.mxu0 %v8503
    %v9680 = vpop.f32.mrf.mxu0
    %v9681 = vadd.f32 %v8417, %v9680
    %v9682 = vpop.f32.mrf.mxu0
    %v9683 = vadd.f32 %v8417, %v9682
    %v9684 = vpop.f32.mrf.mxu0
    %v9685 = vadd.f32 %v8422, %v9684
    %v9686 = vpop.f32.mrf.mxu0
    %v9687 = vadd.f32 %v8422, %v9686
    %9688 = vdwg.mxu0
    %9689 = vmatprep.subr.bf16.mxu0 %v9311
    %9690 = vmatpush1.bf16.msra.mxu0 %v9310
    %9691 = vmatprep.subr.bf16.mxu0 %v9305
    %9692 = vmatpush1.bf16.msra.mxu0 %v9304
    %9693 = vmatprep.subr.bf16.mxu0 %v9299
    %9694 = vmatpush1.bf16.msra.mxu0 %v9298
    %9695 = vmatprep.subr.bf16.mxu0 %v9293
    %9696 = vmatpush1.bf16.msra.mxu0 %v9292
    %9697 = vmatprep.subr.bf16.mxu0 %v9287
    %9698 = vmatpush1.bf16.msra.mxu0 %v9286
    %9699 = vmatprep.subr.bf16.mxu0 %v9281
    %9700 = vmatpush1.bf16.msra.mxu0 %v9280
    %9701 = vmatprep.subr.bf16.mxu0 %v9275
    %9702 = vmatpush1.bf16.msra.mxu0 %v9274
    %9703 = vmatprep.subr.bf16.mxu0 %v9269
    %9704 = vmatpush1.bf16.msra.mxu0 %v9268
    %9705 = vmatprep.subr.bf16.mxu0 %v9359
    %9706 = vmatpush2.bf16.msra.mxu0 %v9358
    %9707 = vmatprep.subr.bf16.mxu0 %v9353
    %9708 = vmatpush2.bf16.msra.mxu0 %v9352
    %9709 = vmatprep.subr.bf16.mxu0 %v9347
    %9710 = vmatpush2.bf16.msra.mxu0 %v9346
    %9711 = vmatprep.subr.bf16.mxu0 %v9341
    %9712 = vmatpush2.bf16.msra.mxu0 %v9340
    %9713 = vmatprep.subr.bf16.mxu0 %v9335
    %9714 = vmatpush2.bf16.msra.mxu0 %v9334
    %9715 = vmatprep.subr.bf16.mxu0 %v9329
    %9716 = vmatpush2.bf16.msra.mxu0 %v9328
    %9717 = vmatprep.subr.bf16.mxu0 %v9323
    %9718 = vmatpush2.bf16.msra.mxu0 %v9322
    %9719 = vmatprep.subr.bf16.mxu0 %v9317
    %9720 = vmatpush2.bf16.msra.mxu0 %v9316
    %9721 = vmatprep.mubr.bf16.mxu0 %v8491
    %9722 = vmatmul.mubr.bf16.gmra.mxu0 %v8490
    %v9723 = vpop.f32.mrf.mxu0
    %v9724 = vadd.f32 %v9651, %v9723
    %v9725 = vpop.f32.mrf.mxu0
    %v9726 = vadd.f32 %v9653, %v9725
    %v9727 = vpop.f32.mrf.mxu0
    %v9728 = vadd.f32 %v9655, %v9727
    %v9729 = vpop.f32.mrf.mxu0
    %v9730 = vadd.f32 %v9657, %v9729
    %9731 = vmatprep.mubr.bf16.mxu0 %v8496
    %9732 = vmatmul.mubr.bf16.gmra.mxu0 %v8495
    %v9733 = vpop.f32.mrf.mxu0
    %v9734 = vadd.f32 %v9661, %v9733
    %v9735 = vpop.f32.mrf.mxu0
    %v9736 = vadd.f32 %v9663, %v9735
    %v9737 = vpop.f32.mrf.mxu0
    %v9738 = vadd.f32 %v9665, %v9737
    %v9739 = vpop.f32.mrf.mxu0
    %v9740 = vadd.f32 %v9667, %v9739
    %9741 = vmatprep.mubr.bf16.mxu0 %v8501
    %9742 = vmatmul.mubr.bf16.gmra.mxu0 %v8500
    %v9743 = vpop.f32.mrf.mxu0
    %v9744 = vadd.f32 %v9671, %v9743
    %v9745 = vpop.f32.mrf.mxu0
    %v9746 = vadd.f32 %v9673, %v9745
    %v9747 = vpop.f32.mrf.mxu0
    %v9748 = vadd.f32 %v9675, %v9747
    %v9749 = vpop.f32.mrf.mxu0
    %v9750 = vadd.f32 %v9677, %v9749
    %9751 = vmatprep.mubr.bf16.mxu0 %v8506
    %9752 = vmatmul.mubr.bf16.gmra.mxu0 %v8505
    %v9753 = vpop.f32.mrf.mxu0
    %v9754 = vadd.f32 %v9681, %v9753
    %v9755 = vpop.f32.mrf.mxu0
    %v9756 = vadd.f32 %v9683, %v9755
    %v9757 = vpop.f32.mrf.mxu0
    %v9758 = vadd.f32 %v9685, %v9757
    %v9759 = vpop.f32.mrf.mxu0
    %v9760 = vadd.f32 %v9687, %v9759
    %9761 = vdwg.mxu0
    %9762 = vmatprep.subr.bf16.mxu0 0
    %9763 = vmatpush1.bf16.msra.mxu0 0
    %9764 = vmatprep.subr.bf16.mxu0 0
    %9765 = vmatpush1.bf16.msra.mxu0 0
    %9766 = vmatprep.subr.bf16.mxu0 0
    %9767 = vmatpush1.bf16.msra.mxu0 0
    %9768 = vmatprep.subr.bf16.mxu0 0
    %9769 = vmatpush1.bf16.msra.mxu0 0
    %9770 = vmatprep.subr.bf16.mxu0 %v9383
    %9771 = vmatpush1.bf16.msra.mxu0 %v9382
    %9772 = vmatprep.subr.bf16.mxu0 %v9377
    %9773 = vmatpush1.bf16.msra.mxu0 %v9376
    %9774 = vmatprep.subr.bf16.mxu0 %v9371
    %9775 = vmatpush1.bf16.msra.mxu0 %v9370
    %9776 = vmatprep.subr.bf16.mxu0 %v9365
    %9777 = vmatpush1.bf16.msra.mxu0 %v9364
    %9778 = vmatprep.subr.bf16.mxu0 0
    %9779 = vmatpush2.bf16.msra.mxu0 0
    %9780 = vmatprep.subr.bf16.mxu0 0
    %9781 = vmatpush2.bf16.msra.mxu0 0
    %9782 = vmatprep.subr.bf16.mxu0 0
    %9783 = vmatpush2.bf16.msra.mxu0 0
    %9784 = vmatprep.subr.bf16.mxu0 0
    %9785 = vmatpush2.bf16.msra.mxu0 0
    %9786 = vmatprep.subr.bf16.mxu0 0
    %9787 = vmatpush2.bf16.msra.mxu0 0
    %9788 = vmatprep.subr.bf16.mxu0 0
    %9789 = vmatpush2.bf16.msra.mxu0 0
    %9790 = vmatprep.subr.bf16.mxu0 0
    %9791 = vmatpush2.bf16.msra.mxu0 0
    %9792 = vmatprep.subr.bf16.mxu0 0
    %9793 = vmatpush2.bf16.msra.mxu0 0
    %9794 = vmatprep.mubr.bf16.mxu0 0
    %9795 = vmatmul.mubr.bf16.gmra.mxu0 %v9605
    %v9796 = vpop.f32.mrf.mxu0
    %v9797 = vadd.f32 %v9724, %v9796
    %v9798 = vpop.f32.mrf.mxu0
    %v9799 = vadd.f32 %v9726, %v9798
    %v9800 = vpop.f32.mrf.mxu0
    %v9801 = vadd.f32 %v9728, %v9800
    %v9802 = vpop.f32.mrf.mxu0
    %v9803 = vadd.f32 %v9730, %v9802
    %9804 = vmatprep.mubr.bf16.mxu0 0
    %9805 = vmatmul.mubr.bf16.gmra.mxu0 %v9608
    %v9806 = vpop.f32.mrf.mxu0
    %v9807 = vadd.f32 %v9734, %v9806
    %v9808 = vpop.f32.mrf.mxu0
    %v9809 = vadd.f32 %v9736, %v9808
    %v9810 = vpop.f32.mrf.mxu0
    %v9811 = vadd.f32 %v9738, %v9810
    %v9812 = vpop.f32.mrf.mxu0
    %v9813 = vadd.f32 %v9740, %v9812
    %9814 = vmatprep.mubr.bf16.mxu0 0
    %9815 = vmatmul.mubr.bf16.gmra.mxu0 %v9611
    %v9816 = vpop.f32.mrf.mxu0
    %v9817 = vadd.f32 %v9744, %v9816
    %v9818 = vpop.f32.mrf.mxu0
    %v9819 = vadd.f32 %v9746, %v9818
    %v9820 = vpop.f32.mrf.mxu0
    %v9821 = vadd.f32 %v9748, %v9820
    %v9822 = vpop.f32.mrf.mxu0
    %v9823 = vadd.f32 %v9750, %v9822
    %9824 = vmatprep.mubr.bf16.mxu0 0
    %9825 = vmatmul.mubr.bf16.gmra.mxu0 %v9614
    %v9826 = vpop.f32.mrf.mxu0
    %v9827 = vadd.f32 %v9754, %v9826
    %v9828 = vpop.f32.mrf.mxu0
    %v9829 = vadd.f32 %v9756, %v9828
    %v9830 = vpop.f32.mrf.mxu0
    %v9831 = vadd.f32 %v9758, %v9830
    %v9832 = vpop.f32.mrf.mxu0
    %v9833 = vadd.f32 %v9760, %v9832
    %9834 = vdwg.mxu0
    %9835 = vmatprep.subr.bf16.mxu0 %v9217
    %9836 = vmatpush1.bf16.msra.mxu0 %v9216
    %9837 = vmatprep.subr.bf16.mxu0 %v9211
    %9838 = vmatpush1.bf16.msra.mxu0 %v9210
    %9839 = vmatprep.subr.bf16.mxu0 %v9205
    %9840 = vmatpush1.bf16.msra.mxu0 %v9204
    %9841 = vmatprep.subr.bf16.mxu0 %v9199
    %9842 = vmatpush1.bf16.msra.mxu0 %v9198
    %9843 = vmatprep.subr.bf16.mxu0 %v9193
    %9844 = vmatpush1.bf16.msra.mxu0 %v9192
    %9845 = vmatprep.subr.bf16.mxu0 %v9187
    %9846 = vmatpush1.bf16.msra.mxu0 %v9186
    %9847 = vmatprep.subr.bf16.mxu0 %v9181
    %9848 = vmatpush1.bf16.msra.mxu0 %v9180
    %9849 = vmatprep.subr.bf16.mxu0 %v9175
    %9850 = vmatpush1.bf16.msra.mxu0 %v9174
    %9851 = vmatprep.subr.bf16.mxu0 %v9265
    %9852 = vmatpush2.bf16.msra.mxu0 %v9264
    %9853 = vmatprep.subr.bf16.mxu0 %v9259
    %9854 = vmatpush2.bf16.msra.mxu0 %v9258
    %9855 = vmatprep.subr.bf16.mxu0 %v9253
    %9856 = vmatpush2.bf16.msra.mxu0 %v9252
    %9857 = vmatprep.subr.bf16.mxu0 %v9247
    %9858 = vmatpush2.bf16.msra.mxu0 %v9246
    %9859 = vmatprep.subr.bf16.mxu0 %v9241
    %9860 = vmatpush2.bf16.msra.mxu0 %v9240
    %9861 = vmatprep.subr.bf16.mxu0 %v9235
    %9862 = vmatpush2.bf16.msra.mxu0 %v9234
    %9863 = vmatprep.subr.bf16.mxu0 %v9229
    %9864 = vmatpush2.bf16.msra.mxu0 %v9228
    %9865 = vmatprep.subr.bf16.mxu0 %v9223
    %9866 = vmatpush2.bf16.msra.mxu0 %v9222
    %9867 = vmatprep.mubr.bf16.mxu0 %v8489
    %9868 = vmatmul.mubr.bf16.gmra.mxu0 %v8488
    %v9869 = vpop.f32.mrf.mxu0
    %v9870 = vadd.f32 %v8387, %v9869
    %v9871 = vpop.f32.mrf.mxu0
    %v9872 = vadd.f32 %v8387, %v9871
    %v9873 = vpop.f32.mrf.mxu0
    %v9874 = vadd.f32 %v8392, %v9873
    %v9875 = vpop.f32.mrf.mxu0
    %v9876 = vadd.f32 %v8392, %v9875
    %9877 = vmatprep.mubr.bf16.mxu0 %v8494
    %9878 = vmatmul.mubr.bf16.gmra.mxu0 %v8493
    %v9879 = vpop.f32.mrf.mxu0
    %v9880 = vadd.f32 %v8397, %v9879
    %v9881 = vpop.f32.mrf.mxu0
    %v9882 = vadd.f32 %v8397, %v9881
    %v9883 = vpop.f32.mrf.mxu0
    %v9884 = vadd.f32 %v8402, %v9883
    %v9885 = vpop.f32.mrf.mxu0
    %v9886 = vadd.f32 %v8402, %v9885
    %9887 = vmatprep.mubr.bf16.mxu0 %v8499
    %9888 = vmatmul.mubr.bf16.gmra.mxu0 %v8498
    %v9889 = vpop.f32.mrf.mxu0
    %v9890 = vadd.f32 %v8407, %v9889
    %v9891 = vpop.f32.mrf.mxu0
    %v9892 = vadd.f32 %v8407, %v9891
    %v9893 = vpop.f32.mrf.mxu0
    %v9894 = vadd.f32 %v8412, %v9893
    %v9895 = vpop.f32.mrf.mxu0
    %v9896 = vadd.f32 %v8412, %v9895
    %9897 = vmatprep.mubr.bf16.mxu0 %v8504
    %9898 = vmatmul.mubr.bf16.gmra.mxu0 %v8503
    %v9899 = vpop.f32.mrf.mxu0
    %v9900 = vadd.f32 %v8417, %v9899
    %v9901 = vpop.f32.mrf.mxu0
    %v9902 = vadd.f32 %v8417, %v9901
    %v9903 = vpop.f32.mrf.mxu0
    %v9904 = vadd.f32 %v8422, %v9903
    %v9905 = vpop.f32.mrf.mxu0
    %v9906 = vadd.f32 %v8422, %v9905
    %9907 = vdwg.mxu0
    %9908 = vmatprep.subr.bf16.mxu0 %v9313
    %9909 = vmatpush1.bf16.msra.mxu0 %v9312
    %9910 = vmatprep.subr.bf16.mxu0 %v9307
    %9911 = vmatpush1.bf16.msra.mxu0 %v9306
    %9912 = vmatprep.subr.bf16.mxu0 %v9301
    %9913 = vmatpush1.bf16.msra.mxu0 %v9300
    %9914 = vmatprep.subr.bf16.mxu0 %v9295
    %9915 = vmatpush1.bf16.msra.mxu0 %v9294
    %9916 = vmatprep.subr.bf16.mxu0 %v9289
    %9917 = vmatpush1.bf16.msra.mxu0 %v9288
    %9918 = vmatprep.subr.bf16.mxu0 %v9283
    %9919 = vmatpush1.bf16.msra.mxu0 %v9282
    %9920 = vmatprep.subr.bf16.mxu0 %v9277
    %9921 = vmatpush1.bf16.msra.mxu0 %v9276
    %9922 = vmatprep.subr.bf16.mxu0 %v9271
    %9923 = vmatpush1.bf16.msra.mxu0 %v9270
    %9924 = vmatprep.subr.bf16.mxu0 %v9361
    %9925 = vmatpush2.bf16.msra.mxu0 %v9360
    %9926 = vmatprep.subr.bf16.mxu0 %v9355
    %9927 = vmatpush2.bf16.msra.mxu0 %v9354
    %9928 = vmatprep.subr.bf16.mxu0 %v9349
    %9929 = vmatpush2.bf16.msra.mxu0 %v9348
    %9930 = vmatprep.subr.bf16.mxu0 %v9343
    %9931 = vmatpush2.bf16.msra.mxu0 %v9342
    %9932 = vmatprep.subr.bf16.mxu0 %v9337
    %9933 = vmatpush2.bf16.msra.mxu0 %v9336
    %9934 = vmatprep.subr.bf16.mxu0 %v9331
    %9935 = vmatpush2.bf16.msra.mxu0 %v9330
    %9936 = vmatprep.subr.bf16.mxu0 %v9325
    %9937 = vmatpush2.bf16.msra.mxu0 %v9324
    %9938 = vmatprep.subr.bf16.mxu0 %v9319
    %9939 = vmatpush2.bf16.msra.mxu0 %v9318
    %9940 = vmatprep.mubr.bf16.mxu0 %v8491
    %9941 = vmatmul.mubr.bf16.gmra.mxu0 %v8490
    %v9942 = vpop.f32.mrf.mxu0
    %v9943 = vadd.f32 %v9870, %v9942
    %v9944 = vpop.f32.mrf.mxu0
    %v9945 = vadd.f32 %v9872, %v9944
    %v9946 = vpop.f32.mrf.mxu0
    %v9947 = vadd.f32 %v9874, %v9946
    %v9948 = vpop.f32.mrf.mxu0
    %v9949 = vadd.f32 %v9876, %v9948
    %9950 = vmatprep.mubr.bf16.mxu0 %v8496
    %9951 = vmatmul.mubr.bf16.gmra.mxu0 %v8495
    %v9952 = vpop.f32.mrf.mxu0
    %v9953 = vadd.f32 %v9880, %v9952
    %v9954 = vpop.f32.mrf.mxu0
    %v9955 = vadd.f32 %v9882, %v9954
    %v9956 = vpop.f32.mrf.mxu0
    %v9957 = vadd.f32 %v9884, %v9956
    %v9958 = vpop.f32.mrf.mxu0
    %v9959 = vadd.f32 %v9886, %v9958
    %9960 = vmatprep.mubr.bf16.mxu0 %v8501
    %9961 = vmatmul.mubr.bf16.gmra.mxu0 %v8500
    %v9962 = vpop.f32.mrf.mxu0
    %v9963 = vadd.f32 %v9890, %v9962
    %v9964 = vpop.f32.mrf.mxu0
    %v9965 = vadd.f32 %v9892, %v9964
    %v9966 = vpop.f32.mrf.mxu0
    %v9967 = vadd.f32 %v9894, %v9966
    %v9968 = vpop.f32.mrf.mxu0
    %v9969 = vadd.f32 %v9896, %v9968
    %9970 = vmatprep.mubr.bf16.mxu0 %v8506
    %9971 = vmatmul.mubr.bf16.gmra.mxu0 %v8505
    %v9972 = vpop.f32.mrf.mxu0
    %v9973 = vadd.f32 %v9900, %v9972
    %v9974 = vpop.f32.mrf.mxu0
    %v9975 = vadd.f32 %v9902, %v9974
    %v9976 = vpop.f32.mrf.mxu0
    %v9977 = vadd.f32 %v9904, %v9976
    %v9978 = vpop.f32.mrf.mxu0
    %v9979 = vadd.f32 %v9906, %v9978
    %9980 = vdwg.mxu0
    %9981 = vmatprep.subr.bf16.mxu0 0
    %9982 = vmatpush1.bf16.msra.mxu0 0
    %9983 = vmatprep.subr.bf16.mxu0 0
    %9984 = vmatpush1.bf16.msra.mxu0 0
    %9985 = vmatprep.subr.bf16.mxu0 0
    %9986 = vmatpush1.bf16.msra.mxu0 0
    %9987 = vmatprep.subr.bf16.mxu0 0
    %9988 = vmatpush1.bf16.msra.mxu0 0
    %9989 = vmatprep.subr.bf16.mxu0 %v9385
    %9990 = vmatpush1.bf16.msra.mxu0 %v9384
    %9991 = vmatprep.subr.bf16.mxu0 %v9379
    %9992 = vmatpush1.bf16.msra.mxu0 %v9378
    %9993 = vmatprep.subr.bf16.mxu0 %v9373
    %9994 = vmatpush1.bf16.msra.mxu0 %v9372
    %9995 = vmatprep.subr.bf16.mxu0 %v9367
    %9996 = vmatpush1.bf16.msra.mxu0 %v9366
    %9997 = vmatprep.subr.bf16.mxu0 0
    %9998 = vmatpush2.bf16.msra.mxu0 0
    %9999 = vmatprep.subr.bf16.mxu0 0
    %10000 = vmatpush2.bf16.msra.mxu0 0
    %10001 = vmatprep.subr.bf16.mxu0 0
    %10002 = vmatpush2.bf16.msra.mxu0 0
    %10003 = vmatprep.subr.bf16.mxu0 0
    %10004 = vmatpush2.bf16.msra.mxu0 0
    %10005 = vmatprep.subr.bf16.mxu0 0
    %10006 = vmatpush2.bf16.msra.mxu0 0
    %10007 = vmatprep.subr.bf16.mxu0 0
    %10008 = vmatpush2.bf16.msra.mxu0 0
    %10009 = vmatprep.subr.bf16.mxu0 0
    %10010 = vmatpush2.bf16.msra.mxu0 0
    %10011 = vmatprep.subr.bf16.mxu0 0
    %10012 = vmatpush2.bf16.msra.mxu0 0
    %10013 = vmatprep.mubr.bf16.mxu0 0
    %10014 = vmatmul.mubr.bf16.gmra.mxu0 %v9605
    %v10015 = vpop.f32.mrf.mxu0
    %v10016 = vadd.f32 %v9943, %v10015
    %v10017 = vpop.f32.mrf.mxu0
    %v10018 = vadd.f32 %v9945, %v10017
    %v10019 = vpop.f32.mrf.mxu0
    %v10020 = vadd.f32 %v9947, %v10019
    %v10021 = vpop.f32.mrf.mxu0
    %v10022 = vadd.f32 %v9949, %v10021
    %10023 = vmatprep.mubr.bf16.mxu0 0
    %10024 = vmatmul.mubr.bf16.gmra.mxu0 %v9608
    %v10025 = vpop.f32.mrf.mxu0
    %v10026 = vadd.f32 %v9953, %v10025
    %v10027 = vpop.f32.mrf.mxu0
    %v10028 = vadd.f32 %v9955, %v10027
    %v10029 = vpop.f32.mrf.mxu0
    %v10030 = vadd.f32 %v9957, %v10029
    %v10031 = vpop.f32.mrf.mxu0
    %v10032 = vadd.f32 %v9959, %v10031
    %10033 = vmatprep.mubr.bf16.mxu0 0
    %10034 = vmatmul.mubr.bf16.gmra.mxu0 %v9611
    %v10035 = vpop.f32.mrf.mxu0
    %v10036 = vadd.f32 %v9963, %v10035
    %v10037 = vpop.f32.mrf.mxu0
    %v10038 = vadd.f32 %v9965, %v10037
    %v10039 = vpop.f32.mrf.mxu0
    %v10040 = vadd.f32 %v9967, %v10039
    %v10041 = vpop.f32.mrf.mxu0
    %v10042 = vadd.f32 %v9969, %v10041
    %10043 = vmatprep.mubr.bf16.mxu0 0
    %10044 = vmatmul.mubr.bf16.gmra.mxu0 %v9614
    %v10045 = vpop.f32.mrf.mxu0
    %v10046 = vadd.f32 %v9973, %v10045
    %v10047 = vpop.f32.mrf.mxu0
    %v10048 = vadd.f32 %v9975, %v10047
    %v10049 = vpop.f32.mrf.mxu0
    %v10050 = vadd.f32 %v9977, %v10049
    %v10051 = vpop.f32.mrf.mxu0
    %v10052 = vadd.f32 %v9979, %v10051
    %10053 = vdwg.mxu0
    %10054 = vmatprep.subr.bf16.mxu0 %v9219
    %10055 = vmatpush1.bf16.msra.mxu0 %v9218
    %10056 = vmatprep.subr.bf16.mxu0 %v9213
    %10057 = vmatpush1.bf16.msra.mxu0 %v9212
    %10058 = vmatprep.subr.bf16.mxu0 %v9207
    %10059 = vmatpush1.bf16.msra.mxu0 %v9206
    %10060 = vmatprep.subr.bf16.mxu0 %v9201
    %10061 = vmatpush1.bf16.msra.mxu0 %v9200
    %10062 = vmatprep.subr.bf16.mxu0 %v9195
    %10063 = vmatpush1.bf16.msra.mxu0 %v9194
    %10064 = vmatprep.subr.bf16.mxu0 %v9189
    %10065 = vmatpush1.bf16.msra.mxu0 %v9188
    %10066 = vmatprep.subr.bf16.mxu0 %v9183
    %10067 = vmatpush1.bf16.msra.mxu0 %v9182
    %10068 = vmatprep.subr.bf16.mxu0 %v9177
    %10069 = vmatpush1.bf16.msra.mxu0 %v9176
    %10070 = vmatprep.subr.bf16.mxu0 %v9267
    %10071 = vmatpush2.bf16.msra.mxu0 %v9266
    %10072 = vmatprep.subr.bf16.mxu0 %v9261
    %10073 = vmatpush2.bf16.msra.mxu0 %v9260
    %10074 = vmatprep.subr.bf16.mxu0 %v9255
    %10075 = vmatpush2.bf16.msra.mxu0 %v9254
    %10076 = vmatprep.subr.bf16.mxu0 %v9249
    %10077 = vmatpush2.bf16.msra.mxu0 %v9248
    %10078 = vmatprep.subr.bf16.mxu0 %v9243
    %10079 = vmatpush2.bf16.msra.mxu0 %v9242
    %10080 = vmatprep.subr.bf16.mxu0 %v9237
    %10081 = vmatpush2.bf16.msra.mxu0 %v9236
    %10082 = vmatprep.subr.bf16.mxu0 %v9231
    %10083 = vmatpush2.bf16.msra.mxu0 %v9230
    %10084 = vmatprep.subr.bf16.mxu0 %v9225
    %10085 = vmatpush2.bf16.msra.mxu0 %v9224
    %10086 = vmatprep.mubr.bf16.mxu0 %v8489
    %10087 = vmatmul.mubr.bf16.gmra.mxu0 %v8488
    %v10088 = vpop.f32.mrf.mxu0
    %v10089 = vadd.f32 %v8387, %v10088
    %v10090 = vpop.f32.mrf.mxu0
    %v10091 = vadd.f32 %v8387, %v10090
    %v10092 = vpop.f32.mrf.mxu0
    %v10093 = vadd.f32 %v8392, %v10092
    %v10094 = vpop.f32.mrf.mxu0
    %v10095 = vadd.f32 %v8392, %v10094
    %10096 = vmatprep.mubr.bf16.mxu0 %v8494
    %10097 = vmatmul.mubr.bf16.gmra.mxu0 %v8493
    %v10098 = vpop.f32.mrf.mxu0
    %v10099 = vadd.f32 %v8397, %v10098
    %v10100 = vpop.f32.mrf.mxu0
    %v10101 = vadd.f32 %v8397, %v10100
    %v10102 = vpop.f32.mrf.mxu0
    %v10103 = vadd.f32 %v8402, %v10102
    %v10104 = vpop.f32.mrf.mxu0
    %v10105 = vadd.f32 %v8402, %v10104
    %10106 = vmatprep.mubr.bf16.mxu0 %v8499
    %10107 = vmatmul.mubr.bf16.gmra.mxu0 %v8498
    %v10108 = vpop.f32.mrf.mxu0
    %v10109 = vadd.f32 %v8407, %v10108
    %v10110 = vpop.f32.mrf.mxu0
    %v10111 = vadd.f32 %v8407, %v10110
    %v10112 = vpop.f32.mrf.mxu0
    %v10113 = vadd.f32 %v8412, %v10112
    %v10114 = vpop.f32.mrf.mxu0
    %v10115 = vadd.f32 %v8412, %v10114
    %10116 = vmatprep.mubr.bf16.mxu0 %v8504
    %10117 = vmatmul.mubr.bf16.gmra.mxu0 %v8503
    %v10118 = vpop.f32.mrf.mxu0
    %v10119 = vadd.f32 %v8417, %v10118
    %v10120 = vpop.f32.mrf.mxu0
    %v10121 = vadd.f32 %v8417, %v10120
    %v10122 = vpop.f32.mrf.mxu0
    %v10123 = vadd.f32 %v8422, %v10122
    %v10124 = vpop.f32.mrf.mxu0
    %v10125 = vadd.f32 %v8422, %v10124
    %10126 = vdwg.mxu0
    %10127 = vmatprep.subr.bf16.mxu0 %v9315
    %10128 = vmatpush1.bf16.msra.mxu0 %v9314
    %10129 = vmatprep.subr.bf16.mxu0 %v9309
    %10130 = vmatpush1.bf16.msra.mxu0 %v9308
    %10131 = vmatprep.subr.bf16.mxu0 %v9303
    %10132 = vmatpush1.bf16.msra.mxu0 %v9302
    %10133 = vmatprep.subr.bf16.mxu0 %v9297
    %10134 = vmatpush1.bf16.msra.mxu0 %v9296
    %10135 = vmatprep.subr.bf16.mxu0 %v9291
    %10136 = vmatpush1.bf16.msra.mxu0 %v9290
    %10137 = vmatprep.subr.bf16.mxu0 %v9285
    %10138 = vmatpush1.bf16.msra.mxu0 %v9284
    %10139 = vmatprep.subr.bf16.mxu0 %v9279
    %10140 = vmatpush1.bf16.msra.mxu0 %v9278
    %10141 = vmatprep.subr.bf16.mxu0 %v9273
    %10142 = vmatpush1.bf16.msra.mxu0 %v9272
    %10143 = vmatprep.subr.bf16.mxu0 %v9363
    %10144 = vmatpush2.bf16.msra.mxu0 %v9362
    %10145 = vmatprep.subr.bf16.mxu0 %v9357
    %10146 = vmatpush2.bf16.msra.mxu0 %v9356
    %10147 = vmatprep.subr.bf16.mxu0 %v9351
    %10148 = vmatpush2.bf16.msra.mxu0 %v9350
    %10149 = vmatprep.subr.bf16.mxu0 %v9345
    %10150 = vmatpush2.bf16.msra.mxu0 %v9344
    %10151 = vmatprep.subr.bf16.mxu0 %v9339
    %10152 = vmatpush2.bf16.msra.mxu0 %v9338
    %10153 = vmatprep.subr.bf16.mxu0 %v9333
    %10154 = vmatpush2.bf16.msra.mxu0 %v9332
    %10155 = vmatprep.subr.bf16.mxu0 %v9327
    %10156 = vmatpush2.bf16.msra.mxu0 %v9326
    %10157 = vmatprep.subr.bf16.mxu0 %v9321
    %10158 = vmatpush2.bf16.msra.mxu0 %v9320
    %10159 = vmatprep.mubr.bf16.mxu0 %v8491
    %10160 = vmatmul.mubr.bf16.gmra.mxu0 %v8490
    %v10161 = vpop.f32.mrf.mxu0
    %v10162 = vadd.f32 %v10089, %v10161
    %v10163 = vpop.f32.mrf.mxu0
    %v10164 = vadd.f32 %v10091, %v10163
    %v10165 = vpop.f32.mrf.mxu0
    %v10166 = vadd.f32 %v10093, %v10165
    %v10167 = vpop.f32.mrf.mxu0
    %v10168 = vadd.f32 %v10095, %v10167
    %10169 = vmatprep.mubr.bf16.mxu0 %v8496
    %10170 = vmatmul.mubr.bf16.gmra.mxu0 %v8495
    %v10171 = vpop.f32.mrf.mxu0
    %v10172 = vadd.f32 %v10099, %v10171
    %v10173 = vpop.f32.mrf.mxu0
    %v10174 = vadd.f32 %v10101, %v10173
    %v10175 = vpop.f32.mrf.mxu0
    %v10176 = vadd.f32 %v10103, %v10175
    %v10177 = vpop.f32.mrf.mxu0
    %v10178 = vadd.f32 %v10105, %v10177
    %10179 = vmatprep.mubr.bf16.mxu0 %v8501
    %10180 = vmatmul.mubr.bf16.gmra.mxu0 %v8500
    %v10181 = vpop.f32.mrf.mxu0
    %v10182 = vadd.f32 %v10109, %v10181
    %v10183 = vpop.f32.mrf.mxu0
    %v10184 = vadd.f32 %v10111, %v10183
    %v10185 = vpop.f32.mrf.mxu0
    %v10186 = vadd.f32 %v10113, %v10185
    %v10187 = vpop.f32.mrf.mxu0
    %v10188 = vadd.f32 %v10115, %v10187
    %10189 = vmatprep.mubr.bf16.mxu0 %v8506
    %10190 = vmatmul.mubr.bf16.gmra.mxu0 %v8505
    %v10191 = vpop.f32.mrf.mxu0
    %v10192 = vadd.f32 %v10119, %v10191
    %v10193 = vpop.f32.mrf.mxu0
    %v10194 = vadd.f32 %v10121, %v10193
    %v10195 = vpop.f32.mrf.mxu0
    %v10196 = vadd.f32 %v10123, %v10195
    %v10197 = vpop.f32.mrf.mxu0
    %v10198 = vadd.f32 %v10125, %v10197
    %10199 = vdwg.mxu0
    %10200 = vmatprep.subr.bf16.mxu0 0
    %10201 = vmatpush1.bf16.msra.mxu0 0
    %10202 = vmatprep.subr.bf16.mxu0 0
    %10203 = vmatpush1.bf16.msra.mxu0 0
    %10204 = vmatprep.subr.bf16.mxu0 0
    %10205 = vmatpush1.bf16.msra.mxu0 0
    %10206 = vmatprep.subr.bf16.mxu0 0
    %10207 = vmatpush1.bf16.msra.mxu0 0
    %10208 = vmatprep.subr.bf16.mxu0 %v9387
    %10209 = vmatpush1.bf16.msra.mxu0 %v9386
    %10210 = vmatprep.subr.bf16.mxu0 %v9381
    %10211 = vmatpush1.bf16.msra.mxu0 %v9380
    %10212 = vmatprep.subr.bf16.mxu0 %v9375
    %10213 = vmatpush1.bf16.msra.mxu0 %v9374
    %10214 = vmatprep.subr.bf16.mxu0 %v9369
    %10215 = vmatpush1.bf16.msra.mxu0 %v9368
    %10216 = vmatprep.subr.bf16.mxu0 0
    %10217 = vmatpush2.bf16.msra.mxu0 0
    %10218 = vmatprep.subr.bf16.mxu0 0
    %10219 = vmatpush2.bf16.msra.mxu0 0
    %10220 = vmatprep.subr.bf16.mxu0 0
    %10221 = vmatpush2.bf16.msra.mxu0 0
    %10222 = vmatprep.subr.bf16.mxu0 0
    %10223 = vmatpush2.bf16.msra.mxu0 0
    %10224 = vmatprep.subr.bf16.mxu0 0
    %10225 = vmatpush2.bf16.msra.mxu0 0
    %10226 = vmatprep.subr.bf16.mxu0 0
    %10227 = vmatpush2.bf16.msra.mxu0 0
    %10228 = vmatprep.subr.bf16.mxu0 0
    %10229 = vmatpush2.bf16.msra.mxu0 0
    %10230 = vmatprep.subr.bf16.mxu0 0
    %10231 = vmatpush2.bf16.msra.mxu0 0
    %10232 = vmatprep.mubr.bf16.mxu0 0
    %10233 = vmatmul.mubr.bf16.gmra.mxu0 %v9605
    %v10234 = vpop.f32.mrf.mxu0
    %v10235 = vadd.f32 %v10162, %v10234
    %v10236 = vpop.f32.mrf.mxu0
    %v10237 = vadd.f32 %v10164, %v10236
    %v10238 = vpop.f32.mrf.mxu0
    %v10239 = vadd.f32 %v10166, %v10238
    %v10240 = vpop.f32.mrf.mxu0
    %v10241 = vadd.f32 %v10168, %v10240
    %10242 = vmatprep.mubr.bf16.mxu0 0
    %10243 = vmatmul.mubr.bf16.gmra.mxu0 %v9608
    %v10244 = vpop.f32.mrf.mxu0
    %v10245 = vadd.f32 %v10172, %v10244
    %v10246 = vpop.f32.mrf.mxu0
    %v10247 = vadd.f32 %v10174, %v10246
    %v10248 = vpop.f32.mrf.mxu0
    %v10249 = vadd.f32 %v10176, %v10248
    %v10250 = vpop.f32.mrf.mxu0
    %v10251 = vadd.f32 %v10178, %v10250
    %10252 = vmatprep.mubr.bf16.mxu0 0
    %10253 = vmatmul.mubr.bf16.gmra.mxu0 %v9611
    %v10254 = vpop.f32.mrf.mxu0
    %v10255 = vadd.f32 %v10182, %v10254
    %v10256 = vpop.f32.mrf.mxu0
    %v10257 = vadd.f32 %v10184, %v10256
    %v10258 = vpop.f32.mrf.mxu0
    %v10259 = vadd.f32 %v10186, %v10258
    %v10260 = vpop.f32.mrf.mxu0
    %v10261 = vadd.f32 %v10188, %v10260
    %10262 = vmatprep.mubr.bf16.mxu0 0
    %10263 = vmatmul.mubr.bf16.gmra.mxu0 %v9614
    %v10264 = vpop.f32.mrf.mxu0
    %v10265 = vadd.f32 %v10192, %v10264
    %v10266 = vpop.f32.mrf.mxu0
    %v10267 = vadd.f32 %v10194, %v10266
    %v10268 = vpop.f32.mrf.mxu0
    %v10269 = vadd.f32 %v10196, %v10268
    %v10270 = vpop.f32.mrf.mxu0
    %v10271 = vadd.f32 %v10198, %v10270
    %10272 = vdwg.mxu0
    %v10273 = vld [vmem:[#allocation3] sm:$0xff]
    %v10274 = vld [vmem:[#allocation3 + $0x8] sm:$0xff]
    %v10275 = vld [vmem:[#allocation3 + $0x10] sm:$0xff]
    %v10276 = vld [vmem:[#allocation3 + $0x18] sm:$0xff]
    %v10277 = vld [vmem:[#allocation3 + $0x20] sm:$0xff]
    %v10278 = vld [vmem:[#allocation3 + $0x28] sm:$0xff]
    %v10279 = vld [vmem:[#allocation3 + $0x30] sm:$0xff]
    %v10280 = vld [vmem:[#allocation3 + $0x38] sm:$0xff]
    %v10281 = vld [vmem:[#allocation3 + $0x40] sm:$0xff]
    %v10282 = vld [vmem:[#allocation3 + $0x48] sm:$0xff]
    %v10283 = vld [vmem:[#allocation3 + $0x50] sm:$0xff]
    %v10284 = vld [vmem:[#allocation3 + $0x58] sm:$0xff]
    %v10285 = vld [vmem:[#allocation3 + $0x60] sm:$0xff]
    %v10286 = vld [vmem:[#allocation3 + $0x68] sm:$0xff]
    %v10287 = vld [vmem:[#allocation3 + $0x70] sm:$0xff]
    %v10288 = vld [vmem:[#allocation3 + $0x78] sm:$0xff]
    %v10289 = vld [vmem:[#allocation3 + $0x80] sm:$0xff]
    %v10290 = vld [vmem:[#allocation3 + $0x88] sm:$0xff]
    %v10291 = vld [vmem:[#allocation3 + $0x90] sm:$0xff]
    %v10292 = vld [vmem:[#allocation3 + $0x98] sm:$0xff]
    %v10293 = vld [vmem:[#allocation3 + $0xa0] sm:$0xff]
    %v10294 = vld [vmem:[#allocation3 + $0xa8] sm:$0xff]
    %v10295 = vld [vmem:[#allocation3 + $0xb0] sm:$0xff]
    %v10296 = vld [vmem:[#allocation3 + $0xb8] sm:$0xff]
    %v10297 = vadd.f32 %v10273, %v9797
    %v10298 = vadd.f32 %v10274, %v9799
    %v10299 = vadd.f32 %v10275, %v10016
    %v10300 = vadd.f32 %v10276, %v9801
    %v10301 = vadd.f32 %v10277, %v9803
    %v10302 = vadd.f32 %v10278, %v10020
    %v10303 = vadd.f32 %v10279, %v9807
    %v10304 = vadd.f32 %v10280, %v9809
    %v10305 = vadd.f32 %v10281, %v10026
    %v10306 = vadd.f32 %v10282, %v9811
    %v10307 = vadd.f32 %v10283, %v9813
    %v10308 = vadd.f32 %v10284, %v10030
    %v10309 = vadd.f32 %v10285, %v9817
    %v10310 = vadd.f32 %v10286, %v9819
    %v10311 = vadd.f32 %v10287, %v10036
    %v10312 = vadd.f32 %v10288, %v9821
    %v10313 = vadd.f32 %v10289, %v9823
    %v10314 = vadd.f32 %v10290, %v10040
    %v10315 = vadd.f32 %v10291, %v9827
    %v10316 = vadd.f32 %v10292, %v9829
    %v10317 = vadd.f32 %v10293, %v10046
    %v10318 = vadd.f32 %v10294, %v9831
    %v10319 = vadd.f32 %v10295, %v9833
    %v10320 = vadd.f32 %v10296, %v10050
    %v10321 = vmul.f32 %v10297, %v5196
    %v10322 = vmul.f32 %v10298, %v5200
    %v10323 = vmul.f32 %v10299, %v5204
    %v10324 = vmul.f32 %v10300, %v5196
    %v10325 = vmul.f32 %v10301, %v5200
    %v10326 = vmul.f32 %v10302, %v5204
    %v10327 = vmul.f32 %v10303, %v5196
    %v10328 = vmul.f32 %v10304, %v5200
    %v10329 = vmul.f32 %v10305, %v5204
    %v10330 = vmul.f32 %v10306, %v5196
    %v10331 = vmul.f32 %v10307, %v5200
    %v10332 = vmul.f32 %v10308, %v5204
    %v10333 = vmul.f32 %v10309, %v5196
    %v10334 = vmul.f32 %v10310, %v5200
    %v10335 = vmul.f32 %v10311, %v5204
    %v10336 = vmul.f32 %v10312, %v5196
    %v10337 = vmul.f32 %v10313, %v5200
    %v10338 = vmul.f32 %v10314, %v5204
    %v10339 = vmul.f32 %v10315, %v5196
    %v10340 = vmul.f32 %v10316, %v5200
    %v10341 = vmul.f32 %v10317, %v5204
    %v10342 = vmul.f32 %v10318, %v5196
    %v10343 = vmul.f32 %v10319, %v5200
    %v10344 = vmul.f32 %v10320, %v5204
    %10345 = vst [vmem:[#allocation9] sm:$0xff] %v10321
    %10346 = vst [vmem:[#allocation9 + $0x8] sm:$0xff] %v10322
    %10347 = vst [vmem:[#allocation9 + $0x10] sm:$0xff] %v10323
    %10348 = vst [vmem:[#allocation9 + $0x18] sm:$0xff] %v10324
    %10349 = vst [vmem:[#allocation9 + $0x20] sm:$0xff] %v10325
    %10350 = vst [vmem:[#allocation9 + $0x28] sm:$0xff] %v10326
    %10351 = vst [vmem:[#allocation9 + $0x30] sm:$0xff] %v10327
    %10352 = vst [vmem:[#allocation9 + $0x38] sm:$0xff] %v10328
    %10353 = vst [vmem:[#allocation9 + $0x40] sm:$0xff] %v10329
    %10354 = vst [vmem:[#allocation9 + $0x48] sm:$0xff] %v10330
    %10355 = vst [vmem:[#allocation9 + $0x50] sm:$0xff] %v10331
    %10356 = vst [vmem:[#allocation9 + $0x58] sm:$0xff] %v10332
    %10357 = vst [vmem:[#allocation9 + $0x60] sm:$0xff] %v10333
    %10358 = vst [vmem:[#allocation9 + $0x68] sm:$0xff] %v10334
    %10359 = vst [vmem:[#allocation9 + $0x70] sm:$0xff] %v10335
    %10360 = vst [vmem:[#allocation9 + $0x78] sm:$0xff] %v10336
    %10361 = vst [vmem:[#allocation9 + $0x80] sm:$0xff] %v10337
    %10362 = vst [vmem:[#allocation9 + $0x88] sm:$0xff] %v10338
    %10363 = vst [vmem:[#allocation9 + $0x90] sm:$0xff] %v10339
    %10364 = vst [vmem:[#allocation9 + $0x98] sm:$0xff] %v10340
    %10365 = vst [vmem:[#allocation9 + $0xa0] sm:$0xff] %v10341
    %10366 = vst [vmem:[#allocation9 + $0xa8] sm:$0xff] %v10342
    %10367 = vst [vmem:[#allocation9 + $0xb0] sm:$0xff] %v10343
    %10368 = vst [vmem:[#allocation9 + $0xb8] sm:$0xff] %v10344
    %v10369 = vld [vmem:[%s1541] sm:$0xff]
    %v10370 = vld [vmem:[%s1541 + $0x8] sm:$0xff]
    %v10371 = vld [vmem:[%s1541 + $0x10] sm:$0xff]
    %v10372 = vld [vmem:[%s1541 + $0x18] sm:$0xff]
    %v10373 = vld [vmem:[%s1541 + $0x20] sm:$0xff]
    %v10374 = vld [vmem:[%s1541 + $0x28] sm:$0xff]
    %v10375 = vld [vmem:[%s1541 + $0x30] sm:$0xff]
    %v10376 = vld [vmem:[%s1541 + $0x38] sm:$0xff]
    %v10377 = vld [vmem:[%s1541 + $0x40] sm:$0xff]
    %v10378 = vld [vmem:[%s1541 + $0x48] sm:$0xff]
    %v10379 = vld [vmem:[%s1541 + $0x50] sm:$0xff]
    %v10380 = vld [vmem:[%s1541 + $0x58] sm:$0xff]
    %v10381 = vld [vmem:[%s1541 + $0x60] sm:$0xff]
    %v10382 = vld [vmem:[%s1541 + $0x68] sm:$0xff]
    %v10383 = vld [vmem:[%s1541 + $0x70] sm:$0xff]
    %v10384 = vld [vmem:[%s1541 + $0x78] sm:$0xff]
    %v10385 = vld [vmem:[%s1541 + $0x80] sm:$0xff]
    %v10386 = vld [vmem:[%s1541 + $0x88] sm:$0xff]
    %v10387 = vld [vmem:[%s1541 + $0x90] sm:$0xff]
    %v10388 = vld [vmem:[%s1541 + $0x98] sm:$0xff]
    %v10389 = vld [vmem:[%s1541 + $0xa0] sm:$0xff]
    %v10390 = vld [vmem:[%s1541 + $0xa8] sm:$0xff]
    %v10391 = vld [vmem:[%s1541 + $0xb0] sm:$0xff]
    %v10392 = vld [vmem:[%s1541 + $0xb8] sm:$0xff]
    %v10393 = vadd.f32 %v10369, %v10018
    %v10394 = vadd.f32 %v10370, %v10235
    %v10395 = vadd.f32 %v10371, %v10237
    %v10396 = vadd.f32 %v10372, %v10022
    %v10397 = vadd.f32 %v10373, %v10239
    %v10398 = vadd.f32 %v10374, %v10241
    %v10399 = vadd.f32 %v10375, %v10028
    %v10400 = vadd.f32 %v10376, %v10245
    %v10401 = vadd.f32 %v10377, %v10247
    %v10402 = vadd.f32 %v10378, %v10032
    %v10403 = vadd.f32 %v10379, %v10249
    %v10404 = vadd.f32 %v10380, %v10251
    %v10405 = vadd.f32 %v10381, %v10038
    %v10406 = vadd.f32 %v10382, %v10255
    %v10407 = vadd.f32 %v10383, %v10257
    %v10408 = vadd.f32 %v10384, %v10042
    %v10409 = vadd.f32 %v10385, %v10259
    %v10410 = vadd.f32 %v10386, %v10261
    %v10411 = vadd.f32 %v10387, %v10048
    %v10412 = vadd.f32 %v10388, %v10265
    %v10413 = vadd.f32 %v10389, %v10267
    %v10414 = vadd.f32 %v10390, %v10052
    %v10415 = vadd.f32 %v10391, %v10269
    %v10416 = vadd.f32 %v10392, %v10271
    %v10417 = vmul.f32 %v10393, %v5196
    %v10418 = vmul.f32 %v10394, %v5200
    %v10419 = vmul.f32 %v10395, %v5204
    %v10420 = vmul.f32 %v10396, %v5196
    %v10421 = vmul.f32 %v10397, %v5200
    %v10422 = vmul.f32 %v10398, %v5204
    %v10423 = vmul.f32 %v10399, %v5196
    %v10424 = vmul.f32 %v10400, %v5200
    %v10425 = vmul.f32 %v10401, %v5204
    %v10426 = vmul.f32 %v10402, %v5196
    %v10427 = vmul.f32 %v10403, %v5200
    %v10428 = vmul.f32 %v10404, %v5204
    %v10429 = vmul.f32 %v10405, %v5196
    %v10430 = vmul.f32 %v10406, %v5200
    %v10431 = vmul.f32 %v10407, %v5204
    %v10432 = vmul.f32 %v10408, %v5196
    %v10433 = vmul.f32 %v10409, %v5200
    %v10434 = vmul.f32 %v10410, %v5204
    %v10435 = vmul.f32 %v10411, %v5196
    %v10436 = vmul.f32 %v10412, %v5200
    %v10437 = vmul.f32 %v10413, %v5204
    %v10438 = vmul.f32 %v10414, %v5196
    %v10439 = vmul.f32 %v10415, %v5200
    %v10440 = vmul.f32 %v10416, %v5204
    %s10441 = scalar_lea.vmem [#allocation9], 192
    %10442 = vst [vmem:[%s10441] sm:$0xff] %v10417
    %10443 = vst [vmem:[%s10441 + $0x8] sm:$0xff] %v10418
    %10444 = vst [vmem:[%s10441 + $0x10] sm:$0xff] %v10419
    %10445 = vst [vmem:[%s10441 + $0x18] sm:$0xff] %v10420
    %10446 = vst [vmem:[%s10441 + $0x20] sm:$0xff] %v10421
    %10447 = vst [vmem:[%s10441 + $0x28] sm:$0xff] %v10422
    %10448 = vst [vmem:[%s10441 + $0x30] sm:$0xff] %v10423
    %10449 = vst [vmem:[%s10441 + $0x38] sm:$0xff] %v10424
    %10450 = vst [vmem:[%s10441 + $0x40] sm:$0xff] %v10425
    %10451 = vst [vmem:[%s10441 + $0x48] sm:$0xff] %v10426
    %10452 = vst [vmem:[%s10441 + $0x50] sm:$0xff] %v10427
    %10453 = vst [vmem:[%s10441 + $0x58] sm:$0xff] %v10428
    %10454 = vst [vmem:[%s10441 + $0x60] sm:$0xff] %v10429
    %10455 = vst [vmem:[%s10441 + $0x68] sm:$0xff] %v10430
    %10456 = vst [vmem:[%s10441 + $0x70] sm:$0xff] %v10431
    %10457 = vst [vmem:[%s10441 + $0x78] sm:$0xff] %v10432
    %10458 = vst [vmem:[%s10441 + $0x80] sm:$0xff] %v10433
    %10459 = vst [vmem:[%s10441 + $0x88] sm:$0xff] %v10434
    %10460 = vst [vmem:[%s10441 + $0x90] sm:$0xff] %v10435
    %10461 = vst [vmem:[%s10441 + $0x98] sm:$0xff] %v10436
    %10462 = vst [vmem:[%s10441 + $0xa0] sm:$0xff] %v10437
    %10463 = vst [vmem:[%s10441 + $0xa8] sm:$0xff] %v10438
    %10464 = vst [vmem:[%s10441 + $0xb0] sm:$0xff] %v10439
    %10465 = vst [vmem:[%s10441 + $0xb8] sm:$0xff] %v10440
    // Predicated region
    $region38: #{tpu_custom_call.1} parent=1 // pred_check
      _
    $region39: #{tpu_custom_call.1} parent=1 // pred_check_branch
      %10467 = sbr.rel (0) target = $region41
    $region40: #{tpu_custom_call.1} parent=1 // pred_region
      %s10469 = ssub.s32 6144, 6144
      %10470 = vsyncadd [#allocation5], %s10469
      %s10471 = sshll.u32 [#allocation9], 4
      %s10472 = int_to_ptr.vmem [resolvable:$true] %s10471
      %10477 = dma.vmem_to_hbm [thread:$0]  %s10472, 6144, %s6, [#allocation5], 384, 384, 24
    $region41: #{tpu_custom_call.1} parent=1 // pred_fallthru
      _
    // Predicated region
    $region42: #{tpu_custom_call.1} parent=1 // pred_check
      _
    $region43: #{tpu_custom_call.1} parent=1 // pred_check_branch
      %10479 = sbr.rel (0) target = $region45
    $region44: #{tpu_custom_call.1} parent=1 // pred_region
      %10480 = dma.done [#allocation5], 6144
    $region45: #{tpu_custom_call.1} parent=1 // pred_fallthru
      _
    %10481 = vsyncpa [#allocation4], 1
    %10482 = vsyncpa [#allocation7], 1
    %10483 = vsyncpa [#allocation5], 1

</llo_original>
